<compile_context>
chip_gen: v7x
topology: tpu7x:2x2x1
jax: 0.10.0
libtpu: 0.0.40
codegen_flags: <defaults>
</compile_context>

<pallas_src>
import functools

import jax
import jax.numpy as jnp
import numpy as np
from jax.experimental import pallas as pl
from jax.experimental.pallas import tpu as pltpu

EPS = 1e-5
# tap order t = (kh*3 + kw), kh = dh+1, kw = dw+1  (matches weight repacking)
_TAPS = tuple((dh, dw) for dh in (-1, 0, 1) for dw in (-1, 0, 1))


def _round_up8(c):
    return ((c + 7) // 8) * 8


# ------------------------------ fused kernel ------------------------------- #

def _residual_g_kernel(x_ref, gsel_ref, mask_ref, pin_ref, pout_ref,
                       w1_ref, w2_ref, wsc_ref, o_ref, patch_ref, stack_ref,
                       *, wm):
    cin, p0 = x_ref.shape                     # (Cin, N*H*W)    coarse pixels
    cout, q = o_ref.shape                     # (Cout, N*Hm*Wm) fine pixels
    cin_p = _round_up8(cin)                   # conv1 K-block padded to 8 rows

    # packed per-channel params: 2 tiny inputs instead of 8 padded VMEM tiles
    g1, be1 = pin_ref[:, 0:1], pin_ref[:, 1:2]
    g2, be2 = pout_ref[:, 0:1], pout_ref[:, 1:2]
    b1, b2, bsc = pout_ref[:, 2:3], pout_ref[:, 3:4], pout_ref[:, 4:5]

    # ---- training-mode BatchNorm (batch stats, biased var, eps=1e-5) + ReLU -
    def bn_relu(v, gamma, beta, stage=None):
        c, m = v.shape
        inv_m = 1.0 / m
        if (stage is not None and c < 8
                and 2 * c <= stage.shape[0] and stage.shape[1] == m):
            # fuse the two cross-lane reductions: stage [v ; v*v] as one
            # >=8-sublane block -> a single full-vreg XLU reduce chain
            stage[0:c, :] = v
            stage[c:2 * c, :] = v * v
            s = jnp.sum(stage[0:2 * c, :], axis=1, keepdims=True) * inv_m
            mean, msq = s[0:c], s[c:2 * c]
        else:
            # rows already fill vregs: keep two independent reduce chains
            mean = jnp.sum(v, axis=1, keepdims=True) * inv_m
            msq = jnp.sum(v * v, axis=1, keepdims=True) * inv_m
        xhat = (v - mean) * jax.lax.rsqrt(msq - mean * mean + EPS)
        return jnp.maximum(xhat * gamma + beta, 0.0)

    x = x_ref[...]                                                  # (Cin, P0)
    a1 = bn_relu(x, g1, be1, stage=stack_ref)                       # (Cin, P0)

    # ---- shortcut 1x1 SN-conv at coarse resolution (commutes with nearest
    # upsampling; valid for mode='nearest' only) ------------------------------
    sc = jnp.dot(wsc_ref[...], x,
                 preferred_element_type=jnp.float32) + bsc          # (Cout,P0)

    # ---- fused nearest-2x upsample of [a1 ; sc] as ONE bf16 selection dot ---
    stack_ref[0:cin, :] = a1
    if cin_p > cin:                           # pad rows must be exact zeros
        stack_ref[cin:cin_p, :] = jnp.zeros((cin_p - cin, p0), jnp.float32)
    stack_ref[cin_p:cin_p + cout, :] = sc
    up = jnp.dot(stack_ref[...].astype(jnp.bfloat16), gsel_ref[...],
                 preferred_element_type=jnp.float32)                # (.., Q)
    a1u = up[0:cin_p]                         # (cin_p, Q), pad rows are zero
    scu = up[cin_p:cin_p + cout]              # (Cout, Q)

    # ---- 3x3 conv (pad=1) as a single im2col matmul: shifts via lane rolls,
    # zero padding via precomputed border masks, taps written as full
    # 8-sublane-aligned f32 blocks of the patch scratch ------------------------
    def conv3x3(act_pad, w_mat, bias):
        cp = act_pad.shape[0]                 # multiple of 8
        for t, (dh, dw) in enumerate(_TAPS):
            off = dh * wm + dw                # flat-pixel offset on fine grid
            s = act_pad if off == 0 else pltpu.roll(act_pad, (-off) % q, axis=1)
            if dh != 0 or dw != 0:            # center tap needs no mask
                s = s * mask_ref[t:t + 1, :]
            patch_ref[t * cp:(t + 1) * cp, :] = s
        return (jnp.dot(w_mat, patch_ref[0:9 * cp, :],
                        preferred_element_type=jnp.float32) + bias)

    h1 = conv3x3(a1u, w1_ref[...], b1)                              # (Cout, Q)
    a2 = bn_relu(h1, g2, be2)                                       # BN2 + ReLU
    h2 = conv3x3(a2, w2_ref[...], b2)                               # (Cout, Q)

    o_ref[...] = h2 + scu                                           # residual


# ------------------------------- JAX glue ----------------------------------- #

def spectral_norm_weight(w_oihw, u):
    # Exactly SpectralNorm.compute_weight: one power iteration with stored u.
    # TODO(synk): PyTorch's hook also writes the updated u back into the module
    # (training-time in-place buffer mutation) -- not representable here.
    co = w_oihw.shape[0]
    wmat = w_oihw.reshape(co, -1)
    v = wmat.T @ u
    v = v / jnp.linalg.norm(v)
    u2 = wmat @ v
    u2 = u2 / jnp.linalg.norm(u2)
    sigma = (u2.T @ wmat @ v)[0, 0]
    return (wmat / sigma).reshape(w_oihw.shape)


def _make_constants(n, h, w):
    """Compile-time constants: upsample selection matrix + conv border masks."""
    hm, wm = 2 * h, 2 * w
    p0, q = n * h * w, n * hm * wm
    qi = np.arange(q)
    n_i = qi // (hm * wm)
    r_i = qi % (hm * wm)
    h_i = r_i // wm
    w_i = r_i % wm
    # nearest-2x: fine pixel (n, h, w) reads coarse pixel (n, h//2, w//2)
    src = n_i * (h * w) + (h_i // 2) * w + (w_i // 2)
    gsel = np.zeros((p0, q), np.float32)
    gsel[src, qi] = 1.0
    # combined zero-padding border mask per tap (tap order = _TAPS)
    masks = np.ones((9, q), np.float32)
    for t, (dh, dw) in enumerate(_TAPS):
        m = np.ones((q,), np.float32)
        if dh == -1:
            m *= (h_i >= 1)
        elif dh == 1:
            m *= (h_i <= hm - 2)
        if dw == -1:
            m *= (w_i >= 1)
        elif dw == 1:
            m *= (w_i <= wm - 2)
        masks[t] = m
    return gsel, masks


def residual_g_forward(x_nchw, p):
    # up_sampling=True configuration (the only shape-consistent one; see header)
    x = x_nchw.astype(jnp.float32)
    n, cin, h, w = x.shape
    hm, wm = 2 * h, 2 * w
    cout = p["w1"].shape[0]
    p0, q = n * h * w, n * hm * wm
    cin_p = _round_up8(cin)
    assert cout % 8 == 0, "out_channels must be a multiple of 8"

    # spectral-normalized weights (one power iteration with the stored u)
    w1 = spectral_norm_weight(p["w1"], p["u1"])          # (Cout, Cin, 3, 3)
    w2 = spectral_norm_weight(p["w2"], p["u2"])          # (Cout, Cout, 3, 3)
    wsc = spectral_norm_weight(p["wsc"], p["usc"])       # (Cout, Cin, 1, 1)

    # [co, ci, kh, kw] -> [co, (kh*3+kw)*Cp + ci], ci zero-padded to 8-aligned
    def repack(wt, ci, cp):
        wt = jnp.transpose(wt, (0, 2, 3, 1))             # (co, 3, 3, ci)
        wt = jnp.pad(wt, ((0, 0), (0, 0), (0, 0), (0, cp - ci)))
        return wt.reshape(cout, 9 * cp)
    w1_mat = repack(w1, cin, cin_p)                      # (Cout, 9*cin_p)
    w2_mat = repack(w2, cout, cout)                      # (Cout, 9*Cout)
    wsc_mat = wsc[:, :, 0, 0]                            # (Cout, Cin)

    # pack the eight tiny per-channel vectors into two small inputs
    pin = jnp.stack([p["bn1_gamma"], p["bn1_beta"]], axis=1)          # (Cin, 2)
    pout = jnp.stack([p["bn2_gamma"], p["bn2_beta"],
                      p["b1"], p["b2"], p["bsc"]], axis=1)            # (Cout,5)

    # compile-time constants: bf16 upsample selection matrix + border masks
    gsel_np, masks_np = _make_constants(n, h, w)
    gsel = jnp.asarray(gsel_np, jnp.bfloat16)            # 0/1: exact in bf16
    masks = jnp.asarray(masks_np, jnp.float32)

    # channels-on-sublanes / flat-pixels-on-lanes layout (layout plumbing only)
    x_flat = jnp.transpose(x, (1, 0, 2, 3)).reshape(cin, p0)
    full = lambda shape: pl.BlockSpec(shape, lambda: (0, 0))

    kernel = functools.partial(_residual_g_kernel, wm=wm)
    out_flat = pl.pallas_call(
        kernel,
        out_shape=jax.ShapeDtypeStruct((cout, q), jnp.float32),
        in_specs=[
            full((cin, p0)),                             # x
            full((p0, q)),                               # gsel (bf16 constant)
            full((9, q)),                                # border masks
            full((cin, 2)),                              # BN1 gamma / beta
            full((cout, 5)),                             # BN2 g/b, b1, b2, bsc
            full((cout, 9 * cin_p)),                     # conv1 weight
            full((cout, 9 * cout)),                      # conv2 weight
            full((cout, cin)),                           # shortcut weight
        ],
        out_specs=full((cout, q)),
        scratch_shapes=[
            pltpu.VMEM((9 * max(cin_p, cout), q), jnp.float32),   # im2col patch
            pltpu.VMEM((cin_p + cout, p0), jnp.float32),          # upsample LHS
        ],
        compiler_params=pltpu.CompilerParams(
            vmem_limit_bytes=32 * 1024 * 1024),
    )(x_flat, gsel, masks,
      pin.astype(jnp.float32), pout.astype(jnp.float32),
      w1_mat, w2_mat, wsc_mat)

    out = out_flat.reshape(cout, n, hm, wm)
    return jnp.transpose(out, (1, 0, 2, 3))              # -> NCHW


# --------------------------------- main -------------------------------------- #

if __name__ == "__main__":
    key = jax.random.PRNGKey(0)
    ks = jax.random.split(key, 10)
    # Residual_G(in_channels=4, out_channels=8, up_sampling=True)
    N, Cin, H, W, Cout = 2, 4, 16, 16, 8

    x = jax.random.normal(ks[0], (N, Cin, H, W), jnp.float32)
    params = {
        "w1":  jax.random.normal(ks[1], (Cout, Cin, 3, 3), jnp.float32) * 0.1,
        "b1":  jax.random.normal(ks[2], (Cout,), jnp.float32) * 0.01,
        "u1":  jax.random.normal(ks[3], (Cout, 1), jnp.float32) * 0.1,
        "w2":  jax.random.normal(ks[4], (Cout, Cout, 3, 3), jnp.float32) * 0.1,
        "b2":  jax.random.normal(ks[5], (Cout,), jnp.float32) * 0.01,
        "u2":  jax.random.normal(ks[6], (Cout, 1), jnp.float32) * 0.1,
        "wsc": jax.random.normal(ks[7], (Cout, Cin, 1, 1), jnp.float32) * 0.1,
        "bsc": jax.random.normal(ks[8], (Cout,), jnp.float32) * 0.01,
        "usc": jax.random.normal(ks[9], (Cout, 1), jnp.float32) * 0.1,
        # BatchNorm2d default-initialized affine parameters
        # TODO(synk): BatchNorm running-stat updates (training-time in-place
        # buffer mutations) are not part of the functional forward output.
        "bn1_gamma": jnp.ones((Cin,), jnp.float32),
        "bn1_beta":  jnp.zeros((Cin,), jnp.float32),
        "bn2_gamma": jnp.ones((Cout,), jnp.float32),
        "bn2_beta":  jnp.zeros((Cout,), jnp.float32),
    }

    out = jax.jit(residual_g_forward)(x, params)
    jax.block_until_ready(out)
    assert out.shape == (N, Cout, 2 * H, 2 * W), out.shape
    assert bool(jnp.all(jnp.isfinite(out)))
    print("KERNEL_OK")
</pallas_src>

<mosaic_0001>
module attributes {stable_mosaic.version = 11 : i64} {
  func.func @_residual_g_kernel(%arg0: memref<4x512xf32, #tpu.memory_space<vmem>>, %arg1: memref<512x2048xbf16, #tpu.memory_space<vmem>>, %arg2: memref<9x2048xf32, #tpu.memory_space<vmem>>, %arg3: memref<4x2xf32, #tpu.memory_space<vmem>>, %arg4: memref<8x5xf32, #tpu.memory_space<vmem>>, %arg5: memref<8x72xf32, #tpu.memory_space<vmem>>, %arg6: memref<8x72xf32, #tpu.memory_space<vmem>>, %arg7: memref<8x4xf32, #tpu.memory_space<vmem>>, %arg8: memref<8x2048xf32, #tpu.memory_space<vmem>>, %arg9: memref<72x2048xf32, #tpu.memory_space<vmem>>, %arg10: memref<16x512xf32, #tpu.memory_space<vmem>>) attributes {dimension_semantics = [], scalar_prefetch = 0 : i64, scratch_operands = 2 : i64, tpu.core_type = #tpu.core_type<tc>} {
    %c0 = arith.constant 0 : index
    %c0_0 = arith.constant 0 : index
    %0 = vector.load %arg3[%c0, %c0_0] : memref<4x2xf32, #tpu.memory_space<vmem>>, vector<4x1xf32>
    %c0_1 = arith.constant 0 : index
    %c1 = arith.constant 1 : index
    %1 = vector.load %arg3[%c0_1, %c1] : memref<4x2xf32, #tpu.memory_space<vmem>>, vector<4x1xf32>
    %c0_2 = arith.constant 0 : index
    %c0_3 = arith.constant 0 : index
    %2 = vector.load %arg4[%c0_2, %c0_3] : memref<8x5xf32, #tpu.memory_space<vmem>>, vector<8x1xf32>
    %c0_4 = arith.constant 0 : index
    %c1_5 = arith.constant 1 : index
    %3 = vector.load %arg4[%c0_4, %c1_5] : memref<8x5xf32, #tpu.memory_space<vmem>>, vector<8x1xf32>
    %c0_6 = arith.constant 0 : index
    %c2 = arith.constant 2 : index
    %4 = vector.load %arg4[%c0_6, %c2] : memref<8x5xf32, #tpu.memory_space<vmem>>, vector<8x1xf32>
    %c0_7 = arith.constant 0 : index
    %c3 = arith.constant 3 : index
    %5 = vector.load %arg4[%c0_7, %c3] : memref<8x5xf32, #tpu.memory_space<vmem>>, vector<8x1xf32>
    %c0_8 = arith.constant 0 : index
    %c4 = arith.constant 4 : index
    %6 = vector.load %arg4[%c0_8, %c4] : memref<8x5xf32, #tpu.memory_space<vmem>>, vector<8x1xf32>
    %c0_9 = arith.constant 0 : index
    %c0_10 = arith.constant 0 : index
    %7 = vector.load %arg0[%c0_9, %c0_10] : memref<4x512xf32, #tpu.memory_space<vmem>>, vector<4x512xf32>
    %c0_11 = arith.constant 0 : index
    %c0_12 = arith.constant 0 : index
    %8 = vector.load %arg10[%c0_11, %c0_12] : memref<16x512xf32, #tpu.memory_space<vmem>>, vector<4x512xf32>
    tpu.vector_store %arg10[%c0_11, %c0_12], %7 {strides = array<i32>} : memref<16x512xf32, #tpu.memory_space<vmem>>, vector<4x512xf32>,
    %9 = arith.mulf %7, %7 : vector<4x512xf32>
    %c4_13 = arith.constant 4 : index
    %c0_14 = arith.constant 0 : index
    %10 = vector.load %arg10[%c4_13, %c0_14] : memref<16x512xf32, #tpu.memory_space<vmem>>, vector<4x512xf32>
    tpu.vector_store %arg10[%c4_13, %c0_14], %9 {strides = array<i32>} : memref<16x512xf32, #tpu.memory_space<vmem>>, vector<4x512xf32>,
    %c0_15 = arith.constant 0 : index
    %c0_16 = arith.constant 0 : index
    %11 = vector.load %arg10[%c0_15, %c0_16] : memref<16x512xf32, #tpu.memory_space<vmem>>, vector<8x512xf32>
    %cst = arith.constant dense<0.000000e+00> : vector<8xf32>
    %12 = vector.multi_reduction <add>, %11, %cst [1] : vector<8x512xf32> to vector<8xf32>
    %13 = vector.shape_cast %12 : vector<8xf32> to vector<8x1xf32>
    %cst_17 = arith.constant 0.001953125 : f32
    %14 = vector.broadcast %cst_17 : f32 to vector<8x1xf32>
    %15 = arith.mulf %13, %14 : vector<8x1xf32>
    %16 = vector.extract_strided_slice %15 {offsets = [0, 0], sizes = [4, 1], strides = [1, 1]} : vector<8x1xf32> to vector<4x1xf32>
    %17 = vector.extract_strided_slice %15 {offsets = [4, 0], sizes = [4, 1], strides = [1, 1]} : vector<8x1xf32> to vector<4x1xf32>
    %18 = vector.broadcast %16 : vector<4x1xf32> to vector<4x512xf32>
    %19 = arith.subf %7, %18 : vector<4x512xf32>
    %20 = arith.mulf %16, %16 : vector<4x1xf32>
    %21 = arith.subf %17, %20 : vector<4x1xf32>
    %cst_18 = arith.constant 9.99999974E-6 : f32
    %22 = vector.broadcast %cst_18 : f32 to vector<4x1xf32>
    %23 = arith.addf %21, %22 : vector<4x1xf32>
    %24 = math.rsqrt %23 : vector<4x1xf32>
    %25 = vector.broadcast %24 : vector<4x1xf32> to vector<4x512xf32>
    %26 = arith.mulf %19, %25 : vector<4x512xf32>
    %27 = vector.broadcast %0 : vector<4x1xf32> to vector<4x512xf32>
    %28 = arith.mulf %26, %27 : vector<4x512xf32>
    %29 = vector.broadcast %1 : vector<4x1xf32> to vector<4x512xf32>
    %30 = arith.addf %28, %29 : vector<4x512xf32>
    %cst_19 = arith.constant 0.000000e+00 : f32
    %31 = vector.broadcast %cst_19 : f32 to vector<4x512xf32>
    %32 = arith.maximumf %30, %31 : vector<4x512xf32>
    %c0_20 = arith.constant 0 : index
    %c0_21 = arith.constant 0 : index
    %33 = vector.load %arg7[%c0_20, %c0_21] : memref<8x4xf32, #tpu.memory_space<vmem>>, vector<8x4xf32>
    %cst_22 = arith.constant dense<0.000000e+00> : vector<8x512xf32>
    %34 = tpu.matmul %33, %7, %cst_22 {dimension_numbers = #tpu.dot_dimension_numbers<[1], [0], [0], [1], [0, 0, 1, 1], [], []>} : vector<8x4xf32>, vector<4x512xf32>, vector<8x512xf32> -> vector<8x512xf32>
    %35 = vector.broadcast %6 : vector<8x1xf32> to vector<8x512xf32>
    %36 = arith.addf %34, %35 : vector<8x512xf32>
    %c0_23 = arith.constant 0 : index
    %c0_24 = arith.constant 0 : index
    %37 = vector.load %arg10[%c0_23, %c0_24] : memref<16x512xf32, #tpu.memory_space<vmem>>, vector<4x512xf32>
    tpu.vector_store %arg10[%c0_23, %c0_24], %32 {strides = array<i32>} : memref<16x512xf32, #tpu.memory_space<vmem>>, vector<4x512xf32>,
    %cst_25 = arith.constant 0.000000e+00 : f32
    %38 = vector.broadcast %cst_25 : f32 to vector<4x512xf32>
    %c4_26 = arith.constant 4 : index
    %c0_27 = arith.constant 0 : index
    %39 = vector.load %arg10[%c4_26, %c0_27] : memref<16x512xf32, #tpu.memory_space<vmem>>, vector<4x512xf32>
    tpu.vector_store %arg10[%c4_26, %c0_27], %38 {strides = array<i32>} : memref<16x512xf32, #tpu.memory_space<vmem>>, vector<4x512xf32>,
    %c8 = arith.constant 8 : index
    %c0_28 = arith.constant 0 : index
    %40 = vector.load %arg10[%c8, %c0_28] : memref<16x512xf32, #tpu.memory_space<vmem>>, vector<8x512xf32>
    tpu.vector_store %arg10[%c8, %c0_28], %36 {strides = array<i32>} : memref<16x512xf32, #tpu.memory_space<vmem>>, vector<8x512xf32>,
    %c0_29 = arith.constant 0 : index
    %c0_30 = arith.constant 0 : index
    %41 = vector.load %arg10[%c0_29, %c0_30] : memref<16x512xf32, #tpu.memory_space<vmem>>, vector<16x512xf32>
    %42 = arith.truncf %41 : vector<16x512xf32> to vector<16x512xbf16>
    %c0_31 = arith.constant 0 : index
    %c0_32 = arith.constant 0 : index
    %43 = vector.load %arg1[%c0_31, %c0_32] : memref<512x2048xbf16, #tpu.memory_space<vmem>>, vector<512x2048xbf16>
    %cst_33 = arith.constant dense<0.000000e+00> : vector<16x2048xf32>
    %44 = tpu.matmul %42, %43, %cst_33 {dimension_numbers = #tpu.dot_dimension_numbers<[1], [0], [0], [1], [0, 0, 1, 1], [], []>} : vector<16x512xbf16>, vector<512x2048xbf16>, vector<16x2048xf32> -> vector<16x2048xf32>
    %45 = vector.extract_strided_slice %44 {offsets = [0, 0], sizes = [8, 2048], strides = [1, 1]} : vector<16x2048xf32> to vector<8x2048xf32>
    %46 = vector.extract_strided_slice %44 {offsets = [8, 0], sizes = [8, 2048], strides = [1, 1]} : vector<16x2048xf32> to vector<8x2048xf32>
    %c0_34 = arith.constant 0 : index
    %c0_35 = arith.constant 0 : index
    %47 = vector.load %arg5[%c0_34, %c0_35] : memref<8x72xf32, #tpu.memory_space<vmem>>, vector<8x72xf32>
    %c33_i32 = arith.constant 33 : i32
    %48 = tpu.dynamic_rotate %45 by %c33_i32 dim 1 : vector<8x2048xf32>, i32 -> vector<8x2048xf32>
    %c0_36 = arith.constant 0 : index
    %c0_37 = arith.constant 0 : index
    %49 = vector.load %arg2[%c0_36, %c0_37] : memref<9x2048xf32, #tpu.memory_space<vmem>>, vector<1x2048xf32>
    %50 = vector.broadcast %49 : vector<1x2048xf32> to vector<8x2048xf32>
    %51 = arith.mulf %48, %50 : vector<8x2048xf32>
    %c0_38 = arith.constant 0 : index
    %c0_39 = arith.constant 0 : index
    %52 = vector.load %arg9[%c0_38, %c0_39] : memref<72x2048xf32, #tpu.memory_space<vmem>>, vector<8x2048xf32>
    tpu.vector_store %arg9[%c0_38, %c0_39], %51 {strides = array<i32>} : memref<72x2048xf32, #tpu.memory_space<vmem>>, vector<8x2048xf32>,
    %c32_i32 = arith.constant 32 : i32
    %53 = tpu.dynamic_rotate %45 by %c32_i32 dim 1 : vector<8x2048xf32>, i32 -> vector<8x2048xf32>
    %c1_40 = arith.constant 1 : index
    %c0_41 = arith.constant 0 : index
    %54 = vector.load %arg2[%c1_40, %c0_41] : memref<9x2048xf32, #tpu.memory_space<vmem>>, vector<1x2048xf32>
    %55 = vector.broadcast %54 : vector<1x2048xf32> to vector<8x2048xf32>
    %56 = arith.mulf %53, %55 : vector<8x2048xf32>
    %c8_42 = arith.constant 8 : index
    %c0_43 = arith.constant 0 : index
    %57 = vector.load %arg9[%c8_42, %c0_43] : memref<72x2048xf32, #tpu.memory_space<vmem>>, vector<8x2048xf32>
    tpu.vector_store %arg9[%c8_42, %c0_43], %56 {strides = array<i32>} : memref<72x2048xf32, #tpu.memory_space<vmem>>, vector<8x2048xf32>,
    %c31_i32 = arith.constant 31 : i32
    %58 = tpu.dynamic_rotate %45 by %c31_i32 dim 1 : vector<8x2048xf32>, i32 -> vector<8x2048xf32>
    %c2_44 = arith.constant 2 : index
    %c0_45 = arith.constant 0 : index
    %59 = vector.load %arg2[%c2_44, %c0_45] : memref<9x2048xf32, #tpu.memory_space<vmem>>, vector<1x2048xf32>
    %60 = vector.broadcast %59 : vector<1x2048xf32> to vector<8x2048xf32>
    %61 = arith.mulf %58, %60 : vector<8x2048xf32>
    %c16 = arith.constant 16 : index
    %c0_46 = arith.constant 0 : index
    %62 = vector.load %arg9[%c16, %c0_46] : memref<72x2048xf32, #tpu.memory_space<vmem>>, vector<8x2048xf32>
    tpu.vector_store %arg9[%c16, %c0_46], %61 {strides = array<i32>} : memref<72x2048xf32, #tpu.memory_space<vmem>>, vector<8x2048xf32>,
    %c1_i32 = arith.constant 1 : i32
    %63 = tpu.dynamic_rotate %45 by %c1_i32 dim 1 : vector<8x2048xf32>, i32 -> vector<8x2048xf32>
    %c3_47 = arith.constant 3 : index
    %c0_48 = arith.constant 0 : index
    %64 = vector.load %arg2[%c3_47, %c0_48] : memref<9x2048xf32, #tpu.memory_space<vmem>>, vector<1x2048xf32>
    %65 = vector.broadcast %64 : vector<1x2048xf32> to vector<8x2048xf32>
    %66 = arith.mulf %63, %65 : vector<8x2048xf32>
    %c24 = arith.constant 24 : index
    %c0_49 = arith.constant 0 : index
    %67 = vector.load %arg9[%c24, %c0_49] : memref<72x2048xf32, #tpu.memory_space<vmem>>, vector<8x2048xf32>
    tpu.vector_store %arg9[%c24, %c0_49], %66 {strides = array<i32>} : memref<72x2048xf32, #tpu.memory_space<vmem>>, vector<8x2048xf32>,
    %c32 = arith.constant 32 : index
    %c0_50 = arith.constant 0 : index
    %68 = vector.load %arg9[%c32, %c0_50] : memref<72x2048xf32, #tpu.memory_space<vmem>>, vector<8x2048xf32>
    tpu.vector_store %arg9[%c32, %c0_50], %45 {strides = array<i32>} : memref<72x2048xf32, #tpu.memory_space<vmem>>, vector<8x2048xf32>,
    %c2047_i32 = arith.constant 2047 : i32
    %69 = tpu.dynamic_rotate %45 by %c2047_i32 dim 1 : vector<8x2048xf32>, i32 -> vector<8x2048xf32>
    %c5 = arith.constant 5 : index
    %c0_51 = arith.constant 0 : index
    %70 = vector.load %arg2[%c5, %c0_51] : memref<9x2048xf32, #tpu.memory_space<vmem>>, vector<1x2048xf32>
    %71 = vector.broadcast %70 : vector<1x2048xf32> to vector<8x2048xf32>
    %72 = arith.mulf %69, %71 : vector<8x2048xf32>
    %c40 = arith.constant 40 : index
    %c0_52 = arith.constant 0 : index
    %73 = vector.load %arg9[%c40, %c0_52] : memref<72x2048xf32, #tpu.memory_space<vmem>>, vector<8x2048xf32>
    tpu.vector_store %arg9[%c40, %c0_52], %72 {strides = array<i32>} : memref<72x2048xf32, #tpu.memory_space<vmem>>, vector<8x2048xf32>,
    %c2017_i32 = arith.constant 2017 : i32
    %74 = tpu.dynamic_rotate %45 by %c2017_i32 dim 1 : vector<8x2048xf32>, i32 -> vector<8x2048xf32>
    %c6 = arith.constant 6 : index
    %c0_53 = arith.constant 0 : index
    %75 = vector.load %arg2[%c6, %c0_53] : memref<9x2048xf32, #tpu.memory_space<vmem>>, vector<1x2048xf32>
    %76 = vector.broadcast %75 : vector<1x2048xf32> to vector<8x2048xf32>
    %77 = arith.mulf %74, %76 : vector<8x2048xf32>
    %c48 = arith.constant 48 : index
    %c0_54 = arith.constant 0 : index
    %78 = vector.load %arg9[%c48, %c0_54] : memref<72x2048xf32, #tpu.memory_space<vmem>>, vector<8x2048xf32>
    tpu.vector_store %arg9[%c48, %c0_54], %77 {strides = array<i32>} : memref<72x2048xf32, #tpu.memory_space<vmem>>, vector<8x2048xf32>,
    %c2016_i32 = arith.constant 2016 : i32
    %79 = tpu.dynamic_rotate %45 by %c2016_i32 dim 1 : vector<8x2048xf32>, i32 -> vector<8x2048xf32>
    %c7 = arith.constant 7 : index
    %c0_55 = arith.constant 0 : index
    %80 = vector.load %arg2[%c7, %c0_55] : memref<9x2048xf32, #tpu.memory_space<vmem>>, vector<1x2048xf32>
    %81 = vector.broadcast %80 : vector<1x2048xf32> to vector<8x2048xf32>
    %82 = arith.mulf %79, %81 : vector<8x2048xf32>
    %c56 = arith.constant 56 : index
    %c0_56 = arith.constant 0 : index
    %83 = vector.load %arg9[%c56, %c0_56] : memref<72x2048xf32, #tpu.memory_space<vmem>>, vector<8x2048xf32>
    tpu.vector_store %arg9[%c56, %c0_56], %82 {strides = array<i32>} : memref<72x2048xf32, #tpu.memory_space<vmem>>, vector<8x2048xf32>,
    %c2015_i32 = arith.constant 2015 : i32
    %84 = tpu.dynamic_rotate %45 by %c2015_i32 dim 1 : vector<8x2048xf32>, i32 -> vector<8x2048xf32>
    %c8_57 = arith.constant 8 : index
    %c0_58 = arith.constant 0 : index
    %85 = vector.load %arg2[%c8_57, %c0_58] : memref<9x2048xf32, #tpu.memory_space<vmem>>, vector<1x2048xf32>
    %86 = vector.broadcast %85 : vector<1x2048xf32> to vector<8x2048xf32>
    %87 = arith.mulf %84, %86 : vector<8x2048xf32>
    %c64 = arith.constant 64 : index
    %c0_59 = arith.constant 0 : index
    %88 = vector.load %arg9[%c64, %c0_59] : memref<72x2048xf32, #tpu.memory_space<vmem>>, vector<8x2048xf32>
    tpu.vector_store %arg9[%c64, %c0_59], %87 {strides = array<i32>} : memref<72x2048xf32, #tpu.memory_space<vmem>>, vector<8x2048xf32>,
    %c0_60 = arith.constant 0 : index
    %c0_61 = arith.constant 0 : index
    %89 = vector.load %arg9[%c0_60, %c0_61] : memref<72x2048xf32, #tpu.memory_space<vmem>>, vector<72x2048xf32>
    %cst_62 = arith.constant dense<0.000000e+00> : vector<8x2048xf32>
    %90 = tpu.matmul %47, %89, %cst_62 {dimension_numbers = #tpu.dot_dimension_numbers<[1], [0], [0], [1], [0, 0, 1, 1], [], []>} : vector<8x72xf32>, vector<72x2048xf32>, vector<8x2048xf32> -> vector<8x2048xf32>
    %91 = vector.broadcast %4 : vector<8x1xf32> to vector<8x2048xf32>
    %92 = arith.addf %90, %91 : vector<8x2048xf32>
    %cst_63 = arith.constant dense<0.000000e+00> : vector<8xf32>
    %93 = vector.multi_reduction <add>, %92, %cst_63 [1] : vector<8x2048xf32> to vector<8xf32>
    %94 = vector.shape_cast %93 : vector<8xf32> to vector<8x1xf32>
    %cst_64 = arith.constant 4.8828125E-4 : f32
    %95 = vector.broadcast %cst_64 : f32 to vector<8x1xf32>
    %96 = arith.mulf %94, %95 : vector<8x1xf32>
    %97 = arith.mulf %92, %92 : vector<8x2048xf32>
    %cst_65 = arith.constant dense<0.000000e+00> : vector<8xf32>
    %98 = vector.multi_reduction <add>, %97, %cst_65 [1] : vector<8x2048xf32> to vector<8xf32>
    %99 = vector.shape_cast %98 : vector<8xf32> to vector<8x1xf32>
    %cst_66 = arith.constant 4.8828125E-4 : f32
    %100 = vector.broadcast %cst_66 : f32 to vector<8x1xf32>
    %101 = arith.mulf %99, %100 : vector<8x1xf32>
    %102 = vector.broadcast %96 : vector<8x1xf32> to vector<8x2048xf32>
    %103 = arith.subf %92, %102 : vector<8x2048xf32>
    %104 = arith.mulf %96, %96 : vector<8x1xf32>
    %105 = arith.subf %101, %104 : vector<8x1xf32>
    %cst_67 = arith.constant 9.99999974E-6 : f32
    %106 = vector.broadcast %cst_67 : f32 to vector<8x1xf32>
    %107 = arith.addf %105, %106 : vector<8x1xf32>
    %108 = math.rsqrt %107 : vector<8x1xf32>
    %109 = vector.broadcast %108 : vector<8x1xf32> to vector<8x2048xf32>
    %110 = arith.mulf %103, %109 : vector<8x2048xf32>
    %111 = vector.broadcast %2 : vector<8x1xf32> to vector<8x2048xf32>
    %112 = arith.mulf %110, %111 : vector<8x2048xf32>
    %113 = vector.broadcast %3 : vector<8x1xf32> to vector<8x2048xf32>
    %114 = arith.addf %112, %113 : vector<8x2048xf32>
    %cst_68 = arith.constant 0.000000e+00 : f32
    %115 = vector.broadcast %cst_68 : f32 to vector<8x2048xf32>
    %116 = arith.maximumf %114, %115 : vector<8x2048xf32>
    %c0_69 = arith.constant 0 : index
    %c0_70 = arith.constant 0 : index
    %117 = vector.load %arg6[%c0_69, %c0_70] : memref<8x72xf32, #tpu.memory_space<vmem>>, vector<8x72xf32>
    %c33_i32_71 = arith.constant 33 : i32
    %118 = tpu.dynamic_rotate %116 by %c33_i32_71 dim 1 : vector<8x2048xf32>, i32 -> vector<8x2048xf32>
    %c0_72 = arith.constant 0 : index
    %c0_73 = arith.constant 0 : index
    %119 = vector.load %arg2[%c0_72, %c0_73] : memref<9x2048xf32, #tpu.memory_space<vmem>>, vector<1x2048xf32>
    %120 = vector.broadcast %119 : vector<1x2048xf32> to vector<8x2048xf32>
    %121 = arith.mulf %118, %120 : vector<8x2048xf32>
    %c0_74 = arith.constant 0 : index
    %c0_75 = arith.constant 0 : index
    %122 = vector.load %arg9[%c0_74, %c0_75] : memref<72x2048xf32, #tpu.memory_space<vmem>>, vector<8x2048xf32>
    tpu.vector_store %arg9[%c0_74, %c0_75], %121 {strides = array<i32>} : memref<72x2048xf32, #tpu.memory_space<vmem>>, vector<8x2048xf32>,
    %c32_i32_76 = arith.constant 32 : i32
    %123 = tpu.dynamic_rotate %116 by %c32_i32_76 dim 1 : vector<8x2048xf32>, i32 -> vector<8x2048xf32>
    %c1_77 = arith.constant 1 : index
    %c0_78 = arith.constant 0 : index
    %124 = vector.load %arg2[%c1_77, %c0_78] : memref<9x2048xf32, #tpu.memory_space<vmem>>, vector<1x2048xf32>
    %125 = vector.broadcast %124 : vector<1x2048xf32> to vector<8x2048xf32>
    %126 = arith.mulf %123, %125 : vector<8x2048xf32>
    %c8_79 = arith.constant 8 : index
    %c0_80 = arith.constant 0 : index
    %127 = vector.load %arg9[%c8_79, %c0_80] : memref<72x2048xf32, #tpu.memory_space<vmem>>, vector<8x2048xf32>
    tpu.vector_store %arg9[%c8_79, %c0_80], %126 {strides = array<i32>} : memref<72x2048xf32, #tpu.memory_space<vmem>>, vector<8x2048xf32>,
    %c31_i32_81 = arith.constant 31 : i32
    %128 = tpu.dynamic_rotate %116 by %c31_i32_81 dim 1 : vector<8x2048xf32>, i32 -> vector<8x2048xf32>
    %c2_82 = arith.constant 2 : index
    %c0_83 = arith.constant 0 : index
    %129 = vector.load %arg2[%c2_82, %c0_83] : memref<9x2048xf32, #tpu.memory_space<vmem>>, vector<1x2048xf32>
    %130 = vector.broadcast %129 : vector<1x2048xf32> to vector<8x2048xf32>
    %131 = arith.mulf %128, %130 : vector<8x2048xf32>
    %c16_84 = arith.constant 16 : index
    %c0_85 = arith.constant 0 : index
    %132 = vector.load %arg9[%c16_84, %c0_85] : memref<72x2048xf32, #tpu.memory_space<vmem>>, vector<8x2048xf32>
    tpu.vector_store %arg9[%c16_84, %c0_85], %131 {strides = array<i32>} : memref<72x2048xf32, #tpu.memory_space<vmem>>, vector<8x2048xf32>,
    %c1_i32_86 = arith.constant 1 : i32
    %133 = tpu.dynamic_rotate %116 by %c1_i32_86 dim 1 : vector<8x2048xf32>, i32 -> vector<8x2048xf32>
    %c3_87 = arith.constant 3 : index
    %c0_88 = arith.constant 0 : index
    %134 = vector.load %arg2[%c3_87, %c0_88] : memref<9x2048xf32, #tpu.memory_space<vmem>>, vector<1x2048xf32>
    %135 = vector.broadcast %134 : vector<1x2048xf32> to vector<8x2048xf32>
    %136 = arith.mulf %133, %135 : vector<8x2048xf32>
    %c24_89 = arith.constant 24 : index
    %c0_90 = arith.constant 0 : index
    %137 = vector.load %arg9[%c24_89, %c0_90] : memref<72x2048xf32, #tpu.memory_space<vmem>>, vector<8x2048xf32>
    tpu.vector_store %arg9[%c24_89, %c0_90], %136 {strides = array<i32>} : memref<72x2048xf32, #tpu.memory_space<vmem>>, vector<8x2048xf32>,
    %c32_91 = arith.constant 32 : index
    %c0_92 = arith.constant 0 : index
    %138 = vector.load %arg9[%c32_91, %c0_92] : memref<72x2048xf32, #tpu.memory_space<vmem>>, vector<8x2048xf32>
    tpu.vector_store %arg9[%c32_91, %c0_92], %116 {strides = array<i32>} : memref<72x2048xf32, #tpu.memory_space<vmem>>, vector<8x2048xf32>,
    %c2047_i32_93 = arith.constant 2047 : i32
    %139 = tpu.dynamic_rotate %116 by %c2047_i32_93 dim 1 : vector<8x2048xf32>, i32 -> vector<8x2048xf32>
    %c5_94 = arith.constant 5 : index
    %c0_95 = arith.constant 0 : index
    %140 = vector.load %arg2[%c5_94, %c0_95] : memref<9x2048xf32, #tpu.memory_space<vmem>>, vector<1x2048xf32>
    %141 = vector.broadcast %140 : vector<1x2048xf32> to vector<8x2048xf32>
    %142 = arith.mulf %139, %141 : vector<8x2048xf32>
    %c40_96 = arith.constant 40 : index
    %c0_97 = arith.constant 0 : index
    %143 = vector.load %arg9[%c40_96, %c0_97] : memref<72x2048xf32, #tpu.memory_space<vmem>>, vector<8x2048xf32>
    tpu.vector_store %arg9[%c40_96, %c0_97], %142 {strides = array<i32>} : memref<72x2048xf32, #tpu.memory_space<vmem>>, vector<8x2048xf32>,
    %c2017_i32_98 = arith.constant 2017 : i32
    %144 = tpu.dynamic_rotate %116 by %c2017_i32_98 dim 1 : vector<8x2048xf32>, i32 -> vector<8x2048xf32>
    %c6_99 = arith.constant 6 : index
    %c0_100 = arith.constant 0 : index
    %145 = vector.load %arg2[%c6_99, %c0_100] : memref<9x2048xf32, #tpu.memory_space<vmem>>, vector<1x2048xf32>
    %146 = vector.broadcast %145 : vector<1x2048xf32> to vector<8x2048xf32>
    %147 = arith.mulf %144, %146 : vector<8x2048xf32>
    %c48_101 = arith.constant 48 : index
    %c0_102 = arith.constant 0 : index
    %148 = vector.load %arg9[%c48_101, %c0_102] : memref<72x2048xf32, #tpu.memory_space<vmem>>, vector<8x2048xf32>
    tpu.vector_store %arg9[%c48_101, %c0_102], %147 {strides = array<i32>} : memref<72x2048xf32, #tpu.memory_space<vmem>>, vector<8x2048xf32>,
    %c2016_i32_103 = arith.constant 2016 : i32
    %149 = tpu.dynamic_rotate %116 by %c2016_i32_103 dim 1 : vector<8x2048xf32>, i32 -> vector<8x2048xf32>
    %c7_104 = arith.constant 7 : index
    %c0_105 = arith.constant 0 : index
    %150 = vector.load %arg2[%c7_104, %c0_105] : memref<9x2048xf32, #tpu.memory_space<vmem>>, vector<1x2048xf32>
    %151 = vector.broadcast %150 : vector<1x2048xf32> to vector<8x2048xf32>
    %152 = arith.mulf %149, %151 : vector<8x2048xf32>
    %c56_106 = arith.constant 56 : index
    %c0_107 = arith.constant 0 : index
    %153 = vector.load %arg9[%c56_106, %c0_107] : memref<72x2048xf32, #tpu.memory_space<vmem>>, vector<8x2048xf32>
    tpu.vector_store %arg9[%c56_106, %c0_107], %152 {strides = array<i32>} : memref<72x2048xf32, #tpu.memory_space<vmem>>, vector<8x2048xf32>,
    %c2015_i32_108 = arith.constant 2015 : i32
    %154 = tpu.dynamic_rotate %116 by %c2015_i32_108 dim 1 : vector<8x2048xf32>, i32 -> vector<8x2048xf32>
    %c8_109 = arith.constant 8 : index
    %c0_110 = arith.constant 0 : index
    %155 = vector.load %arg2[%c8_109, %c0_110] : memref<9x2048xf32, #tpu.memory_space<vmem>>, vector<1x2048xf32>
    %156 = vector.broadcast %155 : vector<1x2048xf32> to vector<8x2048xf32>
    %157 = arith.mulf %154, %156 : vector<8x2048xf32>
    %c64_111 = arith.constant 64 : index
    %c0_112 = arith.constant 0 : index
    %158 = vector.load %arg9[%c64_111, %c0_112] : memref<72x2048xf32, #tpu.memory_space<vmem>>, vector<8x2048xf32>
    tpu.vector_store %arg9[%c64_111, %c0_112], %157 {strides = array<i32>} : memref<72x2048xf32, #tpu.memory_space<vmem>>, vector<8x2048xf32>,
    %c0_113 = arith.constant 0 : index
    %c0_114 = arith.constant 0 : index
    %159 = vector.load %arg9[%c0_113, %c0_114] : memref<72x2048xf32, #tpu.memory_space<vmem>>, vector<72x2048xf32>
    %cst_115 = arith.constant dense<0.000000e+00> : vector<8x2048xf32>
    %160 = tpu.matmul %117, %159, %cst_115 {dimension_numbers = #tpu.dot_dimension_numbers<[1], [0], [0], [1], [0, 0, 1, 1], [], []>} : vector<8x72xf32>, vector<72x2048xf32>, vector<8x2048xf32> -> vector<8x2048xf32>
    %161 = vector.broadcast %5 : vector<8x1xf32> to vector<8x2048xf32>
    %162 = arith.addf %160, %161 : vector<8x2048xf32>
    %163 = arith.addf %162, %46 : vector<8x2048xf32>
    %c0_116 = arith.constant 0 : index
    %c0_117 = arith.constant 0 : index
    %164 = vector.load %arg8[%c0_116, %c0_117] : memref<8x2048xf32, #tpu.memory_space<vmem>>, vector<8x2048xf32>
    tpu.vector_store %arg8[%c0_116, %c0_117], %163 {strides = array<i32>} : memref<8x2048xf32, #tpu.memory_space<vmem>>, vector<8x2048xf32>,
    return
  }
}

</mosaic_0001>

<llo_original>
// kernel: residual_g_forward.1
$region0: #{residual_g_forward.1}
  #allocation0 [shape = 'u32[]', space=smem, size = 0x4, offset = 0x4, fixed_abs, tag = 'smem constant byte address 0x4 - core index']
  #allocation1 [shape = 'u32[144,128]{1,0:T(1,128)}', space=vmem, size = 0x12000, scoped, tag = 'internal scratch']
  #allocation2 [shape = 'f32[72,2048]{1,0:T(8,128)}', space=vmem, size = 0x90000, scoped, tag = 'scratch operand']
  #allocation3 [shape = 'f32[16,512]{1,0:T(8,128)}', space=vmem, size = 0x8000, scoped, tag = 'scratch operand']
  %s0 = inlined_call_operand.vmem [shape: f32[4,512], index: 0, kind: input, shape index: {}]
  %s1 = inlined_call_operand.vmem [shape: bf16[512,2048], index: 1, kind: input, shape index: {}]
  %s2 = inlined_call_operand.vmem [shape: f32[9,2048], index: 2, kind: input, shape index: {}]
  %s3 = inlined_call_operand.vmem [shape: f32[4,2], index: 3, kind: input, shape index: {}]
  %s4 = inlined_call_operand.vmem [shape: f32[8,5], index: 4, kind: input, shape index: {}]
  %s5 = inlined_call_operand.vmem [shape: f32[8,72], index: 5, kind: input, shape index: {}]
  %s6 = inlined_call_operand.vmem [shape: f32[8,72], index: 6, kind: input, shape index: {}]
  %s7 = inlined_call_operand.vmem [shape: f32[8,4], index: 7, kind: input, shape index: {}]
  %s8 = inlined_call_operand.vmem [shape: f32[8,2048], index: 8, kind: output, shape index: {}]
  %s9 = sld [smem:[#allocation0]]
  $region42: #{residual_g_forward.1} parent=0
    _
  %s11 = ssub.s32 1, %s9
  %s12 = scalar_select 0, %s11, %s9
  // Predicated region
  $region2: #{residual_g_forward.1} parent=0 // pred_check
    _
  $region3: #{residual_g_forward.1} parent=0 // pred_check_branch
    %14 = sbr.rel (0) target = $region5
  $region4: #{residual_g_forward.1} parent=0 // pred_region
    _
  $region5: #{residual_g_forward.1} parent=0 // pred_fallthru
    _
  // Predicated region
  $region6: #{residual_g_forward.1} parent=0 // pred_check
    _
  $region7: #{residual_g_forward.1} parent=0 // pred_check_branch
    %16 = sbr.rel (0) target = $region9
  $region8: #{residual_g_forward.1} parent=0 // pred_region
    _
  $region9: #{residual_g_forward.1} parent=0 // pred_fallthru
    _
  // Predicated region
  $region10: #{residual_g_forward.1} parent=0 // pred_check
    _
  $region11: #{residual_g_forward.1} parent=0 // pred_check_branch
    %18 = sbr.rel (0) target = $region13
  $region12: #{residual_g_forward.1} parent=0 // pred_region
    _
  $region13: #{residual_g_forward.1} parent=0 // pred_fallthru
    _
  // Predicated region
  $region14: #{residual_g_forward.1} parent=0 // pred_check
    _
  $region15: #{residual_g_forward.1} parent=0 // pred_check_branch
    %20 = sbr.rel (0) target = $region17
  $region16: #{residual_g_forward.1} parent=0 // pred_region
    _
  $region17: #{residual_g_forward.1} parent=0 // pred_fallthru
    _
  // Predicated region
  $region18: #{residual_g_forward.1} parent=0 // pred_check
    _
  $region19: #{residual_g_forward.1} parent=0 // pred_check_branch
    %22 = sbr.rel (0) target = $region21
  $region20: #{residual_g_forward.1} parent=0 // pred_region
    _
  $region21: #{residual_g_forward.1} parent=0 // pred_fallthru
    _
  // Predicated region
  $region22: #{residual_g_forward.1} parent=0 // pred_check
    _
  $region23: #{residual_g_forward.1} parent=0 // pred_check_branch
    %24 = sbr.rel (0) target = $region25
  $region24: #{residual_g_forward.1} parent=0 // pred_region
    _
  $region25: #{residual_g_forward.1} parent=0 // pred_fallthru
    _
  // Predicated region
  $region26: #{residual_g_forward.1} parent=0 // pred_check
    _
  $region27: #{residual_g_forward.1} parent=0 // pred_check_branch
    %26 = sbr.rel (0) target = $region29
  $region28: #{residual_g_forward.1} parent=0 // pred_region
    _
  $region29: #{residual_g_forward.1} parent=0 // pred_fallthru
    _
  // Predicated region
  $region30: #{residual_g_forward.1} parent=0 // pred_check
    _
  $region31: #{residual_g_forward.1} parent=0 // pred_check_branch
    %28 = sbr.rel (0) target = $region33
  $region32: #{residual_g_forward.1} parent=0 // pred_region
    _
  $region33: #{residual_g_forward.1} parent=0 // pred_fallthru
    _
  %v29 = vld [vmem:[%s3] sm:$0xf]
  %v30 = vld [vmem:[%s4] sm:$0xff]
  %v31 = vld [vmem:[%s0] sm:$0xff]
  %v32 = vld [vmem:[%s0 + $0x8] sm:$0xff]
  %v35 = vcombine.high %v31, %v31
  %v36 = vcombine.high %v32, %v32
  %39 = vst [vmem:[#allocation3] sm:$0xf] %v31
  %40 = vst [vmem:[#allocation3 + $0x8] sm:$0xf] %v35
  %41 = vst [vmem:[#allocation3 + $0x10] sm:$0xf] %v32
  %42 = vst [vmem:[#allocation3 + $0x18] sm:$0xf] %v36
  %v43 = vmul.f32 %v31, %v31
  %v44 = vmul.f32 %v32, %v32
  %v47 = vcombine.low %v43, %v43
  %v48 = vcombine.low %v44, %v44
  %51 = vst [vmem:[#allocation3] sm:$0xf0] %v47
  %52 = vst [vmem:[#allocation3 + $0x8] sm:$0xf0] %v43
  %53 = vst [vmem:[#allocation3 + $0x10] sm:$0xf0] %v48
  %54 = vst [vmem:[#allocation3 + $0x18] sm:$0xf0] %v44
  %v55 = vld [vmem:[#allocation3] sm:$0xff]
  %v56 = vld [vmem:[#allocation3 + $0x8] sm:$0xff]
  %v57 = vld [vmem:[#allocation3 + $0x10] sm:$0xff]
  %v58 = vld [vmem:[#allocation3 + $0x18] sm:$0xff]
  %v59 = vadd.f32 %v55, %v56
  %v60 = vadd.f32 %v59, %v57
  %v61 = vadd.f32 %v60, %v58
  %62 = vadd.xlane.f32.xlu0 %v61
  %v63 = vpop.xlane.xlu0 %62
  %v64 = vmul.f32 %v63, 0.001953125
  %v67 = vunpack.c.l.s4 839922192
  %v68 = vunpack.c.0.s8 %v67
  %v69 = vlaneseq
  %v70 = vshrl.u32 %v69, 7
  %v71 = vsub.s32 %v68, %v70
  %v72 = vrot.slane %v64, %v71
  %v74 = vsub.f32 %v31, %v72
  %v75 = vsub.f32 %v32, %v72
  %v76 = vmul.f32 %v64, %v64
  %v78 = vrot.slane %v76, 4
  %v80 = vsub.f32 %v64, %v78
  %v81 = vadd.f32 %v80, 1e-05
  %v82 = vrsqrt.pop %v81
  %84 = vset.pattern.permute.xlu0 0
  %85 = vperm.xlu0 %84, %v82
  %v86 = vpop.permute.xlu0 %85
  %v88 = vunpack.c.l.s4 1985246804
  %v89 = vunpack.c.0.s8 %v88
  %v90 = vlaneseq
  %v91 = vshrl.u32 %v90, 7
  %v92 = vsub.s32 %v89, %v91
  %v93 = vrot.slane %v86, %v92
  %v95 = vmul.f32 %v74, %v93
  %v96 = vmul.f32 %v75, %v93
  %98 = vset.pattern.permute.xlu0 0
  %99 = vperm.xlu0 %98, %v29
  %v100 = vpop.permute.xlu0 %99
  %v102 = vunpack.c.l.s4 839922192
  %v103 = vunpack.c.0.s8 %v102
  %v104 = vlaneseq
  %v105 = vshrl.u32 %v104, 7
  %v106 = vsub.s32 %v103, %v105
  %v107 = vrot.slane %v100, %v106
  %v109 = vmul.f32 %v95, %v107
  %v110 = vmul.f32 %v96, %v107
  %111 = vset.pattern.permute.xlu0 1
  %112 = vperm.xlu0 %111, %v29
  %v113 = vpop.permute.xlu0 %112
  %v115 = vunpack.c.l.s4 839922192
  %v116 = vunpack.c.0.s8 %v115
  %v117 = vlaneseq
  %v118 = vshrl.u32 %v117, 7
  %v119 = vsub.s32 %v116, %v118
  %v120 = vrot.slane %v113, %v119
  %v122 = vadd.f32 %v109, %v120
  %v123 = vadd.f32 %v110, %v120
  %v124 = vmax.f32 %v122, 0.0
  %v125 = vmax.f32 %v123, 0.0
  %v126 = vld [vmem:[%s7] sm:$0xff]
  %128 = vset.pattern.permute.xlu0 4
  %129 = vperm.xlu0 %128, %v30
  %v130 = vpop.permute.xlu0 %129
  %vm132 = vcmask 31744
  %v134 = vsel %vm132, %v126, 0
  %vm136 = vcmask 1043456
  %v137 = vsel %vm136, %v31, 0
  %v139 = vsel %vm136, %v35, 0
  %v141 = vsel %vm136, %v32, 0
  %v143 = vsel %vm136, %v36, 0
  %145 = vmatprep.subr.mxu0 %v139
  %146 = vmatpush1.msra.mxu0 %v137
  %147 = vmatprep.subr.mxu0 0.0
  %148 = vmatpush1.msra.mxu0 0.0
  %149 = vmatprep.subr.mxu0 0.0
  %150 = vmatpush1.msra.mxu0 0.0
  %151 = vmatprep.subr.mxu0 0.0
  %152 = vmatpush1.msra.mxu0 0.0
  %153 = vmatprep.subr.mxu0 0.0
  %154 = vmatpush1.msra.mxu0 0.0
  %155 = vmatprep.subr.mxu0 0.0
  %156 = vmatpush1.msra.mxu0 0.0
  %157 = vmatprep.subr.mxu0 0.0
  %158 = vmatpush1.msra.mxu0 0.0
  %159 = vmatprep.subr.mxu0 0.0
  %160 = vmatpush1.msra.mxu0 0.0
  %161 = vmatprep.subr.mxu0 0.0
  %162 = vmatpush1.msra.mxu0 0.0
  %163 = vmatprep.subr.mxu0 0.0
  %164 = vmatpush1.msra.mxu0 0.0
  %165 = vmatprep.subr.mxu0 0.0
  %166 = vmatpush1.msra.mxu0 0.0
  %167 = vmatprep.subr.mxu0 0.0
  %168 = vmatpush1.msra.mxu0 0.0
  %169 = vmatprep.subr.mxu0 0.0
  %170 = vmatpush1.msra.mxu0 0.0
  %171 = vmatprep.subr.mxu0 0.0
  %172 = vmatpush1.msra.mxu0 0.0
  %173 = vmatprep.subr.mxu0 0.0
  %174 = vmatpush1.msra.mxu0 0.0
  %175 = vmatprep.subr.mxu0 0.0
  %176 = vmatpush1.msra.mxu0 0.0
  %177 = vmatprep.subr.mxu0 0.0
  %178 = vmatpush1.msra.mxu0 0.0
  %179 = vmatprep.subr.mxu0 0.0
  %180 = vmatpush1.msra.mxu0 0.0
  %181 = vmatprep.subr.mxu0 0.0
  %182 = vmatpush1.msra.mxu0 0.0
  %183 = vmatprep.subr.mxu0 0.0
  %184 = vmatpush1.msra.mxu0 0.0
  %185 = vmatprep.subr.mxu0 0.0
  %186 = vmatpush1.msra.mxu0 0.0
  %187 = vmatprep.subr.mxu0 0.0
  %188 = vmatpush1.msra.mxu0 0.0
  %189 = vmatprep.subr.mxu0 0.0
  %190 = vmatpush1.msra.mxu0 0.0
  %191 = vmatprep.subr.mxu0 0.0
  %192 = vmatpush1.msra.mxu0 0.0
  %193 = vmatprep.subr.mxu0 0.0
  %194 = vmatpush1.msra.mxu0 0.0
  %195 = vmatprep.subr.mxu0 0.0
  %196 = vmatpush1.msra.mxu0 0.0
  %197 = vmatprep.subr.mxu0 0.0
  %198 = vmatpush1.msra.mxu0 0.0
  %199 = vmatprep.subr.mxu0 0.0
  %200 = vmatpush1.msra.mxu0 0.0
  %201 = vmatprep.subr.mxu0 0.0
  %202 = vmatpush1.msra.mxu0 0.0
  %203 = vmatprep.subr.mxu0 0.0
  %204 = vmatpush1.msra.mxu0 0.0
  %205 = vmatprep.subr.mxu0 0.0
  %206 = vmatpush1.msra.mxu0 0.0
  %207 = vmatprep.subr.mxu0 0.0
  %208 = vmatpush1.msra.mxu0 0.0
  %209 = vmatprep.mubr.f32.mxu0 0.0
  %210 = vmatmul.mubr.f32.gmra.mrb[0].mxu0 %v134
  %v211 = vpop.f32.mrb[0].mxu0
  %v212 = vadd.f32 %v130, %v211
  %v213 = vpop.f32.mrb[0].mxu0
  %v214 = vadd.f32 %v130, %v213
  %215 = vdwg.mxu0
  %216 = vmatprep.subr.mxu0 %v143
  %217 = vmatpush1.msra.mxu0 %v141
  %218 = vmatprep.subr.mxu0 0.0
  %219 = vmatpush1.msra.mxu0 0.0
  %220 = vmatprep.subr.mxu0 0.0
  %221 = vmatpush1.msra.mxu0 0.0
  %222 = vmatprep.subr.mxu0 0.0
  %223 = vmatpush1.msra.mxu0 0.0
  %224 = vmatprep.subr.mxu0 0.0
  %225 = vmatpush1.msra.mxu0 0.0
  %226 = vmatprep.subr.mxu0 0.0
  %227 = vmatpush1.msra.mxu0 0.0
  %228 = vmatprep.subr.mxu0 0.0
  %229 = vmatpush1.msra.mxu0 0.0
  %230 = vmatprep.subr.mxu0 0.0
  %231 = vmatpush1.msra.mxu0 0.0
  %232 = vmatprep.subr.mxu0 0.0
  %233 = vmatpush1.msra.mxu0 0.0
  %234 = vmatprep.subr.mxu0 0.0
  %235 = vmatpush1.msra.mxu0 0.0
  %236 = vmatprep.subr.mxu0 0.0
  %237 = vmatpush1.msra.mxu0 0.0
  %238 = vmatprep.subr.mxu0 0.0
  %239 = vmatpush1.msra.mxu0 0.0
  %240 = vmatprep.subr.mxu0 0.0
  %241 = vmatpush1.msra.mxu0 0.0
  %242 = vmatprep.subr.mxu0 0.0
  %243 = vmatpush1.msra.mxu0 0.0
  %244 = vmatprep.subr.mxu0 0.0
  %245 = vmatpush1.msra.mxu0 0.0
  %246 = vmatprep.subr.mxu0 0.0
  %247 = vmatpush1.msra.mxu0 0.0
  %248 = vmatprep.subr.mxu0 0.0
  %249 = vmatpush1.msra.mxu0 0.0
  %250 = vmatprep.subr.mxu0 0.0
  %251 = vmatpush1.msra.mxu0 0.0
  %252 = vmatprep.subr.mxu0 0.0
  %253 = vmatpush1.msra.mxu0 0.0
  %254 = vmatprep.subr.mxu0 0.0
  %255 = vmatpush1.msra.mxu0 0.0
  %256 = vmatprep.subr.mxu0 0.0
  %257 = vmatpush1.msra.mxu0 0.0
  %258 = vmatprep.subr.mxu0 0.0
  %259 = vmatpush1.msra.mxu0 0.0
  %260 = vmatprep.subr.mxu0 0.0
  %261 = vmatpush1.msra.mxu0 0.0
  %262 = vmatprep.subr.mxu0 0.0
  %263 = vmatpush1.msra.mxu0 0.0
  %264 = vmatprep.subr.mxu0 0.0
  %265 = vmatpush1.msra.mxu0 0.0
  %266 = vmatprep.subr.mxu0 0.0
  %267 = vmatpush1.msra.mxu0 0.0
  %268 = vmatprep.subr.mxu0 0.0
  %269 = vmatpush1.msra.mxu0 0.0
  %270 = vmatprep.subr.mxu0 0.0
  %271 = vmatpush1.msra.mxu0 0.0
  %272 = vmatprep.subr.mxu0 0.0
  %273 = vmatpush1.msra.mxu0 0.0
  %274 = vmatprep.subr.mxu0 0.0
  %275 = vmatpush1.msra.mxu0 0.0
  %276 = vmatprep.subr.mxu0 0.0
  %277 = vmatpush1.msra.mxu0 0.0
  %278 = vmatprep.subr.mxu0 0.0
  %279 = vmatpush1.msra.mxu0 0.0
  %280 = vmatprep.mubr.f32.mxu0 0.0
  %281 = vmatmul.mubr.f32.gmra.mrb[0].mxu0 %v134
  %v282 = vpop.f32.mrb[0].mxu0
  %v283 = vadd.f32 %v130, %v282
  %v284 = vpop.f32.mrb[0].mxu0
  %v285 = vadd.f32 %v130, %v284
  %286 = vdwg.mxu0
  %v289 = vcombine.high %v124, %v124
  %v290 = vcombine.high %v125, %v125
  %293 = vst [vmem:[#allocation3] sm:$0xf] %v124
  %294 = vst [vmem:[#allocation3 + $0x8] sm:$0xf] %v289
  %295 = vst [vmem:[#allocation3 + $0x10] sm:$0xf] %v125
  %296 = vst [vmem:[#allocation3 + $0x18] sm:$0xf] %v290
  %297 = vst [vmem:[#allocation3] sm:$0xf0] 0.0
  %298 = vst [vmem:[#allocation3 + $0x8] sm:$0xf0] 0.0
  %299 = vst [vmem:[#allocation3 + $0x10] sm:$0xf0] 0.0
  %300 = vst [vmem:[#allocation3 + $0x18] sm:$0xf0] 0.0
  %301 = vst [vmem:[#allocation3 + $0x20] sm:$0xff] %v212
  %302 = vst [vmem:[#allocation3 + $0x28] sm:$0xff] %v214
  %303 = vst [vmem:[#allocation3 + $0x30] sm:$0xff] %v283
  %304 = vst [vmem:[#allocation3 + $0x38] sm:$0xff] %v285
  %v305 = vld [vmem:[#allocation3] sm:$0xff]
  %v306 = vld [vmem:[#allocation3 + $0x8] sm:$0xff]
  %v307 = vld [vmem:[#allocation3 + $0x10] sm:$0xff]
  %v308 = vld [vmem:[#allocation3 + $0x18] sm:$0xff]
  %v309 = vld [vmem:[#allocation3 + $0x20] sm:$0xff]
  %v310 = vld [vmem:[#allocation3 + $0x28] sm:$0xff]
  %v311 = vld [vmem:[#allocation3 + $0x30] sm:$0xff]
  %v312 = vld [vmem:[#allocation3 + $0x38] sm:$0xff]
  %v313 = vpack.c.bf16 %v309, %v305
  %v314 = vpack.c.bf16 %v310, %v306
  %v315 = vpack.c.bf16 %v311, %v307
  %v316 = vpack.c.bf16 %v312, %v308
  %v317 = vld [vmem:[%s1] sm:$0xff]
  %v318 = vld [vmem:[%s1 + $0x8] sm:$0xff]
  %v319 = vld [vmem:[%s1 + $0x10] sm:$0xff]
  %v320 = vld [vmem:[%s1 + $0x18] sm:$0xff]
  %v321 = vld [vmem:[%s1 + $0x20] sm:$0xff]
  %v322 = vld [vmem:[%s1 + $0x28] sm:$0xff]
  %v323 = vld [vmem:[%s1 + $0x30] sm:$0xff]
  %v324 = vld [vmem:[%s1 + $0x38] sm:$0xff]
  %v325 = vld [vmem:[%s1 + $0x40] sm:$0xff]
  %v326 = vld [vmem:[%s1 + $0x48] sm:$0xff]
  %v327 = vld [vmem:[%s1 + $0x50] sm:$0xff]
  %v328 = vld [vmem:[%s1 + $0x58] sm:$0xff]
  %v329 = vld [vmem:[%s1 + $0x60] sm:$0xff]
  %v330 = vld [vmem:[%s1 + $0x68] sm:$0xff]
  %v331 = vld [vmem:[%s1 + $0x70] sm:$0xff]
  %v332 = vld [vmem:[%s1 + $0x78] sm:$0xff]
  %v333 = vld [vmem:[%s1 + $0x80] sm:$0xff]
  %v334 = vld [vmem:[%s1 + $0x88] sm:$0xff]
  %v335 = vld [vmem:[%s1 + $0x90] sm:$0xff]
  %v336 = vld [vmem:[%s1 + $0x98] sm:$0xff]
  %v337 = vld [vmem:[%s1 + $0xa0] sm:$0xff]
  %v338 = vld [vmem:[%s1 + $0xa8] sm:$0xff]
  %v339 = vld [vmem:[%s1 + $0xb0] sm:$0xff]
  %v340 = vld [vmem:[%s1 + $0xb8] sm:$0xff]
  %v341 = vld [vmem:[%s1 + $0xc0] sm:$0xff]
  %v342 = vld [vmem:[%s1 + $0xc8] sm:$0xff]
  %v343 = vld [vmem:[%s1 + $0xd0] sm:$0xff]
  %v344 = vld [vmem:[%s1 + $0xd8] sm:$0xff]
  %v345 = vld [vmem:[%s1 + $0xe0] sm:$0xff]
  %v346 = vld [vmem:[%s1 + $0xe8] sm:$0xff]
  %v347 = vld [vmem:[%s1 + $0xf0] sm:$0xff]
  %v348 = vld [vmem:[%s1 + $0xf8] sm:$0xff]
  %v349 = vld [vmem:[%s1 + $0x100] sm:$0xff]
  %v350 = vld [vmem:[%s1 + $0x108] sm:$0xff]
  %v351 = vld [vmem:[%s1 + $0x110] sm:$0xff]
  %v352 = vld [vmem:[%s1 + $0x118] sm:$0xff]
  %v353 = vld [vmem:[%s1 + $0x120] sm:$0xff]
  %v354 = vld [vmem:[%s1 + $0x128] sm:$0xff]
  %v355 = vld [vmem:[%s1 + $0x130] sm:$0xff]
  %v356 = vld [vmem:[%s1 + $0x138] sm:$0xff]
  %v357 = vld [vmem:[%s1 + $0x140] sm:$0xff]
  %v358 = vld [vmem:[%s1 + $0x148] sm:$0xff]
  %v359 = vld [vmem:[%s1 + $0x150] sm:$0xff]
  %v360 = vld [vmem:[%s1 + $0x158] sm:$0xff]
  %v361 = vld [vmem:[%s1 + $0x160] sm:$0xff]
  %v362 = vld [vmem:[%s1 + $0x168] sm:$0xff]
  %v363 = vld [vmem:[%s1 + $0x170] sm:$0xff]
  %v364 = vld [vmem:[%s1 + $0x178] sm:$0xff]
  %v365 = vld [vmem:[%s1 + $0x180] sm:$0xff]
  %v366 = vld [vmem:[%s1 + $0x188] sm:$0xff]
  %v367 = vld [vmem:[%s1 + $0x190] sm:$0xff]
  %v368 = vld [vmem:[%s1 + $0x198] sm:$0xff]
  %v369 = vld [vmem:[%s1 + $0x1a0] sm:$0xff]
  %v370 = vld [vmem:[%s1 + $0x1a8] sm:$0xff]
  %v371 = vld [vmem:[%s1 + $0x1b0] sm:$0xff]
  %v372 = vld [vmem:[%s1 + $0x1b8] sm:$0xff]
  %v373 = vld [vmem:[%s1 + $0x1c0] sm:$0xff]
  %v374 = vld [vmem:[%s1 + $0x1c8] sm:$0xff]
  %v375 = vld [vmem:[%s1 + $0x1d0] sm:$0xff]
  %v376 = vld [vmem:[%s1 + $0x1d8] sm:$0xff]
  %v377 = vld [vmem:[%s1 + $0x1e0] sm:$0xff]
  %v378 = vld [vmem:[%s1 + $0x1e8] sm:$0xff]
  %v379 = vld [vmem:[%s1 + $0x1f0] sm:$0xff]
  %v380 = vld [vmem:[%s1 + $0x1f8] sm:$0xff]
  %v381 = vld [vmem:[%s1 + $0x200] sm:$0xff]
  %v382 = vld [vmem:[%s1 + $0x208] sm:$0xff]
  %v383 = vld [vmem:[%s1 + $0x210] sm:$0xff]
  %v384 = vld [vmem:[%s1 + $0x218] sm:$0xff]
  %v385 = vld [vmem:[%s1 + $0x220] sm:$0xff]
  %v386 = vld [vmem:[%s1 + $0x228] sm:$0xff]
  %v387 = vld [vmem:[%s1 + $0x230] sm:$0xff]
  %v388 = vld [vmem:[%s1 + $0x238] sm:$0xff]
  %v389 = vld [vmem:[%s1 + $0x240] sm:$0xff]
  %v390 = vld [vmem:[%s1 + $0x248] sm:$0xff]
  %v391 = vld [vmem:[%s1 + $0x250] sm:$0xff]
  %v392 = vld [vmem:[%s1 + $0x258] sm:$0xff]
  %v393 = vld [vmem:[%s1 + $0x260] sm:$0xff]
  %v394 = vld [vmem:[%s1 + $0x268] sm:$0xff]
  %v395 = vld [vmem:[%s1 + $0x270] sm:$0xff]
  %v396 = vld [vmem:[%s1 + $0x278] sm:$0xff]
  %v397 = vld [vmem:[%s1 + $0x280] sm:$0xff]
  %v398 = vld [vmem:[%s1 + $0x288] sm:$0xff]
  %v399 = vld [vmem:[%s1 + $0x290] sm:$0xff]
  %v400 = vld [vmem:[%s1 + $0x298] sm:$0xff]
  %v401 = vld [vmem:[%s1 + $0x2a0] sm:$0xff]
  %v402 = vld [vmem:[%s1 + $0x2a8] sm:$0xff]
  %v403 = vld [vmem:[%s1 + $0x2b0] sm:$0xff]
  %v404 = vld [vmem:[%s1 + $0x2b8] sm:$0xff]
  %v405 = vld [vmem:[%s1 + $0x2c0] sm:$0xff]
  %v406 = vld [vmem:[%s1 + $0x2c8] sm:$0xff]
  %v407 = vld [vmem:[%s1 + $0x2d0] sm:$0xff]
  %v408 = vld [vmem:[%s1 + $0x2d8] sm:$0xff]
  %v409 = vld [vmem:[%s1 + $0x2e0] sm:$0xff]
  %v410 = vld [vmem:[%s1 + $0x2e8] sm:$0xff]
  %v411 = vld [vmem:[%s1 + $0x2f0] sm:$0xff]
  %v412 = vld [vmem:[%s1 + $0x2f8] sm:$0xff]
  %v413 = vld [vmem:[%s1 + $0x300] sm:$0xff]
  %v414 = vld [vmem:[%s1 + $0x308] sm:$0xff]
  %v415 = vld [vmem:[%s1 + $0x310] sm:$0xff]
  %v416 = vld [vmem:[%s1 + $0x318] sm:$0xff]
  %v417 = vld [vmem:[%s1 + $0x320] sm:$0xff]
  %v418 = vld [vmem:[%s1 + $0x328] sm:$0xff]
  %v419 = vld [vmem:[%s1 + $0x330] sm:$0xff]
  %v420 = vld [vmem:[%s1 + $0x338] sm:$0xff]
  %v421 = vld [vmem:[%s1 + $0x340] sm:$0xff]
  %v422 = vld [vmem:[%s1 + $0x348] sm:$0xff]
  %v423 = vld [vmem:[%s1 + $0x350] sm:$0xff]
  %v424 = vld [vmem:[%s1 + $0x358] sm:$0xff]
  %v425 = vld [vmem:[%s1 + $0x360] sm:$0xff]
  %v426 = vld [vmem:[%s1 + $0x368] sm:$0xff]
  %v427 = vld [vmem:[%s1 + $0x370] sm:$0xff]
  %v428 = vld [vmem:[%s1 + $0x378] sm:$0xff]
  %v429 = vld [vmem:[%s1 + $0x380] sm:$0xff]
  %v430 = vld [vmem:[%s1 + $0x388] sm:$0xff]
  %v431 = vld [vmem:[%s1 + $0x390] sm:$0xff]
  %v432 = vld [vmem:[%s1 + $0x398] sm:$0xff]
  %v433 = vld [vmem:[%s1 + $0x3a0] sm:$0xff]
  %v434 = vld [vmem:[%s1 + $0x3a8] sm:$0xff]
  %v435 = vld [vmem:[%s1 + $0x3b0] sm:$0xff]
  %v436 = vld [vmem:[%s1 + $0x3b8] sm:$0xff]
  %v437 = vld [vmem:[%s1 + $0x3c0] sm:$0xff]
  %v438 = vld [vmem:[%s1 + $0x3c8] sm:$0xff]
  %v439 = vld [vmem:[%s1 + $0x3d0] sm:$0xff]
  %v440 = vld [vmem:[%s1 + $0x3d8] sm:$0xff]
  %v441 = vld [vmem:[%s1 + $0x3e0] sm:$0xff]
  %v442 = vld [vmem:[%s1 + $0x3e8] sm:$0xff]
  %v443 = vld [vmem:[%s1 + $0x3f0] sm:$0xff]
  %v444 = vld [vmem:[%s1 + $0x3f8] sm:$0xff]
  %v445 = vld [vmem:[%s1 + $0x400] sm:$0xff]
  %v446 = vld [vmem:[%s1 + $0x408] sm:$0xff]
  %v447 = vld [vmem:[%s1 + $0x410] sm:$0xff]
  %v448 = vld [vmem:[%s1 + $0x418] sm:$0xff]
  %v449 = vld [vmem:[%s1 + $0x420] sm:$0xff]
  %v450 = vld [vmem:[%s1 + $0x428] sm:$0xff]
  %v451 = vld [vmem:[%s1 + $0x430] sm:$0xff]
  %v452 = vld [vmem:[%s1 + $0x438] sm:$0xff]
  %v453 = vld [vmem:[%s1 + $0x440] sm:$0xff]
  %v454 = vld [vmem:[%s1 + $0x448] sm:$0xff]
  %v455 = vld [vmem:[%s1 + $0x450] sm:$0xff]
  %v456 = vld [vmem:[%s1 + $0x458] sm:$0xff]
  %v457 = vld [vmem:[%s1 + $0x460] sm:$0xff]
  %v458 = vld [vmem:[%s1 + $0x468] sm:$0xff]
  %v459 = vld [vmem:[%s1 + $0x470] sm:$0xff]
  %v460 = vld [vmem:[%s1 + $0x478] sm:$0xff]
  %v461 = vld [vmem:[%s1 + $0x480] sm:$0xff]
  %v462 = vld [vmem:[%s1 + $0x488] sm:$0xff]
  %v463 = vld [vmem:[%s1 + $0x490] sm:$0xff]
  %v464 = vld [vmem:[%s1 + $0x498] sm:$0xff]
  %v465 = vld [vmem:[%s1 + $0x4a0] sm:$0xff]
  %v466 = vld [vmem:[%s1 + $0x4a8] sm:$0xff]
  %v467 = vld [vmem:[%s1 + $0x4b0] sm:$0xff]
  %v468 = vld [vmem:[%s1 + $0x4b8] sm:$0xff]
  %v469 = vld [vmem:[%s1 + $0x4c0] sm:$0xff]
  %v470 = vld [vmem:[%s1 + $0x4c8] sm:$0xff]
  %v471 = vld [vmem:[%s1 + $0x4d0] sm:$0xff]
  %v472 = vld [vmem:[%s1 + $0x4d8] sm:$0xff]
  %v473 = vld [vmem:[%s1 + $0x4e0] sm:$0xff]
  %v474 = vld [vmem:[%s1 + $0x4e8] sm:$0xff]
  %v475 = vld [vmem:[%s1 + $0x4f0] sm:$0xff]
  %v476 = vld [vmem:[%s1 + $0x4f8] sm:$0xff]
  %v477 = vld [vmem:[%s1 + $0x500] sm:$0xff]
  %v478 = vld [vmem:[%s1 + $0x508] sm:$0xff]
  %v479 = vld [vmem:[%s1 + $0x510] sm:$0xff]
  %v480 = vld [vmem:[%s1 + $0x518] sm:$0xff]
  %v481 = vld [vmem:[%s1 + $0x520] sm:$0xff]
  %v482 = vld [vmem:[%s1 + $0x528] sm:$0xff]
  %v483 = vld [vmem:[%s1 + $0x530] sm:$0xff]
  %v484 = vld [vmem:[%s1 + $0x538] sm:$0xff]
  %v485 = vld [vmem:[%s1 + $0x540] sm:$0xff]
  %v486 = vld [vmem:[%s1 + $0x548] sm:$0xff]
  %v487 = vld [vmem:[%s1 + $0x550] sm:$0xff]
  %v488 = vld [vmem:[%s1 + $0x558] sm:$0xff]
  %v489 = vld [vmem:[%s1 + $0x560] sm:$0xff]
  %v490 = vld [vmem:[%s1 + $0x568] sm:$0xff]
  %v491 = vld [vmem:[%s1 + $0x570] sm:$0xff]
  %v492 = vld [vmem:[%s1 + $0x578] sm:$0xff]
  %v493 = vld [vmem:[%s1 + $0x580] sm:$0xff]
  %v494 = vld [vmem:[%s1 + $0x588] sm:$0xff]
  %v495 = vld [vmem:[%s1 + $0x590] sm:$0xff]
  %v496 = vld [vmem:[%s1 + $0x598] sm:$0xff]
  %v497 = vld [vmem:[%s1 + $0x5a0] sm:$0xff]
  %v498 = vld [vmem:[%s1 + $0x5a8] sm:$0xff]
  %v499 = vld [vmem:[%s1 + $0x5b0] sm:$0xff]
  %v500 = vld [vmem:[%s1 + $0x5b8] sm:$0xff]
  %v501 = vld [vmem:[%s1 + $0x5c0] sm:$0xff]
  %v502 = vld [vmem:[%s1 + $0x5c8] sm:$0xff]
  %v503 = vld [vmem:[%s1 + $0x5d0] sm:$0xff]
  %v504 = vld [vmem:[%s1 + $0x5d8] sm:$0xff]
  %v505 = vld [vmem:[%s1 + $0x5e0] sm:$0xff]
  %v506 = vld [vmem:[%s1 + $0x5e8] sm:$0xff]
  %v507 = vld [vmem:[%s1 + $0x5f0] sm:$0xff]
  %v508 = vld [vmem:[%s1 + $0x5f8] sm:$0xff]
  %v509 = vld [vmem:[%s1 + $0x600] sm:$0xff]
  %v510 = vld [vmem:[%s1 + $0x608] sm:$0xff]
  %v511 = vld [vmem:[%s1 + $0x610] sm:$0xff]
  %v512 = vld [vmem:[%s1 + $0x618] sm:$0xff]
  %v513 = vld [vmem:[%s1 + $0x620] sm:$0xff]
  %v514 = vld [vmem:[%s1 + $0x628] sm:$0xff]
  %v515 = vld [vmem:[%s1 + $0x630] sm:$0xff]
  %v516 = vld [vmem:[%s1 + $0x638] sm:$0xff]
  %v517 = vld [vmem:[%s1 + $0x640] sm:$0xff]
  %v518 = vld [vmem:[%s1 + $0x648] sm:$0xff]
  %v519 = vld [vmem:[%s1 + $0x650] sm:$0xff]
  %v520 = vld [vmem:[%s1 + $0x658] sm:$0xff]
  %v521 = vld [vmem:[%s1 + $0x660] sm:$0xff]
  %v522 = vld [vmem:[%s1 + $0x668] sm:$0xff]
  %v523 = vld [vmem:[%s1 + $0x670] sm:$0xff]
  %v524 = vld [vmem:[%s1 + $0x678] sm:$0xff]
  %v525 = vld [vmem:[%s1 + $0x680] sm:$0xff]
  %v526 = vld [vmem:[%s1 + $0x688] sm:$0xff]
  %v527 = vld [vmem:[%s1 + $0x690] sm:$0xff]
  %v528 = vld [vmem:[%s1 + $0x698] sm:$0xff]
  %v529 = vld [vmem:[%s1 + $0x6a0] sm:$0xff]
  %v530 = vld [vmem:[%s1 + $0x6a8] sm:$0xff]
  %v531 = vld [vmem:[%s1 + $0x6b0] sm:$0xff]
  %v532 = vld [vmem:[%s1 + $0x6b8] sm:$0xff]
  %v533 = vld [vmem:[%s1 + $0x6c0] sm:$0xff]
  %v534 = vld [vmem:[%s1 + $0x6c8] sm:$0xff]
  %v535 = vld [vmem:[%s1 + $0x6d0] sm:$0xff]
  %v536 = vld [vmem:[%s1 + $0x6d8] sm:$0xff]
  %v537 = vld [vmem:[%s1 + $0x6e0] sm:$0xff]
  %v538 = vld [vmem:[%s1 + $0x6e8] sm:$0xff]
  %v539 = vld [vmem:[%s1 + $0x6f0] sm:$0xff]
  %v540 = vld [vmem:[%s1 + $0x6f8] sm:$0xff]
  %v541 = vld [vmem:[%s1 + $0x700] sm:$0xff]
  %v542 = vld [vmem:[%s1 + $0x708] sm:$0xff]
  %v543 = vld [vmem:[%s1 + $0x710] sm:$0xff]
  %v544 = vld [vmem:[%s1 + $0x718] sm:$0xff]
  %v545 = vld [vmem:[%s1 + $0x720] sm:$0xff]
  %v546 = vld [vmem:[%s1 + $0x728] sm:$0xff]
  %v547 = vld [vmem:[%s1 + $0x730] sm:$0xff]
  %v548 = vld [vmem:[%s1 + $0x738] sm:$0xff]
  %v549 = vld [vmem:[%s1 + $0x740] sm:$0xff]
  %v550 = vld [vmem:[%s1 + $0x748] sm:$0xff]
  %v551 = vld [vmem:[%s1 + $0x750] sm:$0xff]
  %v552 = vld [vmem:[%s1 + $0x758] sm:$0xff]
  %v553 = vld [vmem:[%s1 + $0x760] sm:$0xff]
  %v554 = vld [vmem:[%s1 + $0x768] sm:$0xff]
  %v555 = vld [vmem:[%s1 + $0x770] sm:$0xff]
  %v556 = vld [vmem:[%s1 + $0x778] sm:$0xff]
  %v557 = vld [vmem:[%s1 + $0x780] sm:$0xff]
  %v558 = vld [vmem:[%s1 + $0x788] sm:$0xff]
  %v559 = vld [vmem:[%s1 + $0x790] sm:$0xff]
  %v560 = vld [vmem:[%s1 + $0x798] sm:$0xff]
  %v561 = vld [vmem:[%s1 + $0x7a0] sm:$0xff]
  %v562 = vld [vmem:[%s1 + $0x7a8] sm:$0xff]
  %v563 = vld [vmem:[%s1 + $0x7b0] sm:$0xff]
  %v564 = vld [vmem:[%s1 + $0x7b8] sm:$0xff]
  %v565 = vld [vmem:[%s1 + $0x7c0] sm:$0xff]
  %v566 = vld [vmem:[%s1 + $0x7c8] sm:$0xff]
  %v567 = vld [vmem:[%s1 + $0x7d0] sm:$0xff]
  %v568 = vld [vmem:[%s1 + $0x7d8] sm:$0xff]
  %v569 = vld [vmem:[%s1 + $0x7e0] sm:$0xff]
  %v570 = vld [vmem:[%s1 + $0x7e8] sm:$0xff]
  %v571 = vld [vmem:[%s1 + $0x7f0] sm:$0xff]
  %v572 = vld [vmem:[%s1 + $0x7f8] sm:$0xff]
  %v573 = vld [vmem:[%s1 + $0x800] sm:$0xff]
  %v574 = vld [vmem:[%s1 + $0x808] sm:$0xff]
  %v575 = vld [vmem:[%s1 + $0x810] sm:$0xff]
  %v576 = vld [vmem:[%s1 + $0x818] sm:$0xff]
  %v577 = vld [vmem:[%s1 + $0x820] sm:$0xff]
  %v578 = vld [vmem:[%s1 + $0x828] sm:$0xff]
  %v579 = vld [vmem:[%s1 + $0x830] sm:$0xff]
  %v580 = vld [vmem:[%s1 + $0x838] sm:$0xff]
  %v581 = vld [vmem:[%s1 + $0x840] sm:$0xff]
  %v582 = vld [vmem:[%s1 + $0x848] sm:$0xff]
  %v583 = vld [vmem:[%s1 + $0x850] sm:$0xff]
  %v584 = vld [vmem:[%s1 + $0x858] sm:$0xff]
  %v585 = vld [vmem:[%s1 + $0x860] sm:$0xff]
  %v586 = vld [vmem:[%s1 + $0x868] sm:$0xff]
  %v587 = vld [vmem:[%s1 + $0x870] sm:$0xff]
  %v588 = vld [vmem:[%s1 + $0x878] sm:$0xff]
  %v589 = vld [vmem:[%s1 + $0x880] sm:$0xff]
  %v590 = vld [vmem:[%s1 + $0x888] sm:$0xff]
  %v591 = vld [vmem:[%s1 + $0x890] sm:$0xff]
  %v592 = vld [vmem:[%s1 + $0x898] sm:$0xff]
  %v593 = vld [vmem:[%s1 + $0x8a0] sm:$0xff]
  %v594 = vld [vmem:[%s1 + $0x8a8] sm:$0xff]
  %v595 = vld [vmem:[%s1 + $0x8b0] sm:$0xff]
  %v596 = vld [vmem:[%s1 + $0x8b8] sm:$0xff]
  %v597 = vld [vmem:[%s1 + $0x8c0] sm:$0xff]
  %v598 = vld [vmem:[%s1 + $0x8c8] sm:$0xff]
  %v599 = vld [vmem:[%s1 + $0x8d0] sm:$0xff]
  %v600 = vld [vmem:[%s1 + $0x8d8] sm:$0xff]
  %v601 = vld [vmem:[%s1 + $0x8e0] sm:$0xff]
  %v602 = vld [vmem:[%s1 + $0x8e8] sm:$0xff]
  %v603 = vld [vmem:[%s1 + $0x8f0] sm:$0xff]
  %v604 = vld [vmem:[%s1 + $0x8f8] sm:$0xff]
  %v605 = vld [vmem:[%s1 + $0x900] sm:$0xff]
  %v606 = vld [vmem:[%s1 + $0x908] sm:$0xff]
  %v607 = vld [vmem:[%s1 + $0x910] sm:$0xff]
  %v608 = vld [vmem:[%s1 + $0x918] sm:$0xff]
  %v609 = vld [vmem:[%s1 + $0x920] sm:$0xff]
  %v610 = vld [vmem:[%s1 + $0x928] sm:$0xff]
  %v611 = vld [vmem:[%s1 + $0x930] sm:$0xff]
  %v612 = vld [vmem:[%s1 + $0x938] sm:$0xff]
  %v613 = vld [vmem:[%s1 + $0x940] sm:$0xff]
  %v614 = vld [vmem:[%s1 + $0x948] sm:$0xff]
  %v615 = vld [vmem:[%s1 + $0x950] sm:$0xff]
  %v616 = vld [vmem:[%s1 + $0x958] sm:$0xff]
  %v617 = vld [vmem:[%s1 + $0x960] sm:$0xff]
  %v618 = vld [vmem:[%s1 + $0x968] sm:$0xff]
  %v619 = vld [vmem:[%s1 + $0x970] sm:$0xff]
  %v620 = vld [vmem:[%s1 + $0x978] sm:$0xff]
  %v621 = vld [vmem:[%s1 + $0x980] sm:$0xff]
  %v622 = vld [vmem:[%s1 + $0x988] sm:$0xff]
  %v623 = vld [vmem:[%s1 + $0x990] sm:$0xff]
  %v624 = vld [vmem:[%s1 + $0x998] sm:$0xff]
  %v625 = vld [vmem:[%s1 + $0x9a0] sm:$0xff]
  %v626 = vld [vmem:[%s1 + $0x9a8] sm:$0xff]
  %v627 = vld [vmem:[%s1 + $0x9b0] sm:$0xff]
  %v628 = vld [vmem:[%s1 + $0x9b8] sm:$0xff]
  %v629 = vld [vmem:[%s1 + $0x9c0] sm:$0xff]
  %v630 = vld [vmem:[%s1 + $0x9c8] sm:$0xff]
  %v631 = vld [vmem:[%s1 + $0x9d0] sm:$0xff]
  %v632 = vld [vmem:[%s1 + $0x9d8] sm:$0xff]
  %v633 = vld [vmem:[%s1 + $0x9e0] sm:$0xff]
  %v634 = vld [vmem:[%s1 + $0x9e8] sm:$0xff]
  %v635 = vld [vmem:[%s1 + $0x9f0] sm:$0xff]
  %v636 = vld [vmem:[%s1 + $0x9f8] sm:$0xff]
  %v637 = vld [vmem:[%s1 + $0xa00] sm:$0xff]
  %v638 = vld [vmem:[%s1 + $0xa08] sm:$0xff]
  %v639 = vld [vmem:[%s1 + $0xa10] sm:$0xff]
  %v640 = vld [vmem:[%s1 + $0xa18] sm:$0xff]
  %v641 = vld [vmem:[%s1 + $0xa20] sm:$0xff]
  %v642 = vld [vmem:[%s1 + $0xa28] sm:$0xff]
  %v643 = vld [vmem:[%s1 + $0xa30] sm:$0xff]
  %v644 = vld [vmem:[%s1 + $0xa38] sm:$0xff]
  %v645 = vld [vmem:[%s1 + $0xa40] sm:$0xff]
  %v646 = vld [vmem:[%s1 + $0xa48] sm:$0xff]
  %v647 = vld [vmem:[%s1 + $0xa50] sm:$0xff]
  %v648 = vld [vmem:[%s1 + $0xa58] sm:$0xff]
  %v649 = vld [vmem:[%s1 + $0xa60] sm:$0xff]
  %v650 = vld [vmem:[%s1 + $0xa68] sm:$0xff]
  %v651 = vld [vmem:[%s1 + $0xa70] sm:$0xff]
  %v652 = vld [vmem:[%s1 + $0xa78] sm:$0xff]
  %v653 = vld [vmem:[%s1 + $0xa80] sm:$0xff]
  %v654 = vld [vmem:[%s1 + $0xa88] sm:$0xff]
  %v655 = vld [vmem:[%s1 + $0xa90] sm:$0xff]
  %v656 = vld [vmem:[%s1 + $0xa98] sm:$0xff]
  %v657 = vld [vmem:[%s1 + $0xaa0] sm:$0xff]
  %v658 = vld [vmem:[%s1 + $0xaa8] sm:$0xff]
  %v659 = vld [vmem:[%s1 + $0xab0] sm:$0xff]
  %v660 = vld [vmem:[%s1 + $0xab8] sm:$0xff]
  %v661 = vld [vmem:[%s1 + $0xac0] sm:$0xff]
  %v662 = vld [vmem:[%s1 + $0xac8] sm:$0xff]
  %v663 = vld [vmem:[%s1 + $0xad0] sm:$0xff]
  %v664 = vld [vmem:[%s1 + $0xad8] sm:$0xff]
  %v665 = vld [vmem:[%s1 + $0xae0] sm:$0xff]
  %v666 = vld [vmem:[%s1 + $0xae8] sm:$0xff]
  %v667 = vld [vmem:[%s1 + $0xaf0] sm:$0xff]
  %v668 = vld [vmem:[%s1 + $0xaf8] sm:$0xff]
  %v669 = vld [vmem:[%s1 + $0xb00] sm:$0xff]
  %v670 = vld [vmem:[%s1 + $0xb08] sm:$0xff]
  %v671 = vld [vmem:[%s1 + $0xb10] sm:$0xff]
  %v672 = vld [vmem:[%s1 + $0xb18] sm:$0xff]
  %v673 = vld [vmem:[%s1 + $0xb20] sm:$0xff]
  %v674 = vld [vmem:[%s1 + $0xb28] sm:$0xff]
  %v675 = vld [vmem:[%s1 + $0xb30] sm:$0xff]
  %v676 = vld [vmem:[%s1 + $0xb38] sm:$0xff]
  %v677 = vld [vmem:[%s1 + $0xb40] sm:$0xff]
  %v678 = vld [vmem:[%s1 + $0xb48] sm:$0xff]
  %v679 = vld [vmem:[%s1 + $0xb50] sm:$0xff]
  %v680 = vld [vmem:[%s1 + $0xb58] sm:$0xff]
  %v681 = vld [vmem:[%s1 + $0xb60] sm:$0xff]
  %v682 = vld [vmem:[%s1 + $0xb68] sm:$0xff]
  %v683 = vld [vmem:[%s1 + $0xb70] sm:$0xff]
  %v684 = vld [vmem:[%s1 + $0xb78] sm:$0xff]
  %v685 = vld [vmem:[%s1 + $0xb80] sm:$0xff]
  %v686 = vld [vmem:[%s1 + $0xb88] sm:$0xff]
  %v687 = vld [vmem:[%s1 + $0xb90] sm:$0xff]
  %v688 = vld [vmem:[%s1 + $0xb98] sm:$0xff]
  %v689 = vld [vmem:[%s1 + $0xba0] sm:$0xff]
  %v690 = vld [vmem:[%s1 + $0xba8] sm:$0xff]
  %v691 = vld [vmem:[%s1 + $0xbb0] sm:$0xff]
  %v692 = vld [vmem:[%s1 + $0xbb8] sm:$0xff]
  %v693 = vld [vmem:[%s1 + $0xbc0] sm:$0xff]
  %v694 = vld [vmem:[%s1 + $0xbc8] sm:$0xff]
  %v695 = vld [vmem:[%s1 + $0xbd0] sm:$0xff]
  %v696 = vld [vmem:[%s1 + $0xbd8] sm:$0xff]
  %v697 = vld [vmem:[%s1 + $0xbe0] sm:$0xff]
  %v698 = vld [vmem:[%s1 + $0xbe8] sm:$0xff]
  %v699 = vld [vmem:[%s1 + $0xbf0] sm:$0xff]
  %v700 = vld [vmem:[%s1 + $0xbf8] sm:$0xff]
  %v701 = vld [vmem:[%s1 + $0xc00] sm:$0xff]
  %v702 = vld [vmem:[%s1 + $0xc08] sm:$0xff]
  %v703 = vld [vmem:[%s1 + $0xc10] sm:$0xff]
  %v704 = vld [vmem:[%s1 + $0xc18] sm:$0xff]
  %v705 = vld [vmem:[%s1 + $0xc20] sm:$0xff]
  %v706 = vld [vmem:[%s1 + $0xc28] sm:$0xff]
  %v707 = vld [vmem:[%s1 + $0xc30] sm:$0xff]
  %v708 = vld [vmem:[%s1 + $0xc38] sm:$0xff]
  %v709 = vld [vmem:[%s1 + $0xc40] sm:$0xff]
  %v710 = vld [vmem:[%s1 + $0xc48] sm:$0xff]
  %v711 = vld [vmem:[%s1 + $0xc50] sm:$0xff]
  %v712 = vld [vmem:[%s1 + $0xc58] sm:$0xff]
  %v713 = vld [vmem:[%s1 + $0xc60] sm:$0xff]
  %v714 = vld [vmem:[%s1 + $0xc68] sm:$0xff]
  %v715 = vld [vmem:[%s1 + $0xc70] sm:$0xff]
  %v716 = vld [vmem:[%s1 + $0xc78] sm:$0xff]
  %v717 = vld [vmem:[%s1 + $0xc80] sm:$0xff]
  %v718 = vld [vmem:[%s1 + $0xc88] sm:$0xff]
  %v719 = vld [vmem:[%s1 + $0xc90] sm:$0xff]
  %v720 = vld [vmem:[%s1 + $0xc98] sm:$0xff]
  %v721 = vld [vmem:[%s1 + $0xca0] sm:$0xff]
  %v722 = vld [vmem:[%s1 + $0xca8] sm:$0xff]
  %v723 = vld [vmem:[%s1 + $0xcb0] sm:$0xff]
  %v724 = vld [vmem:[%s1 + $0xcb8] sm:$0xff]
  %v725 = vld [vmem:[%s1 + $0xcc0] sm:$0xff]
  %v726 = vld [vmem:[%s1 + $0xcc8] sm:$0xff]
  %v727 = vld [vmem:[%s1 + $0xcd0] sm:$0xff]
  %v728 = vld [vmem:[%s1 + $0xcd8] sm:$0xff]
  %v729 = vld [vmem:[%s1 + $0xce0] sm:$0xff]
  %v730 = vld [vmem:[%s1 + $0xce8] sm:$0xff]
  %v731 = vld [vmem:[%s1 + $0xcf0] sm:$0xff]
  %v732 = vld [vmem:[%s1 + $0xcf8] sm:$0xff]
  %v733 = vld [vmem:[%s1 + $0xd00] sm:$0xff]
  %v734 = vld [vmem:[%s1 + $0xd08] sm:$0xff]
  %v735 = vld [vmem:[%s1 + $0xd10] sm:$0xff]
  %v736 = vld [vmem:[%s1 + $0xd18] sm:$0xff]
  %v737 = vld [vmem:[%s1 + $0xd20] sm:$0xff]
  %v738 = vld [vmem:[%s1 + $0xd28] sm:$0xff]
  %v739 = vld [vmem:[%s1 + $0xd30] sm:$0xff]
  %v740 = vld [vmem:[%s1 + $0xd38] sm:$0xff]
  %v741 = vld [vmem:[%s1 + $0xd40] sm:$0xff]
  %v742 = vld [vmem:[%s1 + $0xd48] sm:$0xff]
  %v743 = vld [vmem:[%s1 + $0xd50] sm:$0xff]
  %v744 = vld [vmem:[%s1 + $0xd58] sm:$0xff]
  %v745 = vld [vmem:[%s1 + $0xd60] sm:$0xff]
  %v746 = vld [vmem:[%s1 + $0xd68] sm:$0xff]
  %v747 = vld [vmem:[%s1 + $0xd70] sm:$0xff]
  %v748 = vld [vmem:[%s1 + $0xd78] sm:$0xff]
  %v749 = vld [vmem:[%s1 + $0xd80] sm:$0xff]
  %v750 = vld [vmem:[%s1 + $0xd88] sm:$0xff]
  %v751 = vld [vmem:[%s1 + $0xd90] sm:$0xff]
  %v752 = vld [vmem:[%s1 + $0xd98] sm:$0xff]
  %v753 = vld [vmem:[%s1 + $0xda0] sm:$0xff]
  %v754 = vld [vmem:[%s1 + $0xda8] sm:$0xff]
  %v755 = vld [vmem:[%s1 + $0xdb0] sm:$0xff]
  %v756 = vld [vmem:[%s1 + $0xdb8] sm:$0xff]
  %v757 = vld [vmem:[%s1 + $0xdc0] sm:$0xff]
  %v758 = vld [vmem:[%s1 + $0xdc8] sm:$0xff]
  %v759 = vld [vmem:[%s1 + $0xdd0] sm:$0xff]
  %v760 = vld [vmem:[%s1 + $0xdd8] sm:$0xff]
  %v761 = vld [vmem:[%s1 + $0xde0] sm:$0xff]
  %v762 = vld [vmem:[%s1 + $0xde8] sm:$0xff]
  %v763 = vld [vmem:[%s1 + $0xdf0] sm:$0xff]
  %v764 = vld [vmem:[%s1 + $0xdf8] sm:$0xff]
  %v765 = vld [vmem:[%s1 + $0xe00] sm:$0xff]
  %v766 = vld [vmem:[%s1 + $0xe08] sm:$0xff]
  %v767 = vld [vmem:[%s1 + $0xe10] sm:$0xff]
  %v768 = vld [vmem:[%s1 + $0xe18] sm:$0xff]
  %v769 = vld [vmem:[%s1 + $0xe20] sm:$0xff]
  %v770 = vld [vmem:[%s1 + $0xe28] sm:$0xff]
  %v771 = vld [vmem:[%s1 + $0xe30] sm:$0xff]
  %v772 = vld [vmem:[%s1 + $0xe38] sm:$0xff]
  %v773 = vld [vmem:[%s1 + $0xe40] sm:$0xff]
  %v774 = vld [vmem:[%s1 + $0xe48] sm:$0xff]
  %v775 = vld [vmem:[%s1 + $0xe50] sm:$0xff]
  %v776 = vld [vmem:[%s1 + $0xe58] sm:$0xff]
  %v777 = vld [vmem:[%s1 + $0xe60] sm:$0xff]
  %v778 = vld [vmem:[%s1 + $0xe68] sm:$0xff]
  %v779 = vld [vmem:[%s1 + $0xe70] sm:$0xff]
  %v780 = vld [vmem:[%s1 + $0xe78] sm:$0xff]
  %v781 = vld [vmem:[%s1 + $0xe80] sm:$0xff]
  %v782 = vld [vmem:[%s1 + $0xe88] sm:$0xff]
  %v783 = vld [vmem:[%s1 + $0xe90] sm:$0xff]
  %v784 = vld [vmem:[%s1 + $0xe98] sm:$0xff]
  %v785 = vld [vmem:[%s1 + $0xea0] sm:$0xff]
  %v786 = vld [vmem:[%s1 + $0xea8] sm:$0xff]
  %v787 = vld [vmem:[%s1 + $0xeb0] sm:$0xff]
  %v788 = vld [vmem:[%s1 + $0xeb8] sm:$0xff]
  %v789 = vld [vmem:[%s1 + $0xec0] sm:$0xff]
  %v790 = vld [vmem:[%s1 + $0xec8] sm:$0xff]
  %v791 = vld [vmem:[%s1 + $0xed0] sm:$0xff]
  %v792 = vld [vmem:[%s1 + $0xed8] sm:$0xff]
  %v793 = vld [vmem:[%s1 + $0xee0] sm:$0xff]
  %v794 = vld [vmem:[%s1 + $0xee8] sm:$0xff]
  %v795 = vld [vmem:[%s1 + $0xef0] sm:$0xff]
  %v796 = vld [vmem:[%s1 + $0xef8] sm:$0xff]
  %v797 = vld [vmem:[%s1 + $0xf00] sm:$0xff]
  %v798 = vld [vmem:[%s1 + $0xf08] sm:$0xff]
  %v799 = vld [vmem:[%s1 + $0xf10] sm:$0xff]
  %v800 = vld [vmem:[%s1 + $0xf18] sm:$0xff]
  %v801 = vld [vmem:[%s1 + $0xf20] sm:$0xff]
  %v802 = vld [vmem:[%s1 + $0xf28] sm:$0xff]
  %v803 = vld [vmem:[%s1 + $0xf30] sm:$0xff]
  %v804 = vld [vmem:[%s1 + $0xf38] sm:$0xff]
  %v805 = vld [vmem:[%s1 + $0xf40] sm:$0xff]
  %v806 = vld [vmem:[%s1 + $0xf48] sm:$0xff]
  %v807 = vld [vmem:[%s1 + $0xf50] sm:$0xff]
  %v808 = vld [vmem:[%s1 + $0xf58] sm:$0xff]
  %v809 = vld [vmem:[%s1 + $0xf60] sm:$0xff]
  %v810 = vld [vmem:[%s1 + $0xf68] sm:$0xff]
  %v811 = vld [vmem:[%s1 + $0xf70] sm:$0xff]
  %v812 = vld [vmem:[%s1 + $0xf78] sm:$0xff]
  %v813 = vld [vmem:[%s1 + $0xf80] sm:$0xff]
  %v814 = vld [vmem:[%s1 + $0xf88] sm:$0xff]
  %v815 = vld [vmem:[%s1 + $0xf90] sm:$0xff]
  %v816 = vld [vmem:[%s1 + $0xf98] sm:$0xff]
  %v817 = vld [vmem:[%s1 + $0xfa0] sm:$0xff]
  %v818 = vld [vmem:[%s1 + $0xfa8] sm:$0xff]
  %v819 = vld [vmem:[%s1 + $0xfb0] sm:$0xff]
  %v820 = vld [vmem:[%s1 + $0xfb8] sm:$0xff]
  %v821 = vld [vmem:[%s1 + $0xfc0] sm:$0xff]
  %v822 = vld [vmem:[%s1 + $0xfc8] sm:$0xff]
  %v823 = vld [vmem:[%s1 + $0xfd0] sm:$0xff]
  %v824 = vld [vmem:[%s1 + $0xfd8] sm:$0xff]
  %v825 = vld [vmem:[%s1 + $0xfe0] sm:$0xff]
  %v826 = vld [vmem:[%s1 + $0xfe8] sm:$0xff]
  %v827 = vld [vmem:[%s1 + $0xff0] sm:$0xff]
  %v828 = vld [vmem:[%s1 + $0xff8] sm:$0xff]
  %v1341 = vunpack.c.l.b16 %v317
  %v1342 = vunpack.c.h.b16 %v317
  %v1343 = vunpack.c.l.b16 %v318
  %v1344 = vunpack.c.h.b16 %v318
  %v1345 = vunpack.c.l.b16 %v319
  %v1346 = vunpack.c.h.b16 %v319
  %v1347 = vunpack.c.l.b16 %v320
  %v1348 = vunpack.c.h.b16 %v320
  %v1349 = vunpack.c.l.b16 %v321
  %v1350 = vunpack.c.h.b16 %v321
  %v1351 = vunpack.c.l.b16 %v322
  %v1352 = vunpack.c.h.b16 %v322
  %v1353 = vunpack.c.l.b16 %v323
  %v1354 = vunpack.c.h.b16 %v323
  %v1355 = vunpack.c.l.b16 %v324
  %v1356 = vunpack.c.h.b16 %v324
  %v1357 = vunpack.c.l.b16 %v325
  %v1358 = vunpack.c.h.b16 %v325
  %v1359 = vunpack.c.l.b16 %v326
  %v1360 = vunpack.c.h.b16 %v326
  %v1361 = vunpack.c.l.b16 %v327
  %v1362 = vunpack.c.h.b16 %v327
  %v1363 = vunpack.c.l.b16 %v328
  %v1364 = vunpack.c.h.b16 %v328
  %v1365 = vunpack.c.l.b16 %v329
  %v1366 = vunpack.c.h.b16 %v329
  %v1367 = vunpack.c.l.b16 %v330
  %v1368 = vunpack.c.h.b16 %v330
  %v1369 = vunpack.c.l.b16 %v331
  %v1370 = vunpack.c.h.b16 %v331
  %v1371 = vunpack.c.l.b16 %v332
  %v1372 = vunpack.c.h.b16 %v332
  %v1373 = vunpack.c.l.b16 %v333
  %v1374 = vunpack.c.h.b16 %v333
  %v1375 = vunpack.c.l.b16 %v334
  %v1376 = vunpack.c.h.b16 %v334
  %v1377 = vunpack.c.l.b16 %v335
  %v1378 = vunpack.c.h.b16 %v335
  %v1379 = vunpack.c.l.b16 %v336
  %v1380 = vunpack.c.h.b16 %v336
  %v1381 = vunpack.c.l.b16 %v337
  %v1382 = vunpack.c.h.b16 %v337
  %v1383 = vunpack.c.l.b16 %v338
  %v1384 = vunpack.c.h.b16 %v338
  %v1385 = vunpack.c.l.b16 %v339
  %v1386 = vunpack.c.h.b16 %v339
  %v1387 = vunpack.c.l.b16 %v340
  %v1388 = vunpack.c.h.b16 %v340
  %v1389 = vunpack.c.l.b16 %v341
  %v1390 = vunpack.c.h.b16 %v341
  %v1391 = vunpack.c.l.b16 %v342
  %v1392 = vunpack.c.h.b16 %v342
  %v1393 = vunpack.c.l.b16 %v343
  %v1394 = vunpack.c.h.b16 %v343
  %v1395 = vunpack.c.l.b16 %v344
  %v1396 = vunpack.c.h.b16 %v344
  %v1397 = vunpack.c.l.b16 %v345
  %v1398 = vunpack.c.h.b16 %v345
  %v1399 = vunpack.c.l.b16 %v346
  %v1400 = vunpack.c.h.b16 %v346
  %v1401 = vunpack.c.l.b16 %v347
  %v1402 = vunpack.c.h.b16 %v347
  %v1403 = vunpack.c.l.b16 %v348
  %v1404 = vunpack.c.h.b16 %v348
  %v1405 = vunpack.c.l.b16 %v349
  %v1406 = vunpack.c.h.b16 %v349
  %v1407 = vunpack.c.l.b16 %v350
  %v1408 = vunpack.c.h.b16 %v350
  %v1409 = vunpack.c.l.b16 %v351
  %v1410 = vunpack.c.h.b16 %v351
  %v1411 = vunpack.c.l.b16 %v352
  %v1412 = vunpack.c.h.b16 %v352
  %v1413 = vunpack.c.l.b16 %v353
  %v1414 = vunpack.c.h.b16 %v353
  %v1415 = vunpack.c.l.b16 %v354
  %v1416 = vunpack.c.h.b16 %v354
  %v1417 = vunpack.c.l.b16 %v355
  %v1418 = vunpack.c.h.b16 %v355
  %v1419 = vunpack.c.l.b16 %v356
  %v1420 = vunpack.c.h.b16 %v356
  %v1421 = vunpack.c.l.b16 %v357
  %v1422 = vunpack.c.h.b16 %v357
  %v1423 = vunpack.c.l.b16 %v358
  %v1424 = vunpack.c.h.b16 %v358
  %v1425 = vunpack.c.l.b16 %v359
  %v1426 = vunpack.c.h.b16 %v359
  %v1427 = vunpack.c.l.b16 %v360
  %v1428 = vunpack.c.h.b16 %v360
  %v1429 = vunpack.c.l.b16 %v361
  %v1430 = vunpack.c.h.b16 %v361
  %v1431 = vunpack.c.l.b16 %v362
  %v1432 = vunpack.c.h.b16 %v362
  %v1433 = vunpack.c.l.b16 %v363
  %v1434 = vunpack.c.h.b16 %v363
  %v1435 = vunpack.c.l.b16 %v364
  %v1436 = vunpack.c.h.b16 %v364
  %v1437 = vunpack.c.l.b16 %v365
  %v1438 = vunpack.c.h.b16 %v365
  %v1439 = vunpack.c.l.b16 %v366
  %v1440 = vunpack.c.h.b16 %v366
  %v1441 = vunpack.c.l.b16 %v367
  %v1442 = vunpack.c.h.b16 %v367
  %v1443 = vunpack.c.l.b16 %v368
  %v1444 = vunpack.c.h.b16 %v368
  %v1445 = vunpack.c.l.b16 %v369
  %v1446 = vunpack.c.h.b16 %v369
  %v1447 = vunpack.c.l.b16 %v370
  %v1448 = vunpack.c.h.b16 %v370
  %v1449 = vunpack.c.l.b16 %v371
  %v1450 = vunpack.c.h.b16 %v371
  %v1451 = vunpack.c.l.b16 %v372
  %v1452 = vunpack.c.h.b16 %v372
  %v1453 = vunpack.c.l.b16 %v373
  %v1454 = vunpack.c.h.b16 %v373
  %v1455 = vunpack.c.l.b16 %v374
  %v1456 = vunpack.c.h.b16 %v374
  %v1457 = vunpack.c.l.b16 %v375
  %v1458 = vunpack.c.h.b16 %v375
  %v1459 = vunpack.c.l.b16 %v376
  %v1460 = vunpack.c.h.b16 %v376
  %v1461 = vunpack.c.l.b16 %v377
  %v1462 = vunpack.c.h.b16 %v377
  %v1463 = vunpack.c.l.b16 %v378
  %v1464 = vunpack.c.h.b16 %v378
  %v1465 = vunpack.c.l.b16 %v379
  %v1466 = vunpack.c.h.b16 %v379
  %v1467 = vunpack.c.l.b16 %v380
  %v1468 = vunpack.c.h.b16 %v380
  %v1469 = vunpack.c.l.b16 %v381
  %v1470 = vunpack.c.h.b16 %v381
  %v1471 = vunpack.c.l.b16 %v382
  %v1472 = vunpack.c.h.b16 %v382
  %v1473 = vunpack.c.l.b16 %v383
  %v1474 = vunpack.c.h.b16 %v383
  %v1475 = vunpack.c.l.b16 %v384
  %v1476 = vunpack.c.h.b16 %v384
  %v1477 = vunpack.c.l.b16 %v385
  %v1478 = vunpack.c.h.b16 %v385
  %v1479 = vunpack.c.l.b16 %v386
  %v1480 = vunpack.c.h.b16 %v386
  %v1481 = vunpack.c.l.b16 %v387
  %v1482 = vunpack.c.h.b16 %v387
  %v1483 = vunpack.c.l.b16 %v388
  %v1484 = vunpack.c.h.b16 %v388
  %v1485 = vunpack.c.l.b16 %v389
  %v1486 = vunpack.c.h.b16 %v389
  %v1487 = vunpack.c.l.b16 %v390
  %v1488 = vunpack.c.h.b16 %v390
  %v1489 = vunpack.c.l.b16 %v391
  %v1490 = vunpack.c.h.b16 %v391
  %v1491 = vunpack.c.l.b16 %v392
  %v1492 = vunpack.c.h.b16 %v392
  %v1493 = vunpack.c.l.b16 %v393
  %v1494 = vunpack.c.h.b16 %v393
  %v1495 = vunpack.c.l.b16 %v394
  %v1496 = vunpack.c.h.b16 %v394
  %v1497 = vunpack.c.l.b16 %v395
  %v1498 = vunpack.c.h.b16 %v395
  %v1499 = vunpack.c.l.b16 %v396
  %v1500 = vunpack.c.h.b16 %v396
  %v1501 = vunpack.c.l.b16 %v397
  %v1502 = vunpack.c.h.b16 %v397
  %v1503 = vunpack.c.l.b16 %v398
  %v1504 = vunpack.c.h.b16 %v398
  %v1505 = vunpack.c.l.b16 %v399
  %v1506 = vunpack.c.h.b16 %v399
  %v1507 = vunpack.c.l.b16 %v400
  %v1508 = vunpack.c.h.b16 %v400
  %v1509 = vunpack.c.l.b16 %v401
  %v1510 = vunpack.c.h.b16 %v401
  %v1511 = vunpack.c.l.b16 %v402
  %v1512 = vunpack.c.h.b16 %v402
  %v1513 = vunpack.c.l.b16 %v403
  %v1514 = vunpack.c.h.b16 %v403
  %v1515 = vunpack.c.l.b16 %v404
  %v1516 = vunpack.c.h.b16 %v404
  %v1517 = vunpack.c.l.b16 %v405
  %v1518 = vunpack.c.h.b16 %v405
  %v1519 = vunpack.c.l.b16 %v406
  %v1520 = vunpack.c.h.b16 %v406
  %v1521 = vunpack.c.l.b16 %v407
  %v1522 = vunpack.c.h.b16 %v407
  %v1523 = vunpack.c.l.b16 %v408
  %v1524 = vunpack.c.h.b16 %v408
  %v1525 = vunpack.c.l.b16 %v409
  %v1526 = vunpack.c.h.b16 %v409
  %v1527 = vunpack.c.l.b16 %v410
  %v1528 = vunpack.c.h.b16 %v410
  %v1529 = vunpack.c.l.b16 %v411
  %v1530 = vunpack.c.h.b16 %v411
  %v1531 = vunpack.c.l.b16 %v412
  %v1532 = vunpack.c.h.b16 %v412
  %v1533 = vunpack.c.l.b16 %v413
  %v1534 = vunpack.c.h.b16 %v413
  %v1535 = vunpack.c.l.b16 %v414
  %v1536 = vunpack.c.h.b16 %v414
  %v1537 = vunpack.c.l.b16 %v415
  %v1538 = vunpack.c.h.b16 %v415
  %v1539 = vunpack.c.l.b16 %v416
  %v1540 = vunpack.c.h.b16 %v416
  %v1541 = vunpack.c.l.b16 %v417
  %v1542 = vunpack.c.h.b16 %v417
  %v1543 = vunpack.c.l.b16 %v418
  %v1544 = vunpack.c.h.b16 %v418
  %v1545 = vunpack.c.l.b16 %v419
  %v1546 = vunpack.c.h.b16 %v419
  %v1547 = vunpack.c.l.b16 %v420
  %v1548 = vunpack.c.h.b16 %v420
  %v1549 = vunpack.c.l.b16 %v421
  %v1550 = vunpack.c.h.b16 %v421
  %v1551 = vunpack.c.l.b16 %v422
  %v1552 = vunpack.c.h.b16 %v422
  %v1553 = vunpack.c.l.b16 %v423
  %v1554 = vunpack.c.h.b16 %v423
  %v1555 = vunpack.c.l.b16 %v424
  %v1556 = vunpack.c.h.b16 %v424
  %v1557 = vunpack.c.l.b16 %v425
  %v1558 = vunpack.c.h.b16 %v425
  %v1559 = vunpack.c.l.b16 %v426
  %v1560 = vunpack.c.h.b16 %v426
  %v1561 = vunpack.c.l.b16 %v427
  %v1562 = vunpack.c.h.b16 %v427
  %v1563 = vunpack.c.l.b16 %v428
  %v1564 = vunpack.c.h.b16 %v428
  %v1565 = vunpack.c.l.b16 %v429
  %v1566 = vunpack.c.h.b16 %v429
  %v1567 = vunpack.c.l.b16 %v430
  %v1568 = vunpack.c.h.b16 %v430
  %v1569 = vunpack.c.l.b16 %v431
  %v1570 = vunpack.c.h.b16 %v431
  %v1571 = vunpack.c.l.b16 %v432
  %v1572 = vunpack.c.h.b16 %v432
  %v1573 = vunpack.c.l.b16 %v433
  %v1574 = vunpack.c.h.b16 %v433
  %v1575 = vunpack.c.l.b16 %v434
  %v1576 = vunpack.c.h.b16 %v434
  %v1577 = vunpack.c.l.b16 %v435
  %v1578 = vunpack.c.h.b16 %v435
  %v1579 = vunpack.c.l.b16 %v436
  %v1580 = vunpack.c.h.b16 %v436
  %v1581 = vunpack.c.l.b16 %v437
  %v1582 = vunpack.c.h.b16 %v437
  %v1583 = vunpack.c.l.b16 %v438
  %v1584 = vunpack.c.h.b16 %v438
  %v1585 = vunpack.c.l.b16 %v439
  %v1586 = vunpack.c.h.b16 %v439
  %v1587 = vunpack.c.l.b16 %v440
  %v1588 = vunpack.c.h.b16 %v440
  %v1589 = vunpack.c.l.b16 %v441
  %v1590 = vunpack.c.h.b16 %v441
  %v1591 = vunpack.c.l.b16 %v442
  %v1592 = vunpack.c.h.b16 %v442
  %v1593 = vunpack.c.l.b16 %v443
  %v1594 = vunpack.c.h.b16 %v443
  %v1595 = vunpack.c.l.b16 %v444
  %v1596 = vunpack.c.h.b16 %v444
  %v1597 = vunpack.c.l.b16 %v445
  %v1598 = vunpack.c.h.b16 %v445
  %v1599 = vunpack.c.l.b16 %v446
  %v1600 = vunpack.c.h.b16 %v446
  %v1601 = vunpack.c.l.b16 %v447
  %v1602 = vunpack.c.h.b16 %v447
  %v1603 = vunpack.c.l.b16 %v448
  %v1604 = vunpack.c.h.b16 %v448
  %v1605 = vunpack.c.l.b16 %v449
  %v1606 = vunpack.c.h.b16 %v449
  %v1607 = vunpack.c.l.b16 %v450
  %v1608 = vunpack.c.h.b16 %v450
  %v1609 = vunpack.c.l.b16 %v451
  %v1610 = vunpack.c.h.b16 %v451
  %v1611 = vunpack.c.l.b16 %v452
  %v1612 = vunpack.c.h.b16 %v452
  %v1613 = vunpack.c.l.b16 %v453
  %v1614 = vunpack.c.h.b16 %v453
  %v1615 = vunpack.c.l.b16 %v454
  %v1616 = vunpack.c.h.b16 %v454
  %v1617 = vunpack.c.l.b16 %v455
  %v1618 = vunpack.c.h.b16 %v455
  %v1619 = vunpack.c.l.b16 %v456
  %v1620 = vunpack.c.h.b16 %v456
  %v1621 = vunpack.c.l.b16 %v457
  %v1622 = vunpack.c.h.b16 %v457
  %v1623 = vunpack.c.l.b16 %v458
  %v1624 = vunpack.c.h.b16 %v458
  %v1625 = vunpack.c.l.b16 %v459
  %v1626 = vunpack.c.h.b16 %v459
  %v1627 = vunpack.c.l.b16 %v460
  %v1628 = vunpack.c.h.b16 %v460
  %v1629 = vunpack.c.l.b16 %v461
  %v1630 = vunpack.c.h.b16 %v461
  %v1631 = vunpack.c.l.b16 %v462
  %v1632 = vunpack.c.h.b16 %v462
  %v1633 = vunpack.c.l.b16 %v463
  %v1634 = vunpack.c.h.b16 %v463
  %v1635 = vunpack.c.l.b16 %v464
  %v1636 = vunpack.c.h.b16 %v464
  %v1637 = vunpack.c.l.b16 %v465
  %v1638 = vunpack.c.h.b16 %v465
  %v1639 = vunpack.c.l.b16 %v466
  %v1640 = vunpack.c.h.b16 %v466
  %v1641 = vunpack.c.l.b16 %v467
  %v1642 = vunpack.c.h.b16 %v467
  %v1643 = vunpack.c.l.b16 %v468
  %v1644 = vunpack.c.h.b16 %v468
  %v1645 = vunpack.c.l.b16 %v469
  %v1646 = vunpack.c.h.b16 %v469
  %v1647 = vunpack.c.l.b16 %v470
  %v1648 = vunpack.c.h.b16 %v470
  %v1649 = vunpack.c.l.b16 %v471
  %v1650 = vunpack.c.h.b16 %v471
  %v1651 = vunpack.c.l.b16 %v472
  %v1652 = vunpack.c.h.b16 %v472
  %v1653 = vunpack.c.l.b16 %v473
  %v1654 = vunpack.c.h.b16 %v473
  %v1655 = vunpack.c.l.b16 %v474
  %v1656 = vunpack.c.h.b16 %v474
  %v1657 = vunpack.c.l.b16 %v475
  %v1658 = vunpack.c.h.b16 %v475
  %v1659 = vunpack.c.l.b16 %v476
  %v1660 = vunpack.c.h.b16 %v476
  %v1661 = vunpack.c.l.b16 %v477
  %v1662 = vunpack.c.h.b16 %v477
  %v1663 = vunpack.c.l.b16 %v478
  %v1664 = vunpack.c.h.b16 %v478
  %v1665 = vunpack.c.l.b16 %v479
  %v1666 = vunpack.c.h.b16 %v479
  %v1667 = vunpack.c.l.b16 %v480
  %v1668 = vunpack.c.h.b16 %v480
  %v1669 = vunpack.c.l.b16 %v481
  %v1670 = vunpack.c.h.b16 %v481
  %v1671 = vunpack.c.l.b16 %v482
  %v1672 = vunpack.c.h.b16 %v482
  %v1673 = vunpack.c.l.b16 %v483
  %v1674 = vunpack.c.h.b16 %v483
  %v1675 = vunpack.c.l.b16 %v484
  %v1676 = vunpack.c.h.b16 %v484
  %v1677 = vunpack.c.l.b16 %v485
  %v1678 = vunpack.c.h.b16 %v485
  %v1679 = vunpack.c.l.b16 %v486
  %v1680 = vunpack.c.h.b16 %v486
  %v1681 = vunpack.c.l.b16 %v487
  %v1682 = vunpack.c.h.b16 %v487
  %v1683 = vunpack.c.l.b16 %v488
  %v1684 = vunpack.c.h.b16 %v488
  %v1685 = vunpack.c.l.b16 %v489
  %v1686 = vunpack.c.h.b16 %v489
  %v1687 = vunpack.c.l.b16 %v490
  %v1688 = vunpack.c.h.b16 %v490
  %v1689 = vunpack.c.l.b16 %v491
  %v1690 = vunpack.c.h.b16 %v491
  %v1691 = vunpack.c.l.b16 %v492
  %v1692 = vunpack.c.h.b16 %v492
  %v1693 = vunpack.c.l.b16 %v493
  %v1694 = vunpack.c.h.b16 %v493
  %v1695 = vunpack.c.l.b16 %v494
  %v1696 = vunpack.c.h.b16 %v494
  %v1697 = vunpack.c.l.b16 %v495
  %v1698 = vunpack.c.h.b16 %v495
  %v1699 = vunpack.c.l.b16 %v496
  %v1700 = vunpack.c.h.b16 %v496
  %v1701 = vunpack.c.l.b16 %v497
  %v1702 = vunpack.c.h.b16 %v497
  %v1703 = vunpack.c.l.b16 %v498
  %v1704 = vunpack.c.h.b16 %v498
  %v1705 = vunpack.c.l.b16 %v499
  %v1706 = vunpack.c.h.b16 %v499
  %v1707 = vunpack.c.l.b16 %v500
  %v1708 = vunpack.c.h.b16 %v500
  %v1709 = vunpack.c.l.b16 %v501
  %v1710 = vunpack.c.h.b16 %v501
  %v1711 = vunpack.c.l.b16 %v502
  %v1712 = vunpack.c.h.b16 %v502
  %v1713 = vunpack.c.l.b16 %v503
  %v1714 = vunpack.c.h.b16 %v503
  %v1715 = vunpack.c.l.b16 %v504
  %v1716 = vunpack.c.h.b16 %v504
  %v1717 = vunpack.c.l.b16 %v505
  %v1718 = vunpack.c.h.b16 %v505
  %v1719 = vunpack.c.l.b16 %v506
  %v1720 = vunpack.c.h.b16 %v506
  %v1721 = vunpack.c.l.b16 %v507
  %v1722 = vunpack.c.h.b16 %v507
  %v1723 = vunpack.c.l.b16 %v508
  %v1724 = vunpack.c.h.b16 %v508
  %v1725 = vunpack.c.l.b16 %v509
  %v1726 = vunpack.c.h.b16 %v509
  %v1727 = vunpack.c.l.b16 %v510
  %v1728 = vunpack.c.h.b16 %v510
  %v1729 = vunpack.c.l.b16 %v511
  %v1730 = vunpack.c.h.b16 %v511
  %v1731 = vunpack.c.l.b16 %v512
  %v1732 = vunpack.c.h.b16 %v512
  %v1733 = vunpack.c.l.b16 %v513
  %v1734 = vunpack.c.h.b16 %v513
  %v1735 = vunpack.c.l.b16 %v514
  %v1736 = vunpack.c.h.b16 %v514
  %v1737 = vunpack.c.l.b16 %v515
  %v1738 = vunpack.c.h.b16 %v515
  %v1739 = vunpack.c.l.b16 %v516
  %v1740 = vunpack.c.h.b16 %v516
  %v1741 = vunpack.c.l.b16 %v517
  %v1742 = vunpack.c.h.b16 %v517
  %v1743 = vunpack.c.l.b16 %v518
  %v1744 = vunpack.c.h.b16 %v518
  %v1745 = vunpack.c.l.b16 %v519
  %v1746 = vunpack.c.h.b16 %v519
  %v1747 = vunpack.c.l.b16 %v520
  %v1748 = vunpack.c.h.b16 %v520
  %v1749 = vunpack.c.l.b16 %v521
  %v1750 = vunpack.c.h.b16 %v521
  %v1751 = vunpack.c.l.b16 %v522
  %v1752 = vunpack.c.h.b16 %v522
  %v1753 = vunpack.c.l.b16 %v523
  %v1754 = vunpack.c.h.b16 %v523
  %v1755 = vunpack.c.l.b16 %v524
  %v1756 = vunpack.c.h.b16 %v524
  %v1757 = vunpack.c.l.b16 %v525
  %v1758 = vunpack.c.h.b16 %v525
  %v1759 = vunpack.c.l.b16 %v526
  %v1760 = vunpack.c.h.b16 %v526
  %v1761 = vunpack.c.l.b16 %v527
  %v1762 = vunpack.c.h.b16 %v527
  %v1763 = vunpack.c.l.b16 %v528
  %v1764 = vunpack.c.h.b16 %v528
  %v1765 = vunpack.c.l.b16 %v529
  %v1766 = vunpack.c.h.b16 %v529
  %v1767 = vunpack.c.l.b16 %v530
  %v1768 = vunpack.c.h.b16 %v530
  %v1769 = vunpack.c.l.b16 %v531
  %v1770 = vunpack.c.h.b16 %v531
  %v1771 = vunpack.c.l.b16 %v532
  %v1772 = vunpack.c.h.b16 %v532
  %v1773 = vunpack.c.l.b16 %v533
  %v1774 = vunpack.c.h.b16 %v533
  %v1775 = vunpack.c.l.b16 %v534
  %v1776 = vunpack.c.h.b16 %v534
  %v1777 = vunpack.c.l.b16 %v535
  %v1778 = vunpack.c.h.b16 %v535
  %v1779 = vunpack.c.l.b16 %v536
  %v1780 = vunpack.c.h.b16 %v536
  %v1781 = vunpack.c.l.b16 %v537
  %v1782 = vunpack.c.h.b16 %v537
  %v1783 = vunpack.c.l.b16 %v538
  %v1784 = vunpack.c.h.b16 %v538
  %v1785 = vunpack.c.l.b16 %v539
  %v1786 = vunpack.c.h.b16 %v539
  %v1787 = vunpack.c.l.b16 %v540
  %v1788 = vunpack.c.h.b16 %v540
  %v1789 = vunpack.c.l.b16 %v541
  %v1790 = vunpack.c.h.b16 %v541
  %v1791 = vunpack.c.l.b16 %v542
  %v1792 = vunpack.c.h.b16 %v542
  %v1793 = vunpack.c.l.b16 %v543
  %v1794 = vunpack.c.h.b16 %v543
  %v1795 = vunpack.c.l.b16 %v544
  %v1796 = vunpack.c.h.b16 %v544
  %v1797 = vunpack.c.l.b16 %v545
  %v1798 = vunpack.c.h.b16 %v545
  %v1799 = vunpack.c.l.b16 %v546
  %v1800 = vunpack.c.h.b16 %v546
  %v1801 = vunpack.c.l.b16 %v547
  %v1802 = vunpack.c.h.b16 %v547
  %v1803 = vunpack.c.l.b16 %v548
  %v1804 = vunpack.c.h.b16 %v548
  %v1805 = vunpack.c.l.b16 %v549
  %v1806 = vunpack.c.h.b16 %v549
  %v1807 = vunpack.c.l.b16 %v550
  %v1808 = vunpack.c.h.b16 %v550
  %v1809 = vunpack.c.l.b16 %v551
  %v1810 = vunpack.c.h.b16 %v551
  %v1811 = vunpack.c.l.b16 %v552
  %v1812 = vunpack.c.h.b16 %v552
  %v1813 = vunpack.c.l.b16 %v553
  %v1814 = vunpack.c.h.b16 %v553
  %v1815 = vunpack.c.l.b16 %v554
  %v1816 = vunpack.c.h.b16 %v554
  %v1817 = vunpack.c.l.b16 %v555
  %v1818 = vunpack.c.h.b16 %v555
  %v1819 = vunpack.c.l.b16 %v556
  %v1820 = vunpack.c.h.b16 %v556
  %v1821 = vunpack.c.l.b16 %v557
  %v1822 = vunpack.c.h.b16 %v557
  %v1823 = vunpack.c.l.b16 %v558
  %v1824 = vunpack.c.h.b16 %v558
  %v1825 = vunpack.c.l.b16 %v559
  %v1826 = vunpack.c.h.b16 %v559
  %v1827 = vunpack.c.l.b16 %v560
  %v1828 = vunpack.c.h.b16 %v560
  %v1829 = vunpack.c.l.b16 %v561
  %v1830 = vunpack.c.h.b16 %v561
  %v1831 = vunpack.c.l.b16 %v562
  %v1832 = vunpack.c.h.b16 %v562
  %v1833 = vunpack.c.l.b16 %v563
  %v1834 = vunpack.c.h.b16 %v563
  %v1835 = vunpack.c.l.b16 %v564
  %v1836 = vunpack.c.h.b16 %v564
  %v1837 = vunpack.c.l.b16 %v565
  %v1838 = vunpack.c.h.b16 %v565
  %v1839 = vunpack.c.l.b16 %v566
  %v1840 = vunpack.c.h.b16 %v566
  %v1841 = vunpack.c.l.b16 %v567
  %v1842 = vunpack.c.h.b16 %v567
  %v1843 = vunpack.c.l.b16 %v568
  %v1844 = vunpack.c.h.b16 %v568
  %v1845 = vunpack.c.l.b16 %v569
  %v1846 = vunpack.c.h.b16 %v569
  %v1847 = vunpack.c.l.b16 %v570
  %v1848 = vunpack.c.h.b16 %v570
  %v1849 = vunpack.c.l.b16 %v571
  %v1850 = vunpack.c.h.b16 %v571
  %v1851 = vunpack.c.l.b16 %v572
  %v1852 = vunpack.c.h.b16 %v572
  %v1853 = vunpack.c.l.b16 %v573
  %v1854 = vunpack.c.h.b16 %v573
  %v1855 = vunpack.c.l.b16 %v574
  %v1856 = vunpack.c.h.b16 %v574
  %v1857 = vunpack.c.l.b16 %v575
  %v1858 = vunpack.c.h.b16 %v575
  %v1859 = vunpack.c.l.b16 %v576
  %v1860 = vunpack.c.h.b16 %v576
  %v1861 = vunpack.c.l.b16 %v577
  %v1862 = vunpack.c.h.b16 %v577
  %v1863 = vunpack.c.l.b16 %v578
  %v1864 = vunpack.c.h.b16 %v578
  %v1865 = vunpack.c.l.b16 %v579
  %v1866 = vunpack.c.h.b16 %v579
  %v1867 = vunpack.c.l.b16 %v580
  %v1868 = vunpack.c.h.b16 %v580
  %v1869 = vunpack.c.l.b16 %v581
  %v1870 = vunpack.c.h.b16 %v581
  %v1871 = vunpack.c.l.b16 %v582
  %v1872 = vunpack.c.h.b16 %v582
  %v1873 = vunpack.c.l.b16 %v583
  %v1874 = vunpack.c.h.b16 %v583
  %v1875 = vunpack.c.l.b16 %v584
  %v1876 = vunpack.c.h.b16 %v584
  %v1877 = vunpack.c.l.b16 %v585
  %v1878 = vunpack.c.h.b16 %v585
  %v1879 = vunpack.c.l.b16 %v586
  %v1880 = vunpack.c.h.b16 %v586
  %v1881 = vunpack.c.l.b16 %v587
  %v1882 = vunpack.c.h.b16 %v587
  %v1883 = vunpack.c.l.b16 %v588
  %v1884 = vunpack.c.h.b16 %v588
  %v1885 = vunpack.c.l.b16 %v589
  %v1886 = vunpack.c.h.b16 %v589
  %v1887 = vunpack.c.l.b16 %v590
  %v1888 = vunpack.c.h.b16 %v590
  %v1889 = vunpack.c.l.b16 %v591
  %v1890 = vunpack.c.h.b16 %v591
  %v1891 = vunpack.c.l.b16 %v592
  %v1892 = vunpack.c.h.b16 %v592
  %v1893 = vunpack.c.l.b16 %v593
  %v1894 = vunpack.c.h.b16 %v593
  %v1895 = vunpack.c.l.b16 %v594
  %v1896 = vunpack.c.h.b16 %v594
  %v1897 = vunpack.c.l.b16 %v595
  %v1898 = vunpack.c.h.b16 %v595
  %v1899 = vunpack.c.l.b16 %v596
  %v1900 = vunpack.c.h.b16 %v596
  %v1901 = vunpack.c.l.b16 %v597
  %v1902 = vunpack.c.h.b16 %v597
  %v1903 = vunpack.c.l.b16 %v598
  %v1904 = vunpack.c.h.b16 %v598
  %v1905 = vunpack.c.l.b16 %v599
  %v1906 = vunpack.c.h.b16 %v599
  %v1907 = vunpack.c.l.b16 %v600
  %v1908 = vunpack.c.h.b16 %v600
  %v1909 = vunpack.c.l.b16 %v601
  %v1910 = vunpack.c.h.b16 %v601
  %v1911 = vunpack.c.l.b16 %v602
  %v1912 = vunpack.c.h.b16 %v602
  %v1913 = vunpack.c.l.b16 %v603
  %v1914 = vunpack.c.h.b16 %v603
  %v1915 = vunpack.c.l.b16 %v604
  %v1916 = vunpack.c.h.b16 %v604
  %v1917 = vunpack.c.l.b16 %v605
  %v1918 = vunpack.c.h.b16 %v605
  %v1919 = vunpack.c.l.b16 %v606
  %v1920 = vunpack.c.h.b16 %v606
  %v1921 = vunpack.c.l.b16 %v607
  %v1922 = vunpack.c.h.b16 %v607
  %v1923 = vunpack.c.l.b16 %v608
  %v1924 = vunpack.c.h.b16 %v608
  %v1925 = vunpack.c.l.b16 %v609
  %v1926 = vunpack.c.h.b16 %v609
  %v1927 = vunpack.c.l.b16 %v610
  %v1928 = vunpack.c.h.b16 %v610
  %v1929 = vunpack.c.l.b16 %v611
  %v1930 = vunpack.c.h.b16 %v611
  %v1931 = vunpack.c.l.b16 %v612
  %v1932 = vunpack.c.h.b16 %v612
  %v1933 = vunpack.c.l.b16 %v613
  %v1934 = vunpack.c.h.b16 %v613
  %v1935 = vunpack.c.l.b16 %v614
  %v1936 = vunpack.c.h.b16 %v614
  %v1937 = vunpack.c.l.b16 %v615
  %v1938 = vunpack.c.h.b16 %v615
  %v1939 = vunpack.c.l.b16 %v616
  %v1940 = vunpack.c.h.b16 %v616
  %v1941 = vunpack.c.l.b16 %v617
  %v1942 = vunpack.c.h.b16 %v617
  %v1943 = vunpack.c.l.b16 %v618
  %v1944 = vunpack.c.h.b16 %v618
  %v1945 = vunpack.c.l.b16 %v619
  %v1946 = vunpack.c.h.b16 %v619
  %v1947 = vunpack.c.l.b16 %v620
  %v1948 = vunpack.c.h.b16 %v620
  %v1949 = vunpack.c.l.b16 %v621
  %v1950 = vunpack.c.h.b16 %v621
  %v1951 = vunpack.c.l.b16 %v622
  %v1952 = vunpack.c.h.b16 %v622
  %v1953 = vunpack.c.l.b16 %v623
  %v1954 = vunpack.c.h.b16 %v623
  %v1955 = vunpack.c.l.b16 %v624
  %v1956 = vunpack.c.h.b16 %v624
  %v1957 = vunpack.c.l.b16 %v625
  %v1958 = vunpack.c.h.b16 %v625
  %v1959 = vunpack.c.l.b16 %v626
  %v1960 = vunpack.c.h.b16 %v626
  %v1961 = vunpack.c.l.b16 %v627
  %v1962 = vunpack.c.h.b16 %v627
  %v1963 = vunpack.c.l.b16 %v628
  %v1964 = vunpack.c.h.b16 %v628
  %v1965 = vunpack.c.l.b16 %v629
  %v1966 = vunpack.c.h.b16 %v629
  %v1967 = vunpack.c.l.b16 %v630
  %v1968 = vunpack.c.h.b16 %v630
  %v1969 = vunpack.c.l.b16 %v631
  %v1970 = vunpack.c.h.b16 %v631
  %v1971 = vunpack.c.l.b16 %v632
  %v1972 = vunpack.c.h.b16 %v632
  %v1973 = vunpack.c.l.b16 %v633
  %v1974 = vunpack.c.h.b16 %v633
  %v1975 = vunpack.c.l.b16 %v634
  %v1976 = vunpack.c.h.b16 %v634
  %v1977 = vunpack.c.l.b16 %v635
  %v1978 = vunpack.c.h.b16 %v635
  %v1979 = vunpack.c.l.b16 %v636
  %v1980 = vunpack.c.h.b16 %v636
  %v1981 = vunpack.c.l.b16 %v637
  %v1982 = vunpack.c.h.b16 %v637
  %v1983 = vunpack.c.l.b16 %v638
  %v1984 = vunpack.c.h.b16 %v638
  %v1985 = vunpack.c.l.b16 %v639
  %v1986 = vunpack.c.h.b16 %v639
  %v1987 = vunpack.c.l.b16 %v640
  %v1988 = vunpack.c.h.b16 %v640
  %v1989 = vunpack.c.l.b16 %v641
  %v1990 = vunpack.c.h.b16 %v641
  %v1991 = vunpack.c.l.b16 %v642
  %v1992 = vunpack.c.h.b16 %v642
  %v1993 = vunpack.c.l.b16 %v643
  %v1994 = vunpack.c.h.b16 %v643
  %v1995 = vunpack.c.l.b16 %v644
  %v1996 = vunpack.c.h.b16 %v644
  %v1997 = vunpack.c.l.b16 %v645
  %v1998 = vunpack.c.h.b16 %v645
  %v1999 = vunpack.c.l.b16 %v646
  %v2000 = vunpack.c.h.b16 %v646
  %v2001 = vunpack.c.l.b16 %v647
  %v2002 = vunpack.c.h.b16 %v647
  %v2003 = vunpack.c.l.b16 %v648
  %v2004 = vunpack.c.h.b16 %v648
  %v2005 = vunpack.c.l.b16 %v649
  %v2006 = vunpack.c.h.b16 %v649
  %v2007 = vunpack.c.l.b16 %v650
  %v2008 = vunpack.c.h.b16 %v650
  %v2009 = vunpack.c.l.b16 %v651
  %v2010 = vunpack.c.h.b16 %v651
  %v2011 = vunpack.c.l.b16 %v652
  %v2012 = vunpack.c.h.b16 %v652
  %v2013 = vunpack.c.l.b16 %v653
  %v2014 = vunpack.c.h.b16 %v653
  %v2015 = vunpack.c.l.b16 %v654
  %v2016 = vunpack.c.h.b16 %v654
  %v2017 = vunpack.c.l.b16 %v655
  %v2018 = vunpack.c.h.b16 %v655
  %v2019 = vunpack.c.l.b16 %v656
  %v2020 = vunpack.c.h.b16 %v656
  %v2021 = vunpack.c.l.b16 %v657
  %v2022 = vunpack.c.h.b16 %v657
  %v2023 = vunpack.c.l.b16 %v658
  %v2024 = vunpack.c.h.b16 %v658
  %v2025 = vunpack.c.l.b16 %v659
  %v2026 = vunpack.c.h.b16 %v659
  %v2027 = vunpack.c.l.b16 %v660
  %v2028 = vunpack.c.h.b16 %v660
  %v2029 = vunpack.c.l.b16 %v661
  %v2030 = vunpack.c.h.b16 %v661
  %v2031 = vunpack.c.l.b16 %v662
  %v2032 = vunpack.c.h.b16 %v662
  %v2033 = vunpack.c.l.b16 %v663
  %v2034 = vunpack.c.h.b16 %v663
  %v2035 = vunpack.c.l.b16 %v664
  %v2036 = vunpack.c.h.b16 %v664
  %v2037 = vunpack.c.l.b16 %v665
  %v2038 = vunpack.c.h.b16 %v665
  %v2039 = vunpack.c.l.b16 %v666
  %v2040 = vunpack.c.h.b16 %v666
  %v2041 = vunpack.c.l.b16 %v667
  %v2042 = vunpack.c.h.b16 %v667
  %v2043 = vunpack.c.l.b16 %v668
  %v2044 = vunpack.c.h.b16 %v668
  %v2045 = vunpack.c.l.b16 %v669
  %v2046 = vunpack.c.h.b16 %v669
  %v2047 = vunpack.c.l.b16 %v670
  %v2048 = vunpack.c.h.b16 %v670
  %v2049 = vunpack.c.l.b16 %v671
  %v2050 = vunpack.c.h.b16 %v671
  %v2051 = vunpack.c.l.b16 %v672
  %v2052 = vunpack.c.h.b16 %v672
  %v2053 = vunpack.c.l.b16 %v673
  %v2054 = vunpack.c.h.b16 %v673
  %v2055 = vunpack.c.l.b16 %v674
  %v2056 = vunpack.c.h.b16 %v674
  %v2057 = vunpack.c.l.b16 %v675
  %v2058 = vunpack.c.h.b16 %v675
  %v2059 = vunpack.c.l.b16 %v676
  %v2060 = vunpack.c.h.b16 %v676
  %v2061 = vunpack.c.l.b16 %v677
  %v2062 = vunpack.c.h.b16 %v677
  %v2063 = vunpack.c.l.b16 %v678
  %v2064 = vunpack.c.h.b16 %v678
  %v2065 = vunpack.c.l.b16 %v679
  %v2066 = vunpack.c.h.b16 %v679
  %v2067 = vunpack.c.l.b16 %v680
  %v2068 = vunpack.c.h.b16 %v680
  %v2069 = vunpack.c.l.b16 %v681
  %v2070 = vunpack.c.h.b16 %v681
  %v2071 = vunpack.c.l.b16 %v682
  %v2072 = vunpack.c.h.b16 %v682
  %v2073 = vunpack.c.l.b16 %v683
  %v2074 = vunpack.c.h.b16 %v683
  %v2075 = vunpack.c.l.b16 %v684
  %v2076 = vunpack.c.h.b16 %v684
  %v2077 = vunpack.c.l.b16 %v685
  %v2078 = vunpack.c.h.b16 %v685
  %v2079 = vunpack.c.l.b16 %v686
  %v2080 = vunpack.c.h.b16 %v686
  %v2081 = vunpack.c.l.b16 %v687
  %v2082 = vunpack.c.h.b16 %v687
  %v2083 = vunpack.c.l.b16 %v688
  %v2084 = vunpack.c.h.b16 %v688
  %v2085 = vunpack.c.l.b16 %v689
  %v2086 = vunpack.c.h.b16 %v689
  %v2087 = vunpack.c.l.b16 %v690
  %v2088 = vunpack.c.h.b16 %v690
  %v2089 = vunpack.c.l.b16 %v691
  %v2090 = vunpack.c.h.b16 %v691
  %v2091 = vunpack.c.l.b16 %v692
  %v2092 = vunpack.c.h.b16 %v692
  %v2093 = vunpack.c.l.b16 %v693
  %v2094 = vunpack.c.h.b16 %v693
  %v2095 = vunpack.c.l.b16 %v694
  %v2096 = vunpack.c.h.b16 %v694
  %v2097 = vunpack.c.l.b16 %v695
  %v2098 = vunpack.c.h.b16 %v695
  %v2099 = vunpack.c.l.b16 %v696
  %v2100 = vunpack.c.h.b16 %v696
  %v2101 = vunpack.c.l.b16 %v697
  %v2102 = vunpack.c.h.b16 %v697
  %v2103 = vunpack.c.l.b16 %v698
  %v2104 = vunpack.c.h.b16 %v698
  %v2105 = vunpack.c.l.b16 %v699
  %v2106 = vunpack.c.h.b16 %v699
  %v2107 = vunpack.c.l.b16 %v700
  %v2108 = vunpack.c.h.b16 %v700
  %v2109 = vunpack.c.l.b16 %v701
  %v2110 = vunpack.c.h.b16 %v701
  %v2111 = vunpack.c.l.b16 %v702
  %v2112 = vunpack.c.h.b16 %v702
  %v2113 = vunpack.c.l.b16 %v703
  %v2114 = vunpack.c.h.b16 %v703
  %v2115 = vunpack.c.l.b16 %v704
  %v2116 = vunpack.c.h.b16 %v704
  %v2117 = vunpack.c.l.b16 %v705
  %v2118 = vunpack.c.h.b16 %v705
  %v2119 = vunpack.c.l.b16 %v706
  %v2120 = vunpack.c.h.b16 %v706
  %v2121 = vunpack.c.l.b16 %v707
  %v2122 = vunpack.c.h.b16 %v707
  %v2123 = vunpack.c.l.b16 %v708
  %v2124 = vunpack.c.h.b16 %v708
  %v2125 = vunpack.c.l.b16 %v709
  %v2126 = vunpack.c.h.b16 %v709
  %v2127 = vunpack.c.l.b16 %v710
  %v2128 = vunpack.c.h.b16 %v710
  %v2129 = vunpack.c.l.b16 %v711
  %v2130 = vunpack.c.h.b16 %v711
  %v2131 = vunpack.c.l.b16 %v712
  %v2132 = vunpack.c.h.b16 %v712
  %v2133 = vunpack.c.l.b16 %v713
  %v2134 = vunpack.c.h.b16 %v713
  %v2135 = vunpack.c.l.b16 %v714
  %v2136 = vunpack.c.h.b16 %v714
  %v2137 = vunpack.c.l.b16 %v715
  %v2138 = vunpack.c.h.b16 %v715
  %v2139 = vunpack.c.l.b16 %v716
  %v2140 = vunpack.c.h.b16 %v716
  %v2141 = vunpack.c.l.b16 %v717
  %v2142 = vunpack.c.h.b16 %v717
  %v2143 = vunpack.c.l.b16 %v718
  %v2144 = vunpack.c.h.b16 %v718
  %v2145 = vunpack.c.l.b16 %v719
  %v2146 = vunpack.c.h.b16 %v719
  %v2147 = vunpack.c.l.b16 %v720
  %v2148 = vunpack.c.h.b16 %v720
  %v2149 = vunpack.c.l.b16 %v721
  %v2150 = vunpack.c.h.b16 %v721
  %v2151 = vunpack.c.l.b16 %v722
  %v2152 = vunpack.c.h.b16 %v722
  %v2153 = vunpack.c.l.b16 %v723
  %v2154 = vunpack.c.h.b16 %v723
  %v2155 = vunpack.c.l.b16 %v724
  %v2156 = vunpack.c.h.b16 %v724
  %v2157 = vunpack.c.l.b16 %v725
  %v2158 = vunpack.c.h.b16 %v725
  %v2159 = vunpack.c.l.b16 %v726
  %v2160 = vunpack.c.h.b16 %v726
  %v2161 = vunpack.c.l.b16 %v727
  %v2162 = vunpack.c.h.b16 %v727
  %v2163 = vunpack.c.l.b16 %v728
  %v2164 = vunpack.c.h.b16 %v728
  %v2165 = vunpack.c.l.b16 %v729
  %v2166 = vunpack.c.h.b16 %v729
  %v2167 = vunpack.c.l.b16 %v730
  %v2168 = vunpack.c.h.b16 %v730
  %v2169 = vunpack.c.l.b16 %v731
  %v2170 = vunpack.c.h.b16 %v731
  %v2171 = vunpack.c.l.b16 %v732
  %v2172 = vunpack.c.h.b16 %v732
  %v2173 = vunpack.c.l.b16 %v733
  %v2174 = vunpack.c.h.b16 %v733
  %v2175 = vunpack.c.l.b16 %v734
  %v2176 = vunpack.c.h.b16 %v734
  %v2177 = vunpack.c.l.b16 %v735
  %v2178 = vunpack.c.h.b16 %v735
  %v2179 = vunpack.c.l.b16 %v736
  %v2180 = vunpack.c.h.b16 %v736
  %v2181 = vunpack.c.l.b16 %v737
  %v2182 = vunpack.c.h.b16 %v737
  %v2183 = vunpack.c.l.b16 %v738
  %v2184 = vunpack.c.h.b16 %v738
  %v2185 = vunpack.c.l.b16 %v739
  %v2186 = vunpack.c.h.b16 %v739
  %v2187 = vunpack.c.l.b16 %v740
  %v2188 = vunpack.c.h.b16 %v740
  %v2189 = vunpack.c.l.b16 %v741
  %v2190 = vunpack.c.h.b16 %v741
  %v2191 = vunpack.c.l.b16 %v742
  %v2192 = vunpack.c.h.b16 %v742
  %v2193 = vunpack.c.l.b16 %v743
  %v2194 = vunpack.c.h.b16 %v743
  %v2195 = vunpack.c.l.b16 %v744
  %v2196 = vunpack.c.h.b16 %v744
  %v2197 = vunpack.c.l.b16 %v745
  %v2198 = vunpack.c.h.b16 %v745
  %v2199 = vunpack.c.l.b16 %v746
  %v2200 = vunpack.c.h.b16 %v746
  %v2201 = vunpack.c.l.b16 %v747
  %v2202 = vunpack.c.h.b16 %v747
  %v2203 = vunpack.c.l.b16 %v748
  %v2204 = vunpack.c.h.b16 %v748
  %v2205 = vunpack.c.l.b16 %v749
  %v2206 = vunpack.c.h.b16 %v749
  %v2207 = vunpack.c.l.b16 %v750
  %v2208 = vunpack.c.h.b16 %v750
  %v2209 = vunpack.c.l.b16 %v751
  %v2210 = vunpack.c.h.b16 %v751
  %v2211 = vunpack.c.l.b16 %v752
  %v2212 = vunpack.c.h.b16 %v752
  %v2213 = vunpack.c.l.b16 %v753
  %v2214 = vunpack.c.h.b16 %v753
  %v2215 = vunpack.c.l.b16 %v754
  %v2216 = vunpack.c.h.b16 %v754
  %v2217 = vunpack.c.l.b16 %v755
  %v2218 = vunpack.c.h.b16 %v755
  %v2219 = vunpack.c.l.b16 %v756
  %v2220 = vunpack.c.h.b16 %v756
  %v2221 = vunpack.c.l.b16 %v757
  %v2222 = vunpack.c.h.b16 %v757
  %v2223 = vunpack.c.l.b16 %v758
  %v2224 = vunpack.c.h.b16 %v758
  %v2225 = vunpack.c.l.b16 %v759
  %v2226 = vunpack.c.h.b16 %v759
  %v2227 = vunpack.c.l.b16 %v760
  %v2228 = vunpack.c.h.b16 %v760
  %v2229 = vunpack.c.l.b16 %v761
  %v2230 = vunpack.c.h.b16 %v761
  %v2231 = vunpack.c.l.b16 %v762
  %v2232 = vunpack.c.h.b16 %v762
  %v2233 = vunpack.c.l.b16 %v763
  %v2234 = vunpack.c.h.b16 %v763
  %v2235 = vunpack.c.l.b16 %v764
  %v2236 = vunpack.c.h.b16 %v764
  %v2237 = vunpack.c.l.b16 %v765
  %v2238 = vunpack.c.h.b16 %v765
  %v2239 = vunpack.c.l.b16 %v766
  %v2240 = vunpack.c.h.b16 %v766
  %v2241 = vunpack.c.l.b16 %v767
  %v2242 = vunpack.c.h.b16 %v767
  %v2243 = vunpack.c.l.b16 %v768
  %v2244 = vunpack.c.h.b16 %v768
  %v2245 = vunpack.c.l.b16 %v769
  %v2246 = vunpack.c.h.b16 %v769
  %v2247 = vunpack.c.l.b16 %v770
  %v2248 = vunpack.c.h.b16 %v770
  %v2249 = vunpack.c.l.b16 %v771
  %v2250 = vunpack.c.h.b16 %v771
  %v2251 = vunpack.c.l.b16 %v772
  %v2252 = vunpack.c.h.b16 %v772
  %v2253 = vunpack.c.l.b16 %v773
  %v2254 = vunpack.c.h.b16 %v773
  %v2255 = vunpack.c.l.b16 %v774
  %v2256 = vunpack.c.h.b16 %v774
  %v2257 = vunpack.c.l.b16 %v775
  %v2258 = vunpack.c.h.b16 %v775
  %v2259 = vunpack.c.l.b16 %v776
  %v2260 = vunpack.c.h.b16 %v776
  %v2261 = vunpack.c.l.b16 %v777
  %v2262 = vunpack.c.h.b16 %v777
  %v2263 = vunpack.c.l.b16 %v778
  %v2264 = vunpack.c.h.b16 %v778
  %v2265 = vunpack.c.l.b16 %v779
  %v2266 = vunpack.c.h.b16 %v779
  %v2267 = vunpack.c.l.b16 %v780
  %v2268 = vunpack.c.h.b16 %v780
  %v2269 = vunpack.c.l.b16 %v781
  %v2270 = vunpack.c.h.b16 %v781
  %v2271 = vunpack.c.l.b16 %v782
  %v2272 = vunpack.c.h.b16 %v782
  %v2273 = vunpack.c.l.b16 %v783
  %v2274 = vunpack.c.h.b16 %v783
  %v2275 = vunpack.c.l.b16 %v784
  %v2276 = vunpack.c.h.b16 %v784
  %v2277 = vunpack.c.l.b16 %v785
  %v2278 = vunpack.c.h.b16 %v785
  %v2279 = vunpack.c.l.b16 %v786
  %v2280 = vunpack.c.h.b16 %v786
  %v2281 = vunpack.c.l.b16 %v787
  %v2282 = vunpack.c.h.b16 %v787
  %v2283 = vunpack.c.l.b16 %v788
  %v2284 = vunpack.c.h.b16 %v788
  %v2285 = vunpack.c.l.b16 %v789
  %v2286 = vunpack.c.h.b16 %v789
  %v2287 = vunpack.c.l.b16 %v790
  %v2288 = vunpack.c.h.b16 %v790
  %v2289 = vunpack.c.l.b16 %v791
  %v2290 = vunpack.c.h.b16 %v791
  %v2291 = vunpack.c.l.b16 %v792
  %v2292 = vunpack.c.h.b16 %v792
  %v2293 = vunpack.c.l.b16 %v793
  %v2294 = vunpack.c.h.b16 %v793
  %v2295 = vunpack.c.l.b16 %v794
  %v2296 = vunpack.c.h.b16 %v794
  %v2297 = vunpack.c.l.b16 %v795
  %v2298 = vunpack.c.h.b16 %v795
  %v2299 = vunpack.c.l.b16 %v796
  %v2300 = vunpack.c.h.b16 %v796
  %v2301 = vunpack.c.l.b16 %v797
  %v2302 = vunpack.c.h.b16 %v797
  %v2303 = vunpack.c.l.b16 %v798
  %v2304 = vunpack.c.h.b16 %v798
  %v2305 = vunpack.c.l.b16 %v799
  %v2306 = vunpack.c.h.b16 %v799
  %v2307 = vunpack.c.l.b16 %v800
  %v2308 = vunpack.c.h.b16 %v800
  %v2309 = vunpack.c.l.b16 %v801
  %v2310 = vunpack.c.h.b16 %v801
  %v2311 = vunpack.c.l.b16 %v802
  %v2312 = vunpack.c.h.b16 %v802
  %v2313 = vunpack.c.l.b16 %v803
  %v2314 = vunpack.c.h.b16 %v803
  %v2315 = vunpack.c.l.b16 %v804
  %v2316 = vunpack.c.h.b16 %v804
  %v2317 = vunpack.c.l.b16 %v805
  %v2318 = vunpack.c.h.b16 %v805
  %v2319 = vunpack.c.l.b16 %v806
  %v2320 = vunpack.c.h.b16 %v806
  %v2321 = vunpack.c.l.b16 %v807
  %v2322 = vunpack.c.h.b16 %v807
  %v2323 = vunpack.c.l.b16 %v808
  %v2324 = vunpack.c.h.b16 %v808
  %v2325 = vunpack.c.l.b16 %v809
  %v2326 = vunpack.c.h.b16 %v809
  %v2327 = vunpack.c.l.b16 %v810
  %v2328 = vunpack.c.h.b16 %v810
  %v2329 = vunpack.c.l.b16 %v811
  %v2330 = vunpack.c.h.b16 %v811
  %v2331 = vunpack.c.l.b16 %v812
  %v2332 = vunpack.c.h.b16 %v812
  %v2333 = vunpack.c.l.b16 %v813
  %v2334 = vunpack.c.h.b16 %v813
  %v2335 = vunpack.c.l.b16 %v814
  %v2336 = vunpack.c.h.b16 %v814
  %v2337 = vunpack.c.l.b16 %v815
  %v2338 = vunpack.c.h.b16 %v815
  %v2339 = vunpack.c.l.b16 %v816
  %v2340 = vunpack.c.h.b16 %v816
  %v2341 = vunpack.c.l.b16 %v817
  %v2342 = vunpack.c.h.b16 %v817
  %v2343 = vunpack.c.l.b16 %v818
  %v2344 = vunpack.c.h.b16 %v818
  %v2345 = vunpack.c.l.b16 %v819
  %v2346 = vunpack.c.h.b16 %v819
  %v2347 = vunpack.c.l.b16 %v820
  %v2348 = vunpack.c.h.b16 %v820
  %v2349 = vunpack.c.l.b16 %v821
  %v2350 = vunpack.c.h.b16 %v821
  %v2351 = vunpack.c.l.b16 %v822
  %v2352 = vunpack.c.h.b16 %v822
  %v2353 = vunpack.c.l.b16 %v823
  %v2354 = vunpack.c.h.b16 %v823
  %v2355 = vunpack.c.l.b16 %v824
  %v2356 = vunpack.c.h.b16 %v824
  %v2357 = vunpack.c.l.b16 %v825
  %v2358 = vunpack.c.h.b16 %v825
  %v2359 = vunpack.c.l.b16 %v826
  %v2360 = vunpack.c.h.b16 %v826
  %v2361 = vunpack.c.l.b16 %v827
  %v2362 = vunpack.c.h.b16 %v827
  %v2363 = vunpack.c.l.b16 %v828
  %v2364 = vunpack.c.h.b16 %v828
  %v2365 = vpack.c.b16 %v1357, %v1341
  %v2366 = vpack.c.b16 %v1358, %v1342
  %v2367 = vpack.c.b16 %v1359, %v1343
  %v2368 = vpack.c.b16 %v1360, %v1344
  %v2369 = vpack.c.b16 %v1361, %v1345
  %v2370 = vpack.c.b16 %v1362, %v1346
  %v2371 = vpack.c.b16 %v1363, %v1347
  %v2372 = vpack.c.b16 %v1364, %v1348
  %v2373 = vpack.c.b16 %v1365, %v1349
  %v2374 = vpack.c.b16 %v1366, %v1350
  %v2375 = vpack.c.b16 %v1367, %v1351
  %v2376 = vpack.c.b16 %v1368, %v1352
  %v2377 = vpack.c.b16 %v1369, %v1353
  %v2378 = vpack.c.b16 %v1370, %v1354
  %v2379 = vpack.c.b16 %v1371, %v1355
  %v2380 = vpack.c.b16 %v1372, %v1356
  %v2381 = vpack.c.b16 %v1389, %v1373
  %v2382 = vpack.c.b16 %v1390, %v1374
  %v2383 = vpack.c.b16 %v1391, %v1375
  %v2384 = vpack.c.b16 %v1392, %v1376
  %v2385 = vpack.c.b16 %v1393, %v1377
  %v2386 = vpack.c.b16 %v1394, %v1378
  %v2387 = vpack.c.b16 %v1395, %v1379
  %v2388 = vpack.c.b16 %v1396, %v1380
  %v2389 = vpack.c.b16 %v1397, %v1381
  %v2390 = vpack.c.b16 %v1398, %v1382
  %v2391 = vpack.c.b16 %v1399, %v1383
  %v2392 = vpack.c.b16 %v1400, %v1384
  %v2393 = vpack.c.b16 %v1401, %v1385
  %v2394 = vpack.c.b16 %v1402, %v1386
  %v2395 = vpack.c.b16 %v1403, %v1387
  %v2396 = vpack.c.b16 %v1404, %v1388
  %v2397 = vpack.c.b16 %v1421, %v1405
  %v2398 = vpack.c.b16 %v1422, %v1406
  %v2399 = vpack.c.b16 %v1423, %v1407
  %v2400 = vpack.c.b16 %v1424, %v1408
  %v2401 = vpack.c.b16 %v1425, %v1409
  %v2402 = vpack.c.b16 %v1426, %v1410
  %v2403 = vpack.c.b16 %v1427, %v1411
  %v2404 = vpack.c.b16 %v1428, %v1412
  %v2405 = vpack.c.b16 %v1429, %v1413
  %v2406 = vpack.c.b16 %v1430, %v1414
  %v2407 = vpack.c.b16 %v1431, %v1415
  %v2408 = vpack.c.b16 %v1432, %v1416
  %v2409 = vpack.c.b16 %v1433, %v1417
  %v2410 = vpack.c.b16 %v1434, %v1418
  %v2411 = vpack.c.b16 %v1435, %v1419
  %v2412 = vpack.c.b16 %v1436, %v1420
  %v2413 = vpack.c.b16 %v1453, %v1437
  %v2414 = vpack.c.b16 %v1454, %v1438
  %v2415 = vpack.c.b16 %v1455, %v1439
  %v2416 = vpack.c.b16 %v1456, %v1440
  %v2417 = vpack.c.b16 %v1457, %v1441
  %v2418 = vpack.c.b16 %v1458, %v1442
  %v2419 = vpack.c.b16 %v1459, %v1443
  %v2420 = vpack.c.b16 %v1460, %v1444
  %v2421 = vpack.c.b16 %v1461, %v1445
  %v2422 = vpack.c.b16 %v1462, %v1446
  %v2423 = vpack.c.b16 %v1463, %v1447
  %v2424 = vpack.c.b16 %v1464, %v1448
  %v2425 = vpack.c.b16 %v1465, %v1449
  %v2426 = vpack.c.b16 %v1466, %v1450
  %v2427 = vpack.c.b16 %v1467, %v1451
  %v2428 = vpack.c.b16 %v1468, %v1452
  %v2429 = vpack.c.b16 %v1485, %v1469
  %v2430 = vpack.c.b16 %v1486, %v1470
  %v2431 = vpack.c.b16 %v1487, %v1471
  %v2432 = vpack.c.b16 %v1488, %v1472
  %v2433 = vpack.c.b16 %v1489, %v1473
  %v2434 = vpack.c.b16 %v1490, %v1474
  %v2435 = vpack.c.b16 %v1491, %v1475
  %v2436 = vpack.c.b16 %v1492, %v1476
  %v2437 = vpack.c.b16 %v1493, %v1477
  %v2438 = vpack.c.b16 %v1494, %v1478
  %v2439 = vpack.c.b16 %v1495, %v1479
  %v2440 = vpack.c.b16 %v1496, %v1480
  %v2441 = vpack.c.b16 %v1497, %v1481
  %v2442 = vpack.c.b16 %v1498, %v1482
  %v2443 = vpack.c.b16 %v1499, %v1483
  %v2444 = vpack.c.b16 %v1500, %v1484
  %v2445 = vpack.c.b16 %v1517, %v1501
  %v2446 = vpack.c.b16 %v1518, %v1502
  %v2447 = vpack.c.b16 %v1519, %v1503
  %v2448 = vpack.c.b16 %v1520, %v1504
  %v2449 = vpack.c.b16 %v1521, %v1505
  %v2450 = vpack.c.b16 %v1522, %v1506
  %v2451 = vpack.c.b16 %v1523, %v1507
  %v2452 = vpack.c.b16 %v1524, %v1508
  %v2453 = vpack.c.b16 %v1525, %v1509
  %v2454 = vpack.c.b16 %v1526, %v1510
  %v2455 = vpack.c.b16 %v1527, %v1511
  %v2456 = vpack.c.b16 %v1528, %v1512
  %v2457 = vpack.c.b16 %v1529, %v1513
  %v2458 = vpack.c.b16 %v1530, %v1514
  %v2459 = vpack.c.b16 %v1531, %v1515
  %v2460 = vpack.c.b16 %v1532, %v1516
  %v2461 = vpack.c.b16 %v1549, %v1533
  %v2462 = vpack.c.b16 %v1550, %v1534
  %v2463 = vpack.c.b16 %v1551, %v1535
  %v2464 = vpack.c.b16 %v1552, %v1536
  %v2465 = vpack.c.b16 %v1553, %v1537
  %v2466 = vpack.c.b16 %v1554, %v1538
  %v2467 = vpack.c.b16 %v1555, %v1539
  %v2468 = vpack.c.b16 %v1556, %v1540
  %v2469 = vpack.c.b16 %v1557, %v1541
  %v2470 = vpack.c.b16 %v1558, %v1542
  %v2471 = vpack.c.b16 %v1559, %v1543
  %v2472 = vpack.c.b16 %v1560, %v1544
  %v2473 = vpack.c.b16 %v1561, %v1545
  %v2474 = vpack.c.b16 %v1562, %v1546
  %v2475 = vpack.c.b16 %v1563, %v1547
  %v2476 = vpack.c.b16 %v1564, %v1548
  %v2477 = vpack.c.b16 %v1581, %v1565
  %v2478 = vpack.c.b16 %v1582, %v1566
  %v2479 = vpack.c.b16 %v1583, %v1567
  %v2480 = vpack.c.b16 %v1584, %v1568
  %v2481 = vpack.c.b16 %v1585, %v1569
  %v2482 = vpack.c.b16 %v1586, %v1570
  %v2483 = vpack.c.b16 %v1587, %v1571
  %v2484 = vpack.c.b16 %v1588, %v1572
  %v2485 = vpack.c.b16 %v1589, %v1573
  %v2486 = vpack.c.b16 %v1590, %v1574
  %v2487 = vpack.c.b16 %v1591, %v1575
  %v2488 = vpack.c.b16 %v1592, %v1576
  %v2489 = vpack.c.b16 %v1593, %v1577
  %v2490 = vpack.c.b16 %v1594, %v1578
  %v2491 = vpack.c.b16 %v1595, %v1579
  %v2492 = vpack.c.b16 %v1596, %v1580
  %v2493 = vpack.c.b16 %v1613, %v1597
  %v2494 = vpack.c.b16 %v1614, %v1598
  %v2495 = vpack.c.b16 %v1615, %v1599
  %v2496 = vpack.c.b16 %v1616, %v1600
  %v2497 = vpack.c.b16 %v1617, %v1601
  %v2498 = vpack.c.b16 %v1618, %v1602
  %v2499 = vpack.c.b16 %v1619, %v1603
  %v2500 = vpack.c.b16 %v1620, %v1604
  %v2501 = vpack.c.b16 %v1621, %v1605
  %v2502 = vpack.c.b16 %v1622, %v1606
  %v2503 = vpack.c.b16 %v1623, %v1607
  %v2504 = vpack.c.b16 %v1624, %v1608
  %v2505 = vpack.c.b16 %v1625, %v1609
  %v2506 = vpack.c.b16 %v1626, %v1610
  %v2507 = vpack.c.b16 %v1627, %v1611
  %v2508 = vpack.c.b16 %v1628, %v1612
  %v2509 = vpack.c.b16 %v1645, %v1629
  %v2510 = vpack.c.b16 %v1646, %v1630
  %v2511 = vpack.c.b16 %v1647, %v1631
  %v2512 = vpack.c.b16 %v1648, %v1632
  %v2513 = vpack.c.b16 %v1649, %v1633
  %v2514 = vpack.c.b16 %v1650, %v1634
  %v2515 = vpack.c.b16 %v1651, %v1635
  %v2516 = vpack.c.b16 %v1652, %v1636
  %v2517 = vpack.c.b16 %v1653, %v1637
  %v2518 = vpack.c.b16 %v1654, %v1638
  %v2519 = vpack.c.b16 %v1655, %v1639
  %v2520 = vpack.c.b16 %v1656, %v1640
  %v2521 = vpack.c.b16 %v1657, %v1641
  %v2522 = vpack.c.b16 %v1658, %v1642
  %v2523 = vpack.c.b16 %v1659, %v1643
  %v2524 = vpack.c.b16 %v1660, %v1644
  %v2525 = vpack.c.b16 %v1677, %v1661
  %v2526 = vpack.c.b16 %v1678, %v1662
  %v2527 = vpack.c.b16 %v1679, %v1663
  %v2528 = vpack.c.b16 %v1680, %v1664
  %v2529 = vpack.c.b16 %v1681, %v1665
  %v2530 = vpack.c.b16 %v1682, %v1666
  %v2531 = vpack.c.b16 %v1683, %v1667
  %v2532 = vpack.c.b16 %v1684, %v1668
  %v2533 = vpack.c.b16 %v1685, %v1669
  %v2534 = vpack.c.b16 %v1686, %v1670
  %v2535 = vpack.c.b16 %v1687, %v1671
  %v2536 = vpack.c.b16 %v1688, %v1672
  %v2537 = vpack.c.b16 %v1689, %v1673
  %v2538 = vpack.c.b16 %v1690, %v1674
  %v2539 = vpack.c.b16 %v1691, %v1675
  %v2540 = vpack.c.b16 %v1692, %v1676
  %v2541 = vpack.c.b16 %v1709, %v1693
  %v2542 = vpack.c.b16 %v1710, %v1694
  %v2543 = vpack.c.b16 %v1711, %v1695
  %v2544 = vpack.c.b16 %v1712, %v1696
  %v2545 = vpack.c.b16 %v1713, %v1697
  %v2546 = vpack.c.b16 %v1714, %v1698
  %v2547 = vpack.c.b16 %v1715, %v1699
  %v2548 = vpack.c.b16 %v1716, %v1700
  %v2549 = vpack.c.b16 %v1717, %v1701
  %v2550 = vpack.c.b16 %v1718, %v1702
  %v2551 = vpack.c.b16 %v1719, %v1703
  %v2552 = vpack.c.b16 %v1720, %v1704
  %v2553 = vpack.c.b16 %v1721, %v1705
  %v2554 = vpack.c.b16 %v1722, %v1706
  %v2555 = vpack.c.b16 %v1723, %v1707
  %v2556 = vpack.c.b16 %v1724, %v1708
  %v2557 = vpack.c.b16 %v1741, %v1725
  %v2558 = vpack.c.b16 %v1742, %v1726
  %v2559 = vpack.c.b16 %v1743, %v1727
  %v2560 = vpack.c.b16 %v1744, %v1728
  %v2561 = vpack.c.b16 %v1745, %v1729
  %v2562 = vpack.c.b16 %v1746, %v1730
  %v2563 = vpack.c.b16 %v1747, %v1731
  %v2564 = vpack.c.b16 %v1748, %v1732
  %v2565 = vpack.c.b16 %v1749, %v1733
  %v2566 = vpack.c.b16 %v1750, %v1734
  %v2567 = vpack.c.b16 %v1751, %v1735
  %v2568 = vpack.c.b16 %v1752, %v1736
  %v2569 = vpack.c.b16 %v1753, %v1737
  %v2570 = vpack.c.b16 %v1754, %v1738
  %v2571 = vpack.c.b16 %v1755, %v1739
  %v2572 = vpack.c.b16 %v1756, %v1740
  %v2573 = vpack.c.b16 %v1773, %v1757
  %v2574 = vpack.c.b16 %v1774, %v1758
  %v2575 = vpack.c.b16 %v1775, %v1759
  %v2576 = vpack.c.b16 %v1776, %v1760
  %v2577 = vpack.c.b16 %v1777, %v1761
  %v2578 = vpack.c.b16 %v1778, %v1762
  %v2579 = vpack.c.b16 %v1779, %v1763
  %v2580 = vpack.c.b16 %v1780, %v1764
  %v2581 = vpack.c.b16 %v1781, %v1765
  %v2582 = vpack.c.b16 %v1782, %v1766
  %v2583 = vpack.c.b16 %v1783, %v1767
  %v2584 = vpack.c.b16 %v1784, %v1768
  %v2585 = vpack.c.b16 %v1785, %v1769
  %v2586 = vpack.c.b16 %v1786, %v1770
  %v2587 = vpack.c.b16 %v1787, %v1771
  %v2588 = vpack.c.b16 %v1788, %v1772
  %v2589 = vpack.c.b16 %v1805, %v1789
  %v2590 = vpack.c.b16 %v1806, %v1790
  %v2591 = vpack.c.b16 %v1807, %v1791
  %v2592 = vpack.c.b16 %v1808, %v1792
  %v2593 = vpack.c.b16 %v1809, %v1793
  %v2594 = vpack.c.b16 %v1810, %v1794
  %v2595 = vpack.c.b16 %v1811, %v1795
  %v2596 = vpack.c.b16 %v1812, %v1796
  %v2597 = vpack.c.b16 %v1813, %v1797
  %v2598 = vpack.c.b16 %v1814, %v1798
  %v2599 = vpack.c.b16 %v1815, %v1799
  %v2600 = vpack.c.b16 %v1816, %v1800
  %v2601 = vpack.c.b16 %v1817, %v1801
  %v2602 = vpack.c.b16 %v1818, %v1802
  %v2603 = vpack.c.b16 %v1819, %v1803
  %v2604 = vpack.c.b16 %v1820, %v1804
  %v2605 = vpack.c.b16 %v1837, %v1821
  %v2606 = vpack.c.b16 %v1838, %v1822
  %v2607 = vpack.c.b16 %v1839, %v1823
  %v2608 = vpack.c.b16 %v1840, %v1824
  %v2609 = vpack.c.b16 %v1841, %v1825
  %v2610 = vpack.c.b16 %v1842, %v1826
  %v2611 = vpack.c.b16 %v1843, %v1827
  %v2612 = vpack.c.b16 %v1844, %v1828
  %v2613 = vpack.c.b16 %v1845, %v1829
  %v2614 = vpack.c.b16 %v1846, %v1830
  %v2615 = vpack.c.b16 %v1847, %v1831
  %v2616 = vpack.c.b16 %v1848, %v1832
  %v2617 = vpack.c.b16 %v1849, %v1833
  %v2618 = vpack.c.b16 %v1850, %v1834
  %v2619 = vpack.c.b16 %v1851, %v1835
  %v2620 = vpack.c.b16 %v1852, %v1836
  %v2621 = vpack.c.b16 %v1869, %v1853
  %v2622 = vpack.c.b16 %v1870, %v1854
  %v2623 = vpack.c.b16 %v1871, %v1855
  %v2624 = vpack.c.b16 %v1872, %v1856
  %v2625 = vpack.c.b16 %v1873, %v1857
  %v2626 = vpack.c.b16 %v1874, %v1858
  %v2627 = vpack.c.b16 %v1875, %v1859
  %v2628 = vpack.c.b16 %v1876, %v1860
  %v2629 = vpack.c.b16 %v1877, %v1861
  %v2630 = vpack.c.b16 %v1878, %v1862
  %v2631 = vpack.c.b16 %v1879, %v1863
  %v2632 = vpack.c.b16 %v1880, %v1864
  %v2633 = vpack.c.b16 %v1881, %v1865
  %v2634 = vpack.c.b16 %v1882, %v1866
  %v2635 = vpack.c.b16 %v1883, %v1867
  %v2636 = vpack.c.b16 %v1884, %v1868
  %v2637 = vpack.c.b16 %v1901, %v1885
  %v2638 = vpack.c.b16 %v1902, %v1886
  %v2639 = vpack.c.b16 %v1903, %v1887
  %v2640 = vpack.c.b16 %v1904, %v1888
  %v2641 = vpack.c.b16 %v1905, %v1889
  %v2642 = vpack.c.b16 %v1906, %v1890
  %v2643 = vpack.c.b16 %v1907, %v1891
  %v2644 = vpack.c.b16 %v1908, %v1892
  %v2645 = vpack.c.b16 %v1909, %v1893
  %v2646 = vpack.c.b16 %v1910, %v1894
  %v2647 = vpack.c.b16 %v1911, %v1895
  %v2648 = vpack.c.b16 %v1912, %v1896
  %v2649 = vpack.c.b16 %v1913, %v1897
  %v2650 = vpack.c.b16 %v1914, %v1898
  %v2651 = vpack.c.b16 %v1915, %v1899
  %v2652 = vpack.c.b16 %v1916, %v1900
  %v2653 = vpack.c.b16 %v1933, %v1917
  %v2654 = vpack.c.b16 %v1934, %v1918
  %v2655 = vpack.c.b16 %v1935, %v1919
  %v2656 = vpack.c.b16 %v1936, %v1920
  %v2657 = vpack.c.b16 %v1937, %v1921
  %v2658 = vpack.c.b16 %v1938, %v1922
  %v2659 = vpack.c.b16 %v1939, %v1923
  %v2660 = vpack.c.b16 %v1940, %v1924
  %v2661 = vpack.c.b16 %v1941, %v1925
  %v2662 = vpack.c.b16 %v1942, %v1926
  %v2663 = vpack.c.b16 %v1943, %v1927
  %v2664 = vpack.c.b16 %v1944, %v1928
  %v2665 = vpack.c.b16 %v1945, %v1929
  %v2666 = vpack.c.b16 %v1946, %v1930
  %v2667 = vpack.c.b16 %v1947, %v1931
  %v2668 = vpack.c.b16 %v1948, %v1932
  %v2669 = vpack.c.b16 %v1965, %v1949
  %v2670 = vpack.c.b16 %v1966, %v1950
  %v2671 = vpack.c.b16 %v1967, %v1951
  %v2672 = vpack.c.b16 %v1968, %v1952
  %v2673 = vpack.c.b16 %v1969, %v1953
  %v2674 = vpack.c.b16 %v1970, %v1954
  %v2675 = vpack.c.b16 %v1971, %v1955
  %v2676 = vpack.c.b16 %v1972, %v1956
  %v2677 = vpack.c.b16 %v1973, %v1957
  %v2678 = vpack.c.b16 %v1974, %v1958
  %v2679 = vpack.c.b16 %v1975, %v1959
  %v2680 = vpack.c.b16 %v1976, %v1960
  %v2681 = vpack.c.b16 %v1977, %v1961
  %v2682 = vpack.c.b16 %v1978, %v1962
  %v2683 = vpack.c.b16 %v1979, %v1963
  %v2684 = vpack.c.b16 %v1980, %v1964
  %v2685 = vpack.c.b16 %v1997, %v1981
  %v2686 = vpack.c.b16 %v1998, %v1982
  %v2687 = vpack.c.b16 %v1999, %v1983
  %v2688 = vpack.c.b16 %v2000, %v1984
  %v2689 = vpack.c.b16 %v2001, %v1985
  %v2690 = vpack.c.b16 %v2002, %v1986
  %v2691 = vpack.c.b16 %v2003, %v1987
  %v2692 = vpack.c.b16 %v2004, %v1988
  %v2693 = vpack.c.b16 %v2005, %v1989
  %v2694 = vpack.c.b16 %v2006, %v1990
  %v2695 = vpack.c.b16 %v2007, %v1991
  %v2696 = vpack.c.b16 %v2008, %v1992
  %v2697 = vpack.c.b16 %v2009, %v1993
  %v2698 = vpack.c.b16 %v2010, %v1994
  %v2699 = vpack.c.b16 %v2011, %v1995
  %v2700 = vpack.c.b16 %v2012, %v1996
  %v2701 = vpack.c.b16 %v2029, %v2013
  %v2702 = vpack.c.b16 %v2030, %v2014
  %v2703 = vpack.c.b16 %v2031, %v2015
  %v2704 = vpack.c.b16 %v2032, %v2016
  %v2705 = vpack.c.b16 %v2033, %v2017
  %v2706 = vpack.c.b16 %v2034, %v2018
  %v2707 = vpack.c.b16 %v2035, %v2019
  %v2708 = vpack.c.b16 %v2036, %v2020
  %v2709 = vpack.c.b16 %v2037, %v2021
  %v2710 = vpack.c.b16 %v2038, %v2022
  %v2711 = vpack.c.b16 %v2039, %v2023
  %v2712 = vpack.c.b16 %v2040, %v2024
  %v2713 = vpack.c.b16 %v2041, %v2025
  %v2714 = vpack.c.b16 %v2042, %v2026
  %v2715 = vpack.c.b16 %v2043, %v2027
  %v2716 = vpack.c.b16 %v2044, %v2028
  %v2717 = vpack.c.b16 %v2061, %v2045
  %v2718 = vpack.c.b16 %v2062, %v2046
  %v2719 = vpack.c.b16 %v2063, %v2047
  %v2720 = vpack.c.b16 %v2064, %v2048
  %v2721 = vpack.c.b16 %v2065, %v2049
  %v2722 = vpack.c.b16 %v2066, %v2050
  %v2723 = vpack.c.b16 %v2067, %v2051
  %v2724 = vpack.c.b16 %v2068, %v2052
  %v2725 = vpack.c.b16 %v2069, %v2053
  %v2726 = vpack.c.b16 %v2070, %v2054
  %v2727 = vpack.c.b16 %v2071, %v2055
  %v2728 = vpack.c.b16 %v2072, %v2056
  %v2729 = vpack.c.b16 %v2073, %v2057
  %v2730 = vpack.c.b16 %v2074, %v2058
  %v2731 = vpack.c.b16 %v2075, %v2059
  %v2732 = vpack.c.b16 %v2076, %v2060
  %v2733 = vpack.c.b16 %v2093, %v2077
  %v2734 = vpack.c.b16 %v2094, %v2078
  %v2735 = vpack.c.b16 %v2095, %v2079
  %v2736 = vpack.c.b16 %v2096, %v2080
  %v2737 = vpack.c.b16 %v2097, %v2081
  %v2738 = vpack.c.b16 %v2098, %v2082
  %v2739 = vpack.c.b16 %v2099, %v2083
  %v2740 = vpack.c.b16 %v2100, %v2084
  %v2741 = vpack.c.b16 %v2101, %v2085
  %v2742 = vpack.c.b16 %v2102, %v2086
  %v2743 = vpack.c.b16 %v2103, %v2087
  %v2744 = vpack.c.b16 %v2104, %v2088
  %v2745 = vpack.c.b16 %v2105, %v2089
  %v2746 = vpack.c.b16 %v2106, %v2090
  %v2747 = vpack.c.b16 %v2107, %v2091
  %v2748 = vpack.c.b16 %v2108, %v2092
  %v2749 = vpack.c.b16 %v2125, %v2109
  %v2750 = vpack.c.b16 %v2126, %v2110
  %v2751 = vpack.c.b16 %v2127, %v2111
  %v2752 = vpack.c.b16 %v2128, %v2112
  %v2753 = vpack.c.b16 %v2129, %v2113
  %v2754 = vpack.c.b16 %v2130, %v2114
  %v2755 = vpack.c.b16 %v2131, %v2115
  %v2756 = vpack.c.b16 %v2132, %v2116
  %v2757 = vpack.c.b16 %v2133, %v2117
  %v2758 = vpack.c.b16 %v2134, %v2118
  %v2759 = vpack.c.b16 %v2135, %v2119
  %v2760 = vpack.c.b16 %v2136, %v2120
  %v2761 = vpack.c.b16 %v2137, %v2121
  %v2762 = vpack.c.b16 %v2138, %v2122
  %v2763 = vpack.c.b16 %v2139, %v2123
  %v2764 = vpack.c.b16 %v2140, %v2124
  %v2765 = vpack.c.b16 %v2157, %v2141
  %v2766 = vpack.c.b16 %v2158, %v2142
  %v2767 = vpack.c.b16 %v2159, %v2143
  %v2768 = vpack.c.b16 %v2160, %v2144
  %v2769 = vpack.c.b16 %v2161, %v2145
  %v2770 = vpack.c.b16 %v2162, %v2146
  %v2771 = vpack.c.b16 %v2163, %v2147
  %v2772 = vpack.c.b16 %v2164, %v2148
  %v2773 = vpack.c.b16 %v2165, %v2149
  %v2774 = vpack.c.b16 %v2166, %v2150
  %v2775 = vpack.c.b16 %v2167, %v2151
  %v2776 = vpack.c.b16 %v2168, %v2152
  %v2777 = vpack.c.b16 %v2169, %v2153
  %v2778 = vpack.c.b16 %v2170, %v2154
  %v2779 = vpack.c.b16 %v2171, %v2155
  %v2780 = vpack.c.b16 %v2172, %v2156
  %v2781 = vpack.c.b16 %v2189, %v2173
  %v2782 = vpack.c.b16 %v2190, %v2174
  %v2783 = vpack.c.b16 %v2191, %v2175
  %v2784 = vpack.c.b16 %v2192, %v2176
  %v2785 = vpack.c.b16 %v2193, %v2177
  %v2786 = vpack.c.b16 %v2194, %v2178
  %v2787 = vpack.c.b16 %v2195, %v2179
  %v2788 = vpack.c.b16 %v2196, %v2180
  %v2789 = vpack.c.b16 %v2197, %v2181
  %v2790 = vpack.c.b16 %v2198, %v2182
  %v2791 = vpack.c.b16 %v2199, %v2183
  %v2792 = vpack.c.b16 %v2200, %v2184
  %v2793 = vpack.c.b16 %v2201, %v2185
  %v2794 = vpack.c.b16 %v2202, %v2186
  %v2795 = vpack.c.b16 %v2203, %v2187
  %v2796 = vpack.c.b16 %v2204, %v2188
  %v2797 = vpack.c.b16 %v2221, %v2205
  %v2798 = vpack.c.b16 %v2222, %v2206
  %v2799 = vpack.c.b16 %v2223, %v2207
  %v2800 = vpack.c.b16 %v2224, %v2208
  %v2801 = vpack.c.b16 %v2225, %v2209
  %v2802 = vpack.c.b16 %v2226, %v2210
  %v2803 = vpack.c.b16 %v2227, %v2211
  %v2804 = vpack.c.b16 %v2228, %v2212
  %v2805 = vpack.c.b16 %v2229, %v2213
  %v2806 = vpack.c.b16 %v2230, %v2214
  %v2807 = vpack.c.b16 %v2231, %v2215
  %v2808 = vpack.c.b16 %v2232, %v2216
  %v2809 = vpack.c.b16 %v2233, %v2217
  %v2810 = vpack.c.b16 %v2234, %v2218
  %v2811 = vpack.c.b16 %v2235, %v2219
  %v2812 = vpack.c.b16 %v2236, %v2220
  %v2813 = vpack.c.b16 %v2253, %v2237
  %v2814 = vpack.c.b16 %v2254, %v2238
  %v2815 = vpack.c.b16 %v2255, %v2239
  %v2816 = vpack.c.b16 %v2256, %v2240
  %v2817 = vpack.c.b16 %v2257, %v2241
  %v2818 = vpack.c.b16 %v2258, %v2242
  %v2819 = vpack.c.b16 %v2259, %v2243
  %v2820 = vpack.c.b16 %v2260, %v2244
  %v2821 = vpack.c.b16 %v2261, %v2245
  %v2822 = vpack.c.b16 %v2262, %v2246
  %v2823 = vpack.c.b16 %v2263, %v2247
  %v2824 = vpack.c.b16 %v2264, %v2248
  %v2825 = vpack.c.b16 %v2265, %v2249
  %v2826 = vpack.c.b16 %v2266, %v2250
  %v2827 = vpack.c.b16 %v2267, %v2251
  %v2828 = vpack.c.b16 %v2268, %v2252
  %v2829 = vpack.c.b16 %v2285, %v2269
  %v2830 = vpack.c.b16 %v2286, %v2270
  %v2831 = vpack.c.b16 %v2287, %v2271
  %v2832 = vpack.c.b16 %v2288, %v2272
  %v2833 = vpack.c.b16 %v2289, %v2273
  %v2834 = vpack.c.b16 %v2290, %v2274
  %v2835 = vpack.c.b16 %v2291, %v2275
  %v2836 = vpack.c.b16 %v2292, %v2276
  %v2837 = vpack.c.b16 %v2293, %v2277
  %v2838 = vpack.c.b16 %v2294, %v2278
  %v2839 = vpack.c.b16 %v2295, %v2279
  %v2840 = vpack.c.b16 %v2296, %v2280
  %v2841 = vpack.c.b16 %v2297, %v2281
  %v2842 = vpack.c.b16 %v2298, %v2282
  %v2843 = vpack.c.b16 %v2299, %v2283
  %v2844 = vpack.c.b16 %v2300, %v2284
  %v2845 = vpack.c.b16 %v2317, %v2301
  %v2846 = vpack.c.b16 %v2318, %v2302
  %v2847 = vpack.c.b16 %v2319, %v2303
  %v2848 = vpack.c.b16 %v2320, %v2304
  %v2849 = vpack.c.b16 %v2321, %v2305
  %v2850 = vpack.c.b16 %v2322, %v2306
  %v2851 = vpack.c.b16 %v2323, %v2307
  %v2852 = vpack.c.b16 %v2324, %v2308
  %v2853 = vpack.c.b16 %v2325, %v2309
  %v2854 = vpack.c.b16 %v2326, %v2310
  %v2855 = vpack.c.b16 %v2327, %v2311
  %v2856 = vpack.c.b16 %v2328, %v2312
  %v2857 = vpack.c.b16 %v2329, %v2313
  %v2858 = vpack.c.b16 %v2330, %v2314
  %v2859 = vpack.c.b16 %v2331, %v2315
  %v2860 = vpack.c.b16 %v2332, %v2316
  %v2861 = vpack.c.b16 %v2349, %v2333
  %v2862 = vpack.c.b16 %v2350, %v2334
  %v2863 = vpack.c.b16 %v2351, %v2335
  %v2864 = vpack.c.b16 %v2352, %v2336
  %v2865 = vpack.c.b16 %v2353, %v2337
  %v2866 = vpack.c.b16 %v2354, %v2338
  %v2867 = vpack.c.b16 %v2355, %v2339
  %v2868 = vpack.c.b16 %v2356, %v2340
  %v2869 = vpack.c.b16 %v2357, %v2341
  %v2870 = vpack.c.b16 %v2358, %v2342
  %v2871 = vpack.c.b16 %v2359, %v2343
  %v2872 = vpack.c.b16 %v2360, %v2344
  %v2873 = vpack.c.b16 %v2361, %v2345
  %v2874 = vpack.c.b16 %v2362, %v2346
  %v2875 = vpack.c.b16 %v2363, %v2347
  %v2876 = vpack.c.b16 %v2364, %v2348
  %3389 = vmatprep.subr.bf16.mxu0 %v2366
  %3390 = vmatpush1.bf16.msra.mxu0 %v2365
  %3391 = vmatprep.subr.bf16.mxu0 %v2382
  %3392 = vmatpush1.bf16.msra.mxu0 %v2381
  %3393 = vmatprep.subr.bf16.mxu0 %v2398
  %3394 = vmatpush1.bf16.msra.mxu0 %v2397
  %3395 = vmatprep.subr.bf16.mxu0 %v2414
  %3396 = vmatpush1.bf16.msra.mxu0 %v2413
  %3397 = vmatprep.subr.bf16.mxu0 %v2430
  %3398 = vmatpush1.bf16.msra.mxu0 %v2429
  %3399 = vmatprep.subr.bf16.mxu0 %v2446
  %3400 = vmatpush1.bf16.msra.mxu0 %v2445
  %3401 = vmatprep.subr.bf16.mxu0 %v2462
  %3402 = vmatpush1.bf16.msra.mxu0 %v2461
  %3403 = vmatprep.subr.bf16.mxu0 %v2478
  %3404 = vmatpush1.bf16.msra.mxu0 %v2477
  %3405 = vmatprep.subr.bf16.mxu0 %v2494
  %3406 = vmatpush1.bf16.msra.mxu0 %v2493
  %3407 = vmatprep.subr.bf16.mxu0 %v2510
  %3408 = vmatpush1.bf16.msra.mxu0 %v2509
  %3409 = vmatprep.subr.bf16.mxu0 %v2526
  %3410 = vmatpush1.bf16.msra.mxu0 %v2525
  %3411 = vmatprep.subr.bf16.mxu0 %v2542
  %3412 = vmatpush1.bf16.msra.mxu0 %v2541
  %3413 = vmatprep.subr.bf16.mxu0 %v2558
  %3414 = vmatpush1.bf16.msra.mxu0 %v2557
  %3415 = vmatprep.subr.bf16.mxu0 %v2574
  %3416 = vmatpush1.bf16.msra.mxu0 %v2573
  %3417 = vmatprep.subr.bf16.mxu0 %v2590
  %3418 = vmatpush1.bf16.msra.mxu0 %v2589
  %3419 = vmatprep.subr.bf16.mxu0 %v2606
  %3420 = vmatpush1.bf16.msra.mxu0 %v2605
  %3421 = vmatprep.mubr.bf16.mxu0 %v314
  %3422 = vmatmul.mubr.bf16.gmra.mrb[0].mxu0 %v313
  %v3423 = vpop.f32.mrb[0].mxu0
  %v3424 = vadd.f32 0.0, %v3423
  %v3425 = vpop.f32.mrb[0].mxu0
  %v3426 = vadd.f32 0.0, %v3425
  %v3427 = vpop.f32.mrb[0].mxu0
  %v3428 = vadd.f32 0.0, %v3427
  %v3429 = vpop.f32.mrb[0].mxu0
  %v3430 = vadd.f32 0.0, %v3429
  %3431 = vdwg.mxu0
  %3432 = vmatprep.subr.bf16.mxu0 %v2622
  %3433 = vmatpush1.bf16.msra.mxu0 %v2621
  %3434 = vmatprep.subr.bf16.mxu0 %v2638
  %3435 = vmatpush1.bf16.msra.mxu0 %v2637
  %3436 = vmatprep.subr.bf16.mxu0 %v2654
  %3437 = vmatpush1.bf16.msra.mxu0 %v2653
  %3438 = vmatprep.subr.bf16.mxu0 %v2670
  %3439 = vmatpush1.bf16.msra.mxu0 %v2669
  %3440 = vmatprep.subr.bf16.mxu0 %v2686
  %3441 = vmatpush1.bf16.msra.mxu0 %v2685
  %3442 = vmatprep.subr.bf16.mxu0 %v2702
  %3443 = vmatpush1.bf16.msra.mxu0 %v2701
  %3444 = vmatprep.subr.bf16.mxu0 %v2718
  %3445 = vmatpush1.bf16.msra.mxu0 %v2717
  %3446 = vmatprep.subr.bf16.mxu0 %v2734
  %3447 = vmatpush1.bf16.msra.mxu0 %v2733
  %3448 = vmatprep.subr.bf16.mxu0 %v2750
  %3449 = vmatpush1.bf16.msra.mxu0 %v2749
  %3450 = vmatprep.subr.bf16.mxu0 %v2766
  %3451 = vmatpush1.bf16.msra.mxu0 %v2765
  %3452 = vmatprep.subr.bf16.mxu0 %v2782
  %3453 = vmatpush1.bf16.msra.mxu0 %v2781
  %3454 = vmatprep.subr.bf16.mxu0 %v2798
  %3455 = vmatpush1.bf16.msra.mxu0 %v2797
  %3456 = vmatprep.subr.bf16.mxu0 %v2814
  %3457 = vmatpush1.bf16.msra.mxu0 %v2813
  %3458 = vmatprep.subr.bf16.mxu0 %v2830
  %3459 = vmatpush1.bf16.msra.mxu0 %v2829
  %3460 = vmatprep.subr.bf16.mxu0 %v2846
  %3461 = vmatpush1.bf16.msra.mxu0 %v2845
  %3462 = vmatprep.subr.bf16.mxu0 %v2862
  %3463 = vmatpush1.bf16.msra.mxu0 %v2861
  %3464 = vmatprep.mubr.bf16.mxu0 %v316
  %3465 = vmatmul.mubr.bf16.gmra.mrb[0].mxu0 %v315
  %v3466 = vpop.f32.mrb[0].mxu0
  %v3467 = vadd.f32 %v3424, %v3466
  %v3468 = vpop.f32.mrb[0].mxu0
  %v3469 = vadd.f32 %v3426, %v3468
  %v3470 = vpop.f32.mrb[0].mxu0
  %v3471 = vadd.f32 %v3428, %v3470
  %v3472 = vpop.f32.mrb[0].mxu0
  %v3473 = vadd.f32 %v3430, %v3472
  %3474 = vdwg.mxu0
  %3475 = vmatprep.subr.bf16.mxu0 %v2368
  %3476 = vmatpush1.bf16.msra.mxu0 %v2367
  %3477 = vmatprep.subr.bf16.mxu0 %v2384
  %3478 = vmatpush1.bf16.msra.mxu0 %v2383
  %3479 = vmatprep.subr.bf16.mxu0 %v2400
  %3480 = vmatpush1.bf16.msra.mxu0 %v2399
  %3481 = vmatprep.subr.bf16.mxu0 %v2416
  %3482 = vmatpush1.bf16.msra.mxu0 %v2415
  %3483 = vmatprep.subr.bf16.mxu0 %v2432
  %3484 = vmatpush1.bf16.msra.mxu0 %v2431
  %3485 = vmatprep.subr.bf16.mxu0 %v2448
  %3486 = vmatpush1.bf16.msra.mxu0 %v2447
  %3487 = vmatprep.subr.bf16.mxu0 %v2464
  %3488 = vmatpush1.bf16.msra.mxu0 %v2463
  %3489 = vmatprep.subr.bf16.mxu0 %v2480
  %3490 = vmatpush1.bf16.msra.mxu0 %v2479
  %3491 = vmatprep.subr.bf16.mxu0 %v2496
  %3492 = vmatpush1.bf16.msra.mxu0 %v2495
  %3493 = vmatprep.subr.bf16.mxu0 %v2512
  %3494 = vmatpush1.bf16.msra.mxu0 %v2511
  %3495 = vmatprep.subr.bf16.mxu0 %v2528
  %3496 = vmatpush1.bf16.msra.mxu0 %v2527
  %3497 = vmatprep.subr.bf16.mxu0 %v2544
  %3498 = vmatpush1.bf16.msra.mxu0 %v2543
  %3499 = vmatprep.subr.bf16.mxu0 %v2560
  %3500 = vmatpush1.bf16.msra.mxu0 %v2559
  %3501 = vmatprep.subr.bf16.mxu0 %v2576
  %3502 = vmatpush1.bf16.msra.mxu0 %v2575
  %3503 = vmatprep.subr.bf16.mxu0 %v2592
  %3504 = vmatpush1.bf16.msra.mxu0 %v2591
  %3505 = vmatprep.subr.bf16.mxu0 %v2608
  %3506 = vmatpush1.bf16.msra.mxu0 %v2607
  %3507 = vmatprep.mubr.bf16.mxu0 %v314
  %3508 = vmatmul.mubr.bf16.gmra.mrb[0].mxu0 %v313
  %v3509 = vpop.f32.mrb[0].mxu0
  %v3510 = vadd.f32 0.0, %v3509
  %v3511 = vpop.f32.mrb[0].mxu0
  %v3512 = vadd.f32 0.0, %v3511
  %v3513 = vpop.f32.mrb[0].mxu0
  %v3514 = vadd.f32 0.0, %v3513
  %v3515 = vpop.f32.mrb[0].mxu0
  %v3516 = vadd.f32 0.0, %v3515
  %3517 = vdwg.mxu0
  %3518 = vmatprep.subr.bf16.mxu0 %v2624
  %3519 = vmatpush1.bf16.msra.mxu0 %v2623
  %3520 = vmatprep.subr.bf16.mxu0 %v2640
  %3521 = vmatpush1.bf16.msra.mxu0 %v2639
  %3522 = vmatprep.subr.bf16.mxu0 %v2656
  %3523 = vmatpush1.bf16.msra.mxu0 %v2655
  %3524 = vmatprep.subr.bf16.mxu0 %v2672
  %3525 = vmatpush1.bf16.msra.mxu0 %v2671
  %3526 = vmatprep.subr.bf16.mxu0 %v2688
  %3527 = vmatpush1.bf16.msra.mxu0 %v2687
  %3528 = vmatprep.subr.bf16.mxu0 %v2704
  %3529 = vmatpush1.bf16.msra.mxu0 %v2703
  %3530 = vmatprep.subr.bf16.mxu0 %v2720
  %3531 = vmatpush1.bf16.msra.mxu0 %v2719
  %3532 = vmatprep.subr.bf16.mxu0 %v2736
  %3533 = vmatpush1.bf16.msra.mxu0 %v2735
  %3534 = vmatprep.subr.bf16.mxu0 %v2752
  %3535 = vmatpush1.bf16.msra.mxu0 %v2751
  %3536 = vmatprep.subr.bf16.mxu0 %v2768
  %3537 = vmatpush1.bf16.msra.mxu0 %v2767
  %3538 = vmatprep.subr.bf16.mxu0 %v2784
  %3539 = vmatpush1.bf16.msra.mxu0 %v2783
  %3540 = vmatprep.subr.bf16.mxu0 %v2800
  %3541 = vmatpush1.bf16.msra.mxu0 %v2799
  %3542 = vmatprep.subr.bf16.mxu0 %v2816
  %3543 = vmatpush1.bf16.msra.mxu0 %v2815
  %3544 = vmatprep.subr.bf16.mxu0 %v2832
  %3545 = vmatpush1.bf16.msra.mxu0 %v2831
  %3546 = vmatprep.subr.bf16.mxu0 %v2848
  %3547 = vmatpush1.bf16.msra.mxu0 %v2847
  %3548 = vmatprep.subr.bf16.mxu0 %v2864
  %3549 = vmatpush1.bf16.msra.mxu0 %v2863
  %3550 = vmatprep.mubr.bf16.mxu0 %v316
  %3551 = vmatmul.mubr.bf16.gmra.mrb[0].mxu0 %v315
  %v3552 = vpop.f32.mrb[0].mxu0
  %v3553 = vadd.f32 %v3510, %v3552
  %v3554 = vpop.f32.mrb[0].mxu0
  %v3555 = vadd.f32 %v3512, %v3554
  %v3556 = vpop.f32.mrb[0].mxu0
  %v3557 = vadd.f32 %v3514, %v3556
  %v3558 = vpop.f32.mrb[0].mxu0
  %v3559 = vadd.f32 %v3516, %v3558
  %3560 = vdwg.mxu0
  %3561 = vmatprep.subr.bf16.mxu0 %v2370
  %3562 = vmatpush1.bf16.msra.mxu0 %v2369
  %3563 = vmatprep.subr.bf16.mxu0 %v2386
  %3564 = vmatpush1.bf16.msra.mxu0 %v2385
  %3565 = vmatprep.subr.bf16.mxu0 %v2402
  %3566 = vmatpush1.bf16.msra.mxu0 %v2401
  %3567 = vmatprep.subr.bf16.mxu0 %v2418
  %3568 = vmatpush1.bf16.msra.mxu0 %v2417
  %3569 = vmatprep.subr.bf16.mxu0 %v2434
  %3570 = vmatpush1.bf16.msra.mxu0 %v2433
  %3571 = vmatprep.subr.bf16.mxu0 %v2450
  %3572 = vmatpush1.bf16.msra.mxu0 %v2449
  %3573 = vmatprep.subr.bf16.mxu0 %v2466
  %3574 = vmatpush1.bf16.msra.mxu0 %v2465
  %3575 = vmatprep.subr.bf16.mxu0 %v2482
  %3576 = vmatpush1.bf16.msra.mxu0 %v2481
  %3577 = vmatprep.subr.bf16.mxu0 %v2498
  %3578 = vmatpush1.bf16.msra.mxu0 %v2497
  %3579 = vmatprep.subr.bf16.mxu0 %v2514
  %3580 = vmatpush1.bf16.msra.mxu0 %v2513
  %3581 = vmatprep.subr.bf16.mxu0 %v2530
  %3582 = vmatpush1.bf16.msra.mxu0 %v2529
  %3583 = vmatprep.subr.bf16.mxu0 %v2546
  %3584 = vmatpush1.bf16.msra.mxu0 %v2545
  %3585 = vmatprep.subr.bf16.mxu0 %v2562
  %3586 = vmatpush1.bf16.msra.mxu0 %v2561
  %3587 = vmatprep.subr.bf16.mxu0 %v2578
  %3588 = vmatpush1.bf16.msra.mxu0 %v2577
  %3589 = vmatprep.subr.bf16.mxu0 %v2594
  %3590 = vmatpush1.bf16.msra.mxu0 %v2593
  %3591 = vmatprep.subr.bf16.mxu0 %v2610
  %3592 = vmatpush1.bf16.msra.mxu0 %v2609
  %3593 = vmatprep.mubr.bf16.mxu0 %v314
  %3594 = vmatmul.mubr.bf16.gmra.mrb[0].mxu0 %v313
  %v3595 = vpop.f32.mrb[0].mxu0
  %v3596 = vadd.f32 0.0, %v3595
  %v3597 = vpop.f32.mrb[0].mxu0
  %v3598 = vadd.f32 0.0, %v3597
  %v3599 = vpop.f32.mrb[0].mxu0
  %v3600 = vadd.f32 0.0, %v3599
  %v3601 = vpop.f32.mrb[0].mxu0
  %v3602 = vadd.f32 0.0, %v3601
  %3603 = vdwg.mxu0
  %3604 = vmatprep.subr.bf16.mxu0 %v2626
  %3605 = vmatpush1.bf16.msra.mxu0 %v2625
  %3606 = vmatprep.subr.bf16.mxu0 %v2642
  %3607 = vmatpush1.bf16.msra.mxu0 %v2641
  %3608 = vmatprep.subr.bf16.mxu0 %v2658
  %3609 = vmatpush1.bf16.msra.mxu0 %v2657
  %3610 = vmatprep.subr.bf16.mxu0 %v2674
  %3611 = vmatpush1.bf16.msra.mxu0 %v2673
  %3612 = vmatprep.subr.bf16.mxu0 %v2690
  %3613 = vmatpush1.bf16.msra.mxu0 %v2689
  %3614 = vmatprep.subr.bf16.mxu0 %v2706
  %3615 = vmatpush1.bf16.msra.mxu0 %v2705
  %3616 = vmatprep.subr.bf16.mxu0 %v2722
  %3617 = vmatpush1.bf16.msra.mxu0 %v2721
  %3618 = vmatprep.subr.bf16.mxu0 %v2738
  %3619 = vmatpush1.bf16.msra.mxu0 %v2737
  %3620 = vmatprep.subr.bf16.mxu0 %v2754
  %3621 = vmatpush1.bf16.msra.mxu0 %v2753
  %3622 = vmatprep.subr.bf16.mxu0 %v2770
  %3623 = vmatpush1.bf16.msra.mxu0 %v2769
  %3624 = vmatprep.subr.bf16.mxu0 %v2786
  %3625 = vmatpush1.bf16.msra.mxu0 %v2785
  %3626 = vmatprep.subr.bf16.mxu0 %v2802
  %3627 = vmatpush1.bf16.msra.mxu0 %v2801
  %3628 = vmatprep.subr.bf16.mxu0 %v2818
  %3629 = vmatpush1.bf16.msra.mxu0 %v2817
  %3630 = vmatprep.subr.bf16.mxu0 %v2834
  %3631 = vmatpush1.bf16.msra.mxu0 %v2833
  %3632 = vmatprep.subr.bf16.mxu0 %v2850
  %3633 = vmatpush1.bf16.msra.mxu0 %v2849
  %3634 = vmatprep.subr.bf16.mxu0 %v2866
  %3635 = vmatpush1.bf16.msra.mxu0 %v2865
  %3636 = vmatprep.mubr.bf16.mxu0 %v316
  %3637 = vmatmul.mubr.bf16.gmra.mrb[0].mxu0 %v315
  %v3638 = vpop.f32.mrb[0].mxu0
  %v3639 = vadd.f32 %v3596, %v3638
  %v3640 = vpop.f32.mrb[0].mxu0
  %v3641 = vadd.f32 %v3598, %v3640
  %v3642 = vpop.f32.mrb[0].mxu0
  %v3643 = vadd.f32 %v3600, %v3642
  %v3644 = vpop.f32.mrb[0].mxu0
  %v3645 = vadd.f32 %v3602, %v3644
  %3646 = vdwg.mxu0
  %3647 = vmatprep.subr.bf16.mxu0 %v2372
  %3648 = vmatpush1.bf16.msra.mxu0 %v2371
  %3649 = vmatprep.subr.bf16.mxu0 %v2388
  %3650 = vmatpush1.bf16.msra.mxu0 %v2387
  %3651 = vmatprep.subr.bf16.mxu0 %v2404
  %3652 = vmatpush1.bf16.msra.mxu0 %v2403
  %3653 = vmatprep.subr.bf16.mxu0 %v2420
  %3654 = vmatpush1.bf16.msra.mxu0 %v2419
  %3655 = vmatprep.subr.bf16.mxu0 %v2436
  %3656 = vmatpush1.bf16.msra.mxu0 %v2435
  %3657 = vmatprep.subr.bf16.mxu0 %v2452
  %3658 = vmatpush1.bf16.msra.mxu0 %v2451
  %3659 = vmatprep.subr.bf16.mxu0 %v2468
  %3660 = vmatpush1.bf16.msra.mxu0 %v2467
  %3661 = vmatprep.subr.bf16.mxu0 %v2484
  %3662 = vmatpush1.bf16.msra.mxu0 %v2483
  %3663 = vmatprep.subr.bf16.mxu0 %v2500
  %3664 = vmatpush1.bf16.msra.mxu0 %v2499
  %3665 = vmatprep.subr.bf16.mxu0 %v2516
  %3666 = vmatpush1.bf16.msra.mxu0 %v2515
  %3667 = vmatprep.subr.bf16.mxu0 %v2532
  %3668 = vmatpush1.bf16.msra.mxu0 %v2531
  %3669 = vmatprep.subr.bf16.mxu0 %v2548
  %3670 = vmatpush1.bf16.msra.mxu0 %v2547
  %3671 = vmatprep.subr.bf16.mxu0 %v2564
  %3672 = vmatpush1.bf16.msra.mxu0 %v2563
  %3673 = vmatprep.subr.bf16.mxu0 %v2580
  %3674 = vmatpush1.bf16.msra.mxu0 %v2579
  %3675 = vmatprep.subr.bf16.mxu0 %v2596
  %3676 = vmatpush1.bf16.msra.mxu0 %v2595
  %3677 = vmatprep.subr.bf16.mxu0 %v2612
  %3678 = vmatpush1.bf16.msra.mxu0 %v2611
  %3679 = vmatprep.mubr.bf16.mxu0 %v314
  %3680 = vmatmul.mubr.bf16.gmra.mrb[0].mxu0 %v313
  %v3681 = vpop.f32.mrb[0].mxu0
  %v3682 = vadd.f32 0.0, %v3681
  %v3683 = vpop.f32.mrb[0].mxu0
  %v3684 = vadd.f32 0.0, %v3683
  %v3685 = vpop.f32.mrb[0].mxu0
  %v3686 = vadd.f32 0.0, %v3685
  %v3687 = vpop.f32.mrb[0].mxu0
  %v3688 = vadd.f32 0.0, %v3687
  %3689 = vdwg.mxu0
  %3690 = vmatprep.subr.bf16.mxu0 %v2628
  %3691 = vmatpush1.bf16.msra.mxu0 %v2627
  %3692 = vmatprep.subr.bf16.mxu0 %v2644
  %3693 = vmatpush1.bf16.msra.mxu0 %v2643
  %3694 = vmatprep.subr.bf16.mxu0 %v2660
  %3695 = vmatpush1.bf16.msra.mxu0 %v2659
  %3696 = vmatprep.subr.bf16.mxu0 %v2676
  %3697 = vmatpush1.bf16.msra.mxu0 %v2675
  %3698 = vmatprep.subr.bf16.mxu0 %v2692
  %3699 = vmatpush1.bf16.msra.mxu0 %v2691
  %3700 = vmatprep.subr.bf16.mxu0 %v2708
  %3701 = vmatpush1.bf16.msra.mxu0 %v2707
  %3702 = vmatprep.subr.bf16.mxu0 %v2724
  %3703 = vmatpush1.bf16.msra.mxu0 %v2723
  %3704 = vmatprep.subr.bf16.mxu0 %v2740
  %3705 = vmatpush1.bf16.msra.mxu0 %v2739
  %3706 = vmatprep.subr.bf16.mxu0 %v2756
  %3707 = vmatpush1.bf16.msra.mxu0 %v2755
  %3708 = vmatprep.subr.bf16.mxu0 %v2772
  %3709 = vmatpush1.bf16.msra.mxu0 %v2771
  %3710 = vmatprep.subr.bf16.mxu0 %v2788
  %3711 = vmatpush1.bf16.msra.mxu0 %v2787
  %3712 = vmatprep.subr.bf16.mxu0 %v2804
  %3713 = vmatpush1.bf16.msra.mxu0 %v2803
  %3714 = vmatprep.subr.bf16.mxu0 %v2820
  %3715 = vmatpush1.bf16.msra.mxu0 %v2819
  %3716 = vmatprep.subr.bf16.mxu0 %v2836
  %3717 = vmatpush1.bf16.msra.mxu0 %v2835
  %3718 = vmatprep.subr.bf16.mxu0 %v2852
  %3719 = vmatpush1.bf16.msra.mxu0 %v2851
  %3720 = vmatprep.subr.bf16.mxu0 %v2868
  %3721 = vmatpush1.bf16.msra.mxu0 %v2867
  %3722 = vmatprep.mubr.bf16.mxu0 %v316
  %3723 = vmatmul.mubr.bf16.gmra.mrb[0].mxu0 %v315
  %v3724 = vpop.f32.mrb[0].mxu0
  %v3725 = vadd.f32 %v3682, %v3724
  %v3726 = vpop.f32.mrb[0].mxu0
  %v3727 = vadd.f32 %v3684, %v3726
  %v3728 = vpop.f32.mrb[0].mxu0
  %v3729 = vadd.f32 %v3686, %v3728
  %v3730 = vpop.f32.mrb[0].mxu0
  %v3731 = vadd.f32 %v3688, %v3730
  %3732 = vdwg.mxu0
  %3733 = vmatprep.subr.bf16.mxu0 %v2374
  %3734 = vmatpush1.bf16.msra.mxu0 %v2373
  %3735 = vmatprep.subr.bf16.mxu0 %v2390
  %3736 = vmatpush1.bf16.msra.mxu0 %v2389
  %3737 = vmatprep.subr.bf16.mxu0 %v2406
  %3738 = vmatpush1.bf16.msra.mxu0 %v2405
  %3739 = vmatprep.subr.bf16.mxu0 %v2422
  %3740 = vmatpush1.bf16.msra.mxu0 %v2421
  %3741 = vmatprep.subr.bf16.mxu0 %v2438
  %3742 = vmatpush1.bf16.msra.mxu0 %v2437
  %3743 = vmatprep.subr.bf16.mxu0 %v2454
  %3744 = vmatpush1.bf16.msra.mxu0 %v2453
  %3745 = vmatprep.subr.bf16.mxu0 %v2470
  %3746 = vmatpush1.bf16.msra.mxu0 %v2469
  %3747 = vmatprep.subr.bf16.mxu0 %v2486
  %3748 = vmatpush1.bf16.msra.mxu0 %v2485
  %3749 = vmatprep.subr.bf16.mxu0 %v2502
  %3750 = vmatpush1.bf16.msra.mxu0 %v2501
  %3751 = vmatprep.subr.bf16.mxu0 %v2518
  %3752 = vmatpush1.bf16.msra.mxu0 %v2517
  %3753 = vmatprep.subr.bf16.mxu0 %v2534
  %3754 = vmatpush1.bf16.msra.mxu0 %v2533
  %3755 = vmatprep.subr.bf16.mxu0 %v2550
  %3756 = vmatpush1.bf16.msra.mxu0 %v2549
  %3757 = vmatprep.subr.bf16.mxu0 %v2566
  %3758 = vmatpush1.bf16.msra.mxu0 %v2565
  %3759 = vmatprep.subr.bf16.mxu0 %v2582
  %3760 = vmatpush1.bf16.msra.mxu0 %v2581
  %3761 = vmatprep.subr.bf16.mxu0 %v2598
  %3762 = vmatpush1.bf16.msra.mxu0 %v2597
  %3763 = vmatprep.subr.bf16.mxu0 %v2614
  %3764 = vmatpush1.bf16.msra.mxu0 %v2613
  %3765 = vmatprep.mubr.bf16.mxu0 %v314
  %3766 = vmatmul.mubr.bf16.gmra.mrb[0].mxu0 %v313
  %v3767 = vpop.f32.mrb[0].mxu0
  %v3768 = vadd.f32 0.0, %v3767
  %v3769 = vpop.f32.mrb[0].mxu0
  %v3770 = vadd.f32 0.0, %v3769
  %v3771 = vpop.f32.mrb[0].mxu0
  %v3772 = vadd.f32 0.0, %v3771
  %v3773 = vpop.f32.mrb[0].mxu0
  %v3774 = vadd.f32 0.0, %v3773
  %3775 = vdwg.mxu0
  %3776 = vmatprep.subr.bf16.mxu0 %v2630
  %3777 = vmatpush1.bf16.msra.mxu0 %v2629
  %3778 = vmatprep.subr.bf16.mxu0 %v2646
  %3779 = vmatpush1.bf16.msra.mxu0 %v2645
  %3780 = vmatprep.subr.bf16.mxu0 %v2662
  %3781 = vmatpush1.bf16.msra.mxu0 %v2661
  %3782 = vmatprep.subr.bf16.mxu0 %v2678
  %3783 = vmatpush1.bf16.msra.mxu0 %v2677
  %3784 = vmatprep.subr.bf16.mxu0 %v2694
  %3785 = vmatpush1.bf16.msra.mxu0 %v2693
  %3786 = vmatprep.subr.bf16.mxu0 %v2710
  %3787 = vmatpush1.bf16.msra.mxu0 %v2709
  %3788 = vmatprep.subr.bf16.mxu0 %v2726
  %3789 = vmatpush1.bf16.msra.mxu0 %v2725
  %3790 = vmatprep.subr.bf16.mxu0 %v2742
  %3791 = vmatpush1.bf16.msra.mxu0 %v2741
  %3792 = vmatprep.subr.bf16.mxu0 %v2758
  %3793 = vmatpush1.bf16.msra.mxu0 %v2757
  %3794 = vmatprep.subr.bf16.mxu0 %v2774
  %3795 = vmatpush1.bf16.msra.mxu0 %v2773
  %3796 = vmatprep.subr.bf16.mxu0 %v2790
  %3797 = vmatpush1.bf16.msra.mxu0 %v2789
  %3798 = vmatprep.subr.bf16.mxu0 %v2806
  %3799 = vmatpush1.bf16.msra.mxu0 %v2805
  %3800 = vmatprep.subr.bf16.mxu0 %v2822
  %3801 = vmatpush1.bf16.msra.mxu0 %v2821
  %3802 = vmatprep.subr.bf16.mxu0 %v2838
  %3803 = vmatpush1.bf16.msra.mxu0 %v2837
  %3804 = vmatprep.subr.bf16.mxu0 %v2854
  %3805 = vmatpush1.bf16.msra.mxu0 %v2853
  %3806 = vmatprep.subr.bf16.mxu0 %v2870
  %3807 = vmatpush1.bf16.msra.mxu0 %v2869
  %3808 = vmatprep.mubr.bf16.mxu0 %v316
  %3809 = vmatmul.mubr.bf16.gmra.mrb[0].mxu0 %v315
  %v3810 = vpop.f32.mrb[0].mxu0
  %v3811 = vadd.f32 %v3768, %v3810
  %v3812 = vpop.f32.mrb[0].mxu0
  %v3813 = vadd.f32 %v3770, %v3812
  %v3814 = vpop.f32.mrb[0].mxu0
  %v3815 = vadd.f32 %v3772, %v3814
  %v3816 = vpop.f32.mrb[0].mxu0
  %v3817 = vadd.f32 %v3774, %v3816
  %3818 = vdwg.mxu0
  %3819 = vmatprep.subr.bf16.mxu0 %v2376
  %3820 = vmatpush1.bf16.msra.mxu0 %v2375
  %3821 = vmatprep.subr.bf16.mxu0 %v2392
  %3822 = vmatpush1.bf16.msra.mxu0 %v2391
  %3823 = vmatprep.subr.bf16.mxu0 %v2408
  %3824 = vmatpush1.bf16.msra.mxu0 %v2407
  %3825 = vmatprep.subr.bf16.mxu0 %v2424
  %3826 = vmatpush1.bf16.msra.mxu0 %v2423
  %3827 = vmatprep.subr.bf16.mxu0 %v2440
  %3828 = vmatpush1.bf16.msra.mxu0 %v2439
  %3829 = vmatprep.subr.bf16.mxu0 %v2456
  %3830 = vmatpush1.bf16.msra.mxu0 %v2455
  %3831 = vmatprep.subr.bf16.mxu0 %v2472
  %3832 = vmatpush1.bf16.msra.mxu0 %v2471
  %3833 = vmatprep.subr.bf16.mxu0 %v2488
  %3834 = vmatpush1.bf16.msra.mxu0 %v2487
  %3835 = vmatprep.subr.bf16.mxu0 %v2504
  %3836 = vmatpush1.bf16.msra.mxu0 %v2503
  %3837 = vmatprep.subr.bf16.mxu0 %v2520
  %3838 = vmatpush1.bf16.msra.mxu0 %v2519
  %3839 = vmatprep.subr.bf16.mxu0 %v2536
  %3840 = vmatpush1.bf16.msra.mxu0 %v2535
  %3841 = vmatprep.subr.bf16.mxu0 %v2552
  %3842 = vmatpush1.bf16.msra.mxu0 %v2551
  %3843 = vmatprep.subr.bf16.mxu0 %v2568
  %3844 = vmatpush1.bf16.msra.mxu0 %v2567
  %3845 = vmatprep.subr.bf16.mxu0 %v2584
  %3846 = vmatpush1.bf16.msra.mxu0 %v2583
  %3847 = vmatprep.subr.bf16.mxu0 %v2600
  %3848 = vmatpush1.bf16.msra.mxu0 %v2599
  %3849 = vmatprep.subr.bf16.mxu0 %v2616
  %3850 = vmatpush1.bf16.msra.mxu0 %v2615
  %3851 = vmatprep.mubr.bf16.mxu0 %v314
  %3852 = vmatmul.mubr.bf16.gmra.mrb[0].mxu0 %v313
  %v3853 = vpop.f32.mrb[0].mxu0
  %v3854 = vadd.f32 0.0, %v3853
  %v3855 = vpop.f32.mrb[0].mxu0
  %v3856 = vadd.f32 0.0, %v3855
  %v3857 = vpop.f32.mrb[0].mxu0
  %v3858 = vadd.f32 0.0, %v3857
  %v3859 = vpop.f32.mrb[0].mxu0
  %v3860 = vadd.f32 0.0, %v3859
  %3861 = vdwg.mxu0
  %3862 = vmatprep.subr.bf16.mxu0 %v2632
  %3863 = vmatpush1.bf16.msra.mxu0 %v2631
  %3864 = vmatprep.subr.bf16.mxu0 %v2648
  %3865 = vmatpush1.bf16.msra.mxu0 %v2647
  %3866 = vmatprep.subr.bf16.mxu0 %v2664
  %3867 = vmatpush1.bf16.msra.mxu0 %v2663
  %3868 = vmatprep.subr.bf16.mxu0 %v2680
  %3869 = vmatpush1.bf16.msra.mxu0 %v2679
  %3870 = vmatprep.subr.bf16.mxu0 %v2696
  %3871 = vmatpush1.bf16.msra.mxu0 %v2695
  %3872 = vmatprep.subr.bf16.mxu0 %v2712
  %3873 = vmatpush1.bf16.msra.mxu0 %v2711
  %3874 = vmatprep.subr.bf16.mxu0 %v2728
  %3875 = vmatpush1.bf16.msra.mxu0 %v2727
  %3876 = vmatprep.subr.bf16.mxu0 %v2744
  %3877 = vmatpush1.bf16.msra.mxu0 %v2743
  %3878 = vmatprep.subr.bf16.mxu0 %v2760
  %3879 = vmatpush1.bf16.msra.mxu0 %v2759
  %3880 = vmatprep.subr.bf16.mxu0 %v2776
  %3881 = vmatpush1.bf16.msra.mxu0 %v2775
  %3882 = vmatprep.subr.bf16.mxu0 %v2792
  %3883 = vmatpush1.bf16.msra.mxu0 %v2791
  %3884 = vmatprep.subr.bf16.mxu0 %v2808
  %3885 = vmatpush1.bf16.msra.mxu0 %v2807
  %3886 = vmatprep.subr.bf16.mxu0 %v2824
  %3887 = vmatpush1.bf16.msra.mxu0 %v2823
  %3888 = vmatprep.subr.bf16.mxu0 %v2840
  %3889 = vmatpush1.bf16.msra.mxu0 %v2839
  %3890 = vmatprep.subr.bf16.mxu0 %v2856
  %3891 = vmatpush1.bf16.msra.mxu0 %v2855
  %3892 = vmatprep.subr.bf16.mxu0 %v2872
  %3893 = vmatpush1.bf16.msra.mxu0 %v2871
  %3894 = vmatprep.mubr.bf16.mxu0 %v316
  %3895 = vmatmul.mubr.bf16.gmra.mrb[0].mxu0 %v315
  %v3896 = vpop.f32.mrb[0].mxu0
  %v3897 = vadd.f32 %v3854, %v3896
  %v3898 = vpop.f32.mrb[0].mxu0
  %v3899 = vadd.f32 %v3856, %v3898
  %v3900 = vpop.f32.mrb[0].mxu0
  %v3901 = vadd.f32 %v3858, %v3900
  %v3902 = vpop.f32.mrb[0].mxu0
  %v3903 = vadd.f32 %v3860, %v3902
  %3904 = vdwg.mxu0
  %3905 = vmatprep.subr.bf16.mxu0 %v2378
  %3906 = vmatpush1.bf16.msra.mxu0 %v2377
  %3907 = vmatprep.subr.bf16.mxu0 %v2394
  %3908 = vmatpush1.bf16.msra.mxu0 %v2393
  %3909 = vmatprep.subr.bf16.mxu0 %v2410
  %3910 = vmatpush1.bf16.msra.mxu0 %v2409
  %3911 = vmatprep.subr.bf16.mxu0 %v2426
  %3912 = vmatpush1.bf16.msra.mxu0 %v2425
  %3913 = vmatprep.subr.bf16.mxu0 %v2442
  %3914 = vmatpush1.bf16.msra.mxu0 %v2441
  %3915 = vmatprep.subr.bf16.mxu0 %v2458
  %3916 = vmatpush1.bf16.msra.mxu0 %v2457
  %3917 = vmatprep.subr.bf16.mxu0 %v2474
  %3918 = vmatpush1.bf16.msra.mxu0 %v2473
  %3919 = vmatprep.subr.bf16.mxu0 %v2490
  %3920 = vmatpush1.bf16.msra.mxu0 %v2489
  %3921 = vmatprep.subr.bf16.mxu0 %v2506
  %3922 = vmatpush1.bf16.msra.mxu0 %v2505
  %3923 = vmatprep.subr.bf16.mxu0 %v2522
  %3924 = vmatpush1.bf16.msra.mxu0 %v2521
  %3925 = vmatprep.subr.bf16.mxu0 %v2538
  %3926 = vmatpush1.bf16.msra.mxu0 %v2537
  %3927 = vmatprep.subr.bf16.mxu0 %v2554
  %3928 = vmatpush1.bf16.msra.mxu0 %v2553
  %3929 = vmatprep.subr.bf16.mxu0 %v2570
  %3930 = vmatpush1.bf16.msra.mxu0 %v2569
  %3931 = vmatprep.subr.bf16.mxu0 %v2586
  %3932 = vmatpush1.bf16.msra.mxu0 %v2585
  %3933 = vmatprep.subr.bf16.mxu0 %v2602
  %3934 = vmatpush1.bf16.msra.mxu0 %v2601
  %3935 = vmatprep.subr.bf16.mxu0 %v2618
  %3936 = vmatpush1.bf16.msra.mxu0 %v2617
  %3937 = vmatprep.mubr.bf16.mxu0 %v314
  %3938 = vmatmul.mubr.bf16.gmra.mrb[0].mxu0 %v313
  %v3939 = vpop.f32.mrb[0].mxu0
  %v3940 = vadd.f32 0.0, %v3939
  %v3941 = vpop.f32.mrb[0].mxu0
  %v3942 = vadd.f32 0.0, %v3941
  %v3943 = vpop.f32.mrb[0].mxu0
  %v3944 = vadd.f32 0.0, %v3943
  %v3945 = vpop.f32.mrb[0].mxu0
  %v3946 = vadd.f32 0.0, %v3945
  %3947 = vdwg.mxu0
  %3948 = vmatprep.subr.bf16.mxu0 %v2634
  %3949 = vmatpush1.bf16.msra.mxu0 %v2633
  %3950 = vmatprep.subr.bf16.mxu0 %v2650
  %3951 = vmatpush1.bf16.msra.mxu0 %v2649
  %3952 = vmatprep.subr.bf16.mxu0 %v2666
  %3953 = vmatpush1.bf16.msra.mxu0 %v2665
  %3954 = vmatprep.subr.bf16.mxu0 %v2682
  %3955 = vmatpush1.bf16.msra.mxu0 %v2681
  %3956 = vmatprep.subr.bf16.mxu0 %v2698
  %3957 = vmatpush1.bf16.msra.mxu0 %v2697
  %3958 = vmatprep.subr.bf16.mxu0 %v2714
  %3959 = vmatpush1.bf16.msra.mxu0 %v2713
  %3960 = vmatprep.subr.bf16.mxu0 %v2730
  %3961 = vmatpush1.bf16.msra.mxu0 %v2729
  %3962 = vmatprep.subr.bf16.mxu0 %v2746
  %3963 = vmatpush1.bf16.msra.mxu0 %v2745
  %3964 = vmatprep.subr.bf16.mxu0 %v2762
  %3965 = vmatpush1.bf16.msra.mxu0 %v2761
  %3966 = vmatprep.subr.bf16.mxu0 %v2778
  %3967 = vmatpush1.bf16.msra.mxu0 %v2777
  %3968 = vmatprep.subr.bf16.mxu0 %v2794
  %3969 = vmatpush1.bf16.msra.mxu0 %v2793
  %3970 = vmatprep.subr.bf16.mxu0 %v2810
  %3971 = vmatpush1.bf16.msra.mxu0 %v2809
  %3972 = vmatprep.subr.bf16.mxu0 %v2826
  %3973 = vmatpush1.bf16.msra.mxu0 %v2825
  %3974 = vmatprep.subr.bf16.mxu0 %v2842
  %3975 = vmatpush1.bf16.msra.mxu0 %v2841
  %3976 = vmatprep.subr.bf16.mxu0 %v2858
  %3977 = vmatpush1.bf16.msra.mxu0 %v2857
  %3978 = vmatprep.subr.bf16.mxu0 %v2874
  %3979 = vmatpush1.bf16.msra.mxu0 %v2873
  %3980 = vmatprep.mubr.bf16.mxu0 %v316
  %3981 = vmatmul.mubr.bf16.gmra.mrb[0].mxu0 %v315
  %v3982 = vpop.f32.mrb[0].mxu0
  %v3983 = vadd.f32 %v3940, %v3982
  %v3984 = vpop.f32.mrb[0].mxu0
  %v3985 = vadd.f32 %v3942, %v3984
  %v3986 = vpop.f32.mrb[0].mxu0
  %v3987 = vadd.f32 %v3944, %v3986
  %v3988 = vpop.f32.mrb[0].mxu0
  %v3989 = vadd.f32 %v3946, %v3988
  %3990 = vdwg.mxu0
  %3991 = vmatprep.subr.bf16.mxu0 %v2380
  %3992 = vmatpush1.bf16.msra.mxu0 %v2379
  %3993 = vmatprep.subr.bf16.mxu0 %v2396
  %3994 = vmatpush1.bf16.msra.mxu0 %v2395
  %3995 = vmatprep.subr.bf16.mxu0 %v2412
  %3996 = vmatpush1.bf16.msra.mxu0 %v2411
  %3997 = vmatprep.subr.bf16.mxu0 %v2428
  %3998 = vmatpush1.bf16.msra.mxu0 %v2427
  %3999 = vmatprep.subr.bf16.mxu0 %v2444
  %4000 = vmatpush1.bf16.msra.mxu0 %v2443
  %4001 = vmatprep.subr.bf16.mxu0 %v2460
  %4002 = vmatpush1.bf16.msra.mxu0 %v2459
  %4003 = vmatprep.subr.bf16.mxu0 %v2476
  %4004 = vmatpush1.bf16.msra.mxu0 %v2475
  %4005 = vmatprep.subr.bf16.mxu0 %v2492
  %4006 = vmatpush1.bf16.msra.mxu0 %v2491
  %4007 = vmatprep.subr.bf16.mxu0 %v2508
  %4008 = vmatpush1.bf16.msra.mxu0 %v2507
  %4009 = vmatprep.subr.bf16.mxu0 %v2524
  %4010 = vmatpush1.bf16.msra.mxu0 %v2523
  %4011 = vmatprep.subr.bf16.mxu0 %v2540
  %4012 = vmatpush1.bf16.msra.mxu0 %v2539
  %4013 = vmatprep.subr.bf16.mxu0 %v2556
  %4014 = vmatpush1.bf16.msra.mxu0 %v2555
  %4015 = vmatprep.subr.bf16.mxu0 %v2572
  %4016 = vmatpush1.bf16.msra.mxu0 %v2571
  %4017 = vmatprep.subr.bf16.mxu0 %v2588
  %4018 = vmatpush1.bf16.msra.mxu0 %v2587
  %4019 = vmatprep.subr.bf16.mxu0 %v2604
  %4020 = vmatpush1.bf16.msra.mxu0 %v2603
  %4021 = vmatprep.subr.bf16.mxu0 %v2620
  %4022 = vmatpush1.bf16.msra.mxu0 %v2619
  %4023 = vmatprep.mubr.bf16.mxu0 %v314
  %4024 = vmatmul.mubr.bf16.gmra.mrb[0].mxu0 %v313
  %v4025 = vpop.f32.mrb[0].mxu0
  %v4026 = vadd.f32 0.0, %v4025
  %v4027 = vpop.f32.mrb[0].mxu0
  %v4028 = vadd.f32 0.0, %v4027
  %v4029 = vpop.f32.mrb[0].mxu0
  %v4030 = vadd.f32 0.0, %v4029
  %v4031 = vpop.f32.mrb[0].mxu0
  %v4032 = vadd.f32 0.0, %v4031
  %4033 = vdwg.mxu0
  %4034 = vmatprep.subr.bf16.mxu0 %v2636
  %4035 = vmatpush1.bf16.msra.mxu0 %v2635
  %4036 = vmatprep.subr.bf16.mxu0 %v2652
  %4037 = vmatpush1.bf16.msra.mxu0 %v2651
  %4038 = vmatprep.subr.bf16.mxu0 %v2668
  %4039 = vmatpush1.bf16.msra.mxu0 %v2667
  %4040 = vmatprep.subr.bf16.mxu0 %v2684
  %4041 = vmatpush1.bf16.msra.mxu0 %v2683
  %4042 = vmatprep.subr.bf16.mxu0 %v2700
  %4043 = vmatpush1.bf16.msra.mxu0 %v2699
  %4044 = vmatprep.subr.bf16.mxu0 %v2716
  %4045 = vmatpush1.bf16.msra.mxu0 %v2715
  %4046 = vmatprep.subr.bf16.mxu0 %v2732
  %4047 = vmatpush1.bf16.msra.mxu0 %v2731
  %4048 = vmatprep.subr.bf16.mxu0 %v2748
  %4049 = vmatpush1.bf16.msra.mxu0 %v2747
  %4050 = vmatprep.subr.bf16.mxu0 %v2764
  %4051 = vmatpush1.bf16.msra.mxu0 %v2763
  %4052 = vmatprep.subr.bf16.mxu0 %v2780
  %4053 = vmatpush1.bf16.msra.mxu0 %v2779
  %4054 = vmatprep.subr.bf16.mxu0 %v2796
  %4055 = vmatpush1.bf16.msra.mxu0 %v2795
  %4056 = vmatprep.subr.bf16.mxu0 %v2812
  %4057 = vmatpush1.bf16.msra.mxu0 %v2811
  %4058 = vmatprep.subr.bf16.mxu0 %v2828
  %4059 = vmatpush1.bf16.msra.mxu0 %v2827
  %4060 = vmatprep.subr.bf16.mxu0 %v2844
  %4061 = vmatpush1.bf16.msra.mxu0 %v2843
  %4062 = vmatprep.subr.bf16.mxu0 %v2860
  %4063 = vmatpush1.bf16.msra.mxu0 %v2859
  %4064 = vmatprep.subr.bf16.mxu0 %v2876
  %4065 = vmatpush1.bf16.msra.mxu0 %v2875
  %4066 = vmatprep.mubr.bf16.mxu0 %v316
  %4067 = vmatmul.mubr.bf16.gmra.mrb[0].mxu0 %v315
  %v4068 = vpop.f32.mrb[0].mxu0
  %v4069 = vadd.f32 %v4026, %v4068
  %v4070 = vpop.f32.mrb[0].mxu0
  %v4071 = vadd.f32 %v4028, %v4070
  %v4072 = vpop.f32.mrb[0].mxu0
  %v4073 = vadd.f32 %v4030, %v4072
  %v4074 = vpop.f32.mrb[0].mxu0
  %v4075 = vadd.f32 %v4032, %v4074
  %4076 = vdwg.mxu0
  %v4077 = vld [vmem:[%s5] sm:$0xff]
  %4078 = vrot.lane.b32.xlu0 %v3467, 33
  %v4079 = vpop.permute.xlu0 %4078
  %4080 = vrot.lane.b32.xlu0 %v3469, 33
  %v4081 = vpop.permute.xlu0 %4080
  %4082 = vrot.lane.b32.xlu0 %v3553, 33
  %v4083 = vpop.permute.xlu0 %4082
  %4084 = vrot.lane.b32.xlu0 %v3555, 33
  %v4085 = vpop.permute.xlu0 %4084
  %4086 = vrot.lane.b32.xlu0 %v3639, 33
  %v4087 = vpop.permute.xlu0 %4086
  %4088 = vrot.lane.b32.xlu0 %v3641, 33
  %v4089 = vpop.permute.xlu0 %4088
  %4090 = vrot.lane.b32.xlu0 %v3725, 33
  %v4091 = vpop.permute.xlu0 %4090
  %4092 = vrot.lane.b32.xlu0 %v3727, 33
  %v4093 = vpop.permute.xlu0 %4092
  %4094 = vrot.lane.b32.xlu0 %v3811, 33
  %v4095 = vpop.permute.xlu0 %4094
  %4096 = vrot.lane.b32.xlu0 %v3813, 33
  %v4097 = vpop.permute.xlu0 %4096
  %4098 = vrot.lane.b32.xlu0 %v3897, 33
  %v4099 = vpop.permute.xlu0 %4098
  %4100 = vrot.lane.b32.xlu0 %v3899, 33
  %v4101 = vpop.permute.xlu0 %4100
  %4102 = vrot.lane.b32.xlu0 %v3983, 33
  %v4103 = vpop.permute.xlu0 %4102
  %4104 = vrot.lane.b32.xlu0 %v3985, 33
  %v4105 = vpop.permute.xlu0 %4104
  %4106 = vrot.lane.b32.xlu0 %v4069, 33
  %v4107 = vpop.permute.xlu0 %4106
  %4108 = vrot.lane.b32.xlu0 %v4071, 33
  %v4109 = vpop.permute.xlu0 %4108
  %v4110 = vlaneseq
  %v4111 = vand.u32 %v4110, 127
  %vm4112 = vcmp.lt.s32.totalorder %v4111, 33
  %v4113 = vsel %vm4112, %v4107, %v4109
  %v4114 = vsel %vm4112, %v4105, %v4107
  %v4115 = vsel %vm4112, %v4103, %v4105
  %v4116 = vsel %vm4112, %v4101, %v4103
  %v4117 = vsel %vm4112, %v4099, %v4101
  %v4118 = vsel %vm4112, %v4097, %v4099
  %v4119 = vsel %vm4112, %v4095, %v4097
  %v4120 = vsel %vm4112, %v4093, %v4095
  %v4121 = vsel %vm4112, %v4091, %v4093
  %v4122 = vsel %vm4112, %v4089, %v4091
  %v4123 = vsel %vm4112, %v4087, %v4089
  %v4124 = vsel %vm4112, %v4085, %v4087
  %v4125 = vsel %vm4112, %v4083, %v4085
  %v4126 = vsel %vm4112, %v4081, %v4083
  %v4127 = vsel %vm4112, %v4079, %v4081
  %v4128 = vsel %vm4112, %v4109, %v4079
  %v4129 = vld [vmem:[%s2] ss:$8 sm:$0xf]
  %v4130 = vld [vmem:[%s2] ss:$8 sm:$0xf0]
  %v4131 = vor.u32 %v4129, %v4130
  %s4132 = scalar_lea.vmem %s2, 64
  %v4133 = vld [vmem:[%s4132] ss:$8 sm:$0xf]
  %v4134 = vld [vmem:[%s4132] ss:$8 sm:$0xf0]
  %v4135 = vor.u32 %v4133, %v4134
  %v4138 = vlaneseq
  %v4139 = vshrl.u32 %v4138, 7
  %v4140 = vsub.s32 0, %v4139
  %v4141 = vrot.slane %v4131, %v4140
  %v4142 = vlaneseq
  %v4143 = vshrl.u32 %v4142, 7
  %v4144 = vsub.s32 1, %v4143
  %v4145 = vrot.slane %v4131, %v4144
  %v4146 = vlaneseq
  %v4147 = vshrl.u32 %v4146, 7
  %v4148 = vsub.s32 2, %v4147
  %v4149 = vrot.slane %v4131, %v4148
  %v4150 = vlaneseq
  %v4151 = vshrl.u32 %v4150, 7
  %v4152 = vsub.s32 3, %v4151
  %v4153 = vrot.slane %v4131, %v4152
  %v4154 = vlaneseq
  %v4155 = vshrl.u32 %v4154, 7
  %v4156 = vsub.s32 4, %v4155
  %v4157 = vrot.slane %v4131, %v4156
  %v4158 = vlaneseq
  %v4159 = vshrl.u32 %v4158, 7
  %v4160 = vsub.s32 5, %v4159
  %v4161 = vrot.slane %v4131, %v4160
  %v4162 = vlaneseq
  %v4163 = vshrl.u32 %v4162, 7
  %v4164 = vsub.s32 6, %v4163
  %v4165 = vrot.slane %v4131, %v4164
  %v4166 = vlaneseq
  %v4167 = vshrl.u32 %v4166, 7
  %v4168 = vsub.s32 7, %v4167
  %v4169 = vrot.slane %v4131, %v4168
  %v4170 = vlaneseq
  %v4171 = vshrl.u32 %v4170, 7
  %v4172 = vsub.s32 0, %v4171
  %v4173 = vrot.slane %v4135, %v4172
  %v4174 = vlaneseq
  %v4175 = vshrl.u32 %v4174, 7
  %v4176 = vsub.s32 1, %v4175
  %v4177 = vrot.slane %v4135, %v4176
  %v4178 = vlaneseq
  %v4179 = vshrl.u32 %v4178, 7
  %v4180 = vsub.s32 2, %v4179
  %v4181 = vrot.slane %v4135, %v4180
  %v4182 = vlaneseq
  %v4183 = vshrl.u32 %v4182, 7
  %v4184 = vsub.s32 3, %v4183
  %v4185 = vrot.slane %v4135, %v4184
  %v4186 = vlaneseq
  %v4187 = vshrl.u32 %v4186, 7
  %v4188 = vsub.s32 4, %v4187
  %v4189 = vrot.slane %v4135, %v4188
  %v4190 = vlaneseq
  %v4191 = vshrl.u32 %v4190, 7
  %v4192 = vsub.s32 5, %v4191
  %v4193 = vrot.slane %v4135, %v4192
  %v4194 = vlaneseq
  %v4195 = vshrl.u32 %v4194, 7
  %v4196 = vsub.s32 6, %v4195
  %v4197 = vrot.slane %v4135, %v4196
  %v4198 = vlaneseq
  %v4199 = vshrl.u32 %v4198, 7
  %v4200 = vsub.s32 7, %v4199
  %v4201 = vrot.slane %v4135, %v4200
  %v4218 = vmul.f32 %v4128, %v4141
  %v4219 = vmul.f32 %v4127, %v4145
  %v4220 = vmul.f32 %v4126, %v4149
  %v4221 = vmul.f32 %v4125, %v4153
  %v4222 = vmul.f32 %v4124, %v4157
  %v4223 = vmul.f32 %v4123, %v4161
  %v4224 = vmul.f32 %v4122, %v4165
  %v4225 = vmul.f32 %v4121, %v4169
  %v4226 = vmul.f32 %v4120, %v4173
  %v4227 = vmul.f32 %v4119, %v4177
  %v4228 = vmul.f32 %v4118, %v4181
  %v4229 = vmul.f32 %v4117, %v4185
  %v4230 = vmul.f32 %v4116, %v4189
  %v4231 = vmul.f32 %v4115, %v4193
  %v4232 = vmul.f32 %v4114, %v4197
  %v4233 = vmul.f32 %v4113, %v4201
  %4234 = vst [vmem:[#allocation2] sm:$0xff] %v4218
  %4235 = vst [vmem:[#allocation2 + $0x8] sm:$0xff] %v4219
  %4236 = vst [vmem:[#allocation2 + $0x10] sm:$0xff] %v4220
  %4237 = vst [vmem:[#allocation2 + $0x18] sm:$0xff] %v4221
  %4238 = vst [vmem:[#allocation2 + $0x20] sm:$0xff] %v4222
  %4239 = vst [vmem:[#allocation2 + $0x28] sm:$0xff] %v4223
  %4240 = vst [vmem:[#allocation2 + $0x30] sm:$0xff] %v4224
  %4241 = vst [vmem:[#allocation2 + $0x38] sm:$0xff] %v4225
  %4242 = vst [vmem:[#allocation2 + $0x40] sm:$0xff] %v4226
  %4243 = vst [vmem:[#allocation2 + $0x48] sm:$0xff] %v4227
  %4244 = vst [vmem:[#allocation2 + $0x50] sm:$0xff] %v4228
  %4245 = vst [vmem:[#allocation2 + $0x58] sm:$0xff] %v4229
  %4246 = vst [vmem:[#allocation2 + $0x60] sm:$0xff] %v4230
  %4247 = vst [vmem:[#allocation2 + $0x68] sm:$0xff] %v4231
  %4248 = vst [vmem:[#allocation2 + $0x70] sm:$0xff] %v4232
  %4249 = vst [vmem:[#allocation2 + $0x78] sm:$0xff] %v4233
  %4250 = vrot.lane.b32.xlu0 %v3467, 32
  %v4251 = vpop.permute.xlu0 %4250
  %4252 = vrot.lane.b32.xlu0 %v3469, 32
  %v4253 = vpop.permute.xlu0 %4252
  %4254 = vrot.lane.b32.xlu0 %v3553, 32
  %v4255 = vpop.permute.xlu0 %4254
  %4256 = vrot.lane.b32.xlu0 %v3555, 32
  %v4257 = vpop.permute.xlu0 %4256
  %4258 = vrot.lane.b32.xlu0 %v3639, 32
  %v4259 = vpop.permute.xlu0 %4258
  %4260 = vrot.lane.b32.xlu0 %v3641, 32
  %v4261 = vpop.permute.xlu0 %4260
  %4262 = vrot.lane.b32.xlu0 %v3725, 32
  %v4263 = vpop.permute.xlu0 %4262
  %4264 = vrot.lane.b32.xlu0 %v3727, 32
  %v4265 = vpop.permute.xlu0 %4264
  %4266 = vrot.lane.b32.xlu0 %v3811, 32
  %v4267 = vpop.permute.xlu0 %4266
  %4268 = vrot.lane.b32.xlu0 %v3813, 32
  %v4269 = vpop.permute.xlu0 %4268
  %4270 = vrot.lane.b32.xlu0 %v3897, 32
  %v4271 = vpop.permute.xlu0 %4270
  %4272 = vrot.lane.b32.xlu0 %v3899, 32
  %v4273 = vpop.permute.xlu0 %4272
  %4274 = vrot.lane.b32.xlu0 %v3983, 32
  %v4275 = vpop.permute.xlu0 %4274
  %4276 = vrot.lane.b32.xlu0 %v3985, 32
  %v4277 = vpop.permute.xlu0 %4276
  %4278 = vrot.lane.b32.xlu0 %v4069, 32
  %v4279 = vpop.permute.xlu0 %4278
  %4280 = vrot.lane.b32.xlu0 %v4071, 32
  %v4281 = vpop.permute.xlu0 %4280
  %vm4282 = vcmp.lt.s32.totalorder %v4111, 32
  %v4283 = vsel %vm4282, %v4279, %v4281
  %v4284 = vsel %vm4282, %v4277, %v4279
  %v4285 = vsel %vm4282, %v4275, %v4277
  %v4286 = vsel %vm4282, %v4273, %v4275
  %v4287 = vsel %vm4282, %v4271, %v4273
  %v4288 = vsel %vm4282, %v4269, %v4271
  %v4289 = vsel %vm4282, %v4267, %v4269
  %v4290 = vsel %vm4282, %v4265, %v4267
  %v4291 = vsel %vm4282, %v4263, %v4265
  %v4292 = vsel %vm4282, %v4261, %v4263
  %v4293 = vsel %vm4282, %v4259, %v4261
  %v4294 = vsel %vm4282, %v4257, %v4259
  %v4295 = vsel %vm4282, %v4255, %v4257
  %v4296 = vsel %vm4282, %v4253, %v4255
  %v4297 = vsel %vm4282, %v4251, %v4253
  %v4298 = vsel %vm4282, %v4281, %v4251
  %s4299 = scalar_lea.vmem %s2, 1
  %v4300 = vld [vmem:[%s4299] ss:$8 sm:$0xf]
  %v4301 = vld [vmem:[%s4299] ss:$8 sm:$0xf0]
  %v4302 = vor.u32 %v4300, %v4301
  %s4303 = scalar_lea.vmem %s2, 65
  %v4304 = vld [vmem:[%s4303] ss:$8 sm:$0xf]
  %v4305 = vld [vmem:[%s4303] ss:$8 sm:$0xf0]
  %v4306 = vor.u32 %v4304, %v4305
  %v4309 = vlaneseq
  %v4310 = vshrl.u32 %v4309, 7
  %v4311 = vsub.s32 0, %v4310
  %v4312 = vrot.slane %v4302, %v4311
  %v4313 = vlaneseq
  %v4314 = vshrl.u32 %v4313, 7
  %v4315 = vsub.s32 1, %v4314
  %v4316 = vrot.slane %v4302, %v4315
  %v4317 = vlaneseq
  %v4318 = vshrl.u32 %v4317, 7
  %v4319 = vsub.s32 2, %v4318
  %v4320 = vrot.slane %v4302, %v4319
  %v4321 = vlaneseq
  %v4322 = vshrl.u32 %v4321, 7
  %v4323 = vsub.s32 3, %v4322
  %v4324 = vrot.slane %v4302, %v4323
  %v4325 = vlaneseq
  %v4326 = vshrl.u32 %v4325, 7
  %v4327 = vsub.s32 4, %v4326
  %v4328 = vrot.slane %v4302, %v4327
  %v4329 = vlaneseq
  %v4330 = vshrl.u32 %v4329, 7
  %v4331 = vsub.s32 5, %v4330
  %v4332 = vrot.slane %v4302, %v4331
  %v4333 = vlaneseq
  %v4334 = vshrl.u32 %v4333, 7
  %v4335 = vsub.s32 6, %v4334
  %v4336 = vrot.slane %v4302, %v4335
  %v4337 = vlaneseq
  %v4338 = vshrl.u32 %v4337, 7
  %v4339 = vsub.s32 7, %v4338
  %v4340 = vrot.slane %v4302, %v4339
  %v4341 = vlaneseq
  %v4342 = vshrl.u32 %v4341, 7
  %v4343 = vsub.s32 0, %v4342
  %v4344 = vrot.slane %v4306, %v4343
  %v4345 = vlaneseq
  %v4346 = vshrl.u32 %v4345, 7
  %v4347 = vsub.s32 1, %v4346
  %v4348 = vrot.slane %v4306, %v4347
  %v4349 = vlaneseq
  %v4350 = vshrl.u32 %v4349, 7
  %v4351 = vsub.s32 2, %v4350
  %v4352 = vrot.slane %v4306, %v4351
  %v4353 = vlaneseq
  %v4354 = vshrl.u32 %v4353, 7
  %v4355 = vsub.s32 3, %v4354
  %v4356 = vrot.slane %v4306, %v4355
  %v4357 = vlaneseq
  %v4358 = vshrl.u32 %v4357, 7
  %v4359 = vsub.s32 4, %v4358
  %v4360 = vrot.slane %v4306, %v4359
  %v4361 = vlaneseq
  %v4362 = vshrl.u32 %v4361, 7
  %v4363 = vsub.s32 5, %v4362
  %v4364 = vrot.slane %v4306, %v4363
  %v4365 = vlaneseq
  %v4366 = vshrl.u32 %v4365, 7
  %v4367 = vsub.s32 6, %v4366
  %v4368 = vrot.slane %v4306, %v4367
  %v4369 = vlaneseq
  %v4370 = vshrl.u32 %v4369, 7
  %v4371 = vsub.s32 7, %v4370
  %v4372 = vrot.slane %v4306, %v4371
  %v4389 = vmul.f32 %v4298, %v4312
  %v4390 = vmul.f32 %v4297, %v4316
  %v4391 = vmul.f32 %v4296, %v4320
  %v4392 = vmul.f32 %v4295, %v4324
  %v4393 = vmul.f32 %v4294, %v4328
  %v4394 = vmul.f32 %v4293, %v4332
  %v4395 = vmul.f32 %v4292, %v4336
  %v4396 = vmul.f32 %v4291, %v4340
  %v4397 = vmul.f32 %v4290, %v4344
  %v4398 = vmul.f32 %v4289, %v4348
  %v4399 = vmul.f32 %v4288, %v4352
  %v4400 = vmul.f32 %v4287, %v4356
  %v4401 = vmul.f32 %v4286, %v4360
  %v4402 = vmul.f32 %v4285, %v4364
  %v4403 = vmul.f32 %v4284, %v4368
  %v4404 = vmul.f32 %v4283, %v4372
  %4405 = vst [vmem:[#allocation2 + $0x80] sm:$0xff] %v4389
  %4406 = vst [vmem:[#allocation2 + $0x88] sm:$0xff] %v4390
  %4407 = vst [vmem:[#allocation2 + $0x90] sm:$0xff] %v4391
  %4408 = vst [vmem:[#allocation2 + $0x98] sm:$0xff] %v4392
  %4409 = vst [vmem:[#allocation2 + $0xa0] sm:$0xff] %v4393
  %4410 = vst [vmem:[#allocation2 + $0xa8] sm:$0xff] %v4394
  %4411 = vst [vmem:[#allocation2 + $0xb0] sm:$0xff] %v4395
  %4412 = vst [vmem:[#allocation2 + $0xb8] sm:$0xff] %v4396
  %4413 = vst [vmem:[#allocation2 + $0xc0] sm:$0xff] %v4397
  %4414 = vst [vmem:[#allocation2 + $0xc8] sm:$0xff] %v4398
  %4415 = vst [vmem:[#allocation2 + $0xd0] sm:$0xff] %v4399
  %4416 = vst [vmem:[#allocation2 + $0xd8] sm:$0xff] %v4400
  %4417 = vst [vmem:[#allocation2 + $0xe0] sm:$0xff] %v4401
  %4418 = vst [vmem:[#allocation2 + $0xe8] sm:$0xff] %v4402
  %4419 = vst [vmem:[#allocation2 + $0xf0] sm:$0xff] %v4403
  %4420 = vst [vmem:[#allocation2 + $0xf8] sm:$0xff] %v4404
  %4421 = vrot.lane.b32.xlu0 %v3467, 31
  %v4422 = vpop.permute.xlu0 %4421
  %4423 = vrot.lane.b32.xlu0 %v3469, 31
  %v4424 = vpop.permute.xlu0 %4423
  %4425 = vrot.lane.b32.xlu0 %v3553, 31
  %v4426 = vpop.permute.xlu0 %4425
  %4427 = vrot.lane.b32.xlu0 %v3555, 31
  %v4428 = vpop.permute.xlu0 %4427
  %4429 = vrot.lane.b32.xlu0 %v3639, 31
  %v4430 = vpop.permute.xlu0 %4429
  %4431 = vrot.lane.b32.xlu0 %v3641, 31
  %v4432 = vpop.permute.xlu0 %4431
  %4433 = vrot.lane.b32.xlu0 %v3725, 31
  %v4434 = vpop.permute.xlu0 %4433
  %4435 = vrot.lane.b32.xlu0 %v3727, 31
  %v4436 = vpop.permute.xlu0 %4435
  %4437 = vrot.lane.b32.xlu0 %v3811, 31
  %v4438 = vpop.permute.xlu0 %4437
  %4439 = vrot.lane.b32.xlu0 %v3813, 31
  %v4440 = vpop.permute.xlu0 %4439
  %4441 = vrot.lane.b32.xlu0 %v3897, 31
  %v4442 = vpop.permute.xlu0 %4441
  %4443 = vrot.lane.b32.xlu0 %v3899, 31
  %v4444 = vpop.permute.xlu0 %4443
  %4445 = vrot.lane.b32.xlu0 %v3983, 31
  %v4446 = vpop.permute.xlu0 %4445
  %4447 = vrot.lane.b32.xlu0 %v3985, 31
  %v4448 = vpop.permute.xlu0 %4447
  %4449 = vrot.lane.b32.xlu0 %v4069, 31
  %v4450 = vpop.permute.xlu0 %4449
  %4451 = vrot.lane.b32.xlu0 %v4071, 31
  %v4452 = vpop.permute.xlu0 %4451
  %vm4453 = vcmp.lt.s32.totalorder %v4111, 31
  %v4454 = vsel %vm4453, %v4450, %v4452
  %v4455 = vsel %vm4453, %v4448, %v4450
  %v4456 = vsel %vm4453, %v4446, %v4448
  %v4457 = vsel %vm4453, %v4444, %v4446
  %v4458 = vsel %vm4453, %v4442, %v4444
  %v4459 = vsel %vm4453, %v4440, %v4442
  %v4460 = vsel %vm4453, %v4438, %v4440
  %v4461 = vsel %vm4453, %v4436, %v4438
  %v4462 = vsel %vm4453, %v4434, %v4436
  %v4463 = vsel %vm4453, %v4432, %v4434
  %v4464 = vsel %vm4453, %v4430, %v4432
  %v4465 = vsel %vm4453, %v4428, %v4430
  %v4466 = vsel %vm4453, %v4426, %v4428
  %v4467 = vsel %vm4453, %v4424, %v4426
  %v4468 = vsel %vm4453, %v4422, %v4424
  %v4469 = vsel %vm4453, %v4452, %v4422
  %s4470 = scalar_lea.vmem %s2, 2
  %v4471 = vld [vmem:[%s4470] ss:$8 sm:$0xf]
  %v4472 = vld [vmem:[%s4470] ss:$8 sm:$0xf0]
  %v4473 = vor.u32 %v4471, %v4472
  %s4474 = scalar_lea.vmem %s2, 66
  %v4475 = vld [vmem:[%s4474] ss:$8 sm:$0xf]
  %v4476 = vld [vmem:[%s4474] ss:$8 sm:$0xf0]
  %v4477 = vor.u32 %v4475, %v4476
  %v4480 = vlaneseq
  %v4481 = vshrl.u32 %v4480, 7
  %v4482 = vsub.s32 0, %v4481
  %v4483 = vrot.slane %v4473, %v4482
  %v4484 = vlaneseq
  %v4485 = vshrl.u32 %v4484, 7
  %v4486 = vsub.s32 1, %v4485
  %v4487 = vrot.slane %v4473, %v4486
  %v4488 = vlaneseq
  %v4489 = vshrl.u32 %v4488, 7
  %v4490 = vsub.s32 2, %v4489
  %v4491 = vrot.slane %v4473, %v4490
  %v4492 = vlaneseq
  %v4493 = vshrl.u32 %v4492, 7
  %v4494 = vsub.s32 3, %v4493
  %v4495 = vrot.slane %v4473, %v4494
  %v4496 = vlaneseq
  %v4497 = vshrl.u32 %v4496, 7
  %v4498 = vsub.s32 4, %v4497
  %v4499 = vrot.slane %v4473, %v4498
  %v4500 = vlaneseq
  %v4501 = vshrl.u32 %v4500, 7
  %v4502 = vsub.s32 5, %v4501
  %v4503 = vrot.slane %v4473, %v4502
  %v4504 = vlaneseq
  %v4505 = vshrl.u32 %v4504, 7
  %v4506 = vsub.s32 6, %v4505
  %v4507 = vrot.slane %v4473, %v4506
  %v4508 = vlaneseq
  %v4509 = vshrl.u32 %v4508, 7
  %v4510 = vsub.s32 7, %v4509
  %v4511 = vrot.slane %v4473, %v4510
  %v4512 = vlaneseq
  %v4513 = vshrl.u32 %v4512, 7
  %v4514 = vsub.s32 0, %v4513
  %v4515 = vrot.slane %v4477, %v4514
  %v4516 = vlaneseq
  %v4517 = vshrl.u32 %v4516, 7
  %v4518 = vsub.s32 1, %v4517
  %v4519 = vrot.slane %v4477, %v4518
  %v4520 = vlaneseq
  %v4521 = vshrl.u32 %v4520, 7
  %v4522 = vsub.s32 2, %v4521
  %v4523 = vrot.slane %v4477, %v4522
  %v4524 = vlaneseq
  %v4525 = vshrl.u32 %v4524, 7
  %v4526 = vsub.s32 3, %v4525
  %v4527 = vrot.slane %v4477, %v4526
  %v4528 = vlaneseq
  %v4529 = vshrl.u32 %v4528, 7
  %v4530 = vsub.s32 4, %v4529
  %v4531 = vrot.slane %v4477, %v4530
  %v4532 = vlaneseq
  %v4533 = vshrl.u32 %v4532, 7
  %v4534 = vsub.s32 5, %v4533
  %v4535 = vrot.slane %v4477, %v4534
  %v4536 = vlaneseq
  %v4537 = vshrl.u32 %v4536, 7
  %v4538 = vsub.s32 6, %v4537
  %v4539 = vrot.slane %v4477, %v4538
  %v4540 = vlaneseq
  %v4541 = vshrl.u32 %v4540, 7
  %v4542 = vsub.s32 7, %v4541
  %v4543 = vrot.slane %v4477, %v4542
  %v4560 = vmul.f32 %v4469, %v4483
  %v4561 = vmul.f32 %v4468, %v4487
  %v4562 = vmul.f32 %v4467, %v4491
  %v4563 = vmul.f32 %v4466, %v4495
  %v4564 = vmul.f32 %v4465, %v4499
  %v4565 = vmul.f32 %v4464, %v4503
  %v4566 = vmul.f32 %v4463, %v4507
  %v4567 = vmul.f32 %v4462, %v4511
  %v4568 = vmul.f32 %v4461, %v4515
  %v4569 = vmul.f32 %v4460, %v4519
  %v4570 = vmul.f32 %v4459, %v4523
  %v4571 = vmul.f32 %v4458, %v4527
  %v4572 = vmul.f32 %v4457, %v4531
  %v4573 = vmul.f32 %v4456, %v4535
  %v4574 = vmul.f32 %v4455, %v4539
  %v4575 = vmul.f32 %v4454, %v4543
  %4576 = vst [vmem:[#allocation2 + $0x100] sm:$0xff] %v4560
  %4577 = vst [vmem:[#allocation2 + $0x108] sm:$0xff] %v4561
  %4578 = vst [vmem:[#allocation2 + $0x110] sm:$0xff] %v4562
  %4579 = vst [vmem:[#allocation2 + $0x118] sm:$0xff] %v4563
  %4580 = vst [vmem:[#allocation2 + $0x120] sm:$0xff] %v4564
  %4581 = vst [vmem:[#allocation2 + $0x128] sm:$0xff] %v4565
  %4582 = vst [vmem:[#allocation2 + $0x130] sm:$0xff] %v4566
  %4583 = vst [vmem:[#allocation2 + $0x138] sm:$0xff] %v4567
  %4584 = vst [vmem:[#allocation2 + $0x140] sm:$0xff] %v4568
  %4585 = vst [vmem:[#allocation2 + $0x148] sm:$0xff] %v4569
  %4586 = vst [vmem:[#allocation2 + $0x150] sm:$0xff] %v4570
  %4587 = vst [vmem:[#allocation2 + $0x158] sm:$0xff] %v4571
  %4588 = vst [vmem:[#allocation2 + $0x160] sm:$0xff] %v4572
  %4589 = vst [vmem:[#allocation2 + $0x168] sm:$0xff] %v4573
  %4590 = vst [vmem:[#allocation2 + $0x170] sm:$0xff] %v4574
  %4591 = vst [vmem:[#allocation2 + $0x178] sm:$0xff] %v4575
  %4592 = vrot.lane.b32.xlu0 %v3467, 1
  %v4593 = vpop.permute.xlu0 %4592
  %4594 = vrot.lane.b32.xlu0 %v3469, 1
  %v4595 = vpop.permute.xlu0 %4594
  %4596 = vrot.lane.b32.xlu0 %v3553, 1
  %v4597 = vpop.permute.xlu0 %4596
  %4598 = vrot.lane.b32.xlu0 %v3555, 1
  %v4599 = vpop.permute.xlu0 %4598
  %4600 = vrot.lane.b32.xlu0 %v3639, 1
  %v4601 = vpop.permute.xlu0 %4600
  %4602 = vrot.lane.b32.xlu0 %v3641, 1
  %v4603 = vpop.permute.xlu0 %4602
  %4604 = vrot.lane.b32.xlu0 %v3725, 1
  %v4605 = vpop.permute.xlu0 %4604
  %4606 = vrot.lane.b32.xlu0 %v3727, 1
  %v4607 = vpop.permute.xlu0 %4606
  %4608 = vrot.lane.b32.xlu0 %v3811, 1
  %v4609 = vpop.permute.xlu0 %4608
  %4610 = vrot.lane.b32.xlu0 %v3813, 1
  %v4611 = vpop.permute.xlu0 %4610
  %4612 = vrot.lane.b32.xlu0 %v3897, 1
  %v4613 = vpop.permute.xlu0 %4612
  %4614 = vrot.lane.b32.xlu0 %v3899, 1
  %v4615 = vpop.permute.xlu0 %4614
  %4616 = vrot.lane.b32.xlu0 %v3983, 1
  %v4617 = vpop.permute.xlu0 %4616
  %4618 = vrot.lane.b32.xlu0 %v3985, 1
  %v4619 = vpop.permute.xlu0 %4618
  %4620 = vrot.lane.b32.xlu0 %v4069, 1
  %v4621 = vpop.permute.xlu0 %4620
  %4622 = vrot.lane.b32.xlu0 %v4071, 1
  %v4623 = vpop.permute.xlu0 %4622
  %vm4624 = vcmp.lt.s32.totalorder %v4111, 1
  %v4625 = vsel %vm4624, %v4621, %v4623
  %v4626 = vsel %vm4624, %v4619, %v4621
  %v4627 = vsel %vm4624, %v4617, %v4619
  %v4628 = vsel %vm4624, %v4615, %v4617
  %v4629 = vsel %vm4624, %v4613, %v4615
  %v4630 = vsel %vm4624, %v4611, %v4613
  %v4631 = vsel %vm4624, %v4609, %v4611
  %v4632 = vsel %vm4624, %v4607, %v4609
  %v4633 = vsel %vm4624, %v4605, %v4607
  %v4634 = vsel %vm4624, %v4603, %v4605
  %v4635 = vsel %vm4624, %v4601, %v4603
  %v4636 = vsel %vm4624, %v4599, %v4601
  %v4637 = vsel %vm4624, %v4597, %v4599
  %v4638 = vsel %vm4624, %v4595, %v4597
  %v4639 = vsel %vm4624, %v4593, %v4595
  %v4640 = vsel %vm4624, %v4623, %v4593
  %s4641 = scalar_lea.vmem %s2, 3
  %v4642 = vld [vmem:[%s4641] ss:$8 sm:$0xf]
  %v4643 = vld [vmem:[%s4641] ss:$8 sm:$0xf0]
  %v4644 = vor.u32 %v4642, %v4643
  %s4645 = scalar_lea.vmem %s2, 67
  %v4646 = vld [vmem:[%s4645] ss:$8 sm:$0xf]
  %v4647 = vld [vmem:[%s4645] ss:$8 sm:$0xf0]
  %v4648 = vor.u32 %v4646, %v4647
  %v4651 = vlaneseq
  %v4652 = vshrl.u32 %v4651, 7
  %v4653 = vsub.s32 0, %v4652
  %v4654 = vrot.slane %v4644, %v4653
  %v4655 = vlaneseq
  %v4656 = vshrl.u32 %v4655, 7
  %v4657 = vsub.s32 1, %v4656
  %v4658 = vrot.slane %v4644, %v4657
  %v4659 = vlaneseq
  %v4660 = vshrl.u32 %v4659, 7
  %v4661 = vsub.s32 2, %v4660
  %v4662 = vrot.slane %v4644, %v4661
  %v4663 = vlaneseq
  %v4664 = vshrl.u32 %v4663, 7
  %v4665 = vsub.s32 3, %v4664
  %v4666 = vrot.slane %v4644, %v4665
  %v4667 = vlaneseq
  %v4668 = vshrl.u32 %v4667, 7
  %v4669 = vsub.s32 4, %v4668
  %v4670 = vrot.slane %v4644, %v4669
  %v4671 = vlaneseq
  %v4672 = vshrl.u32 %v4671, 7
  %v4673 = vsub.s32 5, %v4672
  %v4674 = vrot.slane %v4644, %v4673
  %v4675 = vlaneseq
  %v4676 = vshrl.u32 %v4675, 7
  %v4677 = vsub.s32 6, %v4676
  %v4678 = vrot.slane %v4644, %v4677
  %v4679 = vlaneseq
  %v4680 = vshrl.u32 %v4679, 7
  %v4681 = vsub.s32 7, %v4680
  %v4682 = vrot.slane %v4644, %v4681
  %v4683 = vlaneseq
  %v4684 = vshrl.u32 %v4683, 7
  %v4685 = vsub.s32 0, %v4684
  %v4686 = vrot.slane %v4648, %v4685
  %v4687 = vlaneseq
  %v4688 = vshrl.u32 %v4687, 7
  %v4689 = vsub.s32 1, %v4688
  %v4690 = vrot.slane %v4648, %v4689
  %v4691 = vlaneseq
  %v4692 = vshrl.u32 %v4691, 7
  %v4693 = vsub.s32 2, %v4692
  %v4694 = vrot.slane %v4648, %v4693
  %v4695 = vlaneseq
  %v4696 = vshrl.u32 %v4695, 7
  %v4697 = vsub.s32 3, %v4696
  %v4698 = vrot.slane %v4648, %v4697
  %v4699 = vlaneseq
  %v4700 = vshrl.u32 %v4699, 7
  %v4701 = vsub.s32 4, %v4700
  %v4702 = vrot.slane %v4648, %v4701
  %v4703 = vlaneseq
  %v4704 = vshrl.u32 %v4703, 7
  %v4705 = vsub.s32 5, %v4704
  %v4706 = vrot.slane %v4648, %v4705
  %v4707 = vlaneseq
  %v4708 = vshrl.u32 %v4707, 7
  %v4709 = vsub.s32 6, %v4708
  %v4710 = vrot.slane %v4648, %v4709
  %v4711 = vlaneseq
  %v4712 = vshrl.u32 %v4711, 7
  %v4713 = vsub.s32 7, %v4712
  %v4714 = vrot.slane %v4648, %v4713
  %v4731 = vmul.f32 %v4640, %v4654
  %v4732 = vmul.f32 %v4639, %v4658
  %v4733 = vmul.f32 %v4638, %v4662
  %v4734 = vmul.f32 %v4637, %v4666
  %v4735 = vmul.f32 %v4636, %v4670
  %v4736 = vmul.f32 %v4635, %v4674
  %v4737 = vmul.f32 %v4634, %v4678
  %v4738 = vmul.f32 %v4633, %v4682
  %v4739 = vmul.f32 %v4632, %v4686
  %v4740 = vmul.f32 %v4631, %v4690
  %v4741 = vmul.f32 %v4630, %v4694
  %v4742 = vmul.f32 %v4629, %v4698
  %v4743 = vmul.f32 %v4628, %v4702
  %v4744 = vmul.f32 %v4627, %v4706
  %v4745 = vmul.f32 %v4626, %v4710
  %v4746 = vmul.f32 %v4625, %v4714
  %4747 = vst [vmem:[#allocation2 + $0x180] sm:$0xff] %v4731
  %4748 = vst [vmem:[#allocation2 + $0x188] sm:$0xff] %v4732
  %4749 = vst [vmem:[#allocation2 + $0x190] sm:$0xff] %v4733
  %4750 = vst [vmem:[#allocation2 + $0x198] sm:$0xff] %v4734
  %4751 = vst [vmem:[#allocation2 + $0x1a0] sm:$0xff] %v4735
  %4752 = vst [vmem:[#allocation2 + $0x1a8] sm:$0xff] %v4736
  %4753 = vst [vmem:[#allocation2 + $0x1b0] sm:$0xff] %v4737
  %4754 = vst [vmem:[#allocation2 + $0x1b8] sm:$0xff] %v4738
  %4755 = vst [vmem:[#allocation2 + $0x1c0] sm:$0xff] %v4739
  %4756 = vst [vmem:[#allocation2 + $0x1c8] sm:$0xff] %v4740
  %4757 = vst [vmem:[#allocation2 + $0x1d0] sm:$0xff] %v4741
  %4758 = vst [vmem:[#allocation2 + $0x1d8] sm:$0xff] %v4742
  %4759 = vst [vmem:[#allocation2 + $0x1e0] sm:$0xff] %v4743
  %4760 = vst [vmem:[#allocation2 + $0x1e8] sm:$0xff] %v4744
  %4761 = vst [vmem:[#allocation2 + $0x1f0] sm:$0xff] %v4745
  %4762 = vst [vmem:[#allocation2 + $0x1f8] sm:$0xff] %v4746
  %4763 = vst [vmem:[#allocation2 + $0x200] sm:$0xff] %v3467
  %4764 = vst [vmem:[#allocation2 + $0x208] sm:$0xff] %v3469
  %4765 = vst [vmem:[#allocation2 + $0x210] sm:$0xff] %v3553
  %4766 = vst [vmem:[#allocation2 + $0x218] sm:$0xff] %v3555
  %4767 = vst [vmem:[#allocation2 + $0x220] sm:$0xff] %v3639
  %4768 = vst [vmem:[#allocation2 + $0x228] sm:$0xff] %v3641
  %4769 = vst [vmem:[#allocation2 + $0x230] sm:$0xff] %v3725
  %4770 = vst [vmem:[#allocation2 + $0x238] sm:$0xff] %v3727
  %4771 = vst [vmem:[#allocation2 + $0x240] sm:$0xff] %v3811
  %4772 = vst [vmem:[#allocation2 + $0x248] sm:$0xff] %v3813
  %4773 = vst [vmem:[#allocation2 + $0x250] sm:$0xff] %v3897
  %4774 = vst [vmem:[#allocation2 + $0x258] sm:$0xff] %v3899
  %4775 = vst [vmem:[#allocation2 + $0x260] sm:$0xff] %v3983
  %4776 = vst [vmem:[#allocation2 + $0x268] sm:$0xff] %v3985
  %4777 = vst [vmem:[#allocation2 + $0x270] sm:$0xff] %v4069
  %4778 = vst [vmem:[#allocation2 + $0x278] sm:$0xff] %v4071
  %4779 = vrot.lane.b32.xlu0 %v3467, 127
  %v4780 = vpop.permute.xlu0 %4779
  %4781 = vrot.lane.b32.xlu0 %v3469, 127
  %v4782 = vpop.permute.xlu0 %4781
  %4783 = vrot.lane.b32.xlu0 %v3553, 127
  %v4784 = vpop.permute.xlu0 %4783
  %4785 = vrot.lane.b32.xlu0 %v3555, 127
  %v4786 = vpop.permute.xlu0 %4785
  %4787 = vrot.lane.b32.xlu0 %v3639, 127
  %v4788 = vpop.permute.xlu0 %4787
  %4789 = vrot.lane.b32.xlu0 %v3641, 127
  %v4790 = vpop.permute.xlu0 %4789
  %4791 = vrot.lane.b32.xlu0 %v3725, 127
  %v4792 = vpop.permute.xlu0 %4791
  %4793 = vrot.lane.b32.xlu0 %v3727, 127
  %v4794 = vpop.permute.xlu0 %4793
  %4795 = vrot.lane.b32.xlu0 %v3811, 127
  %v4796 = vpop.permute.xlu0 %4795
  %4797 = vrot.lane.b32.xlu0 %v3813, 127
  %v4798 = vpop.permute.xlu0 %4797
  %4799 = vrot.lane.b32.xlu0 %v3897, 127
  %v4800 = vpop.permute.xlu0 %4799
  %4801 = vrot.lane.b32.xlu0 %v3899, 127
  %v4802 = vpop.permute.xlu0 %4801
  %4803 = vrot.lane.b32.xlu0 %v3983, 127
  %v4804 = vpop.permute.xlu0 %4803
  %4805 = vrot.lane.b32.xlu0 %v3985, 127
  %v4806 = vpop.permute.xlu0 %4805
  %4807 = vrot.lane.b32.xlu0 %v4069, 127
  %v4808 = vpop.permute.xlu0 %4807
  %4809 = vrot.lane.b32.xlu0 %v4071, 127
  %v4810 = vpop.permute.xlu0 %4809
  %vm4811 = vcmp.lt.s32.totalorder %v4111, 127
  %v4812 = vsel %vm4811, %v4808, %v4810
  %v4813 = vsel %vm4811, %v4806, %v4808
  %v4814 = vsel %vm4811, %v4804, %v4806
  %v4815 = vsel %vm4811, %v4802, %v4804
  %v4816 = vsel %vm4811, %v4800, %v4802
  %v4817 = vsel %vm4811, %v4798, %v4800
  %v4818 = vsel %vm4811, %v4796, %v4798
  %v4819 = vsel %vm4811, %v4794, %v4796
  %v4820 = vsel %vm4811, %v4792, %v4794
  %v4821 = vsel %vm4811, %v4790, %v4792
  %v4822 = vsel %vm4811, %v4788, %v4790
  %v4823 = vsel %vm4811, %v4786, %v4788
  %v4824 = vsel %vm4811, %v4784, %v4786
  %v4825 = vsel %vm4811, %v4782, %v4784
  %v4826 = vsel %vm4811, %v4780, %v4782
  %v4827 = vsel %vm4811, %v4810, %v4780
  %s4828 = scalar_lea.vmem %s2, 5
  %v4829 = vld [vmem:[%s4828] ss:$8 sm:$0xf]
  %v4830 = vld [vmem:[%s4828] ss:$8 sm:$0xf0]
  %v4831 = vor.u32 %v4829, %v4830
  %s4832 = scalar_lea.vmem %s2, 69
  %v4833 = vld [vmem:[%s4832] ss:$8 sm:$0xf]
  %v4834 = vld [vmem:[%s4832] ss:$8 sm:$0xf0]
  %v4835 = vor.u32 %v4833, %v4834
  %v4838 = vlaneseq
  %v4839 = vshrl.u32 %v4838, 7
  %v4840 = vsub.s32 0, %v4839
  %v4841 = vrot.slane %v4831, %v4840
  %v4842 = vlaneseq
  %v4843 = vshrl.u32 %v4842, 7
  %v4844 = vsub.s32 1, %v4843
  %v4845 = vrot.slane %v4831, %v4844
  %v4846 = vlaneseq
  %v4847 = vshrl.u32 %v4846, 7
  %v4848 = vsub.s32 2, %v4847
  %v4849 = vrot.slane %v4831, %v4848
  %v4850 = vlaneseq
  %v4851 = vshrl.u32 %v4850, 7
  %v4852 = vsub.s32 3, %v4851
  %v4853 = vrot.slane %v4831, %v4852
  %v4854 = vlaneseq
  %v4855 = vshrl.u32 %v4854, 7
  %v4856 = vsub.s32 4, %v4855
  %v4857 = vrot.slane %v4831, %v4856
  %v4858 = vlaneseq
  %v4859 = vshrl.u32 %v4858, 7
  %v4860 = vsub.s32 5, %v4859
  %v4861 = vrot.slane %v4831, %v4860
  %v4862 = vlaneseq
  %v4863 = vshrl.u32 %v4862, 7
  %v4864 = vsub.s32 6, %v4863
  %v4865 = vrot.slane %v4831, %v4864
  %v4866 = vlaneseq
  %v4867 = vshrl.u32 %v4866, 7
  %v4868 = vsub.s32 7, %v4867
  %v4869 = vrot.slane %v4831, %v4868
  %v4870 = vlaneseq
  %v4871 = vshrl.u32 %v4870, 7
  %v4872 = vsub.s32 0, %v4871
  %v4873 = vrot.slane %v4835, %v4872
  %v4874 = vlaneseq
  %v4875 = vshrl.u32 %v4874, 7
  %v4876 = vsub.s32 1, %v4875
  %v4877 = vrot.slane %v4835, %v4876
  %v4878 = vlaneseq
  %v4879 = vshrl.u32 %v4878, 7
  %v4880 = vsub.s32 2, %v4879
  %v4881 = vrot.slane %v4835, %v4880
  %v4882 = vlaneseq
  %v4883 = vshrl.u32 %v4882, 7
  %v4884 = vsub.s32 3, %v4883
  %v4885 = vrot.slane %v4835, %v4884
  %v4886 = vlaneseq
  %v4887 = vshrl.u32 %v4886, 7
  %v4888 = vsub.s32 4, %v4887
  %v4889 = vrot.slane %v4835, %v4888
  %v4890 = vlaneseq
  %v4891 = vshrl.u32 %v4890, 7
  %v4892 = vsub.s32 5, %v4891
  %v4893 = vrot.slane %v4835, %v4892
  %v4894 = vlaneseq
  %v4895 = vshrl.u32 %v4894, 7
  %v4896 = vsub.s32 6, %v4895
  %v4897 = vrot.slane %v4835, %v4896
  %v4898 = vlaneseq
  %v4899 = vshrl.u32 %v4898, 7
  %v4900 = vsub.s32 7, %v4899
  %v4901 = vrot.slane %v4835, %v4900
  %v4918 = vmul.f32 %v4826, %v4841
  %v4919 = vmul.f32 %v4825, %v4845
  %v4920 = vmul.f32 %v4824, %v4849
  %v4921 = vmul.f32 %v4823, %v4853
  %v4922 = vmul.f32 %v4822, %v4857
  %v4923 = vmul.f32 %v4821, %v4861
  %v4924 = vmul.f32 %v4820, %v4865
  %v4925 = vmul.f32 %v4819, %v4869
  %v4926 = vmul.f32 %v4818, %v4873
  %v4927 = vmul.f32 %v4817, %v4877
  %v4928 = vmul.f32 %v4816, %v4881
  %v4929 = vmul.f32 %v4815, %v4885
  %v4930 = vmul.f32 %v4814, %v4889
  %v4931 = vmul.f32 %v4813, %v4893
  %v4932 = vmul.f32 %v4812, %v4897
  %v4933 = vmul.f32 %v4827, %v4901
  %4934 = vst [vmem:[#allocation2 + $0x280] sm:$0xff] %v4918
  %4935 = vst [vmem:[#allocation2 + $0x288] sm:$0xff] %v4919
  %4936 = vst [vmem:[#allocation2 + $0x290] sm:$0xff] %v4920
  %4937 = vst [vmem:[#allocation2 + $0x298] sm:$0xff] %v4921
  %4938 = vst [vmem:[#allocation2 + $0x2a0] sm:$0xff] %v4922
  %4939 = vst [vmem:[#allocation2 + $0x2a8] sm:$0xff] %v4923
  %4940 = vst [vmem:[#allocation2 + $0x2b0] sm:$0xff] %v4924
  %4941 = vst [vmem:[#allocation2 + $0x2b8] sm:$0xff] %v4925
  %4942 = vst [vmem:[#allocation2 + $0x2c0] sm:$0xff] %v4926
  %4943 = vst [vmem:[#allocation2 + $0x2c8] sm:$0xff] %v4927
  %4944 = vst [vmem:[#allocation2 + $0x2d0] sm:$0xff] %v4928
  %4945 = vst [vmem:[#allocation2 + $0x2d8] sm:$0xff] %v4929
  %4946 = vst [vmem:[#allocation2 + $0x2e0] sm:$0xff] %v4930
  %4947 = vst [vmem:[#allocation2 + $0x2e8] sm:$0xff] %v4931
  %4948 = vst [vmem:[#allocation2 + $0x2f0] sm:$0xff] %v4932
  %4949 = vst [vmem:[#allocation2 + $0x2f8] sm:$0xff] %v4933
  %4950 = vrot.lane.b32.xlu0 %v3467, 97
  %v4951 = vpop.permute.xlu0 %4950
  %4952 = vrot.lane.b32.xlu0 %v3469, 97
  %v4953 = vpop.permute.xlu0 %4952
  %4954 = vrot.lane.b32.xlu0 %v3553, 97
  %v4955 = vpop.permute.xlu0 %4954
  %4956 = vrot.lane.b32.xlu0 %v3555, 97
  %v4957 = vpop.permute.xlu0 %4956
  %4958 = vrot.lane.b32.xlu0 %v3639, 97
  %v4959 = vpop.permute.xlu0 %4958
  %4960 = vrot.lane.b32.xlu0 %v3641, 97
  %v4961 = vpop.permute.xlu0 %4960
  %4962 = vrot.lane.b32.xlu0 %v3725, 97
  %v4963 = vpop.permute.xlu0 %4962
  %4964 = vrot.lane.b32.xlu0 %v3727, 97
  %v4965 = vpop.permute.xlu0 %4964
  %4966 = vrot.lane.b32.xlu0 %v3811, 97
  %v4967 = vpop.permute.xlu0 %4966
  %4968 = vrot.lane.b32.xlu0 %v3813, 97
  %v4969 = vpop.permute.xlu0 %4968
  %4970 = vrot.lane.b32.xlu0 %v3897, 97
  %v4971 = vpop.permute.xlu0 %4970
  %4972 = vrot.lane.b32.xlu0 %v3899, 97
  %v4973 = vpop.permute.xlu0 %4972
  %4974 = vrot.lane.b32.xlu0 %v3983, 97
  %v4975 = vpop.permute.xlu0 %4974
  %4976 = vrot.lane.b32.xlu0 %v3985, 97
  %v4977 = vpop.permute.xlu0 %4976
  %4978 = vrot.lane.b32.xlu0 %v4069, 97
  %v4979 = vpop.permute.xlu0 %4978
  %4980 = vrot.lane.b32.xlu0 %v4071, 97
  %v4981 = vpop.permute.xlu0 %4980
  %vm4982 = vcmp.lt.s32.totalorder %v4111, 97
  %v4983 = vsel %vm4982, %v4979, %v4981
  %v4984 = vsel %vm4982, %v4977, %v4979
  %v4985 = vsel %vm4982, %v4975, %v4977
  %v4986 = vsel %vm4982, %v4973, %v4975
  %v4987 = vsel %vm4982, %v4971, %v4973
  %v4988 = vsel %vm4982, %v4969, %v4971
  %v4989 = vsel %vm4982, %v4967, %v4969
  %v4990 = vsel %vm4982, %v4965, %v4967
  %v4991 = vsel %vm4982, %v4963, %v4965
  %v4992 = vsel %vm4982, %v4961, %v4963
  %v4993 = vsel %vm4982, %v4959, %v4961
  %v4994 = vsel %vm4982, %v4957, %v4959
  %v4995 = vsel %vm4982, %v4955, %v4957
  %v4996 = vsel %vm4982, %v4953, %v4955
  %v4997 = vsel %vm4982, %v4951, %v4953
  %v4998 = vsel %vm4982, %v4981, %v4951
  %s4999 = scalar_lea.vmem %s2, 6
  %v5000 = vld [vmem:[%s4999] ss:$8 sm:$0xf]
  %v5001 = vld [vmem:[%s4999] ss:$8 sm:$0xf0]
  %v5002 = vor.u32 %v5000, %v5001
  %s5003 = scalar_lea.vmem %s2, 70
  %v5004 = vld [vmem:[%s5003] ss:$8 sm:$0xf]
  %v5005 = vld [vmem:[%s5003] ss:$8 sm:$0xf0]
  %v5006 = vor.u32 %v5004, %v5005
  %v5009 = vlaneseq
  %v5010 = vshrl.u32 %v5009, 7
  %v5011 = vsub.s32 0, %v5010
  %v5012 = vrot.slane %v5002, %v5011
  %v5013 = vlaneseq
  %v5014 = vshrl.u32 %v5013, 7
  %v5015 = vsub.s32 1, %v5014
  %v5016 = vrot.slane %v5002, %v5015
  %v5017 = vlaneseq
  %v5018 = vshrl.u32 %v5017, 7
  %v5019 = vsub.s32 2, %v5018
  %v5020 = vrot.slane %v5002, %v5019
  %v5021 = vlaneseq
  %v5022 = vshrl.u32 %v5021, 7
  %v5023 = vsub.s32 3, %v5022
  %v5024 = vrot.slane %v5002, %v5023
  %v5025 = vlaneseq
  %v5026 = vshrl.u32 %v5025, 7
  %v5027 = vsub.s32 4, %v5026
  %v5028 = vrot.slane %v5002, %v5027
  %v5029 = vlaneseq
  %v5030 = vshrl.u32 %v5029, 7
  %v5031 = vsub.s32 5, %v5030
  %v5032 = vrot.slane %v5002, %v5031
  %v5033 = vlaneseq
  %v5034 = vshrl.u32 %v5033, 7
  %v5035 = vsub.s32 6, %v5034
  %v5036 = vrot.slane %v5002, %v5035
  %v5037 = vlaneseq
  %v5038 = vshrl.u32 %v5037, 7
  %v5039 = vsub.s32 7, %v5038
  %v5040 = vrot.slane %v5002, %v5039
  %v5041 = vlaneseq
  %v5042 = vshrl.u32 %v5041, 7
  %v5043 = vsub.s32 0, %v5042
  %v5044 = vrot.slane %v5006, %v5043
  %v5045 = vlaneseq
  %v5046 = vshrl.u32 %v5045, 7
  %v5047 = vsub.s32 1, %v5046
  %v5048 = vrot.slane %v5006, %v5047
  %v5049 = vlaneseq
  %v5050 = vshrl.u32 %v5049, 7
  %v5051 = vsub.s32 2, %v5050
  %v5052 = vrot.slane %v5006, %v5051
  %v5053 = vlaneseq
  %v5054 = vshrl.u32 %v5053, 7
  %v5055 = vsub.s32 3, %v5054
  %v5056 = vrot.slane %v5006, %v5055
  %v5057 = vlaneseq
  %v5058 = vshrl.u32 %v5057, 7
  %v5059 = vsub.s32 4, %v5058
  %v5060 = vrot.slane %v5006, %v5059
  %v5061 = vlaneseq
  %v5062 = vshrl.u32 %v5061, 7
  %v5063 = vsub.s32 5, %v5062
  %v5064 = vrot.slane %v5006, %v5063
  %v5065 = vlaneseq
  %v5066 = vshrl.u32 %v5065, 7
  %v5067 = vsub.s32 6, %v5066
  %v5068 = vrot.slane %v5006, %v5067
  %v5069 = vlaneseq
  %v5070 = vshrl.u32 %v5069, 7
  %v5071 = vsub.s32 7, %v5070
  %v5072 = vrot.slane %v5006, %v5071
  %v5089 = vmul.f32 %v4997, %v5012
  %v5090 = vmul.f32 %v4996, %v5016
  %v5091 = vmul.f32 %v4995, %v5020
  %v5092 = vmul.f32 %v4994, %v5024
  %v5093 = vmul.f32 %v4993, %v5028
  %v5094 = vmul.f32 %v4992, %v5032
  %v5095 = vmul.f32 %v4991, %v5036
  %v5096 = vmul.f32 %v4990, %v5040
  %v5097 = vmul.f32 %v4989, %v5044
  %v5098 = vmul.f32 %v4988, %v5048
  %v5099 = vmul.f32 %v4987, %v5052
  %v5100 = vmul.f32 %v4986, %v5056
  %v5101 = vmul.f32 %v4985, %v5060
  %v5102 = vmul.f32 %v4984, %v5064
  %v5103 = vmul.f32 %v4983, %v5068
  %v5104 = vmul.f32 %v4998, %v5072
  %5105 = vst [vmem:[#allocation2 + $0x300] sm:$0xff] %v5089
  %5106 = vst [vmem:[#allocation2 + $0x308] sm:$0xff] %v5090
  %5107 = vst [vmem:[#allocation2 + $0x310] sm:$0xff] %v5091
  %5108 = vst [vmem:[#allocation2 + $0x318] sm:$0xff] %v5092
  %5109 = vst [vmem:[#allocation2 + $0x320] sm:$0xff] %v5093
  %5110 = vst [vmem:[#allocation2 + $0x328] sm:$0xff] %v5094
  %5111 = vst [vmem:[#allocation2 + $0x330] sm:$0xff] %v5095
  %5112 = vst [vmem:[#allocation2 + $0x338] sm:$0xff] %v5096
  %5113 = vst [vmem:[#allocation2 + $0x340] sm:$0xff] %v5097
  %5114 = vst [vmem:[#allocation2 + $0x348] sm:$0xff] %v5098
  %5115 = vst [vmem:[#allocation2 + $0x350] sm:$0xff] %v5099
  %5116 = vst [vmem:[#allocation2 + $0x358] sm:$0xff] %v5100
  %5117 = vst [vmem:[#allocation2 + $0x360] sm:$0xff] %v5101
  %5118 = vst [vmem:[#allocation2 + $0x368] sm:$0xff] %v5102
  %5119 = vst [vmem:[#allocation2 + $0x370] sm:$0xff] %v5103
  %5120 = vst [vmem:[#allocation2 + $0x378] sm:$0xff] %v5104
  %5121 = vrot.lane.b32.xlu0 %v3467, 96
  %v5122 = vpop.permute.xlu0 %5121
  %5123 = vrot.lane.b32.xlu0 %v3469, 96
  %v5124 = vpop.permute.xlu0 %5123
  %5125 = vrot.lane.b32.xlu0 %v3553, 96
  %v5126 = vpop.permute.xlu0 %5125
  %5127 = vrot.lane.b32.xlu0 %v3555, 96
  %v5128 = vpop.permute.xlu0 %5127
  %5129 = vrot.lane.b32.xlu0 %v3639, 96
  %v5130 = vpop.permute.xlu0 %5129
  %5131 = vrot.lane.b32.xlu0 %v3641, 96
  %v5132 = vpop.permute.xlu0 %5131
  %5133 = vrot.lane.b32.xlu0 %v3725, 96
  %v5134 = vpop.permute.xlu0 %5133
  %5135 = vrot.lane.b32.xlu0 %v3727, 96
  %v5136 = vpop.permute.xlu0 %5135
  %5137 = vrot.lane.b32.xlu0 %v3811, 96
  %v5138 = vpop.permute.xlu0 %5137
  %5139 = vrot.lane.b32.xlu0 %v3813, 96
  %v5140 = vpop.permute.xlu0 %5139
  %5141 = vrot.lane.b32.xlu0 %v3897, 96
  %v5142 = vpop.permute.xlu0 %5141
  %5143 = vrot.lane.b32.xlu0 %v3899, 96
  %v5144 = vpop.permute.xlu0 %5143
  %5145 = vrot.lane.b32.xlu0 %v3983, 96
  %v5146 = vpop.permute.xlu0 %5145
  %5147 = vrot.lane.b32.xlu0 %v3985, 96
  %v5148 = vpop.permute.xlu0 %5147
  %5149 = vrot.lane.b32.xlu0 %v4069, 96
  %v5150 = vpop.permute.xlu0 %5149
  %5151 = vrot.lane.b32.xlu0 %v4071, 96
  %v5152 = vpop.permute.xlu0 %5151
  %vm5153 = vcmp.lt.s32.totalorder %v4111, 96
  %v5154 = vsel %vm5153, %v5150, %v5152
  %v5155 = vsel %vm5153, %v5148, %v5150
  %v5156 = vsel %vm5153, %v5146, %v5148
  %v5157 = vsel %vm5153, %v5144, %v5146
  %v5158 = vsel %vm5153, %v5142, %v5144
  %v5159 = vsel %vm5153, %v5140, %v5142
  %v5160 = vsel %vm5153, %v5138, %v5140
  %v5161 = vsel %vm5153, %v5136, %v5138
  %v5162 = vsel %vm5153, %v5134, %v5136
  %v5163 = vsel %vm5153, %v5132, %v5134
  %v5164 = vsel %vm5153, %v5130, %v5132
  %v5165 = vsel %vm5153, %v5128, %v5130
  %v5166 = vsel %vm5153, %v5126, %v5128
  %v5167 = vsel %vm5153, %v5124, %v5126
  %v5168 = vsel %vm5153, %v5122, %v5124
  %v5169 = vsel %vm5153, %v5152, %v5122
  %s5170 = scalar_lea.vmem %s2, 7
  %v5171 = vld [vmem:[%s5170] ss:$8 sm:$0xf]
  %v5172 = vld [vmem:[%s5170] ss:$8 sm:$0xf0]
  %v5173 = vor.u32 %v5171, %v5172
  %s5174 = scalar_lea.vmem %s2, 71
  %v5175 = vld [vmem:[%s5174] ss:$8 sm:$0xf]
  %v5176 = vld [vmem:[%s5174] ss:$8 sm:$0xf0]
  %v5177 = vor.u32 %v5175, %v5176
  %v5180 = vlaneseq
  %v5181 = vshrl.u32 %v5180, 7
  %v5182 = vsub.s32 0, %v5181
  %v5183 = vrot.slane %v5173, %v5182
  %v5184 = vlaneseq
  %v5185 = vshrl.u32 %v5184, 7
  %v5186 = vsub.s32 1, %v5185
  %v5187 = vrot.slane %v5173, %v5186
  %v5188 = vlaneseq
  %v5189 = vshrl.u32 %v5188, 7
  %v5190 = vsub.s32 2, %v5189
  %v5191 = vrot.slane %v5173, %v5190
  %v5192 = vlaneseq
  %v5193 = vshrl.u32 %v5192, 7
  %v5194 = vsub.s32 3, %v5193
  %v5195 = vrot.slane %v5173, %v5194
  %v5196 = vlaneseq
  %v5197 = vshrl.u32 %v5196, 7
  %v5198 = vsub.s32 4, %v5197
  %v5199 = vrot.slane %v5173, %v5198
  %v5200 = vlaneseq
  %v5201 = vshrl.u32 %v5200, 7
  %v5202 = vsub.s32 5, %v5201
  %v5203 = vrot.slane %v5173, %v5202
  %v5204 = vlaneseq
  %v5205 = vshrl.u32 %v5204, 7
  %v5206 = vsub.s32 6, %v5205
  %v5207 = vrot.slane %v5173, %v5206
  %v5208 = vlaneseq
  %v5209 = vshrl.u32 %v5208, 7
  %v5210 = vsub.s32 7, %v5209
  %v5211 = vrot.slane %v5173, %v5210
  %v5212 = vlaneseq
  %v5213 = vshrl.u32 %v5212, 7
  %v5214 = vsub.s32 0, %v5213
  %v5215 = vrot.slane %v5177, %v5214
  %v5216 = vlaneseq
  %v5217 = vshrl.u32 %v5216, 7
  %v5218 = vsub.s32 1, %v5217
  %v5219 = vrot.slane %v5177, %v5218
  %v5220 = vlaneseq
  %v5221 = vshrl.u32 %v5220, 7
  %v5222 = vsub.s32 2, %v5221
  %v5223 = vrot.slane %v5177, %v5222
  %v5224 = vlaneseq
  %v5225 = vshrl.u32 %v5224, 7
  %v5226 = vsub.s32 3, %v5225
  %v5227 = vrot.slane %v5177, %v5226
  %v5228 = vlaneseq
  %v5229 = vshrl.u32 %v5228, 7
  %v5230 = vsub.s32 4, %v5229
  %v5231 = vrot.slane %v5177, %v5230
  %v5232 = vlaneseq
  %v5233 = vshrl.u32 %v5232, 7
  %v5234 = vsub.s32 5, %v5233
  %v5235 = vrot.slane %v5177, %v5234
  %v5236 = vlaneseq
  %v5237 = vshrl.u32 %v5236, 7
  %v5238 = vsub.s32 6, %v5237
  %v5239 = vrot.slane %v5177, %v5238
  %v5240 = vlaneseq
  %v5241 = vshrl.u32 %v5240, 7
  %v5242 = vsub.s32 7, %v5241
  %v5243 = vrot.slane %v5177, %v5242
  %v5260 = vmul.f32 %v5168, %v5183
  %v5261 = vmul.f32 %v5167, %v5187
  %v5262 = vmul.f32 %v5166, %v5191
  %v5263 = vmul.f32 %v5165, %v5195
  %v5264 = vmul.f32 %v5164, %v5199
  %v5265 = vmul.f32 %v5163, %v5203
  %v5266 = vmul.f32 %v5162, %v5207
  %v5267 = vmul.f32 %v5161, %v5211
  %v5268 = vmul.f32 %v5160, %v5215
  %v5269 = vmul.f32 %v5159, %v5219
  %v5270 = vmul.f32 %v5158, %v5223
  %v5271 = vmul.f32 %v5157, %v5227
  %v5272 = vmul.f32 %v5156, %v5231
  %v5273 = vmul.f32 %v5155, %v5235
  %v5274 = vmul.f32 %v5154, %v5239
  %v5275 = vmul.f32 %v5169, %v5243
  %5276 = vst [vmem:[#allocation2 + $0x380] sm:$0xff] %v5260
  %5277 = vst [vmem:[#allocation2 + $0x388] sm:$0xff] %v5261
  %5278 = vst [vmem:[#allocation2 + $0x390] sm:$0xff] %v5262
  %5279 = vst [vmem:[#allocation2 + $0x398] sm:$0xff] %v5263
  %5280 = vst [vmem:[#allocation2 + $0x3a0] sm:$0xff] %v5264
  %5281 = vst [vmem:[#allocation2 + $0x3a8] sm:$0xff] %v5265
  %5282 = vst [vmem:[#allocation2 + $0x3b0] sm:$0xff] %v5266
  %5283 = vst [vmem:[#allocation2 + $0x3b8] sm:$0xff] %v5267
  %5284 = vst [vmem:[#allocation2 + $0x3c0] sm:$0xff] %v5268
  %5285 = vst [vmem:[#allocation2 + $0x3c8] sm:$0xff] %v5269
  %5286 = vst [vmem:[#allocation2 + $0x3d0] sm:$0xff] %v5270
  %5287 = vst [vmem:[#allocation2 + $0x3d8] sm:$0xff] %v5271
  %5288 = vst [vmem:[#allocation2 + $0x3e0] sm:$0xff] %v5272
  %5289 = vst [vmem:[#allocation2 + $0x3e8] sm:$0xff] %v5273
  %5290 = vst [vmem:[#allocation2 + $0x3f0] sm:$0xff] %v5274
  %5291 = vst [vmem:[#allocation2 + $0x3f8] sm:$0xff] %v5275
  %5292 = vrot.lane.b32.xlu0 %v3467, 95
  %v5293 = vpop.permute.xlu0 %5292
  %5294 = vrot.lane.b32.xlu0 %v3469, 95
  %v5295 = vpop.permute.xlu0 %5294
  %5296 = vrot.lane.b32.xlu0 %v3553, 95
  %v5297 = vpop.permute.xlu0 %5296
  %5298 = vrot.lane.b32.xlu0 %v3555, 95
  %v5299 = vpop.permute.xlu0 %5298
  %5300 = vrot.lane.b32.xlu0 %v3639, 95
  %v5301 = vpop.permute.xlu0 %5300
  %5302 = vrot.lane.b32.xlu0 %v3641, 95
  %v5303 = vpop.permute.xlu0 %5302
  %5304 = vrot.lane.b32.xlu0 %v3725, 95
  %v5305 = vpop.permute.xlu0 %5304
  %5306 = vrot.lane.b32.xlu0 %v3727, 95
  %v5307 = vpop.permute.xlu0 %5306
  %5308 = vrot.lane.b32.xlu0 %v3811, 95
  %v5309 = vpop.permute.xlu0 %5308
  %5310 = vrot.lane.b32.xlu0 %v3813, 95
  %v5311 = vpop.permute.xlu0 %5310
  %5312 = vrot.lane.b32.xlu0 %v3897, 95
  %v5313 = vpop.permute.xlu0 %5312
  %5314 = vrot.lane.b32.xlu0 %v3899, 95
  %v5315 = vpop.permute.xlu0 %5314
  %5316 = vrot.lane.b32.xlu0 %v3983, 95
  %v5317 = vpop.permute.xlu0 %5316
  %5318 = vrot.lane.b32.xlu0 %v3985, 95
  %v5319 = vpop.permute.xlu0 %5318
  %5320 = vrot.lane.b32.xlu0 %v4069, 95
  %v5321 = vpop.permute.xlu0 %5320
  %5322 = vrot.lane.b32.xlu0 %v4071, 95
  %v5323 = vpop.permute.xlu0 %5322
  %vm5324 = vcmp.lt.s32.totalorder %v4111, 95
  %v5325 = vsel %vm5324, %v5321, %v5323
  %v5326 = vsel %vm5324, %v5319, %v5321
  %v5327 = vsel %vm5324, %v5317, %v5319
  %v5328 = vsel %vm5324, %v5315, %v5317
  %v5329 = vsel %vm5324, %v5313, %v5315
  %v5330 = vsel %vm5324, %v5311, %v5313
  %v5331 = vsel %vm5324, %v5309, %v5311
  %v5332 = vsel %vm5324, %v5307, %v5309
  %v5333 = vsel %vm5324, %v5305, %v5307
  %v5334 = vsel %vm5324, %v5303, %v5305
  %v5335 = vsel %vm5324, %v5301, %v5303
  %v5336 = vsel %vm5324, %v5299, %v5301
  %v5337 = vsel %vm5324, %v5297, %v5299
  %v5338 = vsel %vm5324, %v5295, %v5297
  %v5339 = vsel %vm5324, %v5293, %v5295
  %v5340 = vsel %vm5324, %v5323, %v5293
  %s5341 = scalar_lea.vmem %s2, 128
  %v5342 = vld [vmem:[%s5341] ss:$8 sm:$0xf]
  %v5343 = vld [vmem:[%s5341] ss:$8 sm:$0xf0]
  %v5344 = vor.u32 %v5342, %v5343
  %s5345 = scalar_lea.vmem %s2, 192
  %v5346 = vld [vmem:[%s5345] ss:$8 sm:$0xf]
  %v5347 = vld [vmem:[%s5345] ss:$8 sm:$0xf0]
  %v5348 = vor.u32 %v5346, %v5347
  %v5351 = vlaneseq
  %v5352 = vshrl.u32 %v5351, 7
  %v5353 = vsub.s32 0, %v5352
  %v5354 = vrot.slane %v5344, %v5353
  %v5355 = vlaneseq
  %v5356 = vshrl.u32 %v5355, 7
  %v5357 = vsub.s32 1, %v5356
  %v5358 = vrot.slane %v5344, %v5357
  %v5359 = vlaneseq
  %v5360 = vshrl.u32 %v5359, 7
  %v5361 = vsub.s32 2, %v5360
  %v5362 = vrot.slane %v5344, %v5361
  %v5363 = vlaneseq
  %v5364 = vshrl.u32 %v5363, 7
  %v5365 = vsub.s32 3, %v5364
  %v5366 = vrot.slane %v5344, %v5365
  %v5367 = vlaneseq
  %v5368 = vshrl.u32 %v5367, 7
  %v5369 = vsub.s32 4, %v5368
  %v5370 = vrot.slane %v5344, %v5369
  %v5371 = vlaneseq
  %v5372 = vshrl.u32 %v5371, 7
  %v5373 = vsub.s32 5, %v5372
  %v5374 = vrot.slane %v5344, %v5373
  %v5375 = vlaneseq
  %v5376 = vshrl.u32 %v5375, 7
  %v5377 = vsub.s32 6, %v5376
  %v5378 = vrot.slane %v5344, %v5377
  %v5379 = vlaneseq
  %v5380 = vshrl.u32 %v5379, 7
  %v5381 = vsub.s32 7, %v5380
  %v5382 = vrot.slane %v5344, %v5381
  %v5383 = vlaneseq
  %v5384 = vshrl.u32 %v5383, 7
  %v5385 = vsub.s32 0, %v5384
  %v5386 = vrot.slane %v5348, %v5385
  %v5387 = vlaneseq
  %v5388 = vshrl.u32 %v5387, 7
  %v5389 = vsub.s32 1, %v5388
  %v5390 = vrot.slane %v5348, %v5389
  %v5391 = vlaneseq
  %v5392 = vshrl.u32 %v5391, 7
  %v5393 = vsub.s32 2, %v5392
  %v5394 = vrot.slane %v5348, %v5393
  %v5395 = vlaneseq
  %v5396 = vshrl.u32 %v5395, 7
  %v5397 = vsub.s32 3, %v5396
  %v5398 = vrot.slane %v5348, %v5397
  %v5399 = vlaneseq
  %v5400 = vshrl.u32 %v5399, 7
  %v5401 = vsub.s32 4, %v5400
  %v5402 = vrot.slane %v5348, %v5401
  %v5403 = vlaneseq
  %v5404 = vshrl.u32 %v5403, 7
  %v5405 = vsub.s32 5, %v5404
  %v5406 = vrot.slane %v5348, %v5405
  %v5407 = vlaneseq
  %v5408 = vshrl.u32 %v5407, 7
  %v5409 = vsub.s32 6, %v5408
  %v5410 = vrot.slane %v5348, %v5409
  %v5411 = vlaneseq
  %v5412 = vshrl.u32 %v5411, 7
  %v5413 = vsub.s32 7, %v5412
  %v5414 = vrot.slane %v5348, %v5413
  %v5431 = vmul.f32 %v5339, %v5354
  %v5432 = vmul.f32 %v5338, %v5358
  %v5433 = vmul.f32 %v5337, %v5362
  %v5434 = vmul.f32 %v5336, %v5366
  %v5435 = vmul.f32 %v5335, %v5370
  %v5436 = vmul.f32 %v5334, %v5374
  %v5437 = vmul.f32 %v5333, %v5378
  %v5438 = vmul.f32 %v5332, %v5382
  %v5439 = vmul.f32 %v5331, %v5386
  %v5440 = vmul.f32 %v5330, %v5390
  %v5441 = vmul.f32 %v5329, %v5394
  %v5442 = vmul.f32 %v5328, %v5398
  %v5443 = vmul.f32 %v5327, %v5402
  %v5444 = vmul.f32 %v5326, %v5406
  %v5445 = vmul.f32 %v5325, %v5410
  %v5446 = vmul.f32 %v5340, %v5414
  %5447 = vst [vmem:[#allocation2 + $0x400] sm:$0xff] %v5431
  %5448 = vst [vmem:[#allocation2 + $0x408] sm:$0xff] %v5432
  %5449 = vst [vmem:[#allocation2 + $0x410] sm:$0xff] %v5433
  %5450 = vst [vmem:[#allocation2 + $0x418] sm:$0xff] %v5434
  %5451 = vst [vmem:[#allocation2 + $0x420] sm:$0xff] %v5435
  %5452 = vst [vmem:[#allocation2 + $0x428] sm:$0xff] %v5436
  %5453 = vst [vmem:[#allocation2 + $0x430] sm:$0xff] %v5437
  %5454 = vst [vmem:[#allocation2 + $0x438] sm:$0xff] %v5438
  %5455 = vst [vmem:[#allocation2 + $0x440] sm:$0xff] %v5439
  %5456 = vst [vmem:[#allocation2 + $0x448] sm:$0xff] %v5440
  %5457 = vst [vmem:[#allocation2 + $0x450] sm:$0xff] %v5441
  %5458 = vst [vmem:[#allocation2 + $0x458] sm:$0xff] %v5442
  %5459 = vst [vmem:[#allocation2 + $0x460] sm:$0xff] %v5443
  %5460 = vst [vmem:[#allocation2 + $0x468] sm:$0xff] %v5444
  %5461 = vst [vmem:[#allocation2 + $0x470] sm:$0xff] %v5445
  %5462 = vst [vmem:[#allocation2 + $0x478] sm:$0xff] %v5446
  %v5463 = vld [vmem:[#allocation2] sm:$0xff]
  %v5464 = vld [vmem:[#allocation2 + $0x8] sm:$0xff]
  %v5465 = vld [vmem:[#allocation2 + $0x10] sm:$0xff]
  %v5466 = vld [vmem:[#allocation2 + $0x18] sm:$0xff]
  %v5467 = vld [vmem:[#allocation2 + $0x20] sm:$0xff]
  %v5468 = vld [vmem:[#allocation2 + $0x28] sm:$0xff]
  %v5469 = vld [vmem:[#allocation2 + $0x30] sm:$0xff]
  %v5470 = vld [vmem:[#allocation2 + $0x38] sm:$0xff]
  %v5471 = vld [vmem:[#allocation2 + $0x40] sm:$0xff]
  %v5472 = vld [vmem:[#allocation2 + $0x48] sm:$0xff]
  %v5473 = vld [vmem:[#allocation2 + $0x50] sm:$0xff]
  %v5474 = vld [vmem:[#allocation2 + $0x58] sm:$0xff]
  %v5475 = vld [vmem:[#allocation2 + $0x60] sm:$0xff]
  %v5476 = vld [vmem:[#allocation2 + $0x68] sm:$0xff]
  %v5477 = vld [vmem:[#allocation2 + $0x70] sm:$0xff]
  %v5478 = vld [vmem:[#allocation2 + $0x78] sm:$0xff]
  %v5479 = vld [vmem:[#allocation2 + $0x80] sm:$0xff]
  %v5480 = vld [vmem:[#allocation2 + $0x88] sm:$0xff]
  %v5481 = vld [vmem:[#allocation2 + $0x90] sm:$0xff]
  %v5482 = vld [vmem:[#allocation2 + $0x98] sm:$0xff]
  %v5483 = vld [vmem:[#allocation2 + $0xa0] sm:$0xff]
  %v5484 = vld [vmem:[#allocation2 + $0xa8] sm:$0xff]
  %v5485 = vld [vmem:[#allocation2 + $0xb0] sm:$0xff]
  %v5486 = vld [vmem:[#allocation2 + $0xb8] sm:$0xff]
  %v5487 = vld [vmem:[#allocation2 + $0xc0] sm:$0xff]
  %v5488 = vld [vmem:[#allocation2 + $0xc8] sm:$0xff]
  %v5489 = vld [vmem:[#allocation2 + $0xd0] sm:$0xff]
  %v5490 = vld [vmem:[#allocation2 + $0xd8] sm:$0xff]
  %v5491 = vld [vmem:[#allocation2 + $0xe0] sm:$0xff]
  %v5492 = vld [vmem:[#allocation2 + $0xe8] sm:$0xff]
  %v5493 = vld [vmem:[#allocation2 + $0xf0] sm:$0xff]
  %v5494 = vld [vmem:[#allocation2 + $0xf8] sm:$0xff]
  %v5495 = vld [vmem:[#allocation2 + $0x100] sm:$0xff]
  %v5496 = vld [vmem:[#allocation2 + $0x108] sm:$0xff]
  %v5497 = vld [vmem:[#allocation2 + $0x110] sm:$0xff]
  %v5498 = vld [vmem:[#allocation2 + $0x118] sm:$0xff]
  %v5499 = vld [vmem:[#allocation2 + $0x120] sm:$0xff]
  %v5500 = vld [vmem:[#allocation2 + $0x128] sm:$0xff]
  %v5501 = vld [vmem:[#allocation2 + $0x130] sm:$0xff]
  %v5502 = vld [vmem:[#allocation2 + $0x138] sm:$0xff]
  %v5503 = vld [vmem:[#allocation2 + $0x140] sm:$0xff]
  %v5504 = vld [vmem:[#allocation2 + $0x148] sm:$0xff]
  %v5505 = vld [vmem:[#allocation2 + $0x150] sm:$0xff]
  %v5506 = vld [vmem:[#allocation2 + $0x158] sm:$0xff]
  %v5507 = vld [vmem:[#allocation2 + $0x160] sm:$0xff]
  %v5508 = vld [vmem:[#allocation2 + $0x168] sm:$0xff]
  %v5509 = vld [vmem:[#allocation2 + $0x170] sm:$0xff]
  %v5510 = vld [vmem:[#allocation2 + $0x178] sm:$0xff]
  %v5511 = vld [vmem:[#allocation2 + $0x180] sm:$0xff]
  %v5512 = vld [vmem:[#allocation2 + $0x188] sm:$0xff]
  %v5513 = vld [vmem:[#allocation2 + $0x190] sm:$0xff]
  %v5514 = vld [vmem:[#allocation2 + $0x198] sm:$0xff]
  %v5515 = vld [vmem:[#allocation2 + $0x1a0] sm:$0xff]
  %v5516 = vld [vmem:[#allocation2 + $0x1a8] sm:$0xff]
  %v5517 = vld [vmem:[#allocation2 + $0x1b0] sm:$0xff]
  %v5518 = vld [vmem:[#allocation2 + $0x1b8] sm:$0xff]
  %v5519 = vld [vmem:[#allocation2 + $0x1c0] sm:$0xff]
  %v5520 = vld [vmem:[#allocation2 + $0x1c8] sm:$0xff]
  %v5521 = vld [vmem:[#allocation2 + $0x1d0] sm:$0xff]
  %v5522 = vld [vmem:[#allocation2 + $0x1d8] sm:$0xff]
  %v5523 = vld [vmem:[#allocation2 + $0x1e0] sm:$0xff]
  %v5524 = vld [vmem:[#allocation2 + $0x1e8] sm:$0xff]
  %v5525 = vld [vmem:[#allocation2 + $0x1f0] sm:$0xff]
  %v5526 = vld [vmem:[#allocation2 + $0x1f8] sm:$0xff]
  %v5527 = vld [vmem:[#allocation2 + $0x200] sm:$0xff]
  %v5528 = vld [vmem:[#allocation2 + $0x208] sm:$0xff]
  %v5529 = vld [vmem:[#allocation2 + $0x210] sm:$0xff]
  %v5530 = vld [vmem:[#allocation2 + $0x218] sm:$0xff]
  %v5531 = vld [vmem:[#allocation2 + $0x220] sm:$0xff]
  %v5532 = vld [vmem:[#allocation2 + $0x228] sm:$0xff]
  %v5533 = vld [vmem:[#allocation2 + $0x230] sm:$0xff]
  %v5534 = vld [vmem:[#allocation2 + $0x238] sm:$0xff]
  %v5535 = vld [vmem:[#allocation2 + $0x240] sm:$0xff]
  %v5536 = vld [vmem:[#allocation2 + $0x248] sm:$0xff]
  %v5537 = vld [vmem:[#allocation2 + $0x250] sm:$0xff]
  %v5538 = vld [vmem:[#allocation2 + $0x258] sm:$0xff]
  %v5539 = vld [vmem:[#allocation2 + $0x260] sm:$0xff]
  %v5540 = vld [vmem:[#allocation2 + $0x268] sm:$0xff]
  %v5541 = vld [vmem:[#allocation2 + $0x270] sm:$0xff]
  %v5542 = vld [vmem:[#allocation2 + $0x278] sm:$0xff]
  %v5543 = vld [vmem:[#allocation2 + $0x280] sm:$0xff]
  %v5544 = vld [vmem:[#allocation2 + $0x288] sm:$0xff]
  %v5545 = vld [vmem:[#allocation2 + $0x290] sm:$0xff]
  %v5546 = vld [vmem:[#allocation2 + $0x298] sm:$0xff]
  %v5547 = vld [vmem:[#allocation2 + $0x2a0] sm:$0xff]
  %v5548 = vld [vmem:[#allocation2 + $0x2a8] sm:$0xff]
  %v5549 = vld [vmem:[#allocation2 + $0x2b0] sm:$0xff]
  %v5550 = vld [vmem:[#allocation2 + $0x2b8] sm:$0xff]
  %v5551 = vld [vmem:[#allocation2 + $0x2c0] sm:$0xff]
  %v5552 = vld [vmem:[#allocation2 + $0x2c8] sm:$0xff]
  %v5553 = vld [vmem:[#allocation2 + $0x2d0] sm:$0xff]
  %v5554 = vld [vmem:[#allocation2 + $0x2d8] sm:$0xff]
  %v5555 = vld [vmem:[#allocation2 + $0x2e0] sm:$0xff]
  %v5556 = vld [vmem:[#allocation2 + $0x2e8] sm:$0xff]
  %v5557 = vld [vmem:[#allocation2 + $0x2f0] sm:$0xff]
  %v5558 = vld [vmem:[#allocation2 + $0x2f8] sm:$0xff]
  %v5559 = vld [vmem:[#allocation2 + $0x300] sm:$0xff]
  %v5560 = vld [vmem:[#allocation2 + $0x308] sm:$0xff]
  %v5561 = vld [vmem:[#allocation2 + $0x310] sm:$0xff]
  %v5562 = vld [vmem:[#allocation2 + $0x318] sm:$0xff]
  %v5563 = vld [vmem:[#allocation2 + $0x320] sm:$0xff]
  %v5564 = vld [vmem:[#allocation2 + $0x328] sm:$0xff]
  %v5565 = vld [vmem:[#allocation2 + $0x330] sm:$0xff]
  %v5566 = vld [vmem:[#allocation2 + $0x338] sm:$0xff]
  %v5567 = vld [vmem:[#allocation2 + $0x340] sm:$0xff]
  %v5568 = vld [vmem:[#allocation2 + $0x348] sm:$0xff]
  %v5569 = vld [vmem:[#allocation2 + $0x350] sm:$0xff]
  %v5570 = vld [vmem:[#allocation2 + $0x358] sm:$0xff]
  %v5571 = vld [vmem:[#allocation2 + $0x360] sm:$0xff]
  %v5572 = vld [vmem:[#allocation2 + $0x368] sm:$0xff]
  %v5573 = vld [vmem:[#allocation2 + $0x370] sm:$0xff]
  %v5574 = vld [vmem:[#allocation2 + $0x378] sm:$0xff]
  %v5575 = vld [vmem:[#allocation2 + $0x380] sm:$0xff]
  %v5576 = vld [vmem:[#allocation2 + $0x388] sm:$0xff]
  %v5577 = vld [vmem:[#allocation2 + $0x390] sm:$0xff]
  %v5578 = vld [vmem:[#allocation2 + $0x398] sm:$0xff]
  %v5579 = vld [vmem:[#allocation2 + $0x3a0] sm:$0xff]
  %v5580 = vld [vmem:[#allocation2 + $0x3a8] sm:$0xff]
  %v5581 = vld [vmem:[#allocation2 + $0x3b0] sm:$0xff]
  %v5582 = vld [vmem:[#allocation2 + $0x3b8] sm:$0xff]
  %v5583 = vld [vmem:[#allocation2 + $0x3c0] sm:$0xff]
  %v5584 = vld [vmem:[#allocation2 + $0x3c8] sm:$0xff]
  %v5585 = vld [vmem:[#allocation2 + $0x3d0] sm:$0xff]
  %v5586 = vld [vmem:[#allocation2 + $0x3d8] sm:$0xff]
  %v5587 = vld [vmem:[#allocation2 + $0x3e0] sm:$0xff]
  %v5588 = vld [vmem:[#allocation2 + $0x3e8] sm:$0xff]
  %v5589 = vld [vmem:[#allocation2 + $0x3f0] sm:$0xff]
  %v5590 = vld [vmem:[#allocation2 + $0x3f8] sm:$0xff]
  %v5591 = vld [vmem:[#allocation2 + $0x400] sm:$0xff]
  %v5592 = vld [vmem:[#allocation2 + $0x408] sm:$0xff]
  %v5593 = vld [vmem:[#allocation2 + $0x410] sm:$0xff]
  %v5594 = vld [vmem:[#allocation2 + $0x418] sm:$0xff]
  %v5595 = vld [vmem:[#allocation2 + $0x420] sm:$0xff]
  %v5596 = vld [vmem:[#allocation2 + $0x428] sm:$0xff]
  %v5597 = vld [vmem:[#allocation2 + $0x430] sm:$0xff]
  %v5598 = vld [vmem:[#allocation2 + $0x438] sm:$0xff]
  %v5599 = vld [vmem:[#allocation2 + $0x440] sm:$0xff]
  %v5600 = vld [vmem:[#allocation2 + $0x448] sm:$0xff]
  %v5601 = vld [vmem:[#allocation2 + $0x450] sm:$0xff]
  %v5602 = vld [vmem:[#allocation2 + $0x458] sm:$0xff]
  %v5603 = vld [vmem:[#allocation2 + $0x460] sm:$0xff]
  %v5604 = vld [vmem:[#allocation2 + $0x468] sm:$0xff]
  %v5605 = vld [vmem:[#allocation2 + $0x470] sm:$0xff]
  %v5606 = vld [vmem:[#allocation2 + $0x478] sm:$0xff]
  %5607 = vset.pattern.permute.xlu0 2
  %5608 = vperm.xlu0 %5607, %v30
  %v5609 = vpop.permute.xlu0 %5608
  %vm5611 = vcmask 588800
  %v5613 = vsel %vm5611, %v4077, 0
  %5615 = vmatprep.subr.mxu0 %v5464
  %5616 = vmatpush1.msra.mxu0 %v5463
  %5617 = vmatprep.subr.mxu0 %v5480
  %5618 = vmatpush1.msra.mxu0 %v5479
  %5619 = vmatprep.subr.mxu0 %v5496
  %5620 = vmatpush1.msra.mxu0 %v5495
  %5621 = vmatprep.subr.mxu0 %v5512
  %5622 = vmatpush1.msra.mxu0 %v5511
  %5623 = vmatprep.subr.mxu0 %v5528
  %5624 = vmatpush1.msra.mxu0 %v5527
  %5625 = vmatprep.subr.mxu0 %v5544
  %5626 = vmatpush1.msra.mxu0 %v5543
  %5627 = vmatprep.subr.mxu0 %v5560
  %5628 = vmatpush1.msra.mxu0 %v5559
  %5629 = vmatprep.subr.mxu0 %v5576
  %5630 = vmatpush1.msra.mxu0 %v5575
  %5631 = vmatprep.subr.mxu0 %v5592
  %5632 = vmatpush1.msra.mxu0 %v5591
  %5633 = vmatprep.subr.mxu0 0.0
  %5634 = vmatpush1.msra.mxu0 0.0
  %5635 = vmatprep.subr.mxu0 0.0
  %5636 = vmatpush1.msra.mxu0 0.0
  %5637 = vmatprep.subr.mxu0 0.0
  %5638 = vmatpush1.msra.mxu0 0.0
  %5639 = vmatprep.subr.mxu0 0.0
  %5640 = vmatpush1.msra.mxu0 0.0
  %5641 = vmatprep.subr.mxu0 0.0
  %5642 = vmatpush1.msra.mxu0 0.0
  %5643 = vmatprep.subr.mxu0 0.0
  %5644 = vmatpush1.msra.mxu0 0.0
  %5645 = vmatprep.subr.mxu0 0.0
  %5646 = vmatpush1.msra.mxu0 0.0
  %5647 = vmatprep.subr.mxu0 0.0
  %5648 = vmatpush1.msra.mxu0 0.0
  %5649 = vmatprep.subr.mxu0 0.0
  %5650 = vmatpush1.msra.mxu0 0.0
  %5651 = vmatprep.subr.mxu0 0.0
  %5652 = vmatpush1.msra.mxu0 0.0
  %5653 = vmatprep.subr.mxu0 0.0
  %5654 = vmatpush1.msra.mxu0 0.0
  %5655 = vmatprep.subr.mxu0 0.0
  %5656 = vmatpush1.msra.mxu0 0.0
  %5657 = vmatprep.subr.mxu0 0.0
  %5658 = vmatpush1.msra.mxu0 0.0
  %5659 = vmatprep.subr.mxu0 0.0
  %5660 = vmatpush1.msra.mxu0 0.0
  %5661 = vmatprep.subr.mxu0 0.0
  %5662 = vmatpush1.msra.mxu0 0.0
  %5663 = vmatprep.subr.mxu0 0.0
  %5664 = vmatpush1.msra.mxu0 0.0
  %5665 = vmatprep.subr.mxu0 0.0
  %5666 = vmatpush1.msra.mxu0 0.0
  %5667 = vmatprep.subr.mxu0 0.0
  %5668 = vmatpush1.msra.mxu0 0.0
  %5669 = vmatprep.subr.mxu0 0.0
  %5670 = vmatpush1.msra.mxu0 0.0
  %5671 = vmatprep.subr.mxu0 0.0
  %5672 = vmatpush1.msra.mxu0 0.0
  %5673 = vmatprep.subr.mxu0 0.0
  %5674 = vmatpush1.msra.mxu0 0.0
  %5675 = vmatprep.subr.mxu0 0.0
  %5676 = vmatpush1.msra.mxu0 0.0
  %5677 = vmatprep.subr.mxu0 0.0
  %5678 = vmatpush1.msra.mxu0 0.0
  %5679 = vmatprep.mubr.f32.mxu0 0.0
  %5680 = vmatmul.mubr.f32.gmra.mrb[0].mxu0 %v5613
  %v5681 = vpop.f32.mrb[0].mxu0
  %v5682 = vadd.f32 %v5609, %v5681
  %v5683 = vpop.f32.mrb[0].mxu0
  %v5684 = vadd.f32 %v5609, %v5683
  %5685 = vdwg.mxu0
  %5686 = vmatprep.subr.mxu0 %v5466
  %5687 = vmatpush1.msra.mxu0 %v5465
  %5688 = vmatprep.subr.mxu0 %v5482
  %5689 = vmatpush1.msra.mxu0 %v5481
  %5690 = vmatprep.subr.mxu0 %v5498
  %5691 = vmatpush1.msra.mxu0 %v5497
  %5692 = vmatprep.subr.mxu0 %v5514
  %5693 = vmatpush1.msra.mxu0 %v5513
  %5694 = vmatprep.subr.mxu0 %v5530
  %5695 = vmatpush1.msra.mxu0 %v5529
  %5696 = vmatprep.subr.mxu0 %v5546
  %5697 = vmatpush1.msra.mxu0 %v5545
  %5698 = vmatprep.subr.mxu0 %v5562
  %5699 = vmatpush1.msra.mxu0 %v5561
  %5700 = vmatprep.subr.mxu0 %v5578
  %5701 = vmatpush1.msra.mxu0 %v5577
  %5702 = vmatprep.subr.mxu0 %v5594
  %5703 = vmatpush1.msra.mxu0 %v5593
  %5704 = vmatprep.subr.mxu0 0.0
  %5705 = vmatpush1.msra.mxu0 0.0
  %5706 = vmatprep.subr.mxu0 0.0
  %5707 = vmatpush1.msra.mxu0 0.0
  %5708 = vmatprep.subr.mxu0 0.0
  %5709 = vmatpush1.msra.mxu0 0.0
  %5710 = vmatprep.subr.mxu0 0.0
  %5711 = vmatpush1.msra.mxu0 0.0
  %5712 = vmatprep.subr.mxu0 0.0
  %5713 = vmatpush1.msra.mxu0 0.0
  %5714 = vmatprep.subr.mxu0 0.0
  %5715 = vmatpush1.msra.mxu0 0.0
  %5716 = vmatprep.subr.mxu0 0.0
  %5717 = vmatpush1.msra.mxu0 0.0
  %5718 = vmatprep.subr.mxu0 0.0
  %5719 = vmatpush1.msra.mxu0 0.0
  %5720 = vmatprep.subr.mxu0 0.0
  %5721 = vmatpush1.msra.mxu0 0.0
  %5722 = vmatprep.subr.mxu0 0.0
  %5723 = vmatpush1.msra.mxu0 0.0
  %5724 = vmatprep.subr.mxu0 0.0
  %5725 = vmatpush1.msra.mxu0 0.0
  %5726 = vmatprep.subr.mxu0 0.0
  %5727 = vmatpush1.msra.mxu0 0.0
  %5728 = vmatprep.subr.mxu0 0.0
  %5729 = vmatpush1.msra.mxu0 0.0
  %5730 = vmatprep.subr.mxu0 0.0
  %5731 = vmatpush1.msra.mxu0 0.0
  %5732 = vmatprep.subr.mxu0 0.0
  %5733 = vmatpush1.msra.mxu0 0.0
  %5734 = vmatprep.subr.mxu0 0.0
  %5735 = vmatpush1.msra.mxu0 0.0
  %5736 = vmatprep.subr.mxu0 0.0
  %5737 = vmatpush1.msra.mxu0 0.0
  %5738 = vmatprep.subr.mxu0 0.0
  %5739 = vmatpush1.msra.mxu0 0.0
  %5740 = vmatprep.subr.mxu0 0.0
  %5741 = vmatpush1.msra.mxu0 0.0
  %5742 = vmatprep.subr.mxu0 0.0
  %5743 = vmatpush1.msra.mxu0 0.0
  %5744 = vmatprep.subr.mxu0 0.0
  %5745 = vmatpush1.msra.mxu0 0.0
  %5746 = vmatprep.subr.mxu0 0.0
  %5747 = vmatpush1.msra.mxu0 0.0
  %5748 = vmatprep.subr.mxu0 0.0
  %5749 = vmatpush1.msra.mxu0 0.0
  %5750 = vmatprep.mubr.f32.mxu0 0.0
  %5751 = vmatmul.mubr.f32.gmra.mrb[0].mxu0 %v5613
  %v5752 = vpop.f32.mrb[0].mxu0
  %v5753 = vadd.f32 %v5609, %v5752
  %v5754 = vpop.f32.mrb[0].mxu0
  %v5755 = vadd.f32 %v5609, %v5754
  %5756 = vdwg.mxu0
  %5757 = vmatprep.subr.mxu0 %v5468
  %5758 = vmatpush1.msra.mxu0 %v5467
  %5759 = vmatprep.subr.mxu0 %v5484
  %5760 = vmatpush1.msra.mxu0 %v5483
  %5761 = vmatprep.subr.mxu0 %v5500
  %5762 = vmatpush1.msra.mxu0 %v5499
  %5763 = vmatprep.subr.mxu0 %v5516
  %5764 = vmatpush1.msra.mxu0 %v5515
  %5765 = vmatprep.subr.mxu0 %v5532
  %5766 = vmatpush1.msra.mxu0 %v5531
  %5767 = vmatprep.subr.mxu0 %v5548
  %5768 = vmatpush1.msra.mxu0 %v5547
  %5769 = vmatprep.subr.mxu0 %v5564
  %5770 = vmatpush1.msra.mxu0 %v5563
  %5771 = vmatprep.subr.mxu0 %v5580
  %5772 = vmatpush1.msra.mxu0 %v5579
  %5773 = vmatprep.subr.mxu0 %v5596
  %5774 = vmatpush1.msra.mxu0 %v5595
  %5775 = vmatprep.subr.mxu0 0.0
  %5776 = vmatpush1.msra.mxu0 0.0
  %5777 = vmatprep.subr.mxu0 0.0
  %5778 = vmatpush1.msra.mxu0 0.0
  %5779 = vmatprep.subr.mxu0 0.0
  %5780 = vmatpush1.msra.mxu0 0.0
  %5781 = vmatprep.subr.mxu0 0.0
  %5782 = vmatpush1.msra.mxu0 0.0
  %5783 = vmatprep.subr.mxu0 0.0
  %5784 = vmatpush1.msra.mxu0 0.0
  %5785 = vmatprep.subr.mxu0 0.0
  %5786 = vmatpush1.msra.mxu0 0.0
  %5787 = vmatprep.subr.mxu0 0.0
  %5788 = vmatpush1.msra.mxu0 0.0
  %5789 = vmatprep.subr.mxu0 0.0
  %5790 = vmatpush1.msra.mxu0 0.0
  %5791 = vmatprep.subr.mxu0 0.0
  %5792 = vmatpush1.msra.mxu0 0.0
  %5793 = vmatprep.subr.mxu0 0.0
  %5794 = vmatpush1.msra.mxu0 0.0
  %5795 = vmatprep.subr.mxu0 0.0
  %5796 = vmatpush1.msra.mxu0 0.0
  %5797 = vmatprep.subr.mxu0 0.0
  %5798 = vmatpush1.msra.mxu0 0.0
  %5799 = vmatprep.subr.mxu0 0.0
  %5800 = vmatpush1.msra.mxu0 0.0
  %5801 = vmatprep.subr.mxu0 0.0
  %5802 = vmatpush1.msra.mxu0 0.0
  %5803 = vmatprep.subr.mxu0 0.0
  %5804 = vmatpush1.msra.mxu0 0.0
  %5805 = vmatprep.subr.mxu0 0.0
  %5806 = vmatpush1.msra.mxu0 0.0
  %5807 = vmatprep.subr.mxu0 0.0
  %5808 = vmatpush1.msra.mxu0 0.0
  %5809 = vmatprep.subr.mxu0 0.0
  %5810 = vmatpush1.msra.mxu0 0.0
  %5811 = vmatprep.subr.mxu0 0.0
  %5812 = vmatpush1.msra.mxu0 0.0
  %5813 = vmatprep.subr.mxu0 0.0
  %5814 = vmatpush1.msra.mxu0 0.0
  %5815 = vmatprep.subr.mxu0 0.0
  %5816 = vmatpush1.msra.mxu0 0.0
  %5817 = vmatprep.subr.mxu0 0.0
  %5818 = vmatpush1.msra.mxu0 0.0
  %5819 = vmatprep.subr.mxu0 0.0
  %5820 = vmatpush1.msra.mxu0 0.0
  %5821 = vmatprep.mubr.f32.mxu0 0.0
  %5822 = vmatmul.mubr.f32.gmra.mrb[0].mxu0 %v5613
  %v5823 = vpop.f32.mrb[0].mxu0
  %v5824 = vadd.f32 %v5609, %v5823
  %v5825 = vpop.f32.mrb[0].mxu0
  %v5826 = vadd.f32 %v5609, %v5825
  %5827 = vdwg.mxu0
  %5828 = vmatprep.subr.mxu0 %v5470
  %5829 = vmatpush1.msra.mxu0 %v5469
  %5830 = vmatprep.subr.mxu0 %v5486
  %5831 = vmatpush1.msra.mxu0 %v5485
  %5832 = vmatprep.subr.mxu0 %v5502
  %5833 = vmatpush1.msra.mxu0 %v5501
  %5834 = vmatprep.subr.mxu0 %v5518
  %5835 = vmatpush1.msra.mxu0 %v5517
  %5836 = vmatprep.subr.mxu0 %v5534
  %5837 = vmatpush1.msra.mxu0 %v5533
  %5838 = vmatprep.subr.mxu0 %v5550
  %5839 = vmatpush1.msra.mxu0 %v5549
  %5840 = vmatprep.subr.mxu0 %v5566
  %5841 = vmatpush1.msra.mxu0 %v5565
  %5842 = vmatprep.subr.mxu0 %v5582
  %5843 = vmatpush1.msra.mxu0 %v5581
  %5844 = vmatprep.subr.mxu0 %v5598
  %5845 = vmatpush1.msra.mxu0 %v5597
  %5846 = vmatprep.subr.mxu0 0.0
  %5847 = vmatpush1.msra.mxu0 0.0
  %5848 = vmatprep.subr.mxu0 0.0
  %5849 = vmatpush1.msra.mxu0 0.0
  %5850 = vmatprep.subr.mxu0 0.0
  %5851 = vmatpush1.msra.mxu0 0.0
  %5852 = vmatprep.subr.mxu0 0.0
  %5853 = vmatpush1.msra.mxu0 0.0
  %5854 = vmatprep.subr.mxu0 0.0
  %5855 = vmatpush1.msra.mxu0 0.0
  %5856 = vmatprep.subr.mxu0 0.0
  %5857 = vmatpush1.msra.mxu0 0.0
  %5858 = vmatprep.subr.mxu0 0.0
  %5859 = vmatpush1.msra.mxu0 0.0
  %5860 = vmatprep.subr.mxu0 0.0
  %5861 = vmatpush1.msra.mxu0 0.0
  %5862 = vmatprep.subr.mxu0 0.0
  %5863 = vmatpush1.msra.mxu0 0.0
  %5864 = vmatprep.subr.mxu0 0.0
  %5865 = vmatpush1.msra.mxu0 0.0
  %5866 = vmatprep.subr.mxu0 0.0
  %5867 = vmatpush1.msra.mxu0 0.0
  %5868 = vmatprep.subr.mxu0 0.0
  %5869 = vmatpush1.msra.mxu0 0.0
  %5870 = vmatprep.subr.mxu0 0.0
  %5871 = vmatpush1.msra.mxu0 0.0
  %5872 = vmatprep.subr.mxu0 0.0
  %5873 = vmatpush1.msra.mxu0 0.0
  %5874 = vmatprep.subr.mxu0 0.0
  %5875 = vmatpush1.msra.mxu0 0.0
  %5876 = vmatprep.subr.mxu0 0.0
  %5877 = vmatpush1.msra.mxu0 0.0
  %5878 = vmatprep.subr.mxu0 0.0
  %5879 = vmatpush1.msra.mxu0 0.0
  %5880 = vmatprep.subr.mxu0 0.0
  %5881 = vmatpush1.msra.mxu0 0.0
  %5882 = vmatprep.subr.mxu0 0.0
  %5883 = vmatpush1.msra.mxu0 0.0
  %5884 = vmatprep.subr.mxu0 0.0
  %5885 = vmatpush1.msra.mxu0 0.0
  %5886 = vmatprep.subr.mxu0 0.0
  %5887 = vmatpush1.msra.mxu0 0.0
  %5888 = vmatprep.subr.mxu0 0.0
  %5889 = vmatpush1.msra.mxu0 0.0
  %5890 = vmatprep.subr.mxu0 0.0
  %5891 = vmatpush1.msra.mxu0 0.0
  %5892 = vmatprep.mubr.f32.mxu0 0.0
  %5893 = vmatmul.mubr.f32.gmra.mrb[0].mxu0 %v5613
  %v5894 = vpop.f32.mrb[0].mxu0
  %v5895 = vadd.f32 %v5609, %v5894
  %v5896 = vpop.f32.mrb[0].mxu0
  %v5897 = vadd.f32 %v5609, %v5896
  %5898 = vdwg.mxu0
  %5899 = vmatprep.subr.mxu0 %v5472
  %5900 = vmatpush1.msra.mxu0 %v5471
  %5901 = vmatprep.subr.mxu0 %v5488
  %5902 = vmatpush1.msra.mxu0 %v5487
  %5903 = vmatprep.subr.mxu0 %v5504
  %5904 = vmatpush1.msra.mxu0 %v5503
  %5905 = vmatprep.subr.mxu0 %v5520
  %5906 = vmatpush1.msra.mxu0 %v5519
  %5907 = vmatprep.subr.mxu0 %v5536
  %5908 = vmatpush1.msra.mxu0 %v5535
  %5909 = vmatprep.subr.mxu0 %v5552
  %5910 = vmatpush1.msra.mxu0 %v5551
  %5911 = vmatprep.subr.mxu0 %v5568
  %5912 = vmatpush1.msra.mxu0 %v5567
  %5913 = vmatprep.subr.mxu0 %v5584
  %5914 = vmatpush1.msra.mxu0 %v5583
  %5915 = vmatprep.subr.mxu0 %v5600
  %5916 = vmatpush1.msra.mxu0 %v5599
  %5917 = vmatprep.subr.mxu0 0.0
  %5918 = vmatpush1.msra.mxu0 0.0
  %5919 = vmatprep.subr.mxu0 0.0
  %5920 = vmatpush1.msra.mxu0 0.0
  %5921 = vmatprep.subr.mxu0 0.0
  %5922 = vmatpush1.msra.mxu0 0.0
  %5923 = vmatprep.subr.mxu0 0.0
  %5924 = vmatpush1.msra.mxu0 0.0
  %5925 = vmatprep.subr.mxu0 0.0
  %5926 = vmatpush1.msra.mxu0 0.0
  %5927 = vmatprep.subr.mxu0 0.0
  %5928 = vmatpush1.msra.mxu0 0.0
  %5929 = vmatprep.subr.mxu0 0.0
  %5930 = vmatpush1.msra.mxu0 0.0
  %5931 = vmatprep.subr.mxu0 0.0
  %5932 = vmatpush1.msra.mxu0 0.0
  %5933 = vmatprep.subr.mxu0 0.0
  %5934 = vmatpush1.msra.mxu0 0.0
  %5935 = vmatprep.subr.mxu0 0.0
  %5936 = vmatpush1.msra.mxu0 0.0
  %5937 = vmatprep.subr.mxu0 0.0
  %5938 = vmatpush1.msra.mxu0 0.0
  %5939 = vmatprep.subr.mxu0 0.0
  %5940 = vmatpush1.msra.mxu0 0.0
  %5941 = vmatprep.subr.mxu0 0.0
  %5942 = vmatpush1.msra.mxu0 0.0
  %5943 = vmatprep.subr.mxu0 0.0
  %5944 = vmatpush1.msra.mxu0 0.0
  %5945 = vmatprep.subr.mxu0 0.0
  %5946 = vmatpush1.msra.mxu0 0.0
  %5947 = vmatprep.subr.mxu0 0.0
  %5948 = vmatpush1.msra.mxu0 0.0
  %5949 = vmatprep.subr.mxu0 0.0
  %5950 = vmatpush1.msra.mxu0 0.0
  %5951 = vmatprep.subr.mxu0 0.0
  %5952 = vmatpush1.msra.mxu0 0.0
  %5953 = vmatprep.subr.mxu0 0.0
  %5954 = vmatpush1.msra.mxu0 0.0
  %5955 = vmatprep.subr.mxu0 0.0
  %5956 = vmatpush1.msra.mxu0 0.0
  %5957 = vmatprep.subr.mxu0 0.0
  %5958 = vmatpush1.msra.mxu0 0.0
  %5959 = vmatprep.subr.mxu0 0.0
  %5960 = vmatpush1.msra.mxu0 0.0
  %5961 = vmatprep.subr.mxu0 0.0
  %5962 = vmatpush1.msra.mxu0 0.0
  %5963 = vmatprep.mubr.f32.mxu0 0.0
  %5964 = vmatmul.mubr.f32.gmra.mrb[0].mxu0 %v5613
  %v5965 = vpop.f32.mrb[0].mxu0
  %v5966 = vadd.f32 %v5609, %v5965
  %v5967 = vpop.f32.mrb[0].mxu0
  %v5968 = vadd.f32 %v5609, %v5967
  %5969 = vdwg.mxu0
  %5970 = vmatprep.subr.mxu0 %v5474
  %5971 = vmatpush1.msra.mxu0 %v5473
  %5972 = vmatprep.subr.mxu0 %v5490
  %5973 = vmatpush1.msra.mxu0 %v5489
  %5974 = vmatprep.subr.mxu0 %v5506
  %5975 = vmatpush1.msra.mxu0 %v5505
  %5976 = vmatprep.subr.mxu0 %v5522
  %5977 = vmatpush1.msra.mxu0 %v5521
  %5978 = vmatprep.subr.mxu0 %v5538
  %5979 = vmatpush1.msra.mxu0 %v5537
  %5980 = vmatprep.subr.mxu0 %v5554
  %5981 = vmatpush1.msra.mxu0 %v5553
  %5982 = vmatprep.subr.mxu0 %v5570
  %5983 = vmatpush1.msra.mxu0 %v5569
  %5984 = vmatprep.subr.mxu0 %v5586
  %5985 = vmatpush1.msra.mxu0 %v5585
  %5986 = vmatprep.subr.mxu0 %v5602
  %5987 = vmatpush1.msra.mxu0 %v5601
  %5988 = vmatprep.subr.mxu0 0.0
  %5989 = vmatpush1.msra.mxu0 0.0
  %5990 = vmatprep.subr.mxu0 0.0
  %5991 = vmatpush1.msra.mxu0 0.0
  %5992 = vmatprep.subr.mxu0 0.0
  %5993 = vmatpush1.msra.mxu0 0.0
  %5994 = vmatprep.subr.mxu0 0.0
  %5995 = vmatpush1.msra.mxu0 0.0
  %5996 = vmatprep.subr.mxu0 0.0
  %5997 = vmatpush1.msra.mxu0 0.0
  %5998 = vmatprep.subr.mxu0 0.0
  %5999 = vmatpush1.msra.mxu0 0.0
  %6000 = vmatprep.subr.mxu0 0.0
  %6001 = vmatpush1.msra.mxu0 0.0
  %6002 = vmatprep.subr.mxu0 0.0
  %6003 = vmatpush1.msra.mxu0 0.0
  %6004 = vmatprep.subr.mxu0 0.0
  %6005 = vmatpush1.msra.mxu0 0.0
  %6006 = vmatprep.subr.mxu0 0.0
  %6007 = vmatpush1.msra.mxu0 0.0
  %6008 = vmatprep.subr.mxu0 0.0
  %6009 = vmatpush1.msra.mxu0 0.0
  %6010 = vmatprep.subr.mxu0 0.0
  %6011 = vmatpush1.msra.mxu0 0.0
  %6012 = vmatprep.subr.mxu0 0.0
  %6013 = vmatpush1.msra.mxu0 0.0
  %6014 = vmatprep.subr.mxu0 0.0
  %6015 = vmatpush1.msra.mxu0 0.0
  %6016 = vmatprep.subr.mxu0 0.0
  %6017 = vmatpush1.msra.mxu0 0.0
  %6018 = vmatprep.subr.mxu0 0.0
  %6019 = vmatpush1.msra.mxu0 0.0
  %6020 = vmatprep.subr.mxu0 0.0
  %6021 = vmatpush1.msra.mxu0 0.0
  %6022 = vmatprep.subr.mxu0 0.0
  %6023 = vmatpush1.msra.mxu0 0.0
  %6024 = vmatprep.subr.mxu0 0.0
  %6025 = vmatpush1.msra.mxu0 0.0
  %6026 = vmatprep.subr.mxu0 0.0
  %6027 = vmatpush1.msra.mxu0 0.0
  %6028 = vmatprep.subr.mxu0 0.0
  %6029 = vmatpush1.msra.mxu0 0.0
  %6030 = vmatprep.subr.mxu0 0.0
  %6031 = vmatpush1.msra.mxu0 0.0
  %6032 = vmatprep.subr.mxu0 0.0
  %6033 = vmatpush1.msra.mxu0 0.0
  %6034 = vmatprep.mubr.f32.mxu0 0.0
  %6035 = vmatmul.mubr.f32.gmra.mrb[0].mxu0 %v5613
  %v6036 = vpop.f32.mrb[0].mxu0
  %v6037 = vadd.f32 %v5609, %v6036
  %v6038 = vpop.f32.mrb[0].mxu0
  %v6039 = vadd.f32 %v5609, %v6038
  %6040 = vdwg.mxu0
  %6041 = vmatprep.subr.mxu0 %v5476
  %6042 = vmatpush1.msra.mxu0 %v5475
  %6043 = vmatprep.subr.mxu0 %v5492
  %6044 = vmatpush1.msra.mxu0 %v5491
  %6045 = vmatprep.subr.mxu0 %v5508
  %6046 = vmatpush1.msra.mxu0 %v5507
  %6047 = vmatprep.subr.mxu0 %v5524
  %6048 = vmatpush1.msra.mxu0 %v5523
  %6049 = vmatprep.subr.mxu0 %v5540
  %6050 = vmatpush1.msra.mxu0 %v5539
  %6051 = vmatprep.subr.mxu0 %v5556
  %6052 = vmatpush1.msra.mxu0 %v5555
  %6053 = vmatprep.subr.mxu0 %v5572
  %6054 = vmatpush1.msra.mxu0 %v5571
  %6055 = vmatprep.subr.mxu0 %v5588
  %6056 = vmatpush1.msra.mxu0 %v5587
  %6057 = vmatprep.subr.mxu0 %v5604
  %6058 = vmatpush1.msra.mxu0 %v5603
  %6059 = vmatprep.subr.mxu0 0.0
  %6060 = vmatpush1.msra.mxu0 0.0
  %6061 = vmatprep.subr.mxu0 0.0
  %6062 = vmatpush1.msra.mxu0 0.0
  %6063 = vmatprep.subr.mxu0 0.0
  %6064 = vmatpush1.msra.mxu0 0.0
  %6065 = vmatprep.subr.mxu0 0.0
  %6066 = vmatpush1.msra.mxu0 0.0
  %6067 = vmatprep.subr.mxu0 0.0
  %6068 = vmatpush1.msra.mxu0 0.0
  %6069 = vmatprep.subr.mxu0 0.0
  %6070 = vmatpush1.msra.mxu0 0.0
  %6071 = vmatprep.subr.mxu0 0.0
  %6072 = vmatpush1.msra.mxu0 0.0
  %6073 = vmatprep.subr.mxu0 0.0
  %6074 = vmatpush1.msra.mxu0 0.0
  %6075 = vmatprep.subr.mxu0 0.0
  %6076 = vmatpush1.msra.mxu0 0.0
  %6077 = vmatprep.subr.mxu0 0.0
  %6078 = vmatpush1.msra.mxu0 0.0
  %6079 = vmatprep.subr.mxu0 0.0
  %6080 = vmatpush1.msra.mxu0 0.0
  %6081 = vmatprep.subr.mxu0 0.0
  %6082 = vmatpush1.msra.mxu0 0.0
  %6083 = vmatprep.subr.mxu0 0.0
  %6084 = vmatpush1.msra.mxu0 0.0
  %6085 = vmatprep.subr.mxu0 0.0
  %6086 = vmatpush1.msra.mxu0 0.0
  %6087 = vmatprep.subr.mxu0 0.0
  %6088 = vmatpush1.msra.mxu0 0.0
  %6089 = vmatprep.subr.mxu0 0.0
  %6090 = vmatpush1.msra.mxu0 0.0
  %6091 = vmatprep.subr.mxu0 0.0
  %6092 = vmatpush1.msra.mxu0 0.0
  %6093 = vmatprep.subr.mxu0 0.0
  %6094 = vmatpush1.msra.mxu0 0.0
  %6095 = vmatprep.subr.mxu0 0.0
  %6096 = vmatpush1.msra.mxu0 0.0
  %6097 = vmatprep.subr.mxu0 0.0
  %6098 = vmatpush1.msra.mxu0 0.0
  %6099 = vmatprep.subr.mxu0 0.0
  %6100 = vmatpush1.msra.mxu0 0.0
  %6101 = vmatprep.subr.mxu0 0.0
  %6102 = vmatpush1.msra.mxu0 0.0
  %6103 = vmatprep.subr.mxu0 0.0
  %6104 = vmatpush1.msra.mxu0 0.0
  %6105 = vmatprep.mubr.f32.mxu0 0.0
  %6106 = vmatmul.mubr.f32.gmra.mrb[0].mxu0 %v5613
  %v6107 = vpop.f32.mrb[0].mxu0
  %v6108 = vadd.f32 %v5609, %v6107
  %v6109 = vpop.f32.mrb[0].mxu0
  %v6110 = vadd.f32 %v5609, %v6109
  %6111 = vdwg.mxu0
  %6112 = vmatprep.subr.mxu0 %v5478
  %6113 = vmatpush1.msra.mxu0 %v5477
  %6114 = vmatprep.subr.mxu0 %v5494
  %6115 = vmatpush1.msra.mxu0 %v5493
  %6116 = vmatprep.subr.mxu0 %v5510
  %6117 = vmatpush1.msra.mxu0 %v5509
  %6118 = vmatprep.subr.mxu0 %v5526
  %6119 = vmatpush1.msra.mxu0 %v5525
  %6120 = vmatprep.subr.mxu0 %v5542
  %6121 = vmatpush1.msra.mxu0 %v5541
  %6122 = vmatprep.subr.mxu0 %v5558
  %6123 = vmatpush1.msra.mxu0 %v5557
  %6124 = vmatprep.subr.mxu0 %v5574
  %6125 = vmatpush1.msra.mxu0 %v5573
  %6126 = vmatprep.subr.mxu0 %v5590
  %6127 = vmatpush1.msra.mxu0 %v5589
  %6128 = vmatprep.subr.mxu0 %v5606
  %6129 = vmatpush1.msra.mxu0 %v5605
  %6130 = vmatprep.subr.mxu0 0.0
  %6131 = vmatpush1.msra.mxu0 0.0
  %6132 = vmatprep.subr.mxu0 0.0
  %6133 = vmatpush1.msra.mxu0 0.0
  %6134 = vmatprep.subr.mxu0 0.0
  %6135 = vmatpush1.msra.mxu0 0.0
  %6136 = vmatprep.subr.mxu0 0.0
  %6137 = vmatpush1.msra.mxu0 0.0
  %6138 = vmatprep.subr.mxu0 0.0
  %6139 = vmatpush1.msra.mxu0 0.0
  %6140 = vmatprep.subr.mxu0 0.0
  %6141 = vmatpush1.msra.mxu0 0.0
  %6142 = vmatprep.subr.mxu0 0.0
  %6143 = vmatpush1.msra.mxu0 0.0
  %6144 = vmatprep.subr.mxu0 0.0
  %6145 = vmatpush1.msra.mxu0 0.0
  %6146 = vmatprep.subr.mxu0 0.0
  %6147 = vmatpush1.msra.mxu0 0.0
  %6148 = vmatprep.subr.mxu0 0.0
  %6149 = vmatpush1.msra.mxu0 0.0
  %6150 = vmatprep.subr.mxu0 0.0
  %6151 = vmatpush1.msra.mxu0 0.0
  %6152 = vmatprep.subr.mxu0 0.0
  %6153 = vmatpush1.msra.mxu0 0.0
  %6154 = vmatprep.subr.mxu0 0.0
  %6155 = vmatpush1.msra.mxu0 0.0
  %6156 = vmatprep.subr.mxu0 0.0
  %6157 = vmatpush1.msra.mxu0 0.0
  %6158 = vmatprep.subr.mxu0 0.0
  %6159 = vmatpush1.msra.mxu0 0.0
  %6160 = vmatprep.subr.mxu0 0.0
  %6161 = vmatpush1.msra.mxu0 0.0
  %6162 = vmatprep.subr.mxu0 0.0
  %6163 = vmatpush1.msra.mxu0 0.0
  %6164 = vmatprep.subr.mxu0 0.0
  %6165 = vmatpush1.msra.mxu0 0.0
  %6166 = vmatprep.subr.mxu0 0.0
  %6167 = vmatpush1.msra.mxu0 0.0
  %6168 = vmatprep.subr.mxu0 0.0
  %6169 = vmatpush1.msra.mxu0 0.0
  %6170 = vmatprep.subr.mxu0 0.0
  %6171 = vmatpush1.msra.mxu0 0.0
  %6172 = vmatprep.subr.mxu0 0.0
  %6173 = vmatpush1.msra.mxu0 0.0
  %6174 = vmatprep.subr.mxu0 0.0
  %6175 = vmatpush1.msra.mxu0 0.0
  %6176 = vmatprep.mubr.f32.mxu0 0.0
  %6177 = vmatmul.mubr.f32.gmra.mrb[0].mxu0 %v5613
  %v6178 = vpop.f32.mrb[0].mxu0
  %v6179 = vadd.f32 %v5609, %v6178
  %v6180 = vpop.f32.mrb[0].mxu0
  %v6181 = vadd.f32 %v5609, %v6180
  %6182 = vdwg.mxu0
  %v6183 = vadd.f32 %v5682, %v5684
  %v6184 = vadd.f32 %v6183, %v5753
  %v6185 = vadd.f32 %v6184, %v5755
  %v6186 = vadd.f32 %v6185, %v5824
  %v6187 = vadd.f32 %v6186, %v5826
  %v6188 = vadd.f32 %v6187, %v5895
  %v6189 = vadd.f32 %v6188, %v5897
  %v6190 = vadd.f32 %v6189, %v5966
  %v6191 = vadd.f32 %v6190, %v5968
  %v6192 = vadd.f32 %v6191, %v6037
  %v6193 = vadd.f32 %v6192, %v6039
  %v6194 = vadd.f32 %v6193, %v6108
  %v6195 = vadd.f32 %v6194, %v6110
  %v6196 = vadd.f32 %v6195, %v6179
  %v6197 = vadd.f32 %v6196, %v6181
  %6198 = vadd.xlane.f32.xlu0 %v6197
  %v6199 = vpop.xlane.xlu0 %6198
  %v6200 = vmul.f32 %v6199, 0.00048828125
  %v6201 = vmul.f32 %v5682, %v5682
  %v6202 = vmul.f32 %v5684, %v5684
  %v6203 = vmul.f32 %v5753, %v5753
  %v6204 = vmul.f32 %v5755, %v5755
  %v6205 = vmul.f32 %v5824, %v5824
  %v6206 = vmul.f32 %v5826, %v5826
  %v6207 = vmul.f32 %v5895, %v5895
  %v6208 = vmul.f32 %v5897, %v5897
  %v6209 = vmul.f32 %v5966, %v5966
  %v6210 = vmul.f32 %v5968, %v5968
  %v6211 = vmul.f32 %v6037, %v6037
  %v6212 = vmul.f32 %v6039, %v6039
  %v6213 = vmul.f32 %v6108, %v6108
  %v6214 = vmul.f32 %v6110, %v6110
  %v6215 = vmul.f32 %v6179, %v6179
  %v6216 = vmul.f32 %v6181, %v6181
  %v6217 = vadd.f32 %v6201, %v6202
  %v6218 = vadd.f32 %v6217, %v6203
  %v6219 = vadd.f32 %v6218, %v6204
  %v6220 = vadd.f32 %v6219, %v6205
  %v6221 = vadd.f32 %v6220, %v6206
  %v6222 = vadd.f32 %v6221, %v6207
  %v6223 = vadd.f32 %v6222, %v6208
  %v6224 = vadd.f32 %v6223, %v6209
  %v6225 = vadd.f32 %v6224, %v6210
  %v6226 = vadd.f32 %v6225, %v6211
  %v6227 = vadd.f32 %v6226, %v6212
  %v6228 = vadd.f32 %v6227, %v6213
  %v6229 = vadd.f32 %v6228, %v6214
  %v6230 = vadd.f32 %v6229, %v6215
  %v6231 = vadd.f32 %v6230, %v6216
  %6232 = vadd.xlane.f32.xlu0 %v6231
  %v6233 = vpop.xlane.xlu0 %6232
  %v6234 = vmul.f32 %v6233, 0.00048828125
  %v6235 = vsub.f32 %v5682, %v6200
  %v6236 = vsub.f32 %v5684, %v6200
  %v6237 = vsub.f32 %v5753, %v6200
  %v6238 = vsub.f32 %v5755, %v6200
  %v6239 = vsub.f32 %v5824, %v6200
  %v6240 = vsub.f32 %v5826, %v6200
  %v6241 = vsub.f32 %v5895, %v6200
  %v6242 = vsub.f32 %v5897, %v6200
  %v6243 = vsub.f32 %v5966, %v6200
  %v6244 = vsub.f32 %v5968, %v6200
  %v6245 = vsub.f32 %v6037, %v6200
  %v6246 = vsub.f32 %v6039, %v6200
  %v6247 = vsub.f32 %v6108, %v6200
  %v6248 = vsub.f32 %v6110, %v6200
  %v6249 = vsub.f32 %v6179, %v6200
  %v6250 = vsub.f32 %v6181, %v6200
  %v6251 = vmul.f32 %v6200, %v6200
  %v6252 = vsub.f32 %v6234, %v6251
  %v6253 = vadd.f32 %v6252, 1e-05
  %v6254 = vrsqrt.pop %v6253
  %v6255 = vmul.f32 %v6235, %v6254
  %v6256 = vmul.f32 %v6236, %v6254
  %v6257 = vmul.f32 %v6237, %v6254
  %v6258 = vmul.f32 %v6238, %v6254
  %v6259 = vmul.f32 %v6239, %v6254
  %v6260 = vmul.f32 %v6240, %v6254
  %v6261 = vmul.f32 %v6241, %v6254
  %v6262 = vmul.f32 %v6242, %v6254
  %v6263 = vmul.f32 %v6243, %v6254
  %v6264 = vmul.f32 %v6244, %v6254
  %v6265 = vmul.f32 %v6245, %v6254
  %v6266 = vmul.f32 %v6246, %v6254
  %v6267 = vmul.f32 %v6247, %v6254
  %v6268 = vmul.f32 %v6248, %v6254
  %v6269 = vmul.f32 %v6249, %v6254
  %v6270 = vmul.f32 %v6250, %v6254
  %6271 = vset.pattern.permute.xlu0 0
  %6272 = vperm.xlu0 %6271, %v30
  %v6273 = vpop.permute.xlu0 %6272
  %v6275 = vmul.f32 %v6255, %v6273
  %v6276 = vmul.f32 %v6256, %v6273
  %v6277 = vmul.f32 %v6257, %v6273
  %v6278 = vmul.f32 %v6258, %v6273
  %v6279 = vmul.f32 %v6259, %v6273
  %v6280 = vmul.f32 %v6260, %v6273
  %v6281 = vmul.f32 %v6261, %v6273
  %v6282 = vmul.f32 %v6262, %v6273
  %v6283 = vmul.f32 %v6263, %v6273
  %v6284 = vmul.f32 %v6264, %v6273
  %v6285 = vmul.f32 %v6265, %v6273
  %v6286 = vmul.f32 %v6266, %v6273
  %v6287 = vmul.f32 %v6267, %v6273
  %v6288 = vmul.f32 %v6268, %v6273
  %v6289 = vmul.f32 %v6269, %v6273
  %v6290 = vmul.f32 %v6270, %v6273
  %6291 = vset.pattern.permute.xlu0 1
  %6292 = vperm.xlu0 %6291, %v30
  %v6293 = vpop.permute.xlu0 %6292
  %v6295 = vadd.f32 %v6275, %v6293
  %v6296 = vadd.f32 %v6276, %v6293
  %v6297 = vadd.f32 %v6277, %v6293
  %v6298 = vadd.f32 %v6278, %v6293
  %v6299 = vadd.f32 %v6279, %v6293
  %v6300 = vadd.f32 %v6280, %v6293
  %v6301 = vadd.f32 %v6281, %v6293
  %v6302 = vadd.f32 %v6282, %v6293
  %v6303 = vadd.f32 %v6283, %v6293
  %v6304 = vadd.f32 %v6284, %v6293
  %v6305 = vadd.f32 %v6285, %v6293
  %v6306 = vadd.f32 %v6286, %v6293
  %v6307 = vadd.f32 %v6287, %v6293
  %v6308 = vadd.f32 %v6288, %v6293
  %v6309 = vadd.f32 %v6289, %v6293
  %v6310 = vadd.f32 %v6290, %v6293
  %v6311 = vmax.f32 %v6295, 0.0
  %v6312 = vmax.f32 %v6296, 0.0
  %v6313 = vmax.f32 %v6297, 0.0
  %v6314 = vmax.f32 %v6298, 0.0
  %v6315 = vmax.f32 %v6299, 0.0
  %v6316 = vmax.f32 %v6300, 0.0
  %v6317 = vmax.f32 %v6301, 0.0
  %v6318 = vmax.f32 %v6302, 0.0
  %v6319 = vmax.f32 %v6303, 0.0
  %v6320 = vmax.f32 %v6304, 0.0
  %v6321 = vmax.f32 %v6305, 0.0
  %v6322 = vmax.f32 %v6306, 0.0
  %v6323 = vmax.f32 %v6307, 0.0
  %v6324 = vmax.f32 %v6308, 0.0
  %v6325 = vmax.f32 %v6309, 0.0
  %v6326 = vmax.f32 %v6310, 0.0
  %v6327 = vld [vmem:[%s6] sm:$0xff]
  %6328 = vrot.lane.b32.xlu0 %v6311, 33
  %v6329 = vpop.permute.xlu0 %6328
  %6330 = vrot.lane.b32.xlu0 %v6312, 33
  %v6331 = vpop.permute.xlu0 %6330
  %6332 = vrot.lane.b32.xlu0 %v6313, 33
  %v6333 = vpop.permute.xlu0 %6332
  %6334 = vrot.lane.b32.xlu0 %v6314, 33
  %v6335 = vpop.permute.xlu0 %6334
  %6336 = vrot.lane.b32.xlu0 %v6315, 33
  %v6337 = vpop.permute.xlu0 %6336
  %6338 = vrot.lane.b32.xlu0 %v6316, 33
  %v6339 = vpop.permute.xlu0 %6338
  %6340 = vrot.lane.b32.xlu0 %v6317, 33
  %v6341 = vpop.permute.xlu0 %6340
  %6342 = vrot.lane.b32.xlu0 %v6318, 33
  %v6343 = vpop.permute.xlu0 %6342
  %6344 = vrot.lane.b32.xlu0 %v6319, 33
  %v6345 = vpop.permute.xlu0 %6344
  %6346 = vrot.lane.b32.xlu0 %v6320, 33
  %v6347 = vpop.permute.xlu0 %6346
  %6348 = vrot.lane.b32.xlu0 %v6321, 33
  %v6349 = vpop.permute.xlu0 %6348
  %6350 = vrot.lane.b32.xlu0 %v6322, 33
  %v6351 = vpop.permute.xlu0 %6350
  %6352 = vrot.lane.b32.xlu0 %v6323, 33
  %v6353 = vpop.permute.xlu0 %6352
  %6354 = vrot.lane.b32.xlu0 %v6324, 33
  %v6355 = vpop.permute.xlu0 %6354
  %6356 = vrot.lane.b32.xlu0 %v6325, 33
  %v6357 = vpop.permute.xlu0 %6356
  %6358 = vrot.lane.b32.xlu0 %v6326, 33
  %v6359 = vpop.permute.xlu0 %6358
  %v6360 = vsel %vm4112, %v6357, %v6359
  %v6361 = vsel %vm4112, %v6355, %v6357
  %v6362 = vsel %vm4112, %v6353, %v6355
  %v6363 = vsel %vm4112, %v6351, %v6353
  %v6364 = vsel %vm4112, %v6349, %v6351
  %v6365 = vsel %vm4112, %v6347, %v6349
  %v6366 = vsel %vm4112, %v6345, %v6347
  %v6367 = vsel %vm4112, %v6343, %v6345
  %v6368 = vsel %vm4112, %v6341, %v6343
  %v6369 = vsel %vm4112, %v6339, %v6341
  %v6370 = vsel %vm4112, %v6337, %v6339
  %v6371 = vsel %vm4112, %v6335, %v6337
  %v6372 = vsel %vm4112, %v6333, %v6335
  %v6373 = vsel %vm4112, %v6331, %v6333
  %v6374 = vsel %vm4112, %v6329, %v6331
  %v6375 = vsel %vm4112, %v6359, %v6329
  %v6376 = vld [vmem:[%s2] ss:$8 sm:$0xf]
  %v6377 = vld [vmem:[%s2] ss:$8 sm:$0xf0]
  %v6378 = vor.u32 %v6376, %v6377
  %v6379 = vld [vmem:[%s4132] ss:$8 sm:$0xf]
  %v6380 = vld [vmem:[%s4132] ss:$8 sm:$0xf0]
  %v6381 = vor.u32 %v6379, %v6380
  %v6384 = vlaneseq
  %v6385 = vshrl.u32 %v6384, 7
  %v6386 = vsub.s32 0, %v6385
  %v6387 = vrot.slane %v6378, %v6386
  %v6388 = vlaneseq
  %v6389 = vshrl.u32 %v6388, 7
  %v6390 = vsub.s32 1, %v6389
  %v6391 = vrot.slane %v6378, %v6390
  %v6392 = vlaneseq
  %v6393 = vshrl.u32 %v6392, 7
  %v6394 = vsub.s32 2, %v6393
  %v6395 = vrot.slane %v6378, %v6394
  %v6396 = vlaneseq
  %v6397 = vshrl.u32 %v6396, 7
  %v6398 = vsub.s32 3, %v6397
  %v6399 = vrot.slane %v6378, %v6398
  %v6400 = vlaneseq
  %v6401 = vshrl.u32 %v6400, 7
  %v6402 = vsub.s32 4, %v6401
  %v6403 = vrot.slane %v6378, %v6402
  %v6404 = vlaneseq
  %v6405 = vshrl.u32 %v6404, 7
  %v6406 = vsub.s32 5, %v6405
  %v6407 = vrot.slane %v6378, %v6406
  %v6408 = vlaneseq
  %v6409 = vshrl.u32 %v6408, 7
  %v6410 = vsub.s32 6, %v6409
  %v6411 = vrot.slane %v6378, %v6410
  %v6412 = vlaneseq
  %v6413 = vshrl.u32 %v6412, 7
  %v6414 = vsub.s32 7, %v6413
  %v6415 = vrot.slane %v6378, %v6414
  %v6416 = vlaneseq
  %v6417 = vshrl.u32 %v6416, 7
  %v6418 = vsub.s32 0, %v6417
  %v6419 = vrot.slane %v6381, %v6418
  %v6420 = vlaneseq
  %v6421 = vshrl.u32 %v6420, 7
  %v6422 = vsub.s32 1, %v6421
  %v6423 = vrot.slane %v6381, %v6422
  %v6424 = vlaneseq
  %v6425 = vshrl.u32 %v6424, 7
  %v6426 = vsub.s32 2, %v6425
  %v6427 = vrot.slane %v6381, %v6426
  %v6428 = vlaneseq
  %v6429 = vshrl.u32 %v6428, 7
  %v6430 = vsub.s32 3, %v6429
  %v6431 = vrot.slane %v6381, %v6430
  %v6432 = vlaneseq
  %v6433 = vshrl.u32 %v6432, 7
  %v6434 = vsub.s32 4, %v6433
  %v6435 = vrot.slane %v6381, %v6434
  %v6436 = vlaneseq
  %v6437 = vshrl.u32 %v6436, 7
  %v6438 = vsub.s32 5, %v6437
  %v6439 = vrot.slane %v6381, %v6438
  %v6440 = vlaneseq
  %v6441 = vshrl.u32 %v6440, 7
  %v6442 = vsub.s32 6, %v6441
  %v6443 = vrot.slane %v6381, %v6442
  %v6444 = vlaneseq
  %v6445 = vshrl.u32 %v6444, 7
  %v6446 = vsub.s32 7, %v6445
  %v6447 = vrot.slane %v6381, %v6446
  %v6464 = vmul.f32 %v6375, %v6387
  %v6465 = vmul.f32 %v6374, %v6391
  %v6466 = vmul.f32 %v6373, %v6395
  %v6467 = vmul.f32 %v6372, %v6399
  %v6468 = vmul.f32 %v6371, %v6403
  %v6469 = vmul.f32 %v6370, %v6407
  %v6470 = vmul.f32 %v6369, %v6411
  %v6471 = vmul.f32 %v6368, %v6415
  %v6472 = vmul.f32 %v6367, %v6419
  %v6473 = vmul.f32 %v6366, %v6423
  %v6474 = vmul.f32 %v6365, %v6427
  %v6475 = vmul.f32 %v6364, %v6431
  %v6476 = vmul.f32 %v6363, %v6435
  %v6477 = vmul.f32 %v6362, %v6439
  %v6478 = vmul.f32 %v6361, %v6443
  %v6479 = vmul.f32 %v6360, %v6447
  %6480 = vst [vmem:[#allocation2] sm:$0xff] %v6464
  %6481 = vst [vmem:[#allocation2 + $0x8] sm:$0xff] %v6465
  %6482 = vst [vmem:[#allocation2 + $0x10] sm:$0xff] %v6466
  %6483 = vst [vmem:[#allocation2 + $0x18] sm:$0xff] %v6467
  %6484 = vst [vmem:[#allocation2 + $0x20] sm:$0xff] %v6468
  %6485 = vst [vmem:[#allocation2 + $0x28] sm:$0xff] %v6469
  %6486 = vst [vmem:[#allocation2 + $0x30] sm:$0xff] %v6470
  %6487 = vst [vmem:[#allocation2 + $0x38] sm:$0xff] %v6471
  %6488 = vst [vmem:[#allocation2 + $0x40] sm:$0xff] %v6472
  %6489 = vst [vmem:[#allocation2 + $0x48] sm:$0xff] %v6473
  %6490 = vst [vmem:[#allocation2 + $0x50] sm:$0xff] %v6474
  %6491 = vst [vmem:[#allocation2 + $0x58] sm:$0xff] %v6475
  %6492 = vst [vmem:[#allocation2 + $0x60] sm:$0xff] %v6476
  %6493 = vst [vmem:[#allocation2 + $0x68] sm:$0xff] %v6477
  %6494 = vst [vmem:[#allocation2 + $0x70] sm:$0xff] %v6478
  %6495 = vst [vmem:[#allocation2 + $0x78] sm:$0xff] %v6479
  %6496 = vrot.lane.b32.xlu0 %v6311, 32
  %v6497 = vpop.permute.xlu0 %6496
  %6498 = vrot.lane.b32.xlu0 %v6312, 32
  %v6499 = vpop.permute.xlu0 %6498
  %6500 = vrot.lane.b32.xlu0 %v6313, 32
  %v6501 = vpop.permute.xlu0 %6500
  %6502 = vrot.lane.b32.xlu0 %v6314, 32
  %v6503 = vpop.permute.xlu0 %6502
  %6504 = vrot.lane.b32.xlu0 %v6315, 32
  %v6505 = vpop.permute.xlu0 %6504
  %6506 = vrot.lane.b32.xlu0 %v6316, 32
  %v6507 = vpop.permute.xlu0 %6506
  %6508 = vrot.lane.b32.xlu0 %v6317, 32
  %v6509 = vpop.permute.xlu0 %6508
  %6510 = vrot.lane.b32.xlu0 %v6318, 32
  %v6511 = vpop.permute.xlu0 %6510
  %6512 = vrot.lane.b32.xlu0 %v6319, 32
  %v6513 = vpop.permute.xlu0 %6512
  %6514 = vrot.lane.b32.xlu0 %v6320, 32
  %v6515 = vpop.permute.xlu0 %6514
  %6516 = vrot.lane.b32.xlu0 %v6321, 32
  %v6517 = vpop.permute.xlu0 %6516
  %6518 = vrot.lane.b32.xlu0 %v6322, 32
  %v6519 = vpop.permute.xlu0 %6518
  %6520 = vrot.lane.b32.xlu0 %v6323, 32
  %v6521 = vpop.permute.xlu0 %6520
  %6522 = vrot.lane.b32.xlu0 %v6324, 32
  %v6523 = vpop.permute.xlu0 %6522
  %6524 = vrot.lane.b32.xlu0 %v6325, 32
  %v6525 = vpop.permute.xlu0 %6524
  %6526 = vrot.lane.b32.xlu0 %v6326, 32
  %v6527 = vpop.permute.xlu0 %6526
  %v6528 = vsel %vm4282, %v6525, %v6527
  %v6529 = vsel %vm4282, %v6523, %v6525
  %v6530 = vsel %vm4282, %v6521, %v6523
  %v6531 = vsel %vm4282, %v6519, %v6521
  %v6532 = vsel %vm4282, %v6517, %v6519
  %v6533 = vsel %vm4282, %v6515, %v6517
  %v6534 = vsel %vm4282, %v6513, %v6515
  %v6535 = vsel %vm4282, %v6511, %v6513
  %v6536 = vsel %vm4282, %v6509, %v6511
  %v6537 = vsel %vm4282, %v6507, %v6509
  %v6538 = vsel %vm4282, %v6505, %v6507
  %v6539 = vsel %vm4282, %v6503, %v6505
  %v6540 = vsel %vm4282, %v6501, %v6503
  %v6541 = vsel %vm4282, %v6499, %v6501
  %v6542 = vsel %vm4282, %v6497, %v6499
  %v6543 = vsel %vm4282, %v6527, %v6497
  %v6544 = vld [vmem:[%s4299] ss:$8 sm:$0xf]
  %v6545 = vld [vmem:[%s4299] ss:$8 sm:$0xf0]
  %v6546 = vor.u32 %v6544, %v6545
  %v6547 = vld [vmem:[%s4303] ss:$8 sm:$0xf]
  %v6548 = vld [vmem:[%s4303] ss:$8 sm:$0xf0]
  %v6549 = vor.u32 %v6547, %v6548
  %v6552 = vlaneseq
  %v6553 = vshrl.u32 %v6552, 7
  %v6554 = vsub.s32 0, %v6553
  %v6555 = vrot.slane %v6546, %v6554
  %v6556 = vlaneseq
  %v6557 = vshrl.u32 %v6556, 7
  %v6558 = vsub.s32 1, %v6557
  %v6559 = vrot.slane %v6546, %v6558
  %v6560 = vlaneseq
  %v6561 = vshrl.u32 %v6560, 7
  %v6562 = vsub.s32 2, %v6561
  %v6563 = vrot.slane %v6546, %v6562
  %v6564 = vlaneseq
  %v6565 = vshrl.u32 %v6564, 7
  %v6566 = vsub.s32 3, %v6565
  %v6567 = vrot.slane %v6546, %v6566
  %v6568 = vlaneseq
  %v6569 = vshrl.u32 %v6568, 7
  %v6570 = vsub.s32 4, %v6569
  %v6571 = vrot.slane %v6546, %v6570
  %v6572 = vlaneseq
  %v6573 = vshrl.u32 %v6572, 7
  %v6574 = vsub.s32 5, %v6573
  %v6575 = vrot.slane %v6546, %v6574
  %v6576 = vlaneseq
  %v6577 = vshrl.u32 %v6576, 7
  %v6578 = vsub.s32 6, %v6577
  %v6579 = vrot.slane %v6546, %v6578
  %v6580 = vlaneseq
  %v6581 = vshrl.u32 %v6580, 7
  %v6582 = vsub.s32 7, %v6581
  %v6583 = vrot.slane %v6546, %v6582
  %v6584 = vlaneseq
  %v6585 = vshrl.u32 %v6584, 7
  %v6586 = vsub.s32 0, %v6585
  %v6587 = vrot.slane %v6549, %v6586
  %v6588 = vlaneseq
  %v6589 = vshrl.u32 %v6588, 7
  %v6590 = vsub.s32 1, %v6589
  %v6591 = vrot.slane %v6549, %v6590
  %v6592 = vlaneseq
  %v6593 = vshrl.u32 %v6592, 7
  %v6594 = vsub.s32 2, %v6593
  %v6595 = vrot.slane %v6549, %v6594
  %v6596 = vlaneseq
  %v6597 = vshrl.u32 %v6596, 7
  %v6598 = vsub.s32 3, %v6597
  %v6599 = vrot.slane %v6549, %v6598
  %v6600 = vlaneseq
  %v6601 = vshrl.u32 %v6600, 7
  %v6602 = vsub.s32 4, %v6601
  %v6603 = vrot.slane %v6549, %v6602
  %v6604 = vlaneseq
  %v6605 = vshrl.u32 %v6604, 7
  %v6606 = vsub.s32 5, %v6605
  %v6607 = vrot.slane %v6549, %v6606
  %v6608 = vlaneseq
  %v6609 = vshrl.u32 %v6608, 7
  %v6610 = vsub.s32 6, %v6609
  %v6611 = vrot.slane %v6549, %v6610
  %v6612 = vlaneseq
  %v6613 = vshrl.u32 %v6612, 7
  %v6614 = vsub.s32 7, %v6613
  %v6615 = vrot.slane %v6549, %v6614
  %v6632 = vmul.f32 %v6543, %v6555
  %v6633 = vmul.f32 %v6542, %v6559
  %v6634 = vmul.f32 %v6541, %v6563
  %v6635 = vmul.f32 %v6540, %v6567
  %v6636 = vmul.f32 %v6539, %v6571
  %v6637 = vmul.f32 %v6538, %v6575
  %v6638 = vmul.f32 %v6537, %v6579
  %v6639 = vmul.f32 %v6536, %v6583
  %v6640 = vmul.f32 %v6535, %v6587
  %v6641 = vmul.f32 %v6534, %v6591
  %v6642 = vmul.f32 %v6533, %v6595
  %v6643 = vmul.f32 %v6532, %v6599
  %v6644 = vmul.f32 %v6531, %v6603
  %v6645 = vmul.f32 %v6530, %v6607
  %v6646 = vmul.f32 %v6529, %v6611
  %v6647 = vmul.f32 %v6528, %v6615
  %6648 = vst [vmem:[#allocation2 + $0x80] sm:$0xff] %v6632
  %6649 = vst [vmem:[#allocation2 + $0x88] sm:$0xff] %v6633
  %6650 = vst [vmem:[#allocation2 + $0x90] sm:$0xff] %v6634
  %6651 = vst [vmem:[#allocation2 + $0x98] sm:$0xff] %v6635
  %6652 = vst [vmem:[#allocation2 + $0xa0] sm:$0xff] %v6636
  %6653 = vst [vmem:[#allocation2 + $0xa8] sm:$0xff] %v6637
  %6654 = vst [vmem:[#allocation2 + $0xb0] sm:$0xff] %v6638
  %6655 = vst [vmem:[#allocation2 + $0xb8] sm:$0xff] %v6639
  %6656 = vst [vmem:[#allocation2 + $0xc0] sm:$0xff] %v6640
  %6657 = vst [vmem:[#allocation2 + $0xc8] sm:$0xff] %v6641
  %6658 = vst [vmem:[#allocation2 + $0xd0] sm:$0xff] %v6642
  %6659 = vst [vmem:[#allocation2 + $0xd8] sm:$0xff] %v6643
  %6660 = vst [vmem:[#allocation2 + $0xe0] sm:$0xff] %v6644
  %6661 = vst [vmem:[#allocation2 + $0xe8] sm:$0xff] %v6645
  %6662 = vst [vmem:[#allocation2 + $0xf0] sm:$0xff] %v6646
  %6663 = vst [vmem:[#allocation2 + $0xf8] sm:$0xff] %v6647
  %6664 = vrot.lane.b32.xlu0 %v6311, 31
  %v6665 = vpop.permute.xlu0 %6664
  %6666 = vrot.lane.b32.xlu0 %v6312, 31
  %v6667 = vpop.permute.xlu0 %6666
  %6668 = vrot.lane.b32.xlu0 %v6313, 31
  %v6669 = vpop.permute.xlu0 %6668
  %6670 = vrot.lane.b32.xlu0 %v6314, 31
  %v6671 = vpop.permute.xlu0 %6670
  %6672 = vrot.lane.b32.xlu0 %v6315, 31
  %v6673 = vpop.permute.xlu0 %6672
  %6674 = vrot.lane.b32.xlu0 %v6316, 31
  %v6675 = vpop.permute.xlu0 %6674
  %6676 = vrot.lane.b32.xlu0 %v6317, 31
  %v6677 = vpop.permute.xlu0 %6676
  %6678 = vrot.lane.b32.xlu0 %v6318, 31
  %v6679 = vpop.permute.xlu0 %6678
  %6680 = vrot.lane.b32.xlu0 %v6319, 31
  %v6681 = vpop.permute.xlu0 %6680
  %6682 = vrot.lane.b32.xlu0 %v6320, 31
  %v6683 = vpop.permute.xlu0 %6682
  %6684 = vrot.lane.b32.xlu0 %v6321, 31
  %v6685 = vpop.permute.xlu0 %6684
  %6686 = vrot.lane.b32.xlu0 %v6322, 31
  %v6687 = vpop.permute.xlu0 %6686
  %6688 = vrot.lane.b32.xlu0 %v6323, 31
  %v6689 = vpop.permute.xlu0 %6688
  %6690 = vrot.lane.b32.xlu0 %v6324, 31
  %v6691 = vpop.permute.xlu0 %6690
  %6692 = vrot.lane.b32.xlu0 %v6325, 31
  %v6693 = vpop.permute.xlu0 %6692
  %6694 = vrot.lane.b32.xlu0 %v6326, 31
  %v6695 = vpop.permute.xlu0 %6694
  %v6696 = vsel %vm4453, %v6693, %v6695
  %v6697 = vsel %vm4453, %v6691, %v6693
  %v6698 = vsel %vm4453, %v6689, %v6691
  %v6699 = vsel %vm4453, %v6687, %v6689
  %v6700 = vsel %vm4453, %v6685, %v6687
  %v6701 = vsel %vm4453, %v6683, %v6685
  %v6702 = vsel %vm4453, %v6681, %v6683
  %v6703 = vsel %vm4453, %v6679, %v6681
  %v6704 = vsel %vm4453, %v6677, %v6679
  %v6705 = vsel %vm4453, %v6675, %v6677
  %v6706 = vsel %vm4453, %v6673, %v6675
  %v6707 = vsel %vm4453, %v6671, %v6673
  %v6708 = vsel %vm4453, %v6669, %v6671
  %v6709 = vsel %vm4453, %v6667, %v6669
  %v6710 = vsel %vm4453, %v6665, %v6667
  %v6711 = vsel %vm4453, %v6695, %v6665
  %v6712 = vld [vmem:[%s4470] ss:$8 sm:$0xf]
  %v6713 = vld [vmem:[%s4470] ss:$8 sm:$0xf0]
  %v6714 = vor.u32 %v6712, %v6713
  %v6715 = vld [vmem:[%s4474] ss:$8 sm:$0xf]
  %v6716 = vld [vmem:[%s4474] ss:$8 sm:$0xf0]
  %v6717 = vor.u32 %v6715, %v6716
  %v6720 = vlaneseq
  %v6721 = vshrl.u32 %v6720, 7
  %v6722 = vsub.s32 0, %v6721
  %v6723 = vrot.slane %v6714, %v6722
  %v6724 = vlaneseq
  %v6725 = vshrl.u32 %v6724, 7
  %v6726 = vsub.s32 1, %v6725
  %v6727 = vrot.slane %v6714, %v6726
  %v6728 = vlaneseq
  %v6729 = vshrl.u32 %v6728, 7
  %v6730 = vsub.s32 2, %v6729
  %v6731 = vrot.slane %v6714, %v6730
  %v6732 = vlaneseq
  %v6733 = vshrl.u32 %v6732, 7
  %v6734 = vsub.s32 3, %v6733
  %v6735 = vrot.slane %v6714, %v6734
  %v6736 = vlaneseq
  %v6737 = vshrl.u32 %v6736, 7
  %v6738 = vsub.s32 4, %v6737
  %v6739 = vrot.slane %v6714, %v6738
  %v6740 = vlaneseq
  %v6741 = vshrl.u32 %v6740, 7
  %v6742 = vsub.s32 5, %v6741
  %v6743 = vrot.slane %v6714, %v6742
  %v6744 = vlaneseq
  %v6745 = vshrl.u32 %v6744, 7
  %v6746 = vsub.s32 6, %v6745
  %v6747 = vrot.slane %v6714, %v6746
  %v6748 = vlaneseq
  %v6749 = vshrl.u32 %v6748, 7
  %v6750 = vsub.s32 7, %v6749
  %v6751 = vrot.slane %v6714, %v6750
  %v6752 = vlaneseq
  %v6753 = vshrl.u32 %v6752, 7
  %v6754 = vsub.s32 0, %v6753
  %v6755 = vrot.slane %v6717, %v6754
  %v6756 = vlaneseq
  %v6757 = vshrl.u32 %v6756, 7
  %v6758 = vsub.s32 1, %v6757
  %v6759 = vrot.slane %v6717, %v6758
  %v6760 = vlaneseq
  %v6761 = vshrl.u32 %v6760, 7
  %v6762 = vsub.s32 2, %v6761
  %v6763 = vrot.slane %v6717, %v6762
  %v6764 = vlaneseq
  %v6765 = vshrl.u32 %v6764, 7
  %v6766 = vsub.s32 3, %v6765
  %v6767 = vrot.slane %v6717, %v6766
  %v6768 = vlaneseq
  %v6769 = vshrl.u32 %v6768, 7
  %v6770 = vsub.s32 4, %v6769
  %v6771 = vrot.slane %v6717, %v6770
  %v6772 = vlaneseq
  %v6773 = vshrl.u32 %v6772, 7
  %v6774 = vsub.s32 5, %v6773
  %v6775 = vrot.slane %v6717, %v6774
  %v6776 = vlaneseq
  %v6777 = vshrl.u32 %v6776, 7
  %v6778 = vsub.s32 6, %v6777
  %v6779 = vrot.slane %v6717, %v6778
  %v6780 = vlaneseq
  %v6781 = vshrl.u32 %v6780, 7
  %v6782 = vsub.s32 7, %v6781
  %v6783 = vrot.slane %v6717, %v6782
  %v6800 = vmul.f32 %v6711, %v6723
  %v6801 = vmul.f32 %v6710, %v6727
  %v6802 = vmul.f32 %v6709, %v6731
  %v6803 = vmul.f32 %v6708, %v6735
  %v6804 = vmul.f32 %v6707, %v6739
  %v6805 = vmul.f32 %v6706, %v6743
  %v6806 = vmul.f32 %v6705, %v6747
  %v6807 = vmul.f32 %v6704, %v6751
  %v6808 = vmul.f32 %v6703, %v6755
  %v6809 = vmul.f32 %v6702, %v6759
  %v6810 = vmul.f32 %v6701, %v6763
  %v6811 = vmul.f32 %v6700, %v6767
  %v6812 = vmul.f32 %v6699, %v6771
  %v6813 = vmul.f32 %v6698, %v6775
  %v6814 = vmul.f32 %v6697, %v6779
  %v6815 = vmul.f32 %v6696, %v6783
  %6816 = vst [vmem:[#allocation2 + $0x100] sm:$0xff] %v6800
  %6817 = vst [vmem:[#allocation2 + $0x108] sm:$0xff] %v6801
  %6818 = vst [vmem:[#allocation2 + $0x110] sm:$0xff] %v6802
  %6819 = vst [vmem:[#allocation2 + $0x118] sm:$0xff] %v6803
  %6820 = vst [vmem:[#allocation2 + $0x120] sm:$0xff] %v6804
  %6821 = vst [vmem:[#allocation2 + $0x128] sm:$0xff] %v6805
  %6822 = vst [vmem:[#allocation2 + $0x130] sm:$0xff] %v6806
  %6823 = vst [vmem:[#allocation2 + $0x138] sm:$0xff] %v6807
  %6824 = vst [vmem:[#allocation2 + $0x140] sm:$0xff] %v6808
  %6825 = vst [vmem:[#allocation2 + $0x148] sm:$0xff] %v6809
  %6826 = vst [vmem:[#allocation2 + $0x150] sm:$0xff] %v6810
  %6827 = vst [vmem:[#allocation2 + $0x158] sm:$0xff] %v6811
  %6828 = vst [vmem:[#allocation2 + $0x160] sm:$0xff] %v6812
  %6829 = vst [vmem:[#allocation2 + $0x168] sm:$0xff] %v6813
  %6830 = vst [vmem:[#allocation2 + $0x170] sm:$0xff] %v6814
  %6831 = vst [vmem:[#allocation2 + $0x178] sm:$0xff] %v6815
  %6832 = vrot.lane.b32.xlu0 %v6311, 1
  %v6833 = vpop.permute.xlu0 %6832
  %6834 = vrot.lane.b32.xlu0 %v6312, 1
  %v6835 = vpop.permute.xlu0 %6834
  %6836 = vrot.lane.b32.xlu0 %v6313, 1
  %v6837 = vpop.permute.xlu0 %6836
  %6838 = vrot.lane.b32.xlu0 %v6314, 1
  %v6839 = vpop.permute.xlu0 %6838
  %6840 = vrot.lane.b32.xlu0 %v6315, 1
  %v6841 = vpop.permute.xlu0 %6840
  %6842 = vrot.lane.b32.xlu0 %v6316, 1
  %v6843 = vpop.permute.xlu0 %6842
  %6844 = vrot.lane.b32.xlu0 %v6317, 1
  %v6845 = vpop.permute.xlu0 %6844
  %6846 = vrot.lane.b32.xlu0 %v6318, 1
  %v6847 = vpop.permute.xlu0 %6846
  %6848 = vrot.lane.b32.xlu0 %v6319, 1
  %v6849 = vpop.permute.xlu0 %6848
  %6850 = vrot.lane.b32.xlu0 %v6320, 1
  %v6851 = vpop.permute.xlu0 %6850
  %6852 = vrot.lane.b32.xlu0 %v6321, 1
  %v6853 = vpop.permute.xlu0 %6852
  %6854 = vrot.lane.b32.xlu0 %v6322, 1
  %v6855 = vpop.permute.xlu0 %6854
  %6856 = vrot.lane.b32.xlu0 %v6323, 1
  %v6857 = vpop.permute.xlu0 %6856
  %6858 = vrot.lane.b32.xlu0 %v6324, 1
  %v6859 = vpop.permute.xlu0 %6858
  %6860 = vrot.lane.b32.xlu0 %v6325, 1
  %v6861 = vpop.permute.xlu0 %6860
  %6862 = vrot.lane.b32.xlu0 %v6326, 1
  %v6863 = vpop.permute.xlu0 %6862
  %v6864 = vsel %vm4624, %v6861, %v6863
  %v6865 = vsel %vm4624, %v6859, %v6861
  %v6866 = vsel %vm4624, %v6857, %v6859
  %v6867 = vsel %vm4624, %v6855, %v6857
  %v6868 = vsel %vm4624, %v6853, %v6855
  %v6869 = vsel %vm4624, %v6851, %v6853
  %v6870 = vsel %vm4624, %v6849, %v6851
  %v6871 = vsel %vm4624, %v6847, %v6849
  %v6872 = vsel %vm4624, %v6845, %v6847
  %v6873 = vsel %vm4624, %v6843, %v6845
  %v6874 = vsel %vm4624, %v6841, %v6843
  %v6875 = vsel %vm4624, %v6839, %v6841
  %v6876 = vsel %vm4624, %v6837, %v6839
  %v6877 = vsel %vm4624, %v6835, %v6837
  %v6878 = vsel %vm4624, %v6833, %v6835
  %v6879 = vsel %vm4624, %v6863, %v6833
  %v6880 = vld [vmem:[%s4641] ss:$8 sm:$0xf]
  %v6881 = vld [vmem:[%s4641] ss:$8 sm:$0xf0]
  %v6882 = vor.u32 %v6880, %v6881
  %v6883 = vld [vmem:[%s4645] ss:$8 sm:$0xf]
  %v6884 = vld [vmem:[%s4645] ss:$8 sm:$0xf0]
  %v6885 = vor.u32 %v6883, %v6884
  %v6888 = vlaneseq
  %v6889 = vshrl.u32 %v6888, 7
  %v6890 = vsub.s32 0, %v6889
  %v6891 = vrot.slane %v6882, %v6890
  %v6892 = vlaneseq
  %v6893 = vshrl.u32 %v6892, 7
  %v6894 = vsub.s32 1, %v6893
  %v6895 = vrot.slane %v6882, %v6894
  %v6896 = vlaneseq
  %v6897 = vshrl.u32 %v6896, 7
  %v6898 = vsub.s32 2, %v6897
  %v6899 = vrot.slane %v6882, %v6898
  %v6900 = vlaneseq
  %v6901 = vshrl.u32 %v6900, 7
  %v6902 = vsub.s32 3, %v6901
  %v6903 = vrot.slane %v6882, %v6902
  %v6904 = vlaneseq
  %v6905 = vshrl.u32 %v6904, 7
  %v6906 = vsub.s32 4, %v6905
  %v6907 = vrot.slane %v6882, %v6906
  %v6908 = vlaneseq
  %v6909 = vshrl.u32 %v6908, 7
  %v6910 = vsub.s32 5, %v6909
  %v6911 = vrot.slane %v6882, %v6910
  %v6912 = vlaneseq
  %v6913 = vshrl.u32 %v6912, 7
  %v6914 = vsub.s32 6, %v6913
  %v6915 = vrot.slane %v6882, %v6914
  %v6916 = vlaneseq
  %v6917 = vshrl.u32 %v6916, 7
  %v6918 = vsub.s32 7, %v6917
  %v6919 = vrot.slane %v6882, %v6918
  %v6920 = vlaneseq
  %v6921 = vshrl.u32 %v6920, 7
  %v6922 = vsub.s32 0, %v6921
  %v6923 = vrot.slane %v6885, %v6922
  %v6924 = vlaneseq
  %v6925 = vshrl.u32 %v6924, 7
  %v6926 = vsub.s32 1, %v6925
  %v6927 = vrot.slane %v6885, %v6926
  %v6928 = vlaneseq
  %v6929 = vshrl.u32 %v6928, 7
  %v6930 = vsub.s32 2, %v6929
  %v6931 = vrot.slane %v6885, %v6930
  %v6932 = vlaneseq
  %v6933 = vshrl.u32 %v6932, 7
  %v6934 = vsub.s32 3, %v6933
  %v6935 = vrot.slane %v6885, %v6934
  %v6936 = vlaneseq
  %v6937 = vshrl.u32 %v6936, 7
  %v6938 = vsub.s32 4, %v6937
  %v6939 = vrot.slane %v6885, %v6938
  %v6940 = vlaneseq
  %v6941 = vshrl.u32 %v6940, 7
  %v6942 = vsub.s32 5, %v6941
  %v6943 = vrot.slane %v6885, %v6942
  %v6944 = vlaneseq
  %v6945 = vshrl.u32 %v6944, 7
  %v6946 = vsub.s32 6, %v6945
  %v6947 = vrot.slane %v6885, %v6946
  %v6948 = vlaneseq
  %v6949 = vshrl.u32 %v6948, 7
  %v6950 = vsub.s32 7, %v6949
  %v6951 = vrot.slane %v6885, %v6950
  %v6968 = vmul.f32 %v6879, %v6891
  %v6969 = vmul.f32 %v6878, %v6895
  %v6970 = vmul.f32 %v6877, %v6899
  %v6971 = vmul.f32 %v6876, %v6903
  %v6972 = vmul.f32 %v6875, %v6907
  %v6973 = vmul.f32 %v6874, %v6911
  %v6974 = vmul.f32 %v6873, %v6915
  %v6975 = vmul.f32 %v6872, %v6919
  %v6976 = vmul.f32 %v6871, %v6923
  %v6977 = vmul.f32 %v6870, %v6927
  %v6978 = vmul.f32 %v6869, %v6931
  %v6979 = vmul.f32 %v6868, %v6935
  %v6980 = vmul.f32 %v6867, %v6939
  %v6981 = vmul.f32 %v6866, %v6943
  %v6982 = vmul.f32 %v6865, %v6947
  %v6983 = vmul.f32 %v6864, %v6951
  %6984 = vst [vmem:[#allocation2 + $0x180] sm:$0xff] %v6968
  %6985 = vst [vmem:[#allocation2 + $0x188] sm:$0xff] %v6969
  %6986 = vst [vmem:[#allocation2 + $0x190] sm:$0xff] %v6970
  %6987 = vst [vmem:[#allocation2 + $0x198] sm:$0xff] %v6971
  %6988 = vst [vmem:[#allocation2 + $0x1a0] sm:$0xff] %v6972
  %6989 = vst [vmem:[#allocation2 + $0x1a8] sm:$0xff] %v6973
  %6990 = vst [vmem:[#allocation2 + $0x1b0] sm:$0xff] %v6974
  %6991 = vst [vmem:[#allocation2 + $0x1b8] sm:$0xff] %v6975
  %6992 = vst [vmem:[#allocation2 + $0x1c0] sm:$0xff] %v6976
  %6993 = vst [vmem:[#allocation2 + $0x1c8] sm:$0xff] %v6977
  %6994 = vst [vmem:[#allocation2 + $0x1d0] sm:$0xff] %v6978
  %6995 = vst [vmem:[#allocation2 + $0x1d8] sm:$0xff] %v6979
  %6996 = vst [vmem:[#allocation2 + $0x1e0] sm:$0xff] %v6980
  %6997 = vst [vmem:[#allocation2 + $0x1e8] sm:$0xff] %v6981
  %6998 = vst [vmem:[#allocation2 + $0x1f0] sm:$0xff] %v6982
  %6999 = vst [vmem:[#allocation2 + $0x1f8] sm:$0xff] %v6983
  %7000 = vst [vmem:[#allocation2 + $0x200] sm:$0xff] %v6311
  %7001 = vst [vmem:[#allocation2 + $0x208] sm:$0xff] %v6312
  %7002 = vst [vmem:[#allocation2 + $0x210] sm:$0xff] %v6313
  %7003 = vst [vmem:[#allocation2 + $0x218] sm:$0xff] %v6314
  %7004 = vst [vmem:[#allocation2 + $0x220] sm:$0xff] %v6315
  %7005 = vst [vmem:[#allocation2 + $0x228] sm:$0xff] %v6316
  %7006 = vst [vmem:[#allocation2 + $0x230] sm:$0xff] %v6317
  %7007 = vst [vmem:[#allocation2 + $0x238] sm:$0xff] %v6318
  %7008 = vst [vmem:[#allocation2 + $0x240] sm:$0xff] %v6319
  %7009 = vst [vmem:[#allocation2 + $0x248] sm:$0xff] %v6320
  %7010 = vst [vmem:[#allocation2 + $0x250] sm:$0xff] %v6321
  %7011 = vst [vmem:[#allocation2 + $0x258] sm:$0xff] %v6322
  %7012 = vst [vmem:[#allocation2 + $0x260] sm:$0xff] %v6323
  %7013 = vst [vmem:[#allocation2 + $0x268] sm:$0xff] %v6324
  %7014 = vst [vmem:[#allocation2 + $0x270] sm:$0xff] %v6325
  %7015 = vst [vmem:[#allocation2 + $0x278] sm:$0xff] %v6326
  %7016 = vrot.lane.b32.xlu0 %v6311, 127
  %v7017 = vpop.permute.xlu0 %7016
  %7018 = vrot.lane.b32.xlu0 %v6312, 127
  %v7019 = vpop.permute.xlu0 %7018
  %7020 = vrot.lane.b32.xlu0 %v6313, 127
  %v7021 = vpop.permute.xlu0 %7020
  %7022 = vrot.lane.b32.xlu0 %v6314, 127
  %v7023 = vpop.permute.xlu0 %7022
  %7024 = vrot.lane.b32.xlu0 %v6315, 127
  %v7025 = vpop.permute.xlu0 %7024
  %7026 = vrot.lane.b32.xlu0 %v6316, 127
  %v7027 = vpop.permute.xlu0 %7026
  %7028 = vrot.lane.b32.xlu0 %v6317, 127
  %v7029 = vpop.permute.xlu0 %7028
  %7030 = vrot.lane.b32.xlu0 %v6318, 127
  %v7031 = vpop.permute.xlu0 %7030
  %7032 = vrot.lane.b32.xlu0 %v6319, 127
  %v7033 = vpop.permute.xlu0 %7032
  %7034 = vrot.lane.b32.xlu0 %v6320, 127
  %v7035 = vpop.permute.xlu0 %7034
  %7036 = vrot.lane.b32.xlu0 %v6321, 127
  %v7037 = vpop.permute.xlu0 %7036
  %7038 = vrot.lane.b32.xlu0 %v6322, 127
  %v7039 = vpop.permute.xlu0 %7038
  %7040 = vrot.lane.b32.xlu0 %v6323, 127
  %v7041 = vpop.permute.xlu0 %7040
  %7042 = vrot.lane.b32.xlu0 %v6324, 127
  %v7043 = vpop.permute.xlu0 %7042
  %7044 = vrot.lane.b32.xlu0 %v6325, 127
  %v7045 = vpop.permute.xlu0 %7044
  %7046 = vrot.lane.b32.xlu0 %v6326, 127
  %v7047 = vpop.permute.xlu0 %7046
  %v7048 = vsel %vm4811, %v7045, %v7047
  %v7049 = vsel %vm4811, %v7043, %v7045
  %v7050 = vsel %vm4811, %v7041, %v7043
  %v7051 = vsel %vm4811, %v7039, %v7041
  %v7052 = vsel %vm4811, %v7037, %v7039
  %v7053 = vsel %vm4811, %v7035, %v7037
  %v7054 = vsel %vm4811, %v7033, %v7035
  %v7055 = vsel %vm4811, %v7031, %v7033
  %v7056 = vsel %vm4811, %v7029, %v7031
  %v7057 = vsel %vm4811, %v7027, %v7029
  %v7058 = vsel %vm4811, %v7025, %v7027
  %v7059 = vsel %vm4811, %v7023, %v7025
  %v7060 = vsel %vm4811, %v7021, %v7023
  %v7061 = vsel %vm4811, %v7019, %v7021
  %v7062 = vsel %vm4811, %v7017, %v7019
  %v7063 = vsel %vm4811, %v7047, %v7017
  %v7064 = vld [vmem:[%s4828] ss:$8 sm:$0xf]
  %v7065 = vld [vmem:[%s4828] ss:$8 sm:$0xf0]
  %v7066 = vor.u32 %v7064, %v7065
  %v7067 = vld [vmem:[%s4832] ss:$8 sm:$0xf]
  %v7068 = vld [vmem:[%s4832] ss:$8 sm:$0xf0]
  %v7069 = vor.u32 %v7067, %v7068
  %v7072 = vlaneseq
  %v7073 = vshrl.u32 %v7072, 7
  %v7074 = vsub.s32 0, %v7073
  %v7075 = vrot.slane %v7066, %v7074
  %v7076 = vlaneseq
  %v7077 = vshrl.u32 %v7076, 7
  %v7078 = vsub.s32 1, %v7077
  %v7079 = vrot.slane %v7066, %v7078
  %v7080 = vlaneseq
  %v7081 = vshrl.u32 %v7080, 7
  %v7082 = vsub.s32 2, %v7081
  %v7083 = vrot.slane %v7066, %v7082
  %v7084 = vlaneseq
  %v7085 = vshrl.u32 %v7084, 7
  %v7086 = vsub.s32 3, %v7085
  %v7087 = vrot.slane %v7066, %v7086
  %v7088 = vlaneseq
  %v7089 = vshrl.u32 %v7088, 7
  %v7090 = vsub.s32 4, %v7089
  %v7091 = vrot.slane %v7066, %v7090
  %v7092 = vlaneseq
  %v7093 = vshrl.u32 %v7092, 7
  %v7094 = vsub.s32 5, %v7093
  %v7095 = vrot.slane %v7066, %v7094
  %v7096 = vlaneseq
  %v7097 = vshrl.u32 %v7096, 7
  %v7098 = vsub.s32 6, %v7097
  %v7099 = vrot.slane %v7066, %v7098
  %v7100 = vlaneseq
  %v7101 = vshrl.u32 %v7100, 7
  %v7102 = vsub.s32 7, %v7101
  %v7103 = vrot.slane %v7066, %v7102
  %v7104 = vlaneseq
  %v7105 = vshrl.u32 %v7104, 7
  %v7106 = vsub.s32 0, %v7105
  %v7107 = vrot.slane %v7069, %v7106
  %v7108 = vlaneseq
  %v7109 = vshrl.u32 %v7108, 7
  %v7110 = vsub.s32 1, %v7109
  %v7111 = vrot.slane %v7069, %v7110
  %v7112 = vlaneseq
  %v7113 = vshrl.u32 %v7112, 7
  %v7114 = vsub.s32 2, %v7113
  %v7115 = vrot.slane %v7069, %v7114
  %v7116 = vlaneseq
  %v7117 = vshrl.u32 %v7116, 7
  %v7118 = vsub.s32 3, %v7117
  %v7119 = vrot.slane %v7069, %v7118
  %v7120 = vlaneseq
  %v7121 = vshrl.u32 %v7120, 7
  %v7122 = vsub.s32 4, %v7121
  %v7123 = vrot.slane %v7069, %v7122
  %v7124 = vlaneseq
  %v7125 = vshrl.u32 %v7124, 7
  %v7126 = vsub.s32 5, %v7125
  %v7127 = vrot.slane %v7069, %v7126
  %v7128 = vlaneseq
  %v7129 = vshrl.u32 %v7128, 7
  %v7130 = vsub.s32 6, %v7129
  %v7131 = vrot.slane %v7069, %v7130
  %v7132 = vlaneseq
  %v7133 = vshrl.u32 %v7132, 7
  %v7134 = vsub.s32 7, %v7133
  %v7135 = vrot.slane %v7069, %v7134
  %v7152 = vmul.f32 %v7062, %v7075
  %v7153 = vmul.f32 %v7061, %v7079
  %v7154 = vmul.f32 %v7060, %v7083
  %v7155 = vmul.f32 %v7059, %v7087
  %v7156 = vmul.f32 %v7058, %v7091
  %v7157 = vmul.f32 %v7057, %v7095
  %v7158 = vmul.f32 %v7056, %v7099
  %v7159 = vmul.f32 %v7055, %v7103
  %v7160 = vmul.f32 %v7054, %v7107
  %v7161 = vmul.f32 %v7053, %v7111
  %v7162 = vmul.f32 %v7052, %v7115
  %v7163 = vmul.f32 %v7051, %v7119
  %v7164 = vmul.f32 %v7050, %v7123
  %v7165 = vmul.f32 %v7049, %v7127
  %v7166 = vmul.f32 %v7048, %v7131
  %v7167 = vmul.f32 %v7063, %v7135
  %7168 = vst [vmem:[#allocation2 + $0x280] sm:$0xff] %v7152
  %7169 = vst [vmem:[#allocation2 + $0x288] sm:$0xff] %v7153
  %7170 = vst [vmem:[#allocation2 + $0x290] sm:$0xff] %v7154
  %7171 = vst [vmem:[#allocation2 + $0x298] sm:$0xff] %v7155
  %7172 = vst [vmem:[#allocation2 + $0x2a0] sm:$0xff] %v7156
  %7173 = vst [vmem:[#allocation2 + $0x2a8] sm:$0xff] %v7157
  %7174 = vst [vmem:[#allocation2 + $0x2b0] sm:$0xff] %v7158
  %7175 = vst [vmem:[#allocation2 + $0x2b8] sm:$0xff] %v7159
  %7176 = vst [vmem:[#allocation2 + $0x2c0] sm:$0xff] %v7160
  %7177 = vst [vmem:[#allocation2 + $0x2c8] sm:$0xff] %v7161
  %7178 = vst [vmem:[#allocation2 + $0x2d0] sm:$0xff] %v7162
  %7179 = vst [vmem:[#allocation2 + $0x2d8] sm:$0xff] %v7163
  %7180 = vst [vmem:[#allocation2 + $0x2e0] sm:$0xff] %v7164
  %7181 = vst [vmem:[#allocation2 + $0x2e8] sm:$0xff] %v7165
  %7182 = vst [vmem:[#allocation2 + $0x2f0] sm:$0xff] %v7166
  %7183 = vst [vmem:[#allocation2 + $0x2f8] sm:$0xff] %v7167
  %7184 = vrot.lane.b32.xlu0 %v6311, 97
  %v7185 = vpop.permute.xlu0 %7184
  %7186 = vrot.lane.b32.xlu0 %v6312, 97
  %v7187 = vpop.permute.xlu0 %7186
  %7188 = vrot.lane.b32.xlu0 %v6313, 97
  %v7189 = vpop.permute.xlu0 %7188
  %7190 = vrot.lane.b32.xlu0 %v6314, 97
  %v7191 = vpop.permute.xlu0 %7190
  %7192 = vrot.lane.b32.xlu0 %v6315, 97
  %v7193 = vpop.permute.xlu0 %7192
  %7194 = vrot.lane.b32.xlu0 %v6316, 97
  %v7195 = vpop.permute.xlu0 %7194
  %7196 = vrot.lane.b32.xlu0 %v6317, 97
  %v7197 = vpop.permute.xlu0 %7196
  %7198 = vrot.lane.b32.xlu0 %v6318, 97
  %v7199 = vpop.permute.xlu0 %7198
  %7200 = vrot.lane.b32.xlu0 %v6319, 97
  %v7201 = vpop.permute.xlu0 %7200
  %7202 = vrot.lane.b32.xlu0 %v6320, 97
  %v7203 = vpop.permute.xlu0 %7202
  %7204 = vrot.lane.b32.xlu0 %v6321, 97
  %v7205 = vpop.permute.xlu0 %7204
  %7206 = vrot.lane.b32.xlu0 %v6322, 97
  %v7207 = vpop.permute.xlu0 %7206
  %7208 = vrot.lane.b32.xlu0 %v6323, 97
  %v7209 = vpop.permute.xlu0 %7208
  %7210 = vrot.lane.b32.xlu0 %v6324, 97
  %v7211 = vpop.permute.xlu0 %7210
  %7212 = vrot.lane.b32.xlu0 %v6325, 97
  %v7213 = vpop.permute.xlu0 %7212
  %7214 = vrot.lane.b32.xlu0 %v6326, 97
  %v7215 = vpop.permute.xlu0 %7214
  %v7216 = vsel %vm4982, %v7213, %v7215
  %v7217 = vsel %vm4982, %v7211, %v7213
  %v7218 = vsel %vm4982, %v7209, %v7211
  %v7219 = vsel %vm4982, %v7207, %v7209
  %v7220 = vsel %vm4982, %v7205, %v7207
  %v7221 = vsel %vm4982, %v7203, %v7205
  %v7222 = vsel %vm4982, %v7201, %v7203
  %v7223 = vsel %vm4982, %v7199, %v7201
  %v7224 = vsel %vm4982, %v7197, %v7199
  %v7225 = vsel %vm4982, %v7195, %v7197
  %v7226 = vsel %vm4982, %v7193, %v7195
  %v7227 = vsel %vm4982, %v7191, %v7193
  %v7228 = vsel %vm4982, %v7189, %v7191
  %v7229 = vsel %vm4982, %v7187, %v7189
  %v7230 = vsel %vm4982, %v7185, %v7187
  %v7231 = vsel %vm4982, %v7215, %v7185
  %v7232 = vld [vmem:[%s4999] ss:$8 sm:$0xf]
  %v7233 = vld [vmem:[%s4999] ss:$8 sm:$0xf0]
  %v7234 = vor.u32 %v7232, %v7233
  %v7235 = vld [vmem:[%s5003] ss:$8 sm:$0xf]
  %v7236 = vld [vmem:[%s5003] ss:$8 sm:$0xf0]
  %v7237 = vor.u32 %v7235, %v7236
  %v7240 = vlaneseq
  %v7241 = vshrl.u32 %v7240, 7
  %v7242 = vsub.s32 0, %v7241
  %v7243 = vrot.slane %v7234, %v7242
  %v7244 = vlaneseq
  %v7245 = vshrl.u32 %v7244, 7
  %v7246 = vsub.s32 1, %v7245
  %v7247 = vrot.slane %v7234, %v7246
  %v7248 = vlaneseq
  %v7249 = vshrl.u32 %v7248, 7
  %v7250 = vsub.s32 2, %v7249
  %v7251 = vrot.slane %v7234, %v7250
  %v7252 = vlaneseq
  %v7253 = vshrl.u32 %v7252, 7
  %v7254 = vsub.s32 3, %v7253
  %v7255 = vrot.slane %v7234, %v7254
  %v7256 = vlaneseq
  %v7257 = vshrl.u32 %v7256, 7
  %v7258 = vsub.s32 4, %v7257
  %v7259 = vrot.slane %v7234, %v7258
  %v7260 = vlaneseq
  %v7261 = vshrl.u32 %v7260, 7
  %v7262 = vsub.s32 5, %v7261
  %v7263 = vrot.slane %v7234, %v7262
  %v7264 = vlaneseq
  %v7265 = vshrl.u32 %v7264, 7
  %v7266 = vsub.s32 6, %v7265
  %v7267 = vrot.slane %v7234, %v7266
  %v7268 = vlaneseq
  %v7269 = vshrl.u32 %v7268, 7
  %v7270 = vsub.s32 7, %v7269
  %v7271 = vrot.slane %v7234, %v7270
  %v7272 = vlaneseq
  %v7273 = vshrl.u32 %v7272, 7
  %v7274 = vsub.s32 0, %v7273
  %v7275 = vrot.slane %v7237, %v7274
  %v7276 = vlaneseq
  %v7277 = vshrl.u32 %v7276, 7
  %v7278 = vsub.s32 1, %v7277
  %v7279 = vrot.slane %v7237, %v7278
  %v7280 = vlaneseq
  %v7281 = vshrl.u32 %v7280, 7
  %v7282 = vsub.s32 2, %v7281
  %v7283 = vrot.slane %v7237, %v7282
  %v7284 = vlaneseq
  %v7285 = vshrl.u32 %v7284, 7
  %v7286 = vsub.s32 3, %v7285
  %v7287 = vrot.slane %v7237, %v7286
  %v7288 = vlaneseq
  %v7289 = vshrl.u32 %v7288, 7
  %v7290 = vsub.s32 4, %v7289
  %v7291 = vrot.slane %v7237, %v7290
  %v7292 = vlaneseq
  %v7293 = vshrl.u32 %v7292, 7
  %v7294 = vsub.s32 5, %v7293
  %v7295 = vrot.slane %v7237, %v7294
  %v7296 = vlaneseq
  %v7297 = vshrl.u32 %v7296, 7
  %v7298 = vsub.s32 6, %v7297
  %v7299 = vrot.slane %v7237, %v7298
  %v7300 = vlaneseq
  %v7301 = vshrl.u32 %v7300, 7
  %v7302 = vsub.s32 7, %v7301
  %v7303 = vrot.slane %v7237, %v7302
  %v7320 = vmul.f32 %v7230, %v7243
  %v7321 = vmul.f32 %v7229, %v7247
  %v7322 = vmul.f32 %v7228, %v7251
  %v7323 = vmul.f32 %v7227, %v7255
  %v7324 = vmul.f32 %v7226, %v7259
  %v7325 = vmul.f32 %v7225, %v7263
  %v7326 = vmul.f32 %v7224, %v7267
  %v7327 = vmul.f32 %v7223, %v7271
  %v7328 = vmul.f32 %v7222, %v7275
  %v7329 = vmul.f32 %v7221, %v7279
  %v7330 = vmul.f32 %v7220, %v7283
  %v7331 = vmul.f32 %v7219, %v7287
  %v7332 = vmul.f32 %v7218, %v7291
  %v7333 = vmul.f32 %v7217, %v7295
  %v7334 = vmul.f32 %v7216, %v7299
  %v7335 = vmul.f32 %v7231, %v7303
  %7336 = vst [vmem:[#allocation2 + $0x300] sm:$0xff] %v7320
  %7337 = vst [vmem:[#allocation2 + $0x308] sm:$0xff] %v7321
  %7338 = vst [vmem:[#allocation2 + $0x310] sm:$0xff] %v7322
  %7339 = vst [vmem:[#allocation2 + $0x318] sm:$0xff] %v7323
  %7340 = vst [vmem:[#allocation2 + $0x320] sm:$0xff] %v7324
  %7341 = vst [vmem:[#allocation2 + $0x328] sm:$0xff] %v7325
  %7342 = vst [vmem:[#allocation2 + $0x330] sm:$0xff] %v7326
  %7343 = vst [vmem:[#allocation2 + $0x338] sm:$0xff] %v7327
  %7344 = vst [vmem:[#allocation2 + $0x340] sm:$0xff] %v7328
  %7345 = vst [vmem:[#allocation2 + $0x348] sm:$0xff] %v7329
  %7346 = vst [vmem:[#allocation2 + $0x350] sm:$0xff] %v7330
  %7347 = vst [vmem:[#allocation2 + $0x358] sm:$0xff] %v7331
  %7348 = vst [vmem:[#allocation2 + $0x360] sm:$0xff] %v7332
  %7349 = vst [vmem:[#allocation2 + $0x368] sm:$0xff] %v7333
  %7350 = vst [vmem:[#allocation2 + $0x370] sm:$0xff] %v7334
  %7351 = vst [vmem:[#allocation2 + $0x378] sm:$0xff] %v7335
  %7352 = vrot.lane.b32.xlu0 %v6311, 96
  %v7353 = vpop.permute.xlu0 %7352
  %7354 = vrot.lane.b32.xlu0 %v6312, 96
  %v7355 = vpop.permute.xlu0 %7354
  %7356 = vrot.lane.b32.xlu0 %v6313, 96
  %v7357 = vpop.permute.xlu0 %7356
  %7358 = vrot.lane.b32.xlu0 %v6314, 96
  %v7359 = vpop.permute.xlu0 %7358
  %7360 = vrot.lane.b32.xlu0 %v6315, 96
  %v7361 = vpop.permute.xlu0 %7360
  %7362 = vrot.lane.b32.xlu0 %v6316, 96
  %v7363 = vpop.permute.xlu0 %7362
  %7364 = vrot.lane.b32.xlu0 %v6317, 96
  %v7365 = vpop.permute.xlu0 %7364
  %7366 = vrot.lane.b32.xlu0 %v6318, 96
  %v7367 = vpop.permute.xlu0 %7366
  %7368 = vrot.lane.b32.xlu0 %v6319, 96
  %v7369 = vpop.permute.xlu0 %7368
  %7370 = vrot.lane.b32.xlu0 %v6320, 96
  %v7371 = vpop.permute.xlu0 %7370
  %7372 = vrot.lane.b32.xlu0 %v6321, 96
  %v7373 = vpop.permute.xlu0 %7372
  %7374 = vrot.lane.b32.xlu0 %v6322, 96
  %v7375 = vpop.permute.xlu0 %7374
  %7376 = vrot.lane.b32.xlu0 %v6323, 96
  %v7377 = vpop.permute.xlu0 %7376
  %7378 = vrot.lane.b32.xlu0 %v6324, 96
  %v7379 = vpop.permute.xlu0 %7378
  %7380 = vrot.lane.b32.xlu0 %v6325, 96
  %v7381 = vpop.permute.xlu0 %7380
  %7382 = vrot.lane.b32.xlu0 %v6326, 96
  %v7383 = vpop.permute.xlu0 %7382
  %v7384 = vsel %vm5153, %v7381, %v7383
  %v7385 = vsel %vm5153, %v7379, %v7381
  %v7386 = vsel %vm5153, %v7377, %v7379
  %v7387 = vsel %vm5153, %v7375, %v7377
  %v7388 = vsel %vm5153, %v7373, %v7375
  %v7389 = vsel %vm5153, %v7371, %v7373
  %v7390 = vsel %vm5153, %v7369, %v7371
  %v7391 = vsel %vm5153, %v7367, %v7369
  %v7392 = vsel %vm5153, %v7365, %v7367
  %v7393 = vsel %vm5153, %v7363, %v7365
  %v7394 = vsel %vm5153, %v7361, %v7363
  %v7395 = vsel %vm5153, %v7359, %v7361
  %v7396 = vsel %vm5153, %v7357, %v7359
  %v7397 = vsel %vm5153, %v7355, %v7357
  %v7398 = vsel %vm5153, %v7353, %v7355
  %v7399 = vsel %vm5153, %v7383, %v7353
  %v7400 = vld [vmem:[%s5170] ss:$8 sm:$0xf]
  %v7401 = vld [vmem:[%s5170] ss:$8 sm:$0xf0]
  %v7402 = vor.u32 %v7400, %v7401
  %v7403 = vld [vmem:[%s5174] ss:$8 sm:$0xf]
  %v7404 = vld [vmem:[%s5174] ss:$8 sm:$0xf0]
  %v7405 = vor.u32 %v7403, %v7404
  %v7408 = vlaneseq
  %v7409 = vshrl.u32 %v7408, 7
  %v7410 = vsub.s32 0, %v7409
  %v7411 = vrot.slane %v7402, %v7410
  %v7412 = vlaneseq
  %v7413 = vshrl.u32 %v7412, 7
  %v7414 = vsub.s32 1, %v7413
  %v7415 = vrot.slane %v7402, %v7414
  %v7416 = vlaneseq
  %v7417 = vshrl.u32 %v7416, 7
  %v7418 = vsub.s32 2, %v7417
  %v7419 = vrot.slane %v7402, %v7418
  %v7420 = vlaneseq
  %v7421 = vshrl.u32 %v7420, 7
  %v7422 = vsub.s32 3, %v7421
  %v7423 = vrot.slane %v7402, %v7422
  %v7424 = vlaneseq
  %v7425 = vshrl.u32 %v7424, 7
  %v7426 = vsub.s32 4, %v7425
  %v7427 = vrot.slane %v7402, %v7426
  %v7428 = vlaneseq
  %v7429 = vshrl.u32 %v7428, 7
  %v7430 = vsub.s32 5, %v7429
  %v7431 = vrot.slane %v7402, %v7430
  %v7432 = vlaneseq
  %v7433 = vshrl.u32 %v7432, 7
  %v7434 = vsub.s32 6, %v7433
  %v7435 = vrot.slane %v7402, %v7434
  %v7436 = vlaneseq
  %v7437 = vshrl.u32 %v7436, 7
  %v7438 = vsub.s32 7, %v7437
  %v7439 = vrot.slane %v7402, %v7438
  %v7440 = vlaneseq
  %v7441 = vshrl.u32 %v7440, 7
  %v7442 = vsub.s32 0, %v7441
  %v7443 = vrot.slane %v7405, %v7442
  %v7444 = vlaneseq
  %v7445 = vshrl.u32 %v7444, 7
  %v7446 = vsub.s32 1, %v7445
  %v7447 = vrot.slane %v7405, %v7446
  %v7448 = vlaneseq
  %v7449 = vshrl.u32 %v7448, 7
  %v7450 = vsub.s32 2, %v7449
  %v7451 = vrot.slane %v7405, %v7450
  %v7452 = vlaneseq
  %v7453 = vshrl.u32 %v7452, 7
  %v7454 = vsub.s32 3, %v7453
  %v7455 = vrot.slane %v7405, %v7454
  %v7456 = vlaneseq
  %v7457 = vshrl.u32 %v7456, 7
  %v7458 = vsub.s32 4, %v7457
  %v7459 = vrot.slane %v7405, %v7458
  %v7460 = vlaneseq
  %v7461 = vshrl.u32 %v7460, 7
  %v7462 = vsub.s32 5, %v7461
  %v7463 = vrot.slane %v7405, %v7462
  %v7464 = vlaneseq
  %v7465 = vshrl.u32 %v7464, 7
  %v7466 = vsub.s32 6, %v7465
  %v7467 = vrot.slane %v7405, %v7466
  %v7468 = vlaneseq
  %v7469 = vshrl.u32 %v7468, 7
  %v7470 = vsub.s32 7, %v7469
  %v7471 = vrot.slane %v7405, %v7470
  %v7488 = vmul.f32 %v7398, %v7411
  %v7489 = vmul.f32 %v7397, %v7415
  %v7490 = vmul.f32 %v7396, %v7419
  %v7491 = vmul.f32 %v7395, %v7423
  %v7492 = vmul.f32 %v7394, %v7427
  %v7493 = vmul.f32 %v7393, %v7431
  %v7494 = vmul.f32 %v7392, %v7435
  %v7495 = vmul.f32 %v7391, %v7439
  %v7496 = vmul.f32 %v7390, %v7443
  %v7497 = vmul.f32 %v7389, %v7447
  %v7498 = vmul.f32 %v7388, %v7451
  %v7499 = vmul.f32 %v7387, %v7455
  %v7500 = vmul.f32 %v7386, %v7459
  %v7501 = vmul.f32 %v7385, %v7463
  %v7502 = vmul.f32 %v7384, %v7467
  %v7503 = vmul.f32 %v7399, %v7471
  %7504 = vst [vmem:[#allocation2 + $0x380] sm:$0xff] %v7488
  %7505 = vst [vmem:[#allocation2 + $0x388] sm:$0xff] %v7489
  %7506 = vst [vmem:[#allocation2 + $0x390] sm:$0xff] %v7490
  %7507 = vst [vmem:[#allocation2 + $0x398] sm:$0xff] %v7491
  %7508 = vst [vmem:[#allocation2 + $0x3a0] sm:$0xff] %v7492
  %7509 = vst [vmem:[#allocation2 + $0x3a8] sm:$0xff] %v7493
  %7510 = vst [vmem:[#allocation2 + $0x3b0] sm:$0xff] %v7494
  %7511 = vst [vmem:[#allocation2 + $0x3b8] sm:$0xff] %v7495
  %7512 = vst [vmem:[#allocation2 + $0x3c0] sm:$0xff] %v7496
  %7513 = vst [vmem:[#allocation2 + $0x3c8] sm:$0xff] %v7497
  %7514 = vst [vmem:[#allocation2 + $0x3d0] sm:$0xff] %v7498
  %7515 = vst [vmem:[#allocation2 + $0x3d8] sm:$0xff] %v7499
  %7516 = vst [vmem:[#allocation2 + $0x3e0] sm:$0xff] %v7500
  %7517 = vst [vmem:[#allocation2 + $0x3e8] sm:$0xff] %v7501
  %7518 = vst [vmem:[#allocation2 + $0x3f0] sm:$0xff] %v7502
  %7519 = vst [vmem:[#allocation2 + $0x3f8] sm:$0xff] %v7503
  %7520 = vrot.lane.b32.xlu0 %v6311, 95
  %v7521 = vpop.permute.xlu0 %7520
  %7522 = vrot.lane.b32.xlu0 %v6312, 95
  %v7523 = vpop.permute.xlu0 %7522
  %7524 = vrot.lane.b32.xlu0 %v6313, 95
  %v7525 = vpop.permute.xlu0 %7524
  %7526 = vrot.lane.b32.xlu0 %v6314, 95
  %v7527 = vpop.permute.xlu0 %7526
  %7528 = vrot.lane.b32.xlu0 %v6315, 95
  %v7529 = vpop.permute.xlu0 %7528
  %7530 = vrot.lane.b32.xlu0 %v6316, 95
  %v7531 = vpop.permute.xlu0 %7530
  %7532 = vrot.lane.b32.xlu0 %v6317, 95
  %v7533 = vpop.permute.xlu0 %7532
  %7534 = vrot.lane.b32.xlu0 %v6318, 95
  %v7535 = vpop.permute.xlu0 %7534
  %7536 = vrot.lane.b32.xlu0 %v6319, 95
  %v7537 = vpop.permute.xlu0 %7536
  %7538 = vrot.lane.b32.xlu0 %v6320, 95
  %v7539 = vpop.permute.xlu0 %7538
  %7540 = vrot.lane.b32.xlu0 %v6321, 95
  %v7541 = vpop.permute.xlu0 %7540
  %7542 = vrot.lane.b32.xlu0 %v6322, 95
  %v7543 = vpop.permute.xlu0 %7542
  %7544 = vrot.lane.b32.xlu0 %v6323, 95
  %v7545 = vpop.permute.xlu0 %7544
  %7546 = vrot.lane.b32.xlu0 %v6324, 95
  %v7547 = vpop.permute.xlu0 %7546
  %7548 = vrot.lane.b32.xlu0 %v6325, 95
  %v7549 = vpop.permute.xlu0 %7548
  %7550 = vrot.lane.b32.xlu0 %v6326, 95
  %v7551 = vpop.permute.xlu0 %7550
  %v7552 = vsel %vm5324, %v7549, %v7551
  %v7553 = vsel %vm5324, %v7547, %v7549
  %v7554 = vsel %vm5324, %v7545, %v7547
  %v7555 = vsel %vm5324, %v7543, %v7545
  %v7556 = vsel %vm5324, %v7541, %v7543
  %v7557 = vsel %vm5324, %v7539, %v7541
  %v7558 = vsel %vm5324, %v7537, %v7539
  %v7559 = vsel %vm5324, %v7535, %v7537
  %v7560 = vsel %vm5324, %v7533, %v7535
  %v7561 = vsel %vm5324, %v7531, %v7533
  %v7562 = vsel %vm5324, %v7529, %v7531
  %v7563 = vsel %vm5324, %v7527, %v7529
  %v7564 = vsel %vm5324, %v7525, %v7527
  %v7565 = vsel %vm5324, %v7523, %v7525
  %v7566 = vsel %vm5324, %v7521, %v7523
  %v7567 = vsel %vm5324, %v7551, %v7521
  %v7568 = vld [vmem:[%s5341] ss:$8 sm:$0xf]
  %v7569 = vld [vmem:[%s5341] ss:$8 sm:$0xf0]
  %v7570 = vor.u32 %v7568, %v7569
  %v7571 = vld [vmem:[%s5345] ss:$8 sm:$0xf]
  %v7572 = vld [vmem:[%s5345] ss:$8 sm:$0xf0]
  %v7573 = vor.u32 %v7571, %v7572
  %v7576 = vlaneseq
  %v7577 = vshrl.u32 %v7576, 7
  %v7578 = vsub.s32 0, %v7577
  %v7579 = vrot.slane %v7570, %v7578
  %v7580 = vlaneseq
  %v7581 = vshrl.u32 %v7580, 7
  %v7582 = vsub.s32 1, %v7581
  %v7583 = vrot.slane %v7570, %v7582
  %v7584 = vlaneseq
  %v7585 = vshrl.u32 %v7584, 7
  %v7586 = vsub.s32 2, %v7585
  %v7587 = vrot.slane %v7570, %v7586
  %v7588 = vlaneseq
  %v7589 = vshrl.u32 %v7588, 7
  %v7590 = vsub.s32 3, %v7589
  %v7591 = vrot.slane %v7570, %v7590
  %v7592 = vlaneseq
  %v7593 = vshrl.u32 %v7592, 7
  %v7594 = vsub.s32 4, %v7593
  %v7595 = vrot.slane %v7570, %v7594
  %v7596 = vlaneseq
  %v7597 = vshrl.u32 %v7596, 7
  %v7598 = vsub.s32 5, %v7597
  %v7599 = vrot.slane %v7570, %v7598
  %v7600 = vlaneseq
  %v7601 = vshrl.u32 %v7600, 7
  %v7602 = vsub.s32 6, %v7601
  %v7603 = vrot.slane %v7570, %v7602
  %v7604 = vlaneseq
  %v7605 = vshrl.u32 %v7604, 7
  %v7606 = vsub.s32 7, %v7605
  %v7607 = vrot.slane %v7570, %v7606
  %v7608 = vlaneseq
  %v7609 = vshrl.u32 %v7608, 7
  %v7610 = vsub.s32 0, %v7609
  %v7611 = vrot.slane %v7573, %v7610
  %v7612 = vlaneseq
  %v7613 = vshrl.u32 %v7612, 7
  %v7614 = vsub.s32 1, %v7613
  %v7615 = vrot.slane %v7573, %v7614
  %v7616 = vlaneseq
  %v7617 = vshrl.u32 %v7616, 7
  %v7618 = vsub.s32 2, %v7617
  %v7619 = vrot.slane %v7573, %v7618
  %v7620 = vlaneseq
  %v7621 = vshrl.u32 %v7620, 7
  %v7622 = vsub.s32 3, %v7621
  %v7623 = vrot.slane %v7573, %v7622
  %v7624 = vlaneseq
  %v7625 = vshrl.u32 %v7624, 7
  %v7626 = vsub.s32 4, %v7625
  %v7627 = vrot.slane %v7573, %v7626
  %v7628 = vlaneseq
  %v7629 = vshrl.u32 %v7628, 7
  %v7630 = vsub.s32 5, %v7629
  %v7631 = vrot.slane %v7573, %v7630
  %v7632 = vlaneseq
  %v7633 = vshrl.u32 %v7632, 7
  %v7634 = vsub.s32 6, %v7633
  %v7635 = vrot.slane %v7573, %v7634
  %v7636 = vlaneseq
  %v7637 = vshrl.u32 %v7636, 7
  %v7638 = vsub.s32 7, %v7637
  %v7639 = vrot.slane %v7573, %v7638
  %v7656 = vmul.f32 %v7566, %v7579
  %v7657 = vmul.f32 %v7565, %v7583
  %v7658 = vmul.f32 %v7564, %v7587
  %v7659 = vmul.f32 %v7563, %v7591
  %v7660 = vmul.f32 %v7562, %v7595
  %v7661 = vmul.f32 %v7561, %v7599
  %v7662 = vmul.f32 %v7560, %v7603
  %v7663 = vmul.f32 %v7559, %v7607
  %v7664 = vmul.f32 %v7558, %v7611
  %v7665 = vmul.f32 %v7557, %v7615
  %v7666 = vmul.f32 %v7556, %v7619
  %v7667 = vmul.f32 %v7555, %v7623
  %v7668 = vmul.f32 %v7554, %v7627
  %v7669 = vmul.f32 %v7553, %v7631
  %v7670 = vmul.f32 %v7552, %v7635
  %v7671 = vmul.f32 %v7567, %v7639
  %7672 = vst [vmem:[#allocation2 + $0x400] sm:$0xff] %v7656
  %7673 = vst [vmem:[#allocation2 + $0x408] sm:$0xff] %v7657
  %7674 = vst [vmem:[#allocation2 + $0x410] sm:$0xff] %v7658
  %7675 = vst [vmem:[#allocation2 + $0x418] sm:$0xff] %v7659
  %7676 = vst [vmem:[#allocation2 + $0x420] sm:$0xff] %v7660
  %7677 = vst [vmem:[#allocation2 + $0x428] sm:$0xff] %v7661
  %7678 = vst [vmem:[#allocation2 + $0x430] sm:$0xff] %v7662
  %7679 = vst [vmem:[#allocation2 + $0x438] sm:$0xff] %v7663
  %7680 = vst [vmem:[#allocation2 + $0x440] sm:$0xff] %v7664
  %7681 = vst [vmem:[#allocation2 + $0x448] sm:$0xff] %v7665
  %7682 = vst [vmem:[#allocation2 + $0x450] sm:$0xff] %v7666
  %7683 = vst [vmem:[#allocation2 + $0x458] sm:$0xff] %v7667
  %7684 = vst [vmem:[#allocation2 + $0x460] sm:$0xff] %v7668
  %7685 = vst [vmem:[#allocation2 + $0x468] sm:$0xff] %v7669
  %7686 = vst [vmem:[#allocation2 + $0x470] sm:$0xff] %v7670
  %7687 = vst [vmem:[#allocation2 + $0x478] sm:$0xff] %v7671
  %v7688 = vld [vmem:[#allocation2] sm:$0xff]
  %v7689 = vld [vmem:[#allocation2 + $0x8] sm:$0xff]
  %v7690 = vld [vmem:[#allocation2 + $0x10] sm:$0xff]
  %v7691 = vld [vmem:[#allocation2 + $0x18] sm:$0xff]
  %v7692 = vld [vmem:[#allocation2 + $0x20] sm:$0xff]
  %v7693 = vld [vmem:[#allocation2 + $0x28] sm:$0xff]
  %v7694 = vld [vmem:[#allocation2 + $0x30] sm:$0xff]
  %v7695 = vld [vmem:[#allocation2 + $0x38] sm:$0xff]
  %v7696 = vld [vmem:[#allocation2 + $0x40] sm:$0xff]
  %v7697 = vld [vmem:[#allocation2 + $0x48] sm:$0xff]
  %v7698 = vld [vmem:[#allocation2 + $0x50] sm:$0xff]
  %v7699 = vld [vmem:[#allocation2 + $0x58] sm:$0xff]
  %v7700 = vld [vmem:[#allocation2 + $0x60] sm:$0xff]
  %v7701 = vld [vmem:[#allocation2 + $0x68] sm:$0xff]
  %v7702 = vld [vmem:[#allocation2 + $0x70] sm:$0xff]
  %v7703 = vld [vmem:[#allocation2 + $0x78] sm:$0xff]
  %v7704 = vld [vmem:[#allocation2 + $0x80] sm:$0xff]
  %v7705 = vld [vmem:[#allocation2 + $0x88] sm:$0xff]
  %v7706 = vld [vmem:[#allocation2 + $0x90] sm:$0xff]
  %v7707 = vld [vmem:[#allocation2 + $0x98] sm:$0xff]
  %v7708 = vld [vmem:[#allocation2 + $0xa0] sm:$0xff]
  %v7709 = vld [vmem:[#allocation2 + $0xa8] sm:$0xff]
  %v7710 = vld [vmem:[#allocation2 + $0xb0] sm:$0xff]
  %v7711 = vld [vmem:[#allocation2 + $0xb8] sm:$0xff]
  %v7712 = vld [vmem:[#allocation2 + $0xc0] sm:$0xff]
  %v7713 = vld [vmem:[#allocation2 + $0xc8] sm:$0xff]
  %v7714 = vld [vmem:[#allocation2 + $0xd0] sm:$0xff]
  %v7715 = vld [vmem:[#allocation2 + $0xd8] sm:$0xff]
  %v7716 = vld [vmem:[#allocation2 + $0xe0] sm:$0xff]
  %v7717 = vld [vmem:[#allocation2 + $0xe8] sm:$0xff]
  %v7718 = vld [vmem:[#allocation2 + $0xf0] sm:$0xff]
  %v7719 = vld [vmem:[#allocation2 + $0xf8] sm:$0xff]
  %v7720 = vld [vmem:[#allocation2 + $0x100] sm:$0xff]
  %v7721 = vld [vmem:[#allocation2 + $0x108] sm:$0xff]
  %v7722 = vld [vmem:[#allocation2 + $0x110] sm:$0xff]
  %v7723 = vld [vmem:[#allocation2 + $0x118] sm:$0xff]
  %v7724 = vld [vmem:[#allocation2 + $0x120] sm:$0xff]
  %v7725 = vld [vmem:[#allocation2 + $0x128] sm:$0xff]
  %v7726 = vld [vmem:[#allocation2 + $0x130] sm:$0xff]
  %v7727 = vld [vmem:[#allocation2 + $0x138] sm:$0xff]
  %v7728 = vld [vmem:[#allocation2 + $0x140] sm:$0xff]
  %v7729 = vld [vmem:[#allocation2 + $0x148] sm:$0xff]
  %v7730 = vld [vmem:[#allocation2 + $0x150] sm:$0xff]
  %v7731 = vld [vmem:[#allocation2 + $0x158] sm:$0xff]
  %v7732 = vld [vmem:[#allocation2 + $0x160] sm:$0xff]
  %v7733 = vld [vmem:[#allocation2 + $0x168] sm:$0xff]
  %v7734 = vld [vmem:[#allocation2 + $0x170] sm:$0xff]
  %v7735 = vld [vmem:[#allocation2 + $0x178] sm:$0xff]
  %v7736 = vld [vmem:[#allocation2 + $0x180] sm:$0xff]
  %v7737 = vld [vmem:[#allocation2 + $0x188] sm:$0xff]
  %v7738 = vld [vmem:[#allocation2 + $0x190] sm:$0xff]
  %v7739 = vld [vmem:[#allocation2 + $0x198] sm:$0xff]
  %v7740 = vld [vmem:[#allocation2 + $0x1a0] sm:$0xff]
  %v7741 = vld [vmem:[#allocation2 + $0x1a8] sm:$0xff]
  %v7742 = vld [vmem:[#allocation2 + $0x1b0] sm:$0xff]
  %v7743 = vld [vmem:[#allocation2 + $0x1b8] sm:$0xff]
  %v7744 = vld [vmem:[#allocation2 + $0x1c0] sm:$0xff]
  %v7745 = vld [vmem:[#allocation2 + $0x1c8] sm:$0xff]
  %v7746 = vld [vmem:[#allocation2 + $0x1d0] sm:$0xff]
  %v7747 = vld [vmem:[#allocation2 + $0x1d8] sm:$0xff]
  %v7748 = vld [vmem:[#allocation2 + $0x1e0] sm:$0xff]
  %v7749 = vld [vmem:[#allocation2 + $0x1e8] sm:$0xff]
  %v7750 = vld [vmem:[#allocation2 + $0x1f0] sm:$0xff]
  %v7751 = vld [vmem:[#allocation2 + $0x1f8] sm:$0xff]
  %v7752 = vld [vmem:[#allocation2 + $0x200] sm:$0xff]
  %v7753 = vld [vmem:[#allocation2 + $0x208] sm:$0xff]
  %v7754 = vld [vmem:[#allocation2 + $0x210] sm:$0xff]
  %v7755 = vld [vmem:[#allocation2 + $0x218] sm:$0xff]
  %v7756 = vld [vmem:[#allocation2 + $0x220] sm:$0xff]
  %v7757 = vld [vmem:[#allocation2 + $0x228] sm:$0xff]
  %v7758 = vld [vmem:[#allocation2 + $0x230] sm:$0xff]
  %v7759 = vld [vmem:[#allocation2 + $0x238] sm:$0xff]
  %v7760 = vld [vmem:[#allocation2 + $0x240] sm:$0xff]
  %v7761 = vld [vmem:[#allocation2 + $0x248] sm:$0xff]
  %v7762 = vld [vmem:[#allocation2 + $0x250] sm:$0xff]
  %v7763 = vld [vmem:[#allocation2 + $0x258] sm:$0xff]
  %v7764 = vld [vmem:[#allocation2 + $0x260] sm:$0xff]
  %v7765 = vld [vmem:[#allocation2 + $0x268] sm:$0xff]
  %v7766 = vld [vmem:[#allocation2 + $0x270] sm:$0xff]
  %v7767 = vld [vmem:[#allocation2 + $0x278] sm:$0xff]
  %v7768 = vld [vmem:[#allocation2 + $0x280] sm:$0xff]
  %v7769 = vld [vmem:[#allocation2 + $0x288] sm:$0xff]
  %v7770 = vld [vmem:[#allocation2 + $0x290] sm:$0xff]
  %v7771 = vld [vmem:[#allocation2 + $0x298] sm:$0xff]
  %v7772 = vld [vmem:[#allocation2 + $0x2a0] sm:$0xff]
  %v7773 = vld [vmem:[#allocation2 + $0x2a8] sm:$0xff]
  %v7774 = vld [vmem:[#allocation2 + $0x2b0] sm:$0xff]
  %v7775 = vld [vmem:[#allocation2 + $0x2b8] sm:$0xff]
  %v7776 = vld [vmem:[#allocation2 + $0x2c0] sm:$0xff]
  %v7777 = vld [vmem:[#allocation2 + $0x2c8] sm:$0xff]
  %v7778 = vld [vmem:[#allocation2 + $0x2d0] sm:$0xff]
  %v7779 = vld [vmem:[#allocation2 + $0x2d8] sm:$0xff]
  %v7780 = vld [vmem:[#allocation2 + $0x2e0] sm:$0xff]
  %v7781 = vld [vmem:[#allocation2 + $0x2e8] sm:$0xff]
  %v7782 = vld [vmem:[#allocation2 + $0x2f0] sm:$0xff]
  %v7783 = vld [vmem:[#allocation2 + $0x2f8] sm:$0xff]
  %v7784 = vld [vmem:[#allocation2 + $0x300] sm:$0xff]
  %v7785 = vld [vmem:[#allocation2 + $0x308] sm:$0xff]
  %v7786 = vld [vmem:[#allocation2 + $0x310] sm:$0xff]
  %v7787 = vld [vmem:[#allocation2 + $0x318] sm:$0xff]
  %v7788 = vld [vmem:[#allocation2 + $0x320] sm:$0xff]
  %v7789 = vld [vmem:[#allocation2 + $0x328] sm:$0xff]
  %v7790 = vld [vmem:[#allocation2 + $0x330] sm:$0xff]
  %v7791 = vld [vmem:[#allocation2 + $0x338] sm:$0xff]
  %v7792 = vld [vmem:[#allocation2 + $0x340] sm:$0xff]
  %v7793 = vld [vmem:[#allocation2 + $0x348] sm:$0xff]
  %v7794 = vld [vmem:[#allocation2 + $0x350] sm:$0xff]
  %v7795 = vld [vmem:[#allocation2 + $0x358] sm:$0xff]
  %v7796 = vld [vmem:[#allocation2 + $0x360] sm:$0xff]
  %v7797 = vld [vmem:[#allocation2 + $0x368] sm:$0xff]
  %v7798 = vld [vmem:[#allocation2 + $0x370] sm:$0xff]
  %v7799 = vld [vmem:[#allocation2 + $0x378] sm:$0xff]
  %v7800 = vld [vmem:[#allocation2 + $0x380] sm:$0xff]
  %v7801 = vld [vmem:[#allocation2 + $0x388] sm:$0xff]
  %v7802 = vld [vmem:[#allocation2 + $0x390] sm:$0xff]
  %v7803 = vld [vmem:[#allocation2 + $0x398] sm:$0xff]
  %v7804 = vld [vmem:[#allocation2 + $0x3a0] sm:$0xff]
  %v7805 = vld [vmem:[#allocation2 + $0x3a8] sm:$0xff]
  %v7806 = vld [vmem:[#allocation2 + $0x3b0] sm:$0xff]
  %v7807 = vld [vmem:[#allocation2 + $0x3b8] sm:$0xff]
  %v7808 = vld [vmem:[#allocation2 + $0x3c0] sm:$0xff]
  %v7809 = vld [vmem:[#allocation2 + $0x3c8] sm:$0xff]
  %v7810 = vld [vmem:[#allocation2 + $0x3d0] sm:$0xff]
  %v7811 = vld [vmem:[#allocation2 + $0x3d8] sm:$0xff]
  %v7812 = vld [vmem:[#allocation2 + $0x3e0] sm:$0xff]
  %v7813 = vld [vmem:[#allocation2 + $0x3e8] sm:$0xff]
  %v7814 = vld [vmem:[#allocation2 + $0x3f0] sm:$0xff]
  %v7815 = vld [vmem:[#allocation2 + $0x3f8] sm:$0xff]
  %v7816 = vld [vmem:[#allocation2 + $0x400] sm:$0xff]
  %v7817 = vld [vmem:[#allocation2 + $0x408] sm:$0xff]
  %v7818 = vld [vmem:[#allocation2 + $0x410] sm:$0xff]
  %v7819 = vld [vmem:[#allocation2 + $0x418] sm:$0xff]
  %v7820 = vld [vmem:[#allocation2 + $0x420] sm:$0xff]
  %v7821 = vld [vmem:[#allocation2 + $0x428] sm:$0xff]
  %v7822 = vld [vmem:[#allocation2 + $0x430] sm:$0xff]
  %v7823 = vld [vmem:[#allocation2 + $0x438] sm:$0xff]
  %v7824 = vld [vmem:[#allocation2 + $0x440] sm:$0xff]
  %v7825 = vld [vmem:[#allocation2 + $0x448] sm:$0xff]
  %v7826 = vld [vmem:[#allocation2 + $0x450] sm:$0xff]
  %v7827 = vld [vmem:[#allocation2 + $0x458] sm:$0xff]
  %v7828 = vld [vmem:[#allocation2 + $0x460] sm:$0xff]
  %v7829 = vld [vmem:[#allocation2 + $0x468] sm:$0xff]
  %v7830 = vld [vmem:[#allocation2 + $0x470] sm:$0xff]
  %v7831 = vld [vmem:[#allocation2 + $0x478] sm:$0xff]
  %7832 = vset.pattern.permute.xlu0 3
  %7833 = vperm.xlu0 %7832, %v30
  %v7834 = vpop.permute.xlu0 %7833
  %v7837 = vsel %vm5611, %v6327, 0
  %7839 = vmatprep.subr.mxu0 %v7689
  %7840 = vmatpush1.msra.mxu0 %v7688
  %7841 = vmatprep.subr.mxu0 %v7705
  %7842 = vmatpush1.msra.mxu0 %v7704
  %7843 = vmatprep.subr.mxu0 %v7721
  %7844 = vmatpush1.msra.mxu0 %v7720
  %7845 = vmatprep.subr.mxu0 %v7737
  %7846 = vmatpush1.msra.mxu0 %v7736
  %7847 = vmatprep.subr.mxu0 %v7753
  %7848 = vmatpush1.msra.mxu0 %v7752
  %7849 = vmatprep.subr.mxu0 %v7769
  %7850 = vmatpush1.msra.mxu0 %v7768
  %7851 = vmatprep.subr.mxu0 %v7785
  %7852 = vmatpush1.msra.mxu0 %v7784
  %7853 = vmatprep.subr.mxu0 %v7801
  %7854 = vmatpush1.msra.mxu0 %v7800
  %7855 = vmatprep.subr.mxu0 %v7817
  %7856 = vmatpush1.msra.mxu0 %v7816
  %7857 = vmatprep.subr.mxu0 0.0
  %7858 = vmatpush1.msra.mxu0 0.0
  %7859 = vmatprep.subr.mxu0 0.0
  %7860 = vmatpush1.msra.mxu0 0.0
  %7861 = vmatprep.subr.mxu0 0.0
  %7862 = vmatpush1.msra.mxu0 0.0
  %7863 = vmatprep.subr.mxu0 0.0
  %7864 = vmatpush1.msra.mxu0 0.0
  %7865 = vmatprep.subr.mxu0 0.0
  %7866 = vmatpush1.msra.mxu0 0.0
  %7867 = vmatprep.subr.mxu0 0.0
  %7868 = vmatpush1.msra.mxu0 0.0
  %7869 = vmatprep.subr.mxu0 0.0
  %7870 = vmatpush1.msra.mxu0 0.0
  %7871 = vmatprep.subr.mxu0 0.0
  %7872 = vmatpush1.msra.mxu0 0.0
  %7873 = vmatprep.subr.mxu0 0.0
  %7874 = vmatpush1.msra.mxu0 0.0
  %7875 = vmatprep.subr.mxu0 0.0
  %7876 = vmatpush1.msra.mxu0 0.0
  %7877 = vmatprep.subr.mxu0 0.0
  %7878 = vmatpush1.msra.mxu0 0.0
  %7879 = vmatprep.subr.mxu0 0.0
  %7880 = vmatpush1.msra.mxu0 0.0
  %7881 = vmatprep.subr.mxu0 0.0
  %7882 = vmatpush1.msra.mxu0 0.0
  %7883 = vmatprep.subr.mxu0 0.0
  %7884 = vmatpush1.msra.mxu0 0.0
  %7885 = vmatprep.subr.mxu0 0.0
  %7886 = vmatpush1.msra.mxu0 0.0
  %7887 = vmatprep.subr.mxu0 0.0
  %7888 = vmatpush1.msra.mxu0 0.0
  %7889 = vmatprep.subr.mxu0 0.0
  %7890 = vmatpush1.msra.mxu0 0.0
  %7891 = vmatprep.subr.mxu0 0.0
  %7892 = vmatpush1.msra.mxu0 0.0
  %7893 = vmatprep.subr.mxu0 0.0
  %7894 = vmatpush1.msra.mxu0 0.0
  %7895 = vmatprep.subr.mxu0 0.0
  %7896 = vmatpush1.msra.mxu0 0.0
  %7897 = vmatprep.subr.mxu0 0.0
  %7898 = vmatpush1.msra.mxu0 0.0
  %7899 = vmatprep.subr.mxu0 0.0
  %7900 = vmatpush1.msra.mxu0 0.0
  %7901 = vmatprep.subr.mxu0 0.0
  %7902 = vmatpush1.msra.mxu0 0.0
  %7903 = vmatprep.mubr.f32.mxu0 0.0
  %7904 = vmatmul.mubr.f32.gmra.mrb[0].mxu0 %v7837
  %v7905 = vpop.f32.mrb[0].mxu0
  %v7906 = vadd.f32 %v7834, %v7905
  %v7907 = vpop.f32.mrb[0].mxu0
  %v7908 = vadd.f32 %v7834, %v7907
  %7909 = vdwg.mxu0
  %7910 = vmatprep.subr.mxu0 %v7691
  %7911 = vmatpush1.msra.mxu0 %v7690
  %7912 = vmatprep.subr.mxu0 %v7707
  %7913 = vmatpush1.msra.mxu0 %v7706
  %7914 = vmatprep.subr.mxu0 %v7723
  %7915 = vmatpush1.msra.mxu0 %v7722
  %7916 = vmatprep.subr.mxu0 %v7739
  %7917 = vmatpush1.msra.mxu0 %v7738
  %7918 = vmatprep.subr.mxu0 %v7755
  %7919 = vmatpush1.msra.mxu0 %v7754
  %7920 = vmatprep.subr.mxu0 %v7771
  %7921 = vmatpush1.msra.mxu0 %v7770
  %7922 = vmatprep.subr.mxu0 %v7787
  %7923 = vmatpush1.msra.mxu0 %v7786
  %7924 = vmatprep.subr.mxu0 %v7803
  %7925 = vmatpush1.msra.mxu0 %v7802
  %7926 = vmatprep.subr.mxu0 %v7819
  %7927 = vmatpush1.msra.mxu0 %v7818
  %7928 = vmatprep.subr.mxu0 0.0
  %7929 = vmatpush1.msra.mxu0 0.0
  %7930 = vmatprep.subr.mxu0 0.0
  %7931 = vmatpush1.msra.mxu0 0.0
  %7932 = vmatprep.subr.mxu0 0.0
  %7933 = vmatpush1.msra.mxu0 0.0
  %7934 = vmatprep.subr.mxu0 0.0
  %7935 = vmatpush1.msra.mxu0 0.0
  %7936 = vmatprep.subr.mxu0 0.0
  %7937 = vmatpush1.msra.mxu0 0.0
  %7938 = vmatprep.subr.mxu0 0.0
  %7939 = vmatpush1.msra.mxu0 0.0
  %7940 = vmatprep.subr.mxu0 0.0
  %7941 = vmatpush1.msra.mxu0 0.0
  %7942 = vmatprep.subr.mxu0 0.0
  %7943 = vmatpush1.msra.mxu0 0.0
  %7944 = vmatprep.subr.mxu0 0.0
  %7945 = vmatpush1.msra.mxu0 0.0
  %7946 = vmatprep.subr.mxu0 0.0
  %7947 = vmatpush1.msra.mxu0 0.0
  %7948 = vmatprep.subr.mxu0 0.0
  %7949 = vmatpush1.msra.mxu0 0.0
  %7950 = vmatprep.subr.mxu0 0.0
  %7951 = vmatpush1.msra.mxu0 0.0
  %7952 = vmatprep.subr.mxu0 0.0
  %7953 = vmatpush1.msra.mxu0 0.0
  %7954 = vmatprep.subr.mxu0 0.0
  %7955 = vmatpush1.msra.mxu0 0.0
  %7956 = vmatprep.subr.mxu0 0.0
  %7957 = vmatpush1.msra.mxu0 0.0
  %7958 = vmatprep.subr.mxu0 0.0
  %7959 = vmatpush1.msra.mxu0 0.0
  %7960 = vmatprep.subr.mxu0 0.0
  %7961 = vmatpush1.msra.mxu0 0.0
  %7962 = vmatprep.subr.mxu0 0.0
  %7963 = vmatpush1.msra.mxu0 0.0
  %7964 = vmatprep.subr.mxu0 0.0
  %7965 = vmatpush1.msra.mxu0 0.0
  %7966 = vmatprep.subr.mxu0 0.0
  %7967 = vmatpush1.msra.mxu0 0.0
  %7968 = vmatprep.subr.mxu0 0.0
  %7969 = vmatpush1.msra.mxu0 0.0
  %7970 = vmatprep.subr.mxu0 0.0
  %7971 = vmatpush1.msra.mxu0 0.0
  %7972 = vmatprep.subr.mxu0 0.0
  %7973 = vmatpush1.msra.mxu0 0.0
  %7974 = vmatprep.mubr.f32.mxu0 0.0
  %7975 = vmatmul.mubr.f32.gmra.mrb[0].mxu0 %v7837
  %v7976 = vpop.f32.mrb[0].mxu0
  %v7977 = vadd.f32 %v7834, %v7976
  %v7978 = vpop.f32.mrb[0].mxu0
  %v7979 = vadd.f32 %v7834, %v7978
  %7980 = vdwg.mxu0
  %7981 = vmatprep.subr.mxu0 %v7693
  %7982 = vmatpush1.msra.mxu0 %v7692
  %7983 = vmatprep.subr.mxu0 %v7709
  %7984 = vmatpush1.msra.mxu0 %v7708
  %7985 = vmatprep.subr.mxu0 %v7725
  %7986 = vmatpush1.msra.mxu0 %v7724
  %7987 = vmatprep.subr.mxu0 %v7741
  %7988 = vmatpush1.msra.mxu0 %v7740
  %7989 = vmatprep.subr.mxu0 %v7757
  %7990 = vmatpush1.msra.mxu0 %v7756
  %7991 = vmatprep.subr.mxu0 %v7773
  %7992 = vmatpush1.msra.mxu0 %v7772
  %7993 = vmatprep.subr.mxu0 %v7789
  %7994 = vmatpush1.msra.mxu0 %v7788
  %7995 = vmatprep.subr.mxu0 %v7805
  %7996 = vmatpush1.msra.mxu0 %v7804
  %7997 = vmatprep.subr.mxu0 %v7821
  %7998 = vmatpush1.msra.mxu0 %v7820
  %7999 = vmatprep.subr.mxu0 0.0
  %8000 = vmatpush1.msra.mxu0 0.0
  %8001 = vmatprep.subr.mxu0 0.0
  %8002 = vmatpush1.msra.mxu0 0.0
  %8003 = vmatprep.subr.mxu0 0.0
  %8004 = vmatpush1.msra.mxu0 0.0
  %8005 = vmatprep.subr.mxu0 0.0
  %8006 = vmatpush1.msra.mxu0 0.0
  %8007 = vmatprep.subr.mxu0 0.0
  %8008 = vmatpush1.msra.mxu0 0.0
  %8009 = vmatprep.subr.mxu0 0.0
  %8010 = vmatpush1.msra.mxu0 0.0
  %8011 = vmatprep.subr.mxu0 0.0
  %8012 = vmatpush1.msra.mxu0 0.0
  %8013 = vmatprep.subr.mxu0 0.0
  %8014 = vmatpush1.msra.mxu0 0.0
  %8015 = vmatprep.subr.mxu0 0.0
  %8016 = vmatpush1.msra.mxu0 0.0
  %8017 = vmatprep.subr.mxu0 0.0
  %8018 = vmatpush1.msra.mxu0 0.0
  %8019 = vmatprep.subr.mxu0 0.0
  %8020 = vmatpush1.msra.mxu0 0.0
  %8021 = vmatprep.subr.mxu0 0.0
  %8022 = vmatpush1.msra.mxu0 0.0
  %8023 = vmatprep.subr.mxu0 0.0
  %8024 = vmatpush1.msra.mxu0 0.0
  %8025 = vmatprep.subr.mxu0 0.0
  %8026 = vmatpush1.msra.mxu0 0.0
  %8027 = vmatprep.subr.mxu0 0.0
  %8028 = vmatpush1.msra.mxu0 0.0
  %8029 = vmatprep.subr.mxu0 0.0
  %8030 = vmatpush1.msra.mxu0 0.0
  %8031 = vmatprep.subr.mxu0 0.0
  %8032 = vmatpush1.msra.mxu0 0.0
  %8033 = vmatprep.subr.mxu0 0.0
  %8034 = vmatpush1.msra.mxu0 0.0
  %8035 = vmatprep.subr.mxu0 0.0
  %8036 = vmatpush1.msra.mxu0 0.0
  %8037 = vmatprep.subr.mxu0 0.0
  %8038 = vmatpush1.msra.mxu0 0.0
  %8039 = vmatprep.subr.mxu0 0.0
  %8040 = vmatpush1.msra.mxu0 0.0
  %8041 = vmatprep.subr.mxu0 0.0
  %8042 = vmatpush1.msra.mxu0 0.0
  %8043 = vmatprep.subr.mxu0 0.0
  %8044 = vmatpush1.msra.mxu0 0.0
  %8045 = vmatprep.mubr.f32.mxu0 0.0
  %8046 = vmatmul.mubr.f32.gmra.mrb[0].mxu0 %v7837
  %v8047 = vpop.f32.mrb[0].mxu0
  %v8048 = vadd.f32 %v7834, %v8047
  %v8049 = vpop.f32.mrb[0].mxu0
  %v8050 = vadd.f32 %v7834, %v8049
  %8051 = vdwg.mxu0
  %8052 = vmatprep.subr.mxu0 %v7695
  %8053 = vmatpush1.msra.mxu0 %v7694
  %8054 = vmatprep.subr.mxu0 %v7711
  %8055 = vmatpush1.msra.mxu0 %v7710
  %8056 = vmatprep.subr.mxu0 %v7727
  %8057 = vmatpush1.msra.mxu0 %v7726
  %8058 = vmatprep.subr.mxu0 %v7743
  %8059 = vmatpush1.msra.mxu0 %v7742
  %8060 = vmatprep.subr.mxu0 %v7759
  %8061 = vmatpush1.msra.mxu0 %v7758
  %8062 = vmatprep.subr.mxu0 %v7775
  %8063 = vmatpush1.msra.mxu0 %v7774
  %8064 = vmatprep.subr.mxu0 %v7791
  %8065 = vmatpush1.msra.mxu0 %v7790
  %8066 = vmatprep.subr.mxu0 %v7807
  %8067 = vmatpush1.msra.mxu0 %v7806
  %8068 = vmatprep.subr.mxu0 %v7823
  %8069 = vmatpush1.msra.mxu0 %v7822
  %8070 = vmatprep.subr.mxu0 0.0
  %8071 = vmatpush1.msra.mxu0 0.0
  %8072 = vmatprep.subr.mxu0 0.0
  %8073 = vmatpush1.msra.mxu0 0.0
  %8074 = vmatprep.subr.mxu0 0.0
  %8075 = vmatpush1.msra.mxu0 0.0
  %8076 = vmatprep.subr.mxu0 0.0
  %8077 = vmatpush1.msra.mxu0 0.0
  %8078 = vmatprep.subr.mxu0 0.0
  %8079 = vmatpush1.msra.mxu0 0.0
  %8080 = vmatprep.subr.mxu0 0.0
  %8081 = vmatpush1.msra.mxu0 0.0
  %8082 = vmatprep.subr.mxu0 0.0
  %8083 = vmatpush1.msra.mxu0 0.0
  %8084 = vmatprep.subr.mxu0 0.0
  %8085 = vmatpush1.msra.mxu0 0.0
  %8086 = vmatprep.subr.mxu0 0.0
  %8087 = vmatpush1.msra.mxu0 0.0
  %8088 = vmatprep.subr.mxu0 0.0
  %8089 = vmatpush1.msra.mxu0 0.0
  %8090 = vmatprep.subr.mxu0 0.0
  %8091 = vmatpush1.msra.mxu0 0.0
  %8092 = vmatprep.subr.mxu0 0.0
  %8093 = vmatpush1.msra.mxu0 0.0
  %8094 = vmatprep.subr.mxu0 0.0
  %8095 = vmatpush1.msra.mxu0 0.0
  %8096 = vmatprep.subr.mxu0 0.0
  %8097 = vmatpush1.msra.mxu0 0.0
  %8098 = vmatprep.subr.mxu0 0.0
  %8099 = vmatpush1.msra.mxu0 0.0
  %8100 = vmatprep.subr.mxu0 0.0
  %8101 = vmatpush1.msra.mxu0 0.0
  %8102 = vmatprep.subr.mxu0 0.0
  %8103 = vmatpush1.msra.mxu0 0.0
  %8104 = vmatprep.subr.mxu0 0.0
  %8105 = vmatpush1.msra.mxu0 0.0
  %8106 = vmatprep.subr.mxu0 0.0
  %8107 = vmatpush1.msra.mxu0 0.0
  %8108 = vmatprep.subr.mxu0 0.0
  %8109 = vmatpush1.msra.mxu0 0.0
  %8110 = vmatprep.subr.mxu0 0.0
  %8111 = vmatpush1.msra.mxu0 0.0
  %8112 = vmatprep.subr.mxu0 0.0
  %8113 = vmatpush1.msra.mxu0 0.0
  %8114 = vmatprep.subr.mxu0 0.0
  %8115 = vmatpush1.msra.mxu0 0.0
  %8116 = vmatprep.mubr.f32.mxu0 0.0
  %8117 = vmatmul.mubr.f32.gmra.mrb[0].mxu0 %v7837
  %v8118 = vpop.f32.mrb[0].mxu0
  %v8119 = vadd.f32 %v7834, %v8118
  %v8120 = vpop.f32.mrb[0].mxu0
  %v8121 = vadd.f32 %v7834, %v8120
  %8122 = vdwg.mxu0
  %8123 = vmatprep.subr.mxu0 %v7697
  %8124 = vmatpush1.msra.mxu0 %v7696
  %8125 = vmatprep.subr.mxu0 %v7713
  %8126 = vmatpush1.msra.mxu0 %v7712
  %8127 = vmatprep.subr.mxu0 %v7729
  %8128 = vmatpush1.msra.mxu0 %v7728
  %8129 = vmatprep.subr.mxu0 %v7745
  %8130 = vmatpush1.msra.mxu0 %v7744
  %8131 = vmatprep.subr.mxu0 %v7761
  %8132 = vmatpush1.msra.mxu0 %v7760
  %8133 = vmatprep.subr.mxu0 %v7777
  %8134 = vmatpush1.msra.mxu0 %v7776
  %8135 = vmatprep.subr.mxu0 %v7793
  %8136 = vmatpush1.msra.mxu0 %v7792
  %8137 = vmatprep.subr.mxu0 %v7809
  %8138 = vmatpush1.msra.mxu0 %v7808
  %8139 = vmatprep.subr.mxu0 %v7825
  %8140 = vmatpush1.msra.mxu0 %v7824
  %8141 = vmatprep.subr.mxu0 0.0
  %8142 = vmatpush1.msra.mxu0 0.0
  %8143 = vmatprep.subr.mxu0 0.0
  %8144 = vmatpush1.msra.mxu0 0.0
  %8145 = vmatprep.subr.mxu0 0.0
  %8146 = vmatpush1.msra.mxu0 0.0
  %8147 = vmatprep.subr.mxu0 0.0
  %8148 = vmatpush1.msra.mxu0 0.0
  %8149 = vmatprep.subr.mxu0 0.0
  %8150 = vmatpush1.msra.mxu0 0.0
  %8151 = vmatprep.subr.mxu0 0.0
  %8152 = vmatpush1.msra.mxu0 0.0
  %8153 = vmatprep.subr.mxu0 0.0
  %8154 = vmatpush1.msra.mxu0 0.0
  %8155 = vmatprep.subr.mxu0 0.0
  %8156 = vmatpush1.msra.mxu0 0.0
  %8157 = vmatprep.subr.mxu0 0.0
  %8158 = vmatpush1.msra.mxu0 0.0
  %8159 = vmatprep.subr.mxu0 0.0
  %8160 = vmatpush1.msra.mxu0 0.0
  %8161 = vmatprep.subr.mxu0 0.0
  %8162 = vmatpush1.msra.mxu0 0.0
  %8163 = vmatprep.subr.mxu0 0.0
  %8164 = vmatpush1.msra.mxu0 0.0
  %8165 = vmatprep.subr.mxu0 0.0
  %8166 = vmatpush1.msra.mxu0 0.0
  %8167 = vmatprep.subr.mxu0 0.0
  %8168 = vmatpush1.msra.mxu0 0.0
  %8169 = vmatprep.subr.mxu0 0.0
  %8170 = vmatpush1.msra.mxu0 0.0
  %8171 = vmatprep.subr.mxu0 0.0
  %8172 = vmatpush1.msra.mxu0 0.0
  %8173 = vmatprep.subr.mxu0 0.0
  %8174 = vmatpush1.msra.mxu0 0.0
  %8175 = vmatprep.subr.mxu0 0.0
  %8176 = vmatpush1.msra.mxu0 0.0
  %8177 = vmatprep.subr.mxu0 0.0
  %8178 = vmatpush1.msra.mxu0 0.0
  %8179 = vmatprep.subr.mxu0 0.0
  %8180 = vmatpush1.msra.mxu0 0.0
  %8181 = vmatprep.subr.mxu0 0.0
  %8182 = vmatpush1.msra.mxu0 0.0
  %8183 = vmatprep.subr.mxu0 0.0
  %8184 = vmatpush1.msra.mxu0 0.0
  %8185 = vmatprep.subr.mxu0 0.0
  %8186 = vmatpush1.msra.mxu0 0.0
  %8187 = vmatprep.mubr.f32.mxu0 0.0
  %8188 = vmatmul.mubr.f32.gmra.mrb[0].mxu0 %v7837
  %v8189 = vpop.f32.mrb[0].mxu0
  %v8190 = vadd.f32 %v7834, %v8189
  %v8191 = vpop.f32.mrb[0].mxu0
  %v8192 = vadd.f32 %v7834, %v8191
  %8193 = vdwg.mxu0
  %8194 = vmatprep.subr.mxu0 %v7699
  %8195 = vmatpush1.msra.mxu0 %v7698
  %8196 = vmatprep.subr.mxu0 %v7715
  %8197 = vmatpush1.msra.mxu0 %v7714
  %8198 = vmatprep.subr.mxu0 %v7731
  %8199 = vmatpush1.msra.mxu0 %v7730
  %8200 = vmatprep.subr.mxu0 %v7747
  %8201 = vmatpush1.msra.mxu0 %v7746
  %8202 = vmatprep.subr.mxu0 %v7763
  %8203 = vmatpush1.msra.mxu0 %v7762
  %8204 = vmatprep.subr.mxu0 %v7779
  %8205 = vmatpush1.msra.mxu0 %v7778
  %8206 = vmatprep.subr.mxu0 %v7795
  %8207 = vmatpush1.msra.mxu0 %v7794
  %8208 = vmatprep.subr.mxu0 %v7811
  %8209 = vmatpush1.msra.mxu0 %v7810
  %8210 = vmatprep.subr.mxu0 %v7827
  %8211 = vmatpush1.msra.mxu0 %v7826
  %8212 = vmatprep.subr.mxu0 0.0
  %8213 = vmatpush1.msra.mxu0 0.0
  %8214 = vmatprep.subr.mxu0 0.0
  %8215 = vmatpush1.msra.mxu0 0.0
  %8216 = vmatprep.subr.mxu0 0.0
  %8217 = vmatpush1.msra.mxu0 0.0
  %8218 = vmatprep.subr.mxu0 0.0
  %8219 = vmatpush1.msra.mxu0 0.0
  %8220 = vmatprep.subr.mxu0 0.0
  %8221 = vmatpush1.msra.mxu0 0.0
  %8222 = vmatprep.subr.mxu0 0.0
  %8223 = vmatpush1.msra.mxu0 0.0
  %8224 = vmatprep.subr.mxu0 0.0
  %8225 = vmatpush1.msra.mxu0 0.0
  %8226 = vmatprep.subr.mxu0 0.0
  %8227 = vmatpush1.msra.mxu0 0.0
  %8228 = vmatprep.subr.mxu0 0.0
  %8229 = vmatpush1.msra.mxu0 0.0
  %8230 = vmatprep.subr.mxu0 0.0
  %8231 = vmatpush1.msra.mxu0 0.0
  %8232 = vmatprep.subr.mxu0 0.0
  %8233 = vmatpush1.msra.mxu0 0.0
  %8234 = vmatprep.subr.mxu0 0.0
  %8235 = vmatpush1.msra.mxu0 0.0
  %8236 = vmatprep.subr.mxu0 0.0
  %8237 = vmatpush1.msra.mxu0 0.0
  %8238 = vmatprep.subr.mxu0 0.0
  %8239 = vmatpush1.msra.mxu0 0.0
  %8240 = vmatprep.subr.mxu0 0.0
  %8241 = vmatpush1.msra.mxu0 0.0
  %8242 = vmatprep.subr.mxu0 0.0
  %8243 = vmatpush1.msra.mxu0 0.0
  %8244 = vmatprep.subr.mxu0 0.0
  %8245 = vmatpush1.msra.mxu0 0.0
  %8246 = vmatprep.subr.mxu0 0.0
  %8247 = vmatpush1.msra.mxu0 0.0
  %8248 = vmatprep.subr.mxu0 0.0
  %8249 = vmatpush1.msra.mxu0 0.0
  %8250 = vmatprep.subr.mxu0 0.0
  %8251 = vmatpush1.msra.mxu0 0.0
  %8252 = vmatprep.subr.mxu0 0.0
  %8253 = vmatpush1.msra.mxu0 0.0
  %8254 = vmatprep.subr.mxu0 0.0
  %8255 = vmatpush1.msra.mxu0 0.0
  %8256 = vmatprep.subr.mxu0 0.0
  %8257 = vmatpush1.msra.mxu0 0.0
  %8258 = vmatprep.mubr.f32.mxu0 0.0
  %8259 = vmatmul.mubr.f32.gmra.mrb[0].mxu0 %v7837
  %v8260 = vpop.f32.mrb[0].mxu0
  %v8261 = vadd.f32 %v7834, %v8260
  %v8262 = vpop.f32.mrb[0].mxu0
  %v8263 = vadd.f32 %v7834, %v8262
  %8264 = vdwg.mxu0
  %8265 = vmatprep.subr.mxu0 %v7701
  %8266 = vmatpush1.msra.mxu0 %v7700
  %8267 = vmatprep.subr.mxu0 %v7717
  %8268 = vmatpush1.msra.mxu0 %v7716
  %8269 = vmatprep.subr.mxu0 %v7733
  %8270 = vmatpush1.msra.mxu0 %v7732
  %8271 = vmatprep.subr.mxu0 %v7749
  %8272 = vmatpush1.msra.mxu0 %v7748
  %8273 = vmatprep.subr.mxu0 %v7765
  %8274 = vmatpush1.msra.mxu0 %v7764
  %8275 = vmatprep.subr.mxu0 %v7781
  %8276 = vmatpush1.msra.mxu0 %v7780
  %8277 = vmatprep.subr.mxu0 %v7797
  %8278 = vmatpush1.msra.mxu0 %v7796
  %8279 = vmatprep.subr.mxu0 %v7813
  %8280 = vmatpush1.msra.mxu0 %v7812
  %8281 = vmatprep.subr.mxu0 %v7829
  %8282 = vmatpush1.msra.mxu0 %v7828
  %8283 = vmatprep.subr.mxu0 0.0
  %8284 = vmatpush1.msra.mxu0 0.0
  %8285 = vmatprep.subr.mxu0 0.0
  %8286 = vmatpush1.msra.mxu0 0.0
  %8287 = vmatprep.subr.mxu0 0.0
  %8288 = vmatpush1.msra.mxu0 0.0
  %8289 = vmatprep.subr.mxu0 0.0
  %8290 = vmatpush1.msra.mxu0 0.0
  %8291 = vmatprep.subr.mxu0 0.0
  %8292 = vmatpush1.msra.mxu0 0.0
  %8293 = vmatprep.subr.mxu0 0.0
  %8294 = vmatpush1.msra.mxu0 0.0
  %8295 = vmatprep.subr.mxu0 0.0
  %8296 = vmatpush1.msra.mxu0 0.0
  %8297 = vmatprep.subr.mxu0 0.0
  %8298 = vmatpush1.msra.mxu0 0.0
  %8299 = vmatprep.subr.mxu0 0.0
  %8300 = vmatpush1.msra.mxu0 0.0
  %8301 = vmatprep.subr.mxu0 0.0
  %8302 = vmatpush1.msra.mxu0 0.0
  %8303 = vmatprep.subr.mxu0 0.0
  %8304 = vmatpush1.msra.mxu0 0.0
  %8305 = vmatprep.subr.mxu0 0.0
  %8306 = vmatpush1.msra.mxu0 0.0
  %8307 = vmatprep.subr.mxu0 0.0
  %8308 = vmatpush1.msra.mxu0 0.0
  %8309 = vmatprep.subr.mxu0 0.0
  %8310 = vmatpush1.msra.mxu0 0.0
  %8311 = vmatprep.subr.mxu0 0.0
  %8312 = vmatpush1.msra.mxu0 0.0
  %8313 = vmatprep.subr.mxu0 0.0
  %8314 = vmatpush1.msra.mxu0 0.0
  %8315 = vmatprep.subr.mxu0 0.0
  %8316 = vmatpush1.msra.mxu0 0.0
  %8317 = vmatprep.subr.mxu0 0.0
  %8318 = vmatpush1.msra.mxu0 0.0
  %8319 = vmatprep.subr.mxu0 0.0
  %8320 = vmatpush1.msra.mxu0 0.0
  %8321 = vmatprep.subr.mxu0 0.0
  %8322 = vmatpush1.msra.mxu0 0.0
  %8323 = vmatprep.subr.mxu0 0.0
  %8324 = vmatpush1.msra.mxu0 0.0
  %8325 = vmatprep.subr.mxu0 0.0
  %8326 = vmatpush1.msra.mxu0 0.0
  %8327 = vmatprep.subr.mxu0 0.0
  %8328 = vmatpush1.msra.mxu0 0.0
  %8329 = vmatprep.mubr.f32.mxu0 0.0
  %8330 = vmatmul.mubr.f32.gmra.mrb[0].mxu0 %v7837
  %v8331 = vpop.f32.mrb[0].mxu0
  %v8332 = vadd.f32 %v7834, %v8331
  %v8333 = vpop.f32.mrb[0].mxu0
  %v8334 = vadd.f32 %v7834, %v8333
  %8335 = vdwg.mxu0
  %8336 = vmatprep.subr.mxu0 %v7703
  %8337 = vmatpush1.msra.mxu0 %v7702
  %8338 = vmatprep.subr.mxu0 %v7719
  %8339 = vmatpush1.msra.mxu0 %v7718
  %8340 = vmatprep.subr.mxu0 %v7735
  %8341 = vmatpush1.msra.mxu0 %v7734
  %8342 = vmatprep.subr.mxu0 %v7751
  %8343 = vmatpush1.msra.mxu0 %v7750
  %8344 = vmatprep.subr.mxu0 %v7767
  %8345 = vmatpush1.msra.mxu0 %v7766
  %8346 = vmatprep.subr.mxu0 %v7783
  %8347 = vmatpush1.msra.mxu0 %v7782
  %8348 = vmatprep.subr.mxu0 %v7799
  %8349 = vmatpush1.msra.mxu0 %v7798
  %8350 = vmatprep.subr.mxu0 %v7815
  %8351 = vmatpush1.msra.mxu0 %v7814
  %8352 = vmatprep.subr.mxu0 %v7831
  %8353 = vmatpush1.msra.mxu0 %v7830
  %8354 = vmatprep.subr.mxu0 0.0
  %8355 = vmatpush1.msra.mxu0 0.0
  %8356 = vmatprep.subr.mxu0 0.0
  %8357 = vmatpush1.msra.mxu0 0.0
  %8358 = vmatprep.subr.mxu0 0.0
  %8359 = vmatpush1.msra.mxu0 0.0
  %8360 = vmatprep.subr.mxu0 0.0
  %8361 = vmatpush1.msra.mxu0 0.0
  %8362 = vmatprep.subr.mxu0 0.0
  %8363 = vmatpush1.msra.mxu0 0.0
  %8364 = vmatprep.subr.mxu0 0.0
  %8365 = vmatpush1.msra.mxu0 0.0
  %8366 = vmatprep.subr.mxu0 0.0
  %8367 = vmatpush1.msra.mxu0 0.0
  %8368 = vmatprep.subr.mxu0 0.0
  %8369 = vmatpush1.msra.mxu0 0.0
  %8370 = vmatprep.subr.mxu0 0.0
  %8371 = vmatpush1.msra.mxu0 0.0
  %8372 = vmatprep.subr.mxu0 0.0
  %8373 = vmatpush1.msra.mxu0 0.0
  %8374 = vmatprep.subr.mxu0 0.0
  %8375 = vmatpush1.msra.mxu0 0.0
  %8376 = vmatprep.subr.mxu0 0.0
  %8377 = vmatpush1.msra.mxu0 0.0
  %8378 = vmatprep.subr.mxu0 0.0
  %8379 = vmatpush1.msra.mxu0 0.0
  %8380 = vmatprep.subr.mxu0 0.0
  %8381 = vmatpush1.msra.mxu0 0.0
  %8382 = vmatprep.subr.mxu0 0.0
  %8383 = vmatpush1.msra.mxu0 0.0
  %8384 = vmatprep.subr.mxu0 0.0
  %8385 = vmatpush1.msra.mxu0 0.0
  %8386 = vmatprep.subr.mxu0 0.0
  %8387 = vmatpush1.msra.mxu0 0.0
  %8388 = vmatprep.subr.mxu0 0.0
  %8389 = vmatpush1.msra.mxu0 0.0
  %8390 = vmatprep.subr.mxu0 0.0
  %8391 = vmatpush1.msra.mxu0 0.0
  %8392 = vmatprep.subr.mxu0 0.0
  %8393 = vmatpush1.msra.mxu0 0.0
  %8394 = vmatprep.subr.mxu0 0.0
  %8395 = vmatpush1.msra.mxu0 0.0
  %8396 = vmatprep.subr.mxu0 0.0
  %8397 = vmatpush1.msra.mxu0 0.0
  %8398 = vmatprep.subr.mxu0 0.0
  %8399 = vmatpush1.msra.mxu0 0.0
  %8400 = vmatprep.mubr.f32.mxu0 0.0
  %8401 = vmatmul.mubr.f32.gmra.mrb[0].mxu0 %v7837
  %v8402 = vpop.f32.mrb[0].mxu0
  %v8403 = vadd.f32 %v7834, %v8402
  %v8404 = vpop.f32.mrb[0].mxu0
  %v8405 = vadd.f32 %v7834, %v8404
  %8406 = vdwg.mxu0
  %v8407 = vadd.f32 %v7906, %v3471
  %v8408 = vadd.f32 %v7908, %v3473
  %v8409 = vadd.f32 %v7977, %v3557
  %v8410 = vadd.f32 %v7979, %v3559
  %v8411 = vadd.f32 %v8048, %v3643
  %v8412 = vadd.f32 %v8050, %v3645
  %v8413 = vadd.f32 %v8119, %v3729
  %v8414 = vadd.f32 %v8121, %v3731
  %v8415 = vadd.f32 %v8190, %v3815
  %v8416 = vadd.f32 %v8192, %v3817
  %v8417 = vadd.f32 %v8261, %v3901
  %v8418 = vadd.f32 %v8263, %v3903
  %v8419 = vadd.f32 %v8332, %v3987
  %v8420 = vadd.f32 %v8334, %v3989
  %v8421 = vadd.f32 %v8403, %v4073
  %v8422 = vadd.f32 %v8405, %v4075
  %8423 = vst [vmem:[%s8] sm:$0xff] %v8407
  %8424 = vst [vmem:[%s8 + $0x8] sm:$0xff] %v8408
  %8425 = vst [vmem:[%s8 + $0x10] sm:$0xff] %v8409
  %8426 = vst [vmem:[%s8 + $0x18] sm:$0xff] %v8410
  %8427 = vst [vmem:[%s8 + $0x20] sm:$0xff] %v8411
  %8428 = vst [vmem:[%s8 + $0x28] sm:$0xff] %v8412
  %8429 = vst [vmem:[%s8 + $0x30] sm:$0xff] %v8413
  %8430 = vst [vmem:[%s8 + $0x38] sm:$0xff] %v8414
  %8431 = vst [vmem:[%s8 + $0x40] sm:$0xff] %v8415
  %8432 = vst [vmem:[%s8 + $0x48] sm:$0xff] %v8416
  %8433 = vst [vmem:[%s8 + $0x50] sm:$0xff] %v8417
  %8434 = vst [vmem:[%s8 + $0x58] sm:$0xff] %v8418
  %8435 = vst [vmem:[%s8 + $0x60] sm:$0xff] %v8419
  %8436 = vst [vmem:[%s8 + $0x68] sm:$0xff] %v8420
  %8437 = vst [vmem:[%s8 + $0x70] sm:$0xff] %v8421
  %8438 = vst [vmem:[%s8 + $0x78] sm:$0xff] %v8422
  // Predicated region
  $region34: #{residual_g_forward.1} parent=0 // pred_check
    _
  $region35: #{residual_g_forward.1} parent=0 // pred_check_branch
    %8440 = sbr.rel (0) target = $region37
  $region36: #{residual_g_forward.1} parent=0 // pred_region
    _
  $region37: #{residual_g_forward.1} parent=0 // pred_fallthru
    _
  // Predicated region
  $region38: #{residual_g_forward.1} parent=0 // pred_check
    _
  $region39: #{residual_g_forward.1} parent=0 // pred_check_branch
    %8442 = sbr.rel (0) target = $region41
  $region40: #{residual_g_forward.1} parent=0 // pred_region
    _
  $region41: #{residual_g_forward.1} parent=0 // pred_fallthru
    _

</llo_original>
